<compile_context>
chip_gen: v6e
topology: v6e:2x2x1
jax: 0.10.0
libtpu: 0.0.40
codegen_flags: <defaults>
</compile_context>

<pallas_src>
import functools

import jax
import jax.numpy as jnp
import numpy as np
from jax.experimental import pallas as pl
from jax.experimental.pallas import tpu as pltpu

D_MODEL = 32
NHEAD = 4
HEAD_DIM = D_MODEL // NHEAD
DIM_FF = 64
LN_EPS = 1e-5   # torch.nn.LayerNorm default

# ------------------------------------------------------------------ packed-slab layouts
_W_LAYOUT = (("sa_wqkv", 3 * D_MODEL), ("sa_wo", D_MODEL), ("ca_wq", D_MODEL),
             ("ca_wkv", 2 * D_MODEL), ("ca_wo", D_MODEL), ("w1", DIM_FF))
_V_LAYOUT = (("sa_bqkv", 3 * D_MODEL), ("sa_bk", D_MODEL), ("sa_bv", D_MODEL),
             ("sa_bo", D_MODEL), ("ca_bq", D_MODEL), ("ca_bkv", 2 * D_MODEL),
             ("ca_bk", D_MODEL), ("ca_bv", D_MODEL), ("ca_bo", D_MODEL),
             ("n1g", D_MODEL), ("n1b", D_MODEL), ("n2g", D_MODEL), ("n2b", D_MODEL),
             ("n3g", D_MODEL), ("n3b", D_MODEL), ("fb1", DIM_FF), ("fb2", D_MODEL))


def _offsets(layout):
    offs, off = {}, 0
    for name, width in layout:
        offs[name] = (off, off + width)
        off += width
    return offs, off


_W_OFF, _W_TOT = _offsets(_W_LAYOUT)   # (32, 320) weight slab
_V_OFF, _V_TOT = _offsets(_V_LAYOUT)   # (1, 672) vector slab


def _round_up(x, m):
    return (x + m - 1) // m * m


# ------------------------------------------------------------------------------- kernel

def _layer_norm(t, g, b):
    mu = jnp.mean(t, axis=-1, keepdims=True)
    c = t - mu
    var = jnp.mean(c * c, axis=-1, keepdims=True)
    return c * jax.lax.rsqrt(var + LN_EPS) * g + b


def _fused_layer_kernel(x_ref, mem_ref, w_ref, w2_ref, v_ref, out_ref,
                        kpad_ref, vpad_ref, acc_ref, *, B, Lt, Lm, nhead):
    E = x_ref.shape[-1]
    hd = E // nhead
    LKP = kpad_ref.shape[1]            # padded key length (multiple of 8, >= Lk+1)
    NEG = -1e30

    def W(name):                       # (E, w) column slice of the packed weight slab
        lo, hi = _W_OFF[name]
        return w_ref[:, lo:hi]

    def V(name):                       # (1, w) slice of the packed bias/LN vector slab
        lo, hi = _V_OFF[name]
        return v_ref[:, lo:hi]

    x = x_ref[...]                     # (B*Lt, E) -- batch folded into rows
    mem = mem_ref[...]                 # (B*Lm, E)

    # Zero padded K/V scratch once; pad rows stay zero across both attentions
    # (self-attn writes rows [0, Lt], cross-attn rows [0, Lm]; the rest is masked).
    kpad_ref[...] = jnp.zeros_like(kpad_ref)
    vpad_ref[...] = jnp.zeros_like(vpad_ref)

    col_ids = jax.lax.broadcasted_iota(jnp.int32, (1, LKP), 1)

    def attend_accumulate(q_all, Lk, wo_name):
        """Per-(batch, head) softmax(q k^T) v with per-head out_proj partial products
        accumulated straight into acc_ref (no head-output lane concat).  K/V for batch b
        (incl. the bias_kv row at column Lk) live in kpad_ref[b]/vpad_ref[b]."""
        acc_ref[...] = jnp.zeros_like(acc_ref)
        valid = col_ids <= Lk                                    # col Lk == bias_kv row
        wo_lo, wo_hi = _W_OFF[wo_name]
        for b in range(B):                                       # static unroll (B=2)
            qb = q_all[b * Lt:(b + 1) * Lt, :]
            kb = kpad_ref[b]                                     # (LKP, E)
            vb = vpad_ref[b]
            for h in range(nhead):                               # static unroll (nhead=4)
                sl = slice(h * hd, (h + 1) * hd)
                s = jax.lax.dot_general(qb[:, sl], kb[:, sl], (((1,), (1,)), ((), ())),
                                        preferred_element_type=jnp.float32)  # (Lt, LKP)
                s = jnp.where(valid, s, NEG)
                m = jnp.max(s, axis=-1, keepdims=True)
                p = jnp.exp(s - m)                               # pad cols underflow to 0
                l = jnp.sum(p, axis=-1, keepdims=True)
                ctx = jnp.dot(p, vb[:, sl], preferred_element_type=jnp.float32)
                # multiply by the (Lq,1) reciprocal rather than dividing the whole ctx.
                # TODO(synk): pl.reciprocal(approx=True) (EUP slot) if 1e-4 tol is relaxed.
                ctx = ctx * (1.0 / l)
                acc_ref[b * Lt:(b + 1) * Lt, :] += jnp.dot(
                    ctx, w_ref[h * hd:(h + 1) * hd, wo_lo:wo_hi],
                    preferred_element_type=jnp.float32)

    # ---------------- self-attention (fused QKV; muP q-scaling pre-folded) --------------
    qkv = jnp.dot(x, W("sa_wqkv"), preferred_element_type=jnp.float32) + V("sa_bqkv")
    for b in range(B):
        kpad_ref[b, 0:Lt, :] = qkv[b * Lt:(b + 1) * Lt, E:2 * E]
        vpad_ref[b, 0:Lt, :] = qkv[b * Lt:(b + 1) * Lt, 2 * E:]
        kpad_ref[b, Lt:Lt + 1, :] = V("sa_bk")                   # add_bias_kv row
        vpad_ref[b, Lt:Lt + 1, :] = V("sa_bv")
    attend_accumulate(qkv[:, :E], Lt, "sa_wo")
    x = _layer_norm(x + acc_ref[...] + V("sa_bo"), V("n1g"), V("n1b"))

    # ---------------- cross-attention (fused KV; muP q-scaling pre-folded) --------------
    q = jnp.dot(x, W("ca_wq"), preferred_element_type=jnp.float32) + V("ca_bq")
    kv = jnp.dot(mem, W("ca_wkv"), preferred_element_type=jnp.float32) + V("ca_bkv")
    for b in range(B):
        kpad_ref[b, 0:Lm, :] = kv[b * Lm:(b + 1) * Lm, :E]
        vpad_ref[b, 0:Lm, :] = kv[b * Lm:(b + 1) * Lm, E:]
        kpad_ref[b, Lm:Lm + 1, :] = V("ca_bk")
        vpad_ref[b, Lm:Lm + 1, :] = V("ca_bv")
    attend_accumulate(q, Lm, "ca_wo")
    x = _layer_norm(x + acc_ref[...] + V("ca_bo"), V("n2g"), V("n2b"))

    # ---------------- feed-forward -------------------------------------------------------
    h1 = jnp.maximum(jnp.dot(x, W("w1"), preferred_element_type=jnp.float32) + V("fb1"), 0.0)
    y = jnp.dot(h1, w2_ref[...], preferred_element_type=jnp.float32) + V("fb2")
    out_ref[...] = _layer_norm(x + y, V("n3g"), V("n3b"))


# ------------------------------------------------------------------------------ wrapper

def decoder_layer_pallas(tgt, memory, kp):
    B, Lt, E = tgt.shape
    Lm = memory.shape[1]
    F = kp["w2_t"].shape[0]
    x2d = tgt.reshape(B * Lt, E)             # free reshape in the wrapper
    m2d = memory.reshape(B * Lm, E)
    LKP = _round_up(max(Lt, Lm) + 1, 8)      # padded key rows (incl. bias_kv row)

    kernel = functools.partial(_fused_layer_kernel, B=B, Lt=Lt, Lm=Lm, nhead=NHEAD)
    out2d = pl.pallas_call(
        kernel,
        out_shape=jax.ShapeDtypeStruct((B * Lt, E), jnp.float32),
        grid_spec=pltpu.PrefetchScalarGridSpec(
            num_scalar_prefetch=0,
            grid=(1,),                                        # single step: batch folded
            in_specs=[
                pl.BlockSpec((B * Lt, E), lambda i: (0, 0)),  # x (tgt, batch-folded)
                pl.BlockSpec((B * Lm, E), lambda i: (0, 0)),  # memory (batch-folded)
                pl.BlockSpec((E, _W_TOT), lambda i: (0, 0)),  # packed weight slab
                pl.BlockSpec((F, E), lambda i: (0, 0)),       # w2_t
                pl.BlockSpec((1, _V_TOT), lambda i: (0, 0)),  # packed bias/LN vector slab
            ],
            out_specs=pl.BlockSpec((B * Lt, E), lambda i: (0, 0)),
            scratch_shapes=[
                pltpu.VMEM((B, LKP, E), jnp.float32),         # padded K (+ bias_kv row)
                pltpu.VMEM((B, LKP, E), jnp.float32),         # padded V (+ bias_kv row)
                pltpu.VMEM((B * Lt, E), jnp.float32),         # attn out_proj accumulator
            ]),
        compiler_params=pltpu.CompilerParams(dimension_semantics=("arbitrary",)),
    )(x2d, m2d, kp["w_slab"], kp["w2_t"], kp["vec"])
    return out2d.reshape(B, Lt, E)


# ------------------------------------------------------------------------------- params

def init_raw_params(key, d_model=D_MODEL, dim_ff=DIM_FF, encoder_var=1.0):
    """Raw PyTorch-layout parameters (matching MupMultiheadAttention _reset_parameters)."""
    std = (encoder_var / d_model) ** 0.5
    k_sa_in, k_sa_out, k_ca_in, k_ca_out, k_l1, k_l2 = jax.random.split(key, 6)

    def attn(k_in, k_out):
        in_proj = jax.random.normal(k_in, (3 * d_model, d_model), jnp.float32) * std
        in_proj = in_proj.at[:d_model].set(0.0)     # constant_(in_proj_weight[:E], 0)
        wo = jax.random.normal(k_out, (d_model, d_model), jnp.float32) * std
        z = jnp.zeros((1, d_model), jnp.float32)
        return dict(in_proj_w=in_proj,
                    in_proj_b=jnp.zeros((3 * d_model,), jnp.float32),
                    bias_k=z, bias_v=z, wo=wo, bo=z)

    w1 = jax.random.normal(k_l1, (dim_ff, d_model), jnp.float32) * std
    w2 = jax.random.normal(k_l2, (d_model, dim_ff), jnp.float32) * std
    ones_e = jnp.ones((1, d_model), jnp.float32)
    zeros_e = jnp.zeros((1, d_model), jnp.float32)
    return dict(
        self_attn=attn(k_sa_in, k_sa_out), cross_attn=attn(k_ca_in, k_ca_out),
        w1=w1, fb1=jnp.zeros((1, dim_ff), jnp.float32),
        w2=w2, fb2=jnp.zeros((1, d_model), jnp.float32),
        norm1_g=ones_e, norm1_b=zeros_e,
        norm2_g=ones_e, norm2_b=zeros_e,
        norm3_g=ones_e, norm3_b=zeros_e)


def randomize_raw_params(key, d_model=D_MODEL, dim_ff=DIM_FF):
    """Trained-like parameters: exercises the q path, bias_kv rows and all biases, which
    the faithful muP init leaves at zero."""
    keys = iter(jax.random.split(key, 32))

    def n(shape, s=0.3):
        return jax.random.normal(next(keys), shape, jnp.float32) * s

    def attn():
        return dict(in_proj_w=n((3 * d_model, d_model)), in_proj_b=n((3 * d_model,)),
                    bias_k=n((1, d_model)), bias_v=n((1, d_model)),
                    wo=n((d_model, d_model)), bo=n((1, d_model)))

    return dict(
        self_attn=attn(), cross_attn=attn(),
        w1=n((dim_ff, d_model)), fb1=n((1, dim_ff)),
        w2=n((d_model, dim_ff)), fb2=n((1, d_model)),
        norm1_g=1.0 + n((1, d_model), 0.1), norm1_b=n((1, d_model), 0.1),
        norm2_g=1.0 + n((1, d_model), 0.1), norm2_b=n((1, d_model), 0.1),
        norm3_g=1.0 + n((1, d_model), 0.1), norm3_b=n((1, d_model), 0.1))


def pack_kernel_params(raw, d_model=D_MODEL, nhead=NHEAD):
    """Pre-transpose, fuse QKV, fold the muP q-scaling into the weights, and pack
    everything into three slabs: (E, 320) weights, (F, E) w2, (1, 672) vectors."""
    E = d_model
    scaling = 1.0 / float(E // nhead)             # head_dim^-1 * sqrt(attn_mult=1)
    sa, ca = raw["self_attn"], raw["cross_attn"]

    def scaled_qkv_t(a):
        w_t = a["in_proj_w"].T                    # (E, 3E): x @ W.T
        b = a["in_proj_b"][None, :]               # (1, 3E)
        col_scale = jnp.concatenate(
            [jnp.full((E,), scaling, jnp.float32),
             jnp.ones((2 * E,), jnp.float32)])[None, :]
        return w_t * col_scale, b * col_scale     # fold q-scaling into cols [0:E]

    sa_wqkv_t, sa_bqkv = scaled_qkv_t(sa)
    ca_wqkv_t, ca_bqkv = scaled_qkv_t(ca)

    w_pieces = {
        "sa_wqkv": sa_wqkv_t, "sa_wo": sa["wo"].T,
        "ca_wq": ca_wqkv_t[:, :E], "ca_wkv": ca_wqkv_t[:, E:], "ca_wo": ca["wo"].T,
        "w1": raw["w1"].T,
    }
    v_pieces = {
        "sa_bqkv": sa_bqkv, "sa_bk": sa["bias_k"], "sa_bv": sa["bias_v"], "sa_bo": sa["bo"],
        "ca_bq": ca_bqkv[:, :E], "ca_bkv": ca_bqkv[:, E:],
        "ca_bk": ca["bias_k"], "ca_bv": ca["bias_v"], "ca_bo": ca["bo"],
        "n1g": raw["norm1_g"], "n1b": raw["norm1_b"],
        "n2g": raw["norm2_g"], "n2b": raw["norm2_b"],
        "n3g": raw["norm3_g"], "n3b": raw["norm3_b"],
        "fb1": raw["fb1"], "fb2": raw["fb2"],
    }
    w_slab = jnp.concatenate([w_pieces[n] for n, _ in _W_LAYOUT], axis=1)
    vec = jnp.concatenate([v_pieces[n] for n, _ in _V_LAYOUT], axis=1)
    assert w_slab.shape == (E, _W_TOT) and vec.shape == (1, _V_TOT)
    return dict(w_slab=w_slab, w2_t=raw["w2"].T, vec=vec)


# ------------------------------------------------------------------- pure-JAX reference

def _ref_ln(x, g, b):
    mu = x.mean(-1, keepdims=True)
    var = ((x - mu) ** 2).mean(-1, keepdims=True)
    return (x - mu) / jnp.sqrt(var + LN_EPS) * g + b


def _ref_mha(xq, xkv, a, nhead=NHEAD):
    B, Lq, E = xq.shape
    Lk = xkv.shape[1]
    hd = E // nhead
    scaling = 1.0 / hd
    w, b = a["in_proj_w"], a["in_proj_b"]
    q = (xq @ w[:E].T + b[:E]) * scaling               # scaling applied post-bias
    k = xkv @ w[E:2 * E].T + b[E:2 * E]
    v = xkv @ w[2 * E:].T + b[2 * E:]
    k = jnp.concatenate([k, jnp.broadcast_to(a["bias_k"], (B, 1, E))], axis=1)
    v = jnp.concatenate([v, jnp.broadcast_to(a["bias_v"], (B, 1, E))], axis=1)
    qh = q.reshape(B, Lq, nhead, hd).transpose(0, 2, 1, 3)
    kh = k.reshape(B, Lk + 1, nhead, hd).transpose(0, 2, 1, 3)
    vh = v.reshape(B, Lk + 1, nhead, hd).transpose(0, 2, 1, 3)
    s = jnp.einsum("bhqd,bhkd->bhqk", qh, kh)
    p = jax.nn.softmax(s, axis=-1)
    ctx = jnp.einsum("bhqk,bhkd->bhqd", p, vh).transpose(0, 2, 1, 3).reshape(B, Lq, E)
    return ctx @ a["wo"].T + a["bo"]


def _ref_layer(tgt, memory, raw):
    x = _ref_ln(tgt + _ref_mha(tgt, tgt, raw["self_attn"]),
                raw["norm1_g"], raw["norm1_b"])
    x = _ref_ln(x + _ref_mha(x, memory, raw["cross_attn"]),
                raw["norm2_g"], raw["norm2_b"])
    h = jnp.maximum(x @ raw["w1"].T + raw["fb1"], 0.0)
    t2 = h @ raw["w2"].T + raw["fb2"]
    return _ref_ln(x + t2, raw["norm3_g"], raw["norm3_b"])


# ----------------------------------------------------------------------------------- main

if __name__ == "__main__":
    key = jax.random.PRNGKey(0)
    k_p, k_p2, k_tgt, k_mem = jax.random.split(key, 4)

    B, L_TGT, L_MEM = 2, 8, 16
    tgt = jax.random.normal(k_tgt, (B, L_TGT, D_MODEL), jnp.float32)
    memory = jax.random.normal(k_mem, (B, L_MEM, D_MODEL), jnp.float32)

    fwd = jax.jit(decoder_layer_pallas)

    # 1) faithful MupMultiheadAttention init; 2) trained-like arbitrary parameters
    for raw_params in (init_raw_params(k_p), randomize_raw_params(k_p2)):
        kernel_params = pack_kernel_params(raw_params)
        out = jax.block_until_ready(fwd(tgt, memory, kernel_params))
        ref = _ref_layer(tgt, memory, raw_params)
        np.testing.assert_allclose(np.asarray(out), np.asarray(ref), atol=1e-4, rtol=1e-4)

    print("KERNEL_OK")
</pallas_src>

<mosaic_0001>
module attributes {stable_mosaic.version = 11 : i64} {
  func.func @_fused_layer_kernel(%arg0: i32, %arg1: memref<16x32xf32, #tpu.memory_space<vmem>>, %arg2: memref<32x32xf32, #tpu.memory_space<vmem>>, %arg3: memref<32x320xf32, #tpu.memory_space<vmem>>, %arg4: memref<64x32xf32, #tpu.memory_space<vmem>>, %arg5: memref<1x672xf32, #tpu.memory_space<vmem>>, %arg6: memref<16x32xf32, #tpu.memory_space<vmem>>, %arg7: memref<2x24x32xf32, #tpu.memory_space<vmem>>, %arg8: memref<2x24x32xf32, #tpu.memory_space<vmem>>, %arg9: memref<16x32xf32, #tpu.memory_space<vmem>>) attributes {dimension_semantics = [#tpu.dimension_semantics<arbitrary>], iteration_bounds = array<i64: 1>, scalar_prefetch = 0 : i64, scratch_operands = 3 : i64, tpu.core_type = #tpu.core_type<tc>, window_params = [{pipeline_mode = #tpu.pipeline_mode<synchronous>, transform_indices = @transform_0, window_bounds = array<i64: 16, 32>}, {pipeline_mode = #tpu.pipeline_mode<synchronous>, transform_indices = @transform_1, window_bounds = array<i64: 32, 32>}, {pipeline_mode = #tpu.pipeline_mode<synchronous>, transform_indices = @transform_2, window_bounds = array<i64: 32, 320>}, {pipeline_mode = #tpu.pipeline_mode<synchronous>, transform_indices = @transform_3, window_bounds = array<i64: 64, 32>}, {pipeline_mode = #tpu.pipeline_mode<synchronous>, transform_indices = @transform_4, window_bounds = array<i64: 1, 672>}, {pipeline_mode = #tpu.pipeline_mode<synchronous>, transform_indices = @transform_5, window_bounds = array<i64: 16, 32>}]} {
    %c0 = arith.constant 0 : index
    %c0_0 = arith.constant 0 : index
    %0 = vector.load %arg1[%c0, %c0_0] : memref<16x32xf32, #tpu.memory_space<vmem>>, vector<16x32xf32>
    %c0_1 = arith.constant 0 : index
    %c0_2 = arith.constant 0 : index
    %1 = vector.load %arg2[%c0_1, %c0_2] : memref<32x32xf32, #tpu.memory_space<vmem>>, vector<32x32xf32>
    %cst = arith.constant 0.000000e+00 : f32
    %2 = vector.broadcast %cst : f32 to vector<2x24x32xf32>
    %c0_3 = arith.constant 0 : index
    %c0_4 = arith.constant 0 : index
    %c0_5 = arith.constant 0 : index
    %3 = vector.load %arg7[%c0_3, %c0_4, %c0_5] : memref<2x24x32xf32, #tpu.memory_space<vmem>>, vector<2x24x32xf32>
    tpu.vector_store %arg7[%c0_3, %c0_4, %c0_5], %2 {strides = array<i32>} : memref<2x24x32xf32, #tpu.memory_space<vmem>>, vector<2x24x32xf32>,
    %cst_6 = arith.constant 0.000000e+00 : f32
    %4 = vector.broadcast %cst_6 : f32 to vector<2x24x32xf32>
    %c0_7 = arith.constant 0 : index
    %c0_8 = arith.constant 0 : index
    %c0_9 = arith.constant 0 : index
    %5 = vector.load %arg8[%c0_7, %c0_8, %c0_9] : memref<2x24x32xf32, #tpu.memory_space<vmem>>, vector<2x24x32xf32>
    tpu.vector_store %arg8[%c0_7, %c0_8, %c0_9], %4 {strides = array<i32>} : memref<2x24x32xf32, #tpu.memory_space<vmem>>, vector<2x24x32xf32>,
    %6 = tpu.iota {dimensions = array<i32: 1>} : vector<1x24xi32>
    %c0_10 = arith.constant 0 : index
    %c0_11 = arith.constant 0 : index
    %7 = vector.load %arg3[%c0_10, %c0_11] : memref<32x320xf32, #tpu.memory_space<vmem>>, vector<32x96xf32>
    %cst_12 = arith.constant dense<0.000000e+00> : vector<16x96xf32>
    %8 = tpu.matmul %0, %7, %cst_12 {dimension_numbers = #tpu.dot_dimension_numbers<[1], [0], [0], [1], [0, 0, 1, 1], [], []>} : vector<16x32xf32>, vector<32x96xf32>, vector<16x96xf32> -> vector<16x96xf32>
    %c0_13 = arith.constant 0 : index
    %c0_14 = arith.constant 0 : index
    %9 = vector.load %arg5[%c0_13, %c0_14] : memref<1x672xf32, #tpu.memory_space<vmem>>, vector<1x96xf32>
    %10 = vector.broadcast %9 : vector<1x96xf32> to vector<16x96xf32>
    %11 = arith.addf %8, %10 : vector<16x96xf32>
    %12 = vector.extract_strided_slice %11 {offsets = [0, 32], sizes = [8, 32], strides = [1, 1]} : vector<16x96xf32> to vector<8x32xf32>
    %c0_15 = arith.constant 0 : index
    %c0_16 = arith.constant 0 : index
    %c0_17 = arith.constant 0 : index
    %13 = vector.load %arg7[%c0_15, %c0_16, %c0_17] : memref<2x24x32xf32, #tpu.memory_space<vmem>>, vector<1x8x32xf32>
    %14 = vector.shape_cast %13 : vector<1x8x32xf32> to vector<8x32xf32>
    %15 = vector.shape_cast %12 : vector<8x32xf32> to vector<1x8x32xf32>
    tpu.vector_store %arg7[%c0_15, %c0_16, %c0_17], %15 {strides = array<i32>} : memref<2x24x32xf32, #tpu.memory_space<vmem>>, vector<1x8x32xf32>,
    %16 = vector.extract_strided_slice %11 {offsets = [0, 64], sizes = [8, 32], strides = [1, 1]} : vector<16x96xf32> to vector<8x32xf32>
    %c0_18 = arith.constant 0 : index
    %c0_19 = arith.constant 0 : index
    %c0_20 = arith.constant 0 : index
    %17 = vector.load %arg8[%c0_18, %c0_19, %c0_20] : memref<2x24x32xf32, #tpu.memory_space<vmem>>, vector<1x8x32xf32>
    %18 = vector.shape_cast %17 : vector<1x8x32xf32> to vector<8x32xf32>
    %19 = vector.shape_cast %16 : vector<8x32xf32> to vector<1x8x32xf32>
    tpu.vector_store %arg8[%c0_18, %c0_19, %c0_20], %19 {strides = array<i32>} : memref<2x24x32xf32, #tpu.memory_space<vmem>>, vector<1x8x32xf32>,
    %c0_21 = arith.constant 0 : index
    %c96 = arith.constant 96 : index
    %20 = vector.load %arg5[%c0_21, %c96] : memref<1x672xf32, #tpu.memory_space<vmem>>, vector<1x32xf32>
    %c0_22 = arith.constant 0 : index
    %c8 = arith.constant 8 : index
    %c0_23 = arith.constant 0 : index
    %21 = vector.load %arg7[%c0_22, %c8, %c0_23] : memref<2x24x32xf32, #tpu.memory_space<vmem>>, vector<1x1x32xf32>
    %22 = vector.shape_cast %21 : vector<1x1x32xf32> to vector<1x32xf32>
    %23 = vector.shape_cast %20 : vector<1x32xf32> to vector<1x1x32xf32>
    tpu.vector_store %arg7[%c0_22, %c8, %c0_23], %23 {strides = array<i32>} : memref<2x24x32xf32, #tpu.memory_space<vmem>>, vector<1x1x32xf32>,
    %c0_24 = arith.constant 0 : index
    %c128 = arith.constant 128 : index
    %24 = vector.load %arg5[%c0_24, %c128] : memref<1x672xf32, #tpu.memory_space<vmem>>, vector<1x32xf32>
    %c0_25 = arith.constant 0 : index
    %c8_26 = arith.constant 8 : index
    %c0_27 = arith.constant 0 : index
    %25 = vector.load %arg8[%c0_25, %c8_26, %c0_27] : memref<2x24x32xf32, #tpu.memory_space<vmem>>, vector<1x1x32xf32>
    %26 = vector.shape_cast %25 : vector<1x1x32xf32> to vector<1x32xf32>
    %27 = vector.shape_cast %24 : vector<1x32xf32> to vector<1x1x32xf32>
    tpu.vector_store %arg8[%c0_25, %c8_26, %c0_27], %27 {strides = array<i32>} : memref<2x24x32xf32, #tpu.memory_space<vmem>>, vector<1x1x32xf32>,
    %28 = vector.extract_strided_slice %11 {offsets = [8, 32], sizes = [8, 32], strides = [1, 1]} : vector<16x96xf32> to vector<8x32xf32>
    %c1 = arith.constant 1 : index
    %c0_28 = arith.constant 0 : index
    %c0_29 = arith.constant 0 : index
    %29 = vector.load %arg7[%c1, %c0_28, %c0_29] : memref<2x24x32xf32, #tpu.memory_space<vmem>>, vector<1x8x32xf32>
    %30 = vector.shape_cast %29 : vector<1x8x32xf32> to vector<8x32xf32>
    %31 = vector.shape_cast %28 : vector<8x32xf32> to vector<1x8x32xf32>
    tpu.vector_store %arg7[%c1, %c0_28, %c0_29], %31 {strides = array<i32>} : memref<2x24x32xf32, #tpu.memory_space<vmem>>, vector<1x8x32xf32>,
    %32 = vector.extract_strided_slice %11 {offsets = [8, 64], sizes = [8, 32], strides = [1, 1]} : vector<16x96xf32> to vector<8x32xf32>
    %c1_30 = arith.constant 1 : index
    %c0_31 = arith.constant 0 : index
    %c0_32 = arith.constant 0 : index
    %33 = vector.load %arg8[%c1_30, %c0_31, %c0_32] : memref<2x24x32xf32, #tpu.memory_space<vmem>>, vector<1x8x32xf32>
    %34 = vector.shape_cast %33 : vector<1x8x32xf32> to vector<8x32xf32>
    %35 = vector.shape_cast %32 : vector<8x32xf32> to vector<1x8x32xf32>
    tpu.vector_store %arg8[%c1_30, %c0_31, %c0_32], %35 {strides = array<i32>} : memref<2x24x32xf32, #tpu.memory_space<vmem>>, vector<1x8x32xf32>,
    %c0_33 = arith.constant 0 : index
    %c96_34 = arith.constant 96 : index
    %36 = vector.load %arg5[%c0_33, %c96_34] : memref<1x672xf32, #tpu.memory_space<vmem>>, vector<1x32xf32>
    %c1_35 = arith.constant 1 : index
    %c8_36 = arith.constant 8 : index
    %c0_37 = arith.constant 0 : index
    %37 = vector.load %arg7[%c1_35, %c8_36, %c0_37] : memref<2x24x32xf32, #tpu.memory_space<vmem>>, vector<1x1x32xf32>
    %38 = vector.shape_cast %37 : vector<1x1x32xf32> to vector<1x32xf32>
    %39 = vector.shape_cast %36 : vector<1x32xf32> to vector<1x1x32xf32>
    tpu.vector_store %arg7[%c1_35, %c8_36, %c0_37], %39 {strides = array<i32>} : memref<2x24x32xf32, #tpu.memory_space<vmem>>, vector<1x1x32xf32>,
    %c0_38 = arith.constant 0 : index
    %c128_39 = arith.constant 128 : index
    %40 = vector.load %arg5[%c0_38, %c128_39] : memref<1x672xf32, #tpu.memory_space<vmem>>, vector<1x32xf32>
    %c1_40 = arith.constant 1 : index
    %c8_41 = arith.constant 8 : index
    %c0_42 = arith.constant 0 : index
    %41 = vector.load %arg8[%c1_40, %c8_41, %c0_42] : memref<2x24x32xf32, #tpu.memory_space<vmem>>, vector<1x1x32xf32>
    %42 = vector.shape_cast %41 : vector<1x1x32xf32> to vector<1x32xf32>
    %43 = vector.shape_cast %40 : vector<1x32xf32> to vector<1x1x32xf32>
    tpu.vector_store %arg8[%c1_40, %c8_41, %c0_42], %43 {strides = array<i32>} : memref<2x24x32xf32, #tpu.memory_space<vmem>>, vector<1x1x32xf32>,
    %44 = vector.extract_strided_slice %11 {offsets = [0, 0], sizes = [16, 32], strides = [1, 1]} : vector<16x96xf32> to vector<16x32xf32>
    %cst_43 = arith.constant 0.000000e+00 : f32
    %45 = vector.broadcast %cst_43 : f32 to vector<16x32xf32>
    %c0_44 = arith.constant 0 : index
    %c0_45 = arith.constant 0 : index
    %46 = vector.load %arg9[%c0_44, %c0_45] : memref<16x32xf32, #tpu.memory_space<vmem>>, vector<16x32xf32>
    tpu.vector_store %arg9[%c0_44, %c0_45], %45 {strides = array<i32>} : memref<16x32xf32, #tpu.memory_space<vmem>>, vector<16x32xf32>,
    %c8_i32 = arith.constant 8 : i32
    %47 = vector.broadcast %c8_i32 : i32 to vector<1x24xi32>
    %48 = arith.cmpi sle, %6, %47 : vector<1x24xi32>
    %49 = vector.extract_strided_slice %44 {offsets = [0, 0], sizes = [8, 32], strides = [1, 1]} : vector<16x32xf32> to vector<8x32xf32>
    %c0_46 = arith.constant 0 : index
    %c0_47 = arith.constant 0 : index
    %c0_48 = arith.constant 0 : index
    %50 = vector.load %arg7[%c0_46, %c0_47, %c0_48] : memref<2x24x32xf32, #tpu.memory_space<vmem>>, vector<1x24x32xf32>
    %51 = vector.shape_cast %50 : vector<1x24x32xf32> to vector<24x32xf32>
    %c0_49 = arith.constant 0 : index
    %c0_50 = arith.constant 0 : index
    %c0_51 = arith.constant 0 : index
    %52 = vector.load %arg8[%c0_49, %c0_50, %c0_51] : memref<2x24x32xf32, #tpu.memory_space<vmem>>, vector<1x24x32xf32>
    %53 = vector.shape_cast %52 : vector<1x24x32xf32> to vector<24x32xf32>
    %54 = vector.extract_strided_slice %49 {offsets = [0, 0], sizes = [8, 8], strides = [1, 1]} : vector<8x32xf32> to vector<8x8xf32>
    %55 = vector.extract_strided_slice %51 {offsets = [0, 0], sizes = [24, 8], strides = [1, 1]} : vector<24x32xf32> to vector<24x8xf32>
    %cst_52 = arith.constant dense<0.000000e+00> : vector<8x24xf32>
    %56 = tpu.matmul %54, %55, %cst_52 {dimension_numbers = #tpu.dot_dimension_numbers<[1], [1], [0], [0], [0, 0, 1, 0], [], []>} : vector<8x8xf32>, vector<24x8xf32>, vector<8x24xf32> -> vector<8x24xf32>
    %cst_53 = arith.constant -1.000000e+30 : f32
    %57 = vector.shape_cast %48 : vector<1x24xi1> to vector<1x24xi1>
    %58 = vector.broadcast %57 : vector<1x24xi1> to vector<8x24xi1>
    %59 = vector.broadcast %cst_53 : f32 to vector<8x24xf32>
    %60 = arith.select %58, %56, %59 : vector<8x24xi1>, vector<8x24xf32>
    %cst_54 = arith.constant dense<0xFF800000> : vector<8xf32>
    %61 = vector.multi_reduction <maximumf>, %60, %cst_54 [1] : vector<8x24xf32> to vector<8xf32>
    %62 = vector.shape_cast %61 : vector<8xf32> to vector<8x1xf32>
    %63 = vector.broadcast %62 : vector<8x1xf32> to vector<8x24xf32>
    %64 = arith.subf %60, %63 : vector<8x24xf32>
    %65 = math.exp %64 : vector<8x24xf32>
    %cst_55 = arith.constant dense<0.000000e+00> : vector<8xf32>
    %66 = vector.multi_reduction <add>, %65, %cst_55 [1] : vector<8x24xf32> to vector<8xf32>
    %67 = vector.shape_cast %66 : vector<8xf32> to vector<8x1xf32>
    %68 = vector.extract_strided_slice %53 {offsets = [0, 0], sizes = [24, 8], strides = [1, 1]} : vector<24x32xf32> to vector<24x8xf32>
    %cst_56 = arith.constant dense<0.000000e+00> : vector<8x8xf32>
    %69 = tpu.matmul %65, %68, %cst_56 {dimension_numbers = #tpu.dot_dimension_numbers<[1], [0], [0], [1], [0, 0, 1, 1], [], []>} : vector<8x24xf32>, vector<24x8xf32>, vector<8x8xf32> -> vector<8x8xf32>
    %cst_57 = arith.constant 1.000000e+00 : f32
    %70 = vector.broadcast %cst_57 : f32 to vector<8x1xf32>
    %71 = arith.divf %70, %67 : vector<8x1xf32>
    %72 = vector.broadcast %71 : vector<8x1xf32> to vector<8x8xf32>
    %73 = arith.mulf %69, %72 : vector<8x8xf32>
    %c0_58 = arith.constant 0 : index
    %c0_59 = arith.constant 0 : index
    %74 = vector.load %arg9[%c0_58, %c0_59] : memref<16x32xf32, #tpu.memory_space<vmem>>, vector<8x32xf32>
    %c0_60 = arith.constant 0 : index
    %c96_61 = arith.constant 96 : index
    %75 = vector.load %arg3[%c0_60, %c96_61] : memref<32x320xf32, #tpu.memory_space<vmem>>, vector<8x32xf32>
    %cst_62 = arith.constant dense<0.000000e+00> : vector<8x32xf32>
    %76 = tpu.matmul %73, %75, %cst_62 {dimension_numbers = #tpu.dot_dimension_numbers<[1], [0], [0], [1], [0, 0, 1, 1], [], []>} : vector<8x8xf32>, vector<8x32xf32>, vector<8x32xf32> -> vector<8x32xf32>
    %77 = arith.addf %74, %76 : vector<8x32xf32>
    %c0_63 = arith.constant 0 : index
    %c0_64 = arith.constant 0 : index
    %78 = vector.load %arg9[%c0_63, %c0_64] : memref<16x32xf32, #tpu.memory_space<vmem>>, vector<8x32xf32>
    tpu.vector_store %arg9[%c0_63, %c0_64], %77 {strides = array<i32>} : memref<16x32xf32, #tpu.memory_space<vmem>>, vector<8x32xf32>,
    %79 = vector.extract_strided_slice %49 {offsets = [0, 8], sizes = [8, 8], strides = [1, 1]} : vector<8x32xf32> to vector<8x8xf32>
    %80 = vector.extract_strided_slice %51 {offsets = [0, 8], sizes = [24, 8], strides = [1, 1]} : vector<24x32xf32> to vector<24x8xf32>
    %cst_65 = arith.constant dense<0.000000e+00> : vector<8x24xf32>
    %81 = tpu.matmul %79, %80, %cst_65 {dimension_numbers = #tpu.dot_dimension_numbers<[1], [1], [0], [0], [0, 0, 1, 0], [], []>} : vector<8x8xf32>, vector<24x8xf32>, vector<8x24xf32> -> vector<8x24xf32>
    %cst_66 = arith.constant -1.000000e+30 : f32
    %82 = vector.shape_cast %48 : vector<1x24xi1> to vector<1x24xi1>
    %83 = vector.broadcast %82 : vector<1x24xi1> to vector<8x24xi1>
    %84 = vector.broadcast %cst_66 : f32 to vector<8x24xf32>
    %85 = arith.select %83, %81, %84 : vector<8x24xi1>, vector<8x24xf32>
    %cst_67 = arith.constant dense<0xFF800000> : vector<8xf32>
    %86 = vector.multi_reduction <maximumf>, %85, %cst_67 [1] : vector<8x24xf32> to vector<8xf32>
    %87 = vector.shape_cast %86 : vector<8xf32> to vector<8x1xf32>
    %88 = vector.broadcast %87 : vector<8x1xf32> to vector<8x24xf32>
    %89 = arith.subf %85, %88 : vector<8x24xf32>
    %90 = math.exp %89 : vector<8x24xf32>
    %cst_68 = arith.constant dense<0.000000e+00> : vector<8xf32>
    %91 = vector.multi_reduction <add>, %90, %cst_68 [1] : vector<8x24xf32> to vector<8xf32>
    %92 = vector.shape_cast %91 : vector<8xf32> to vector<8x1xf32>
    %93 = vector.extract_strided_slice %53 {offsets = [0, 8], sizes = [24, 8], strides = [1, 1]} : vector<24x32xf32> to vector<24x8xf32>
    %cst_69 = arith.constant dense<0.000000e+00> : vector<8x8xf32>
    %94 = tpu.matmul %90, %93, %cst_69 {dimension_numbers = #tpu.dot_dimension_numbers<[1], [0], [0], [1], [0, 0, 1, 1], [], []>} : vector<8x24xf32>, vector<24x8xf32>, vector<8x8xf32> -> vector<8x8xf32>
    %cst_70 = arith.constant 1.000000e+00 : f32
    %95 = vector.broadcast %cst_70 : f32 to vector<8x1xf32>
    %96 = arith.divf %95, %92 : vector<8x1xf32>
    %97 = vector.broadcast %96 : vector<8x1xf32> to vector<8x8xf32>
    %98 = arith.mulf %94, %97 : vector<8x8xf32>
    %c0_71 = arith.constant 0 : index
    %c0_72 = arith.constant 0 : index
    %99 = vector.load %arg9[%c0_71, %c0_72] : memref<16x32xf32, #tpu.memory_space<vmem>>, vector<8x32xf32>
    %c8_73 = arith.constant 8 : index
    %c96_74 = arith.constant 96 : index
    %100 = vector.load %arg3[%c8_73, %c96_74] : memref<32x320xf32, #tpu.memory_space<vmem>>, vector<8x32xf32>
    %cst_75 = arith.constant dense<0.000000e+00> : vector<8x32xf32>
    %101 = tpu.matmul %98, %100, %cst_75 {dimension_numbers = #tpu.dot_dimension_numbers<[1], [0], [0], [1], [0, 0, 1, 1], [], []>} : vector<8x8xf32>, vector<8x32xf32>, vector<8x32xf32> -> vector<8x32xf32>
    %102 = arith.addf %99, %101 : vector<8x32xf32>
    %c0_76 = arith.constant 0 : index
    %c0_77 = arith.constant 0 : index
    %103 = vector.load %arg9[%c0_76, %c0_77] : memref<16x32xf32, #tpu.memory_space<vmem>>, vector<8x32xf32>
    tpu.vector_store %arg9[%c0_76, %c0_77], %102 {strides = array<i32>} : memref<16x32xf32, #tpu.memory_space<vmem>>, vector<8x32xf32>,
    %104 = vector.extract_strided_slice %49 {offsets = [0, 16], sizes = [8, 8], strides = [1, 1]} : vector<8x32xf32> to vector<8x8xf32>
    %105 = vector.extract_strided_slice %51 {offsets = [0, 16], sizes = [24, 8], strides = [1, 1]} : vector<24x32xf32> to vector<24x8xf32>
    %cst_78 = arith.constant dense<0.000000e+00> : vector<8x24xf32>
    %106 = tpu.matmul %104, %105, %cst_78 {dimension_numbers = #tpu.dot_dimension_numbers<[1], [1], [0], [0], [0, 0, 1, 0], [], []>} : vector<8x8xf32>, vector<24x8xf32>, vector<8x24xf32> -> vector<8x24xf32>
    %cst_79 = arith.constant -1.000000e+30 : f32
    %107 = vector.shape_cast %48 : vector<1x24xi1> to vector<1x24xi1>
    %108 = vector.broadcast %107 : vector<1x24xi1> to vector<8x24xi1>
    %109 = vector.broadcast %cst_79 : f32 to vector<8x24xf32>
    %110 = arith.select %108, %106, %109 : vector<8x24xi1>, vector<8x24xf32>
    %cst_80 = arith.constant dense<0xFF800000> : vector<8xf32>
    %111 = vector.multi_reduction <maximumf>, %110, %cst_80 [1] : vector<8x24xf32> to vector<8xf32>
    %112 = vector.shape_cast %111 : vector<8xf32> to vector<8x1xf32>
    %113 = vector.broadcast %112 : vector<8x1xf32> to vector<8x24xf32>
    %114 = arith.subf %110, %113 : vector<8x24xf32>
    %115 = math.exp %114 : vector<8x24xf32>
    %cst_81 = arith.constant dense<0.000000e+00> : vector<8xf32>
    %116 = vector.multi_reduction <add>, %115, %cst_81 [1] : vector<8x24xf32> to vector<8xf32>
    %117 = vector.shape_cast %116 : vector<8xf32> to vector<8x1xf32>
    %118 = vector.extract_strided_slice %53 {offsets = [0, 16], sizes = [24, 8], strides = [1, 1]} : vector<24x32xf32> to vector<24x8xf32>
    %cst_82 = arith.constant dense<0.000000e+00> : vector<8x8xf32>
    %119 = tpu.matmul %115, %118, %cst_82 {dimension_numbers = #tpu.dot_dimension_numbers<[1], [0], [0], [1], [0, 0, 1, 1], [], []>} : vector<8x24xf32>, vector<24x8xf32>, vector<8x8xf32> -> vector<8x8xf32>
    %cst_83 = arith.constant 1.000000e+00 : f32
    %120 = vector.broadcast %cst_83 : f32 to vector<8x1xf32>
    %121 = arith.divf %120, %117 : vector<8x1xf32>
    %122 = vector.broadcast %121 : vector<8x1xf32> to vector<8x8xf32>
    %123 = arith.mulf %119, %122 : vector<8x8xf32>
    %c0_84 = arith.constant 0 : index
    %c0_85 = arith.constant 0 : index
    %124 = vector.load %arg9[%c0_84, %c0_85] : memref<16x32xf32, #tpu.memory_space<vmem>>, vector<8x32xf32>
    %c16 = arith.constant 16 : index
    %c96_86 = arith.constant 96 : index
    %125 = vector.load %arg3[%c16, %c96_86] : memref<32x320xf32, #tpu.memory_space<vmem>>, vector<8x32xf32>
    %cst_87 = arith.constant dense<0.000000e+00> : vector<8x32xf32>
    %126 = tpu.matmul %123, %125, %cst_87 {dimension_numbers = #tpu.dot_dimension_numbers<[1], [0], [0], [1], [0, 0, 1, 1], [], []>} : vector<8x8xf32>, vector<8x32xf32>, vector<8x32xf32> -> vector<8x32xf32>
    %127 = arith.addf %124, %126 : vector<8x32xf32>
    %c0_88 = arith.constant 0 : index
    %c0_89 = arith.constant 0 : index
    %128 = vector.load %arg9[%c0_88, %c0_89] : memref<16x32xf32, #tpu.memory_space<vmem>>, vector<8x32xf32>
    tpu.vector_store %arg9[%c0_88, %c0_89], %127 {strides = array<i32>} : memref<16x32xf32, #tpu.memory_space<vmem>>, vector<8x32xf32>,
    %129 = vector.extract_strided_slice %49 {offsets = [0, 24], sizes = [8, 8], strides = [1, 1]} : vector<8x32xf32> to vector<8x8xf32>
    %130 = vector.extract_strided_slice %51 {offsets = [0, 24], sizes = [24, 8], strides = [1, 1]} : vector<24x32xf32> to vector<24x8xf32>
    %cst_90 = arith.constant dense<0.000000e+00> : vector<8x24xf32>
    %131 = tpu.matmul %129, %130, %cst_90 {dimension_numbers = #tpu.dot_dimension_numbers<[1], [1], [0], [0], [0, 0, 1, 0], [], []>} : vector<8x8xf32>, vector<24x8xf32>, vector<8x24xf32> -> vector<8x24xf32>
    %cst_91 = arith.constant -1.000000e+30 : f32
    %132 = vector.shape_cast %48 : vector<1x24xi1> to vector<1x24xi1>
    %133 = vector.broadcast %132 : vector<1x24xi1> to vector<8x24xi1>
    %134 = vector.broadcast %cst_91 : f32 to vector<8x24xf32>
    %135 = arith.select %133, %131, %134 : vector<8x24xi1>, vector<8x24xf32>
    %cst_92 = arith.constant dense<0xFF800000> : vector<8xf32>
    %136 = vector.multi_reduction <maximumf>, %135, %cst_92 [1] : vector<8x24xf32> to vector<8xf32>
    %137 = vector.shape_cast %136 : vector<8xf32> to vector<8x1xf32>
    %138 = vector.broadcast %137 : vector<8x1xf32> to vector<8x24xf32>
    %139 = arith.subf %135, %138 : vector<8x24xf32>
    %140 = math.exp %139 : vector<8x24xf32>
    %cst_93 = arith.constant dense<0.000000e+00> : vector<8xf32>
    %141 = vector.multi_reduction <add>, %140, %cst_93 [1] : vector<8x24xf32> to vector<8xf32>
    %142 = vector.shape_cast %141 : vector<8xf32> to vector<8x1xf32>
    %143 = vector.extract_strided_slice %53 {offsets = [0, 24], sizes = [24, 8], strides = [1, 1]} : vector<24x32xf32> to vector<24x8xf32>
    %cst_94 = arith.constant dense<0.000000e+00> : vector<8x8xf32>
    %144 = tpu.matmul %140, %143, %cst_94 {dimension_numbers = #tpu.dot_dimension_numbers<[1], [0], [0], [1], [0, 0, 1, 1], [], []>} : vector<8x24xf32>, vector<24x8xf32>, vector<8x8xf32> -> vector<8x8xf32>
    %cst_95 = arith.constant 1.000000e+00 : f32
    %145 = vector.broadcast %cst_95 : f32 to vector<8x1xf32>
    %146 = arith.divf %145, %142 : vector<8x1xf32>
    %147 = vector.broadcast %146 : vector<8x1xf32> to vector<8x8xf32>
    %148 = arith.mulf %144, %147 : vector<8x8xf32>
    %c0_96 = arith.constant 0 : index
    %c0_97 = arith.constant 0 : index
    %149 = vector.load %arg9[%c0_96, %c0_97] : memref<16x32xf32, #tpu.memory_space<vmem>>, vector<8x32xf32>
    %c24 = arith.constant 24 : index
    %c96_98 = arith.constant 96 : index
    %150 = vector.load %arg3[%c24, %c96_98] : memref<32x320xf32, #tpu.memory_space<vmem>>, vector<8x32xf32>
    %cst_99 = arith.constant dense<0.000000e+00> : vector<8x32xf32>
    %151 = tpu.matmul %148, %150, %cst_99 {dimension_numbers = #tpu.dot_dimension_numbers<[1], [0], [0], [1], [0, 0, 1, 1], [], []>} : vector<8x8xf32>, vector<8x32xf32>, vector<8x32xf32> -> vector<8x32xf32>
    %152 = arith.addf %149, %151 : vector<8x32xf32>
    %c0_100 = arith.constant 0 : index
    %c0_101 = arith.constant 0 : index
    %153 = vector.load %arg9[%c0_100, %c0_101] : memref<16x32xf32, #tpu.memory_space<vmem>>, vector<8x32xf32>
    tpu.vector_store %arg9[%c0_100, %c0_101], %152 {strides = array<i32>} : memref<16x32xf32, #tpu.memory_space<vmem>>, vector<8x32xf32>,
    %154 = vector.extract_strided_slice %44 {offsets = [8, 0], sizes = [8, 32], strides = [1, 1]} : vector<16x32xf32> to vector<8x32xf32>
    %c1_102 = arith.constant 1 : index
    %c0_103 = arith.constant 0 : index
    %c0_104 = arith.constant 0 : index
    %155 = vector.load %arg7[%c1_102, %c0_103, %c0_104] : memref<2x24x32xf32, #tpu.memory_space<vmem>>, vector<1x24x32xf32>
    %156 = vector.shape_cast %155 : vector<1x24x32xf32> to vector<24x32xf32>
    %c1_105 = arith.constant 1 : index
    %c0_106 = arith.constant 0 : index
    %c0_107 = arith.constant 0 : index
    %157 = vector.load %arg8[%c1_105, %c0_106, %c0_107] : memref<2x24x32xf32, #tpu.memory_space<vmem>>, vector<1x24x32xf32>
    %158 = vector.shape_cast %157 : vector<1x24x32xf32> to vector<24x32xf32>
    %159 = vector.extract_strided_slice %154 {offsets = [0, 0], sizes = [8, 8], strides = [1, 1]} : vector<8x32xf32> to vector<8x8xf32>
    %160 = vector.extract_strided_slice %156 {offsets = [0, 0], sizes = [24, 8], strides = [1, 1]} : vector<24x32xf32> to vector<24x8xf32>
    %cst_108 = arith.constant dense<0.000000e+00> : vector<8x24xf32>
    %161 = tpu.matmul %159, %160, %cst_108 {dimension_numbers = #tpu.dot_dimension_numbers<[1], [1], [0], [0], [0, 0, 1, 0], [], []>} : vector<8x8xf32>, vector<24x8xf32>, vector<8x24xf32> -> vector<8x24xf32>
    %cst_109 = arith.constant -1.000000e+30 : f32
    %162 = vector.shape_cast %48 : vector<1x24xi1> to vector<1x24xi1>
    %163 = vector.broadcast %162 : vector<1x24xi1> to vector<8x24xi1>
    %164 = vector.broadcast %cst_109 : f32 to vector<8x24xf32>
    %165 = arith.select %163, %161, %164 : vector<8x24xi1>, vector<8x24xf32>
    %cst_110 = arith.constant dense<0xFF800000> : vector<8xf32>
    %166 = vector.multi_reduction <maximumf>, %165, %cst_110 [1] : vector<8x24xf32> to vector<8xf32>
    %167 = vector.shape_cast %166 : vector<8xf32> to vector<8x1xf32>
    %168 = vector.broadcast %167 : vector<8x1xf32> to vector<8x24xf32>
    %169 = arith.subf %165, %168 : vector<8x24xf32>
    %170 = math.exp %169 : vector<8x24xf32>
    %cst_111 = arith.constant dense<0.000000e+00> : vector<8xf32>
    %171 = vector.multi_reduction <add>, %170, %cst_111 [1] : vector<8x24xf32> to vector<8xf32>
    %172 = vector.shape_cast %171 : vector<8xf32> to vector<8x1xf32>
    %173 = vector.extract_strided_slice %158 {offsets = [0, 0], sizes = [24, 8], strides = [1, 1]} : vector<24x32xf32> to vector<24x8xf32>
    %cst_112 = arith.constant dense<0.000000e+00> : vector<8x8xf32>
    %174 = tpu.matmul %170, %173, %cst_112 {dimension_numbers = #tpu.dot_dimension_numbers<[1], [0], [0], [1], [0, 0, 1, 1], [], []>} : vector<8x24xf32>, vector<24x8xf32>, vector<8x8xf32> -> vector<8x8xf32>
    %cst_113 = arith.constant 1.000000e+00 : f32
    %175 = vector.broadcast %cst_113 : f32 to vector<8x1xf32>
    %176 = arith.divf %175, %172 : vector<8x1xf32>
    %177 = vector.broadcast %176 : vector<8x1xf32> to vector<8x8xf32>
    %178 = arith.mulf %174, %177 : vector<8x8xf32>
    %c8_114 = arith.constant 8 : index
    %c0_115 = arith.constant 0 : index
    %179 = vector.load %arg9[%c8_114, %c0_115] : memref<16x32xf32, #tpu.memory_space<vmem>>, vector<8x32xf32>
    %c0_116 = arith.constant 0 : index
    %c96_117 = arith.constant 96 : index
    %180 = vector.load %arg3[%c0_116, %c96_117] : memref<32x320xf32, #tpu.memory_space<vmem>>, vector<8x32xf32>
    %cst_118 = arith.constant dense<0.000000e+00> : vector<8x32xf32>
    %181 = tpu.matmul %178, %180, %cst_118 {dimension_numbers = #tpu.dot_dimension_numbers<[1], [0], [0], [1], [0, 0, 1, 1], [], []>} : vector<8x8xf32>, vector<8x32xf32>, vector<8x32xf32> -> vector<8x32xf32>
    %182 = arith.addf %179, %181 : vector<8x32xf32>
    %c8_119 = arith.constant 8 : index
    %c0_120 = arith.constant 0 : index
    %183 = vector.load %arg9[%c8_119, %c0_120] : memref<16x32xf32, #tpu.memory_space<vmem>>, vector<8x32xf32>
    tpu.vector_store %arg9[%c8_119, %c0_120], %182 {strides = array<i32>} : memref<16x32xf32, #tpu.memory_space<vmem>>, vector<8x32xf32>,
    %184 = vector.extract_strided_slice %154 {offsets = [0, 8], sizes = [8, 8], strides = [1, 1]} : vector<8x32xf32> to vector<8x8xf32>
    %185 = vector.extract_strided_slice %156 {offsets = [0, 8], sizes = [24, 8], strides = [1, 1]} : vector<24x32xf32> to vector<24x8xf32>
    %cst_121 = arith.constant dense<0.000000e+00> : vector<8x24xf32>
    %186 = tpu.matmul %184, %185, %cst_121 {dimension_numbers = #tpu.dot_dimension_numbers<[1], [1], [0], [0], [0, 0, 1, 0], [], []>} : vector<8x8xf32>, vector<24x8xf32>, vector<8x24xf32> -> vector<8x24xf32>
    %cst_122 = arith.constant -1.000000e+30 : f32
    %187 = vector.shape_cast %48 : vector<1x24xi1> to vector<1x24xi1>
    %188 = vector.broadcast %187 : vector<1x24xi1> to vector<8x24xi1>
    %189 = vector.broadcast %cst_122 : f32 to vector<8x24xf32>
    %190 = arith.select %188, %186, %189 : vector<8x24xi1>, vector<8x24xf32>
    %cst_123 = arith.constant dense<0xFF800000> : vector<8xf32>
    %191 = vector.multi_reduction <maximumf>, %190, %cst_123 [1] : vector<8x24xf32> to vector<8xf32>
    %192 = vector.shape_cast %191 : vector<8xf32> to vector<8x1xf32>
    %193 = vector.broadcast %192 : vector<8x1xf32> to vector<8x24xf32>
    %194 = arith.subf %190, %193 : vector<8x24xf32>
    %195 = math.exp %194 : vector<8x24xf32>
    %cst_124 = arith.constant dense<0.000000e+00> : vector<8xf32>
    %196 = vector.multi_reduction <add>, %195, %cst_124 [1] : vector<8x24xf32> to vector<8xf32>
    %197 = vector.shape_cast %196 : vector<8xf32> to vector<8x1xf32>
    %198 = vector.extract_strided_slice %158 {offsets = [0, 8], sizes = [24, 8], strides = [1, 1]} : vector<24x32xf32> to vector<24x8xf32>
    %cst_125 = arith.constant dense<0.000000e+00> : vector<8x8xf32>
    %199 = tpu.matmul %195, %198, %cst_125 {dimension_numbers = #tpu.dot_dimension_numbers<[1], [0], [0], [1], [0, 0, 1, 1], [], []>} : vector<8x24xf32>, vector<24x8xf32>, vector<8x8xf32> -> vector<8x8xf32>
    %cst_126 = arith.constant 1.000000e+00 : f32
    %200 = vector.broadcast %cst_126 : f32 to vector<8x1xf32>
    %201 = arith.divf %200, %197 : vector<8x1xf32>
    %202 = vector.broadcast %201 : vector<8x1xf32> to vector<8x8xf32>
    %203 = arith.mulf %199, %202 : vector<8x8xf32>
    %c8_127 = arith.constant 8 : index
    %c0_128 = arith.constant 0 : index
    %204 = vector.load %arg9[%c8_127, %c0_128] : memref<16x32xf32, #tpu.memory_space<vmem>>, vector<8x32xf32>
    %c8_129 = arith.constant 8 : index
    %c96_130 = arith.constant 96 : index
    %205 = vector.load %arg3[%c8_129, %c96_130] : memref<32x320xf32, #tpu.memory_space<vmem>>, vector<8x32xf32>
    %cst_131 = arith.constant dense<0.000000e+00> : vector<8x32xf32>
    %206 = tpu.matmul %203, %205, %cst_131 {dimension_numbers = #tpu.dot_dimension_numbers<[1], [0], [0], [1], [0, 0, 1, 1], [], []>} : vector<8x8xf32>, vector<8x32xf32>, vector<8x32xf32> -> vector<8x32xf32>
    %207 = arith.addf %204, %206 : vector<8x32xf32>
    %c8_132 = arith.constant 8 : index
    %c0_133 = arith.constant 0 : index
    %208 = vector.load %arg9[%c8_132, %c0_133] : memref<16x32xf32, #tpu.memory_space<vmem>>, vector<8x32xf32>
    tpu.vector_store %arg9[%c8_132, %c0_133], %207 {strides = array<i32>} : memref<16x32xf32, #tpu.memory_space<vmem>>, vector<8x32xf32>,
    %209 = vector.extract_strided_slice %154 {offsets = [0, 16], sizes = [8, 8], strides = [1, 1]} : vector<8x32xf32> to vector<8x8xf32>
    %210 = vector.extract_strided_slice %156 {offsets = [0, 16], sizes = [24, 8], strides = [1, 1]} : vector<24x32xf32> to vector<24x8xf32>
    %cst_134 = arith.constant dense<0.000000e+00> : vector<8x24xf32>
    %211 = tpu.matmul %209, %210, %cst_134 {dimension_numbers = #tpu.dot_dimension_numbers<[1], [1], [0], [0], [0, 0, 1, 0], [], []>} : vector<8x8xf32>, vector<24x8xf32>, vector<8x24xf32> -> vector<8x24xf32>
    %cst_135 = arith.constant -1.000000e+30 : f32
    %212 = vector.shape_cast %48 : vector<1x24xi1> to vector<1x24xi1>
    %213 = vector.broadcast %212 : vector<1x24xi1> to vector<8x24xi1>
    %214 = vector.broadcast %cst_135 : f32 to vector<8x24xf32>
    %215 = arith.select %213, %211, %214 : vector<8x24xi1>, vector<8x24xf32>
    %cst_136 = arith.constant dense<0xFF800000> : vector<8xf32>
    %216 = vector.multi_reduction <maximumf>, %215, %cst_136 [1] : vector<8x24xf32> to vector<8xf32>
    %217 = vector.shape_cast %216 : vector<8xf32> to vector<8x1xf32>
    %218 = vector.broadcast %217 : vector<8x1xf32> to vector<8x24xf32>
    %219 = arith.subf %215, %218 : vector<8x24xf32>
    %220 = math.exp %219 : vector<8x24xf32>
    %cst_137 = arith.constant dense<0.000000e+00> : vector<8xf32>
    %221 = vector.multi_reduction <add>, %220, %cst_137 [1] : vector<8x24xf32> to vector<8xf32>
    %222 = vector.shape_cast %221 : vector<8xf32> to vector<8x1xf32>
    %223 = vector.extract_strided_slice %158 {offsets = [0, 16], sizes = [24, 8], strides = [1, 1]} : vector<24x32xf32> to vector<24x8xf32>
    %cst_138 = arith.constant dense<0.000000e+00> : vector<8x8xf32>
    %224 = tpu.matmul %220, %223, %cst_138 {dimension_numbers = #tpu.dot_dimension_numbers<[1], [0], [0], [1], [0, 0, 1, 1], [], []>} : vector<8x24xf32>, vector<24x8xf32>, vector<8x8xf32> -> vector<8x8xf32>
    %cst_139 = arith.constant 1.000000e+00 : f32
    %225 = vector.broadcast %cst_139 : f32 to vector<8x1xf32>
    %226 = arith.divf %225, %222 : vector<8x1xf32>
    %227 = vector.broadcast %226 : vector<8x1xf32> to vector<8x8xf32>
    %228 = arith.mulf %224, %227 : vector<8x8xf32>
    %c8_140 = arith.constant 8 : index
    %c0_141 = arith.constant 0 : index
    %229 = vector.load %arg9[%c8_140, %c0_141] : memref<16x32xf32, #tpu.memory_space<vmem>>, vector<8x32xf32>
    %c16_142 = arith.constant 16 : index
    %c96_143 = arith.constant 96 : index
    %230 = vector.load %arg3[%c16_142, %c96_143] : memref<32x320xf32, #tpu.memory_space<vmem>>, vector<8x32xf32>
    %cst_144 = arith.constant dense<0.000000e+00> : vector<8x32xf32>
    %231 = tpu.matmul %228, %230, %cst_144 {dimension_numbers = #tpu.dot_dimension_numbers<[1], [0], [0], [1], [0, 0, 1, 1], [], []>} : vector<8x8xf32>, vector<8x32xf32>, vector<8x32xf32> -> vector<8x32xf32>
    %232 = arith.addf %229, %231 : vector<8x32xf32>
    %c8_145 = arith.constant 8 : index
    %c0_146 = arith.constant 0 : index
    %233 = vector.load %arg9[%c8_145, %c0_146] : memref<16x32xf32, #tpu.memory_space<vmem>>, vector<8x32xf32>
    tpu.vector_store %arg9[%c8_145, %c0_146], %232 {strides = array<i32>} : memref<16x32xf32, #tpu.memory_space<vmem>>, vector<8x32xf32>,
    %234 = vector.extract_strided_slice %154 {offsets = [0, 24], sizes = [8, 8], strides = [1, 1]} : vector<8x32xf32> to vector<8x8xf32>
    %235 = vector.extract_strided_slice %156 {offsets = [0, 24], sizes = [24, 8], strides = [1, 1]} : vector<24x32xf32> to vector<24x8xf32>
    %cst_147 = arith.constant dense<0.000000e+00> : vector<8x24xf32>
    %236 = tpu.matmul %234, %235, %cst_147 {dimension_numbers = #tpu.dot_dimension_numbers<[1], [1], [0], [0], [0, 0, 1, 0], [], []>} : vector<8x8xf32>, vector<24x8xf32>, vector<8x24xf32> -> vector<8x24xf32>
    %cst_148 = arith.constant -1.000000e+30 : f32
    %237 = vector.shape_cast %48 : vector<1x24xi1> to vector<1x24xi1>
    %238 = vector.broadcast %237 : vector<1x24xi1> to vector<8x24xi1>
    %239 = vector.broadcast %cst_148 : f32 to vector<8x24xf32>
    %240 = arith.select %238, %236, %239 : vector<8x24xi1>, vector<8x24xf32>
    %cst_149 = arith.constant dense<0xFF800000> : vector<8xf32>
    %241 = vector.multi_reduction <maximumf>, %240, %cst_149 [1] : vector<8x24xf32> to vector<8xf32>
    %242 = vector.shape_cast %241 : vector<8xf32> to vector<8x1xf32>
    %243 = vector.broadcast %242 : vector<8x1xf32> to vector<8x24xf32>
    %244 = arith.subf %240, %243 : vector<8x24xf32>
    %245 = math.exp %244 : vector<8x24xf32>
    %cst_150 = arith.constant dense<0.000000e+00> : vector<8xf32>
    %246 = vector.multi_reduction <add>, %245, %cst_150 [1] : vector<8x24xf32> to vector<8xf32>
    %247 = vector.shape_cast %246 : vector<8xf32> to vector<8x1xf32>
    %248 = vector.extract_strided_slice %158 {offsets = [0, 24], sizes = [24, 8], strides = [1, 1]} : vector<24x32xf32> to vector<24x8xf32>
    %cst_151 = arith.constant dense<0.000000e+00> : vector<8x8xf32>
    %249 = tpu.matmul %245, %248, %cst_151 {dimension_numbers = #tpu.dot_dimension_numbers<[1], [0], [0], [1], [0, 0, 1, 1], [], []>} : vector<8x24xf32>, vector<24x8xf32>, vector<8x8xf32> -> vector<8x8xf32>
    %cst_152 = arith.constant 1.000000e+00 : f32
    %250 = vector.broadcast %cst_152 : f32 to vector<8x1xf32>
    %251 = arith.divf %250, %247 : vector<8x1xf32>
    %252 = vector.broadcast %251 : vector<8x1xf32> to vector<8x8xf32>
    %253 = arith.mulf %249, %252 : vector<8x8xf32>
    %c8_153 = arith.constant 8 : index
    %c0_154 = arith.constant 0 : index
    %254 = vector.load %arg9[%c8_153, %c0_154] : memref<16x32xf32, #tpu.memory_space<vmem>>, vector<8x32xf32>
    %c24_155 = arith.constant 24 : index
    %c96_156 = arith.constant 96 : index
    %255 = vector.load %arg3[%c24_155, %c96_156] : memref<32x320xf32, #tpu.memory_space<vmem>>, vector<8x32xf32>
    %cst_157 = arith.constant dense<0.000000e+00> : vector<8x32xf32>
    %256 = tpu.matmul %253, %255, %cst_157 {dimension_numbers = #tpu.dot_dimension_numbers<[1], [0], [0], [1], [0, 0, 1, 1], [], []>} : vector<8x8xf32>, vector<8x32xf32>, vector<8x32xf32> -> vector<8x32xf32>
    %257 = arith.addf %254, %256 : vector<8x32xf32>
    %c8_158 = arith.constant 8 : index
    %c0_159 = arith.constant 0 : index
    %258 = vector.load %arg9[%c8_158, %c0_159] : memref<16x32xf32, #tpu.memory_space<vmem>>, vector<8x32xf32>
    tpu.vector_store %arg9[%c8_158, %c0_159], %257 {strides = array<i32>} : memref<16x32xf32, #tpu.memory_space<vmem>>, vector<8x32xf32>,
    %c0_160 = arith.constant 0 : index
    %c0_161 = arith.constant 0 : index
    %259 = vector.load %arg9[%c0_160, %c0_161] : memref<16x32xf32, #tpu.memory_space<vmem>>, vector<16x32xf32>
    %260 = arith.addf %0, %259 : vector<16x32xf32>
    %c0_162 = arith.constant 0 : index
    %c160 = arith.constant 160 : index
    %261 = vector.load %arg5[%c0_162, %c160] : memref<1x672xf32, #tpu.memory_space<vmem>>, vector<1x32xf32>
    %262 = vector.broadcast %261 : vector<1x32xf32> to vector<16x32xf32>
    %263 = arith.addf %260, %262 : vector<16x32xf32>
    %c0_163 = arith.constant 0 : index
    %c384 = arith.constant 384 : index
    %264 = vector.load %arg5[%c0_163, %c384] : memref<1x672xf32, #tpu.memory_space<vmem>>, vector<1x32xf32>
    %c0_164 = arith.constant 0 : index
    %c416 = arith.constant 416 : index
    %265 = vector.load %arg5[%c0_164, %c416] : memref<1x672xf32, #tpu.memory_space<vmem>>, vector<1x32xf32>
    %cst_165 = arith.constant dense<0.000000e+00> : vector<16xf32>
    %266 = vector.multi_reduction <add>, %263, %cst_165 [1] : vector<16x32xf32> to vector<16xf32>
    %267 = vector.shape_cast %266 : vector<16xf32> to vector<16x1xf32>
    %cst_166 = arith.constant 3.200000e+01 : f32
    %268 = vector.broadcast %cst_166 : f32 to vector<16x1xf32>
    %269 = arith.divf %267, %268 : vector<16x1xf32>
    %270 = vector.broadcast %269 : vector<16x1xf32> to vector<16x32xf32>
    %271 = arith.subf %263, %270 : vector<16x32xf32>
    %272 = arith.mulf %271, %271 : vector<16x32xf32>
    %cst_167 = arith.constant dense<0.000000e+00> : vector<16xf32>
    %273 = vector.multi_reduction <add>, %272, %cst_167 [1] : vector<16x32xf32> to vector<16xf32>
    %274 = vector.shape_cast %273 : vector<16xf32> to vector<16x1xf32>
    %cst_168 = arith.constant 3.200000e+01 : f32
    %275 = vector.broadcast %cst_168 : f32 to vector<16x1xf32>
    %276 = arith.divf %274, %275 : vector<16x1xf32>
    %cst_169 = arith.constant 9.99999974E-6 : f32
    %277 = vector.broadcast %cst_169 : f32 to vector<16x1xf32>
    %278 = arith.addf %276, %277 : vector<16x1xf32>
    %279 = math.rsqrt %278 : vector<16x1xf32>
    %280 = vector.broadcast %279 : vector<16x1xf32> to vector<16x32xf32>
    %281 = arith.mulf %271, %280 : vector<16x32xf32>
    %282 = vector.broadcast %264 : vector<1x32xf32> to vector<16x32xf32>
    %283 = arith.mulf %281, %282 : vector<16x32xf32>
    %284 = vector.broadcast %265 : vector<1x32xf32> to vector<16x32xf32>
    %285 = arith.addf %283, %284 : vector<16x32xf32>
    %c0_170 = arith.constant 0 : index
    %c128_171 = arith.constant 128 : index
    %286 = vector.load %arg3[%c0_170, %c128_171] : memref<32x320xf32, #tpu.memory_space<vmem>>, vector<32x32xf32>
    %cst_172 = arith.constant dense<0.000000e+00> : vector<16x32xf32>
    %287 = tpu.matmul %285, %286, %cst_172 {dimension_numbers = #tpu.dot_dimension_numbers<[1], [0], [0], [1], [0, 0, 1, 1], [], []>} : vector<16x32xf32>, vector<32x32xf32>, vector<16x32xf32> -> vector<16x32xf32>
    %c0_173 = arith.constant 0 : index
    %c192 = arith.constant 192 : index
    %288 = vector.load %arg5[%c0_173, %c192] : memref<1x672xf32, #tpu.memory_space<vmem>>, vector<1x32xf32>
    %289 = vector.broadcast %288 : vector<1x32xf32> to vector<16x32xf32>
    %290 = arith.addf %287, %289 : vector<16x32xf32>
    %c0_174 = arith.constant 0 : index
    %c160_175 = arith.constant 160 : index
    %291 = vector.load %arg3[%c0_174, %c160_175] : memref<32x320xf32, #tpu.memory_space<vmem>>, vector<32x64xf32>
    %cst_176 = arith.constant dense<0.000000e+00> : vector<32x64xf32>
    %292 = tpu.matmul %1, %291, %cst_176 {dimension_numbers = #tpu.dot_dimension_numbers<[1], [0], [0], [1], [0, 0, 1, 1], [], []>} : vector<32x32xf32>, vector<32x64xf32>, vector<32x64xf32> -> vector<32x64xf32>
    %c0_177 = arith.constant 0 : index
    %c224 = arith.constant 224 : index
    %293 = vector.load %arg5[%c0_177, %c224] : memref<1x672xf32, #tpu.memory_space<vmem>>, vector<1x64xf32>
    %294 = vector.broadcast %293 : vector<1x64xf32> to vector<32x64xf32>
    %295 = arith.addf %292, %294 : vector<32x64xf32>
    %296 = vector.extract_strided_slice %295 {offsets = [0, 0], sizes = [16, 32], strides = [1, 1]} : vector<32x64xf32> to vector<16x32xf32>
    %c0_178 = arith.constant 0 : index
    %c0_179 = arith.constant 0 : index
    %c0_180 = arith.constant 0 : index
    %297 = vector.load %arg7[%c0_178, %c0_179, %c0_180] : memref<2x24x32xf32, #tpu.memory_space<vmem>>, vector<1x16x32xf32>
    %298 = vector.shape_cast %297 : vector<1x16x32xf32> to vector<16x32xf32>
    %299 = vector.shape_cast %296 : vector<16x32xf32> to vector<1x16x32xf32>
    tpu.vector_store %arg7[%c0_178, %c0_179, %c0_180], %299 {strides = array<i32>} : memref<2x24x32xf32, #tpu.memory_space<vmem>>, vector<1x16x32xf32>,
    %300 = vector.extract_strided_slice %295 {offsets = [0, 32], sizes = [16, 32], strides = [1, 1]} : vector<32x64xf32> to vector<16x32xf32>
    %c0_181 = arith.constant 0 : index
    %c0_182 = arith.constant 0 : index
    %c0_183 = arith.constant 0 : index
    %301 = vector.load %arg8[%c0_181, %c0_182, %c0_183] : memref<2x24x32xf32, #tpu.memory_space<vmem>>, vector<1x16x32xf32>
    %302 = vector.shape_cast %301 : vector<1x16x32xf32> to vector<16x32xf32>
    %303 = vector.shape_cast %300 : vector<16x32xf32> to vector<1x16x32xf32>
    tpu.vector_store %arg8[%c0_181, %c0_182, %c0_183], %303 {strides = array<i32>} : memref<2x24x32xf32, #tpu.memory_space<vmem>>, vector<1x16x32xf32>,
    %c0_184 = arith.constant 0 : index
    %c288 = arith.constant 288 : index
    %304 = vector.load %arg5[%c0_184, %c288] : memref<1x672xf32, #tpu.memory_space<vmem>>, vector<1x32xf32>
    %c0_185 = arith.constant 0 : index
    %c16_186 = arith.constant 16 : index
    %c0_187 = arith.constant 0 : index
    %305 = vector.load %arg7[%c0_185, %c16_186, %c0_187] : memref<2x24x32xf32, #tpu.memory_space<vmem>>, vector<1x1x32xf32>
    %306 = vector.shape_cast %305 : vector<1x1x32xf32> to vector<1x32xf32>
    %307 = vector.shape_cast %304 : vector<1x32xf32> to vector<1x1x32xf32>
    tpu.vector_store %arg7[%c0_185, %c16_186, %c0_187], %307 {strides = array<i32>} : memref<2x24x32xf32, #tpu.memory_space<vmem>>, vector<1x1x32xf32>,
    %c0_188 = arith.constant 0 : index
    %c320 = arith.constant 320 : index
    %308 = vector.load %arg5[%c0_188, %c320] : memref<1x672xf32, #tpu.memory_space<vmem>>, vector<1x32xf32>
    %c0_189 = arith.constant 0 : index
    %c16_190 = arith.constant 16 : index
    %c0_191 = arith.constant 0 : index
    %309 = vector.load %arg8[%c0_189, %c16_190, %c0_191] : memref<2x24x32xf32, #tpu.memory_space<vmem>>, vector<1x1x32xf32>
    %310 = vector.shape_cast %309 : vector<1x1x32xf32> to vector<1x32xf32>
    %311 = vector.shape_cast %308 : vector<1x32xf32> to vector<1x1x32xf32>
    tpu.vector_store %arg8[%c0_189, %c16_190, %c0_191], %311 {strides = array<i32>} : memref<2x24x32xf32, #tpu.memory_space<vmem>>, vector<1x1x32xf32>,
    %312 = vector.extract_strided_slice %295 {offsets = [16, 0], sizes = [16, 32], strides = [1, 1]} : vector<32x64xf32> to vector<16x32xf32>
    %c1_192 = arith.constant 1 : index
    %c0_193 = arith.constant 0 : index
    %c0_194 = arith.constant 0 : index
    %313 = vector.load %arg7[%c1_192, %c0_193, %c0_194] : memref<2x24x32xf32, #tpu.memory_space<vmem>>, vector<1x16x32xf32>
    %314 = vector.shape_cast %313 : vector<1x16x32xf32> to vector<16x32xf32>
    %315 = vector.shape_cast %312 : vector<16x32xf32> to vector<1x16x32xf32>
    tpu.vector_store %arg7[%c1_192, %c0_193, %c0_194], %315 {strides = array<i32>} : memref<2x24x32xf32, #tpu.memory_space<vmem>>, vector<1x16x32xf32>,
    %316 = vector.extract_strided_slice %295 {offsets = [16, 32], sizes = [16, 32], strides = [1, 1]} : vector<32x64xf32> to vector<16x32xf32>
    %c1_195 = arith.constant 1 : index
    %c0_196 = arith.constant 0 : index
    %c0_197 = arith.constant 0 : index
    %317 = vector.load %arg8[%c1_195, %c0_196, %c0_197] : memref<2x24x32xf32, #tpu.memory_space<vmem>>, vector<1x16x32xf32>
    %318 = vector.shape_cast %317 : vector<1x16x32xf32> to vector<16x32xf32>
    %319 = vector.shape_cast %316 : vector<16x32xf32> to vector<1x16x32xf32>
    tpu.vector_store %arg8[%c1_195, %c0_196, %c0_197], %319 {strides = array<i32>} : memref<2x24x32xf32, #tpu.memory_space<vmem>>, vector<1x16x32xf32>,
    %c0_198 = arith.constant 0 : index
    %c288_199 = arith.constant 288 : index
    %320 = vector.load %arg5[%c0_198, %c288_199] : memref<1x672xf32, #tpu.memory_space<vmem>>, vector<1x32xf32>
    %c1_200 = arith.constant 1 : index
    %c16_201 = arith.constant 16 : index
    %c0_202 = arith.constant 0 : index
    %321 = vector.load %arg7[%c1_200, %c16_201, %c0_202] : memref<2x24x32xf32, #tpu.memory_space<vmem>>, vector<1x1x32xf32>
    %322 = vector.shape_cast %321 : vector<1x1x32xf32> to vector<1x32xf32>
    %323 = vector.shape_cast %320 : vector<1x32xf32> to vector<1x1x32xf32>
    tpu.vector_store %arg7[%c1_200, %c16_201, %c0_202], %323 {strides = array<i32>} : memref<2x24x32xf32, #tpu.memory_space<vmem>>, vector<1x1x32xf32>,
    %c0_203 = arith.constant 0 : index
    %c320_204 = arith.constant 320 : index
    %324 = vector.load %arg5[%c0_203, %c320_204] : memref<1x672xf32, #tpu.memory_space<vmem>>, vector<1x32xf32>
    %c1_205 = arith.constant 1 : index
    %c16_206 = arith.constant 16 : index
    %c0_207 = arith.constant 0 : index
    %325 = vector.load %arg8[%c1_205, %c16_206, %c0_207] : memref<2x24x32xf32, #tpu.memory_space<vmem>>, vector<1x1x32xf32>
    %326 = vector.shape_cast %325 : vector<1x1x32xf32> to vector<1x32xf32>
    %327 = vector.shape_cast %324 : vector<1x32xf32> to vector<1x1x32xf32>
    tpu.vector_store %arg8[%c1_205, %c16_206, %c0_207], %327 {strides = array<i32>} : memref<2x24x32xf32, #tpu.memory_space<vmem>>, vector<1x1x32xf32>,
    %cst_208 = arith.constant 0.000000e+00 : f32
    %328 = vector.broadcast %cst_208 : f32 to vector<16x32xf32>
    %c0_209 = arith.constant 0 : index
    %c0_210 = arith.constant 0 : index
    %329 = vector.load %arg9[%c0_209, %c0_210] : memref<16x32xf32, #tpu.memory_space<vmem>>, vector<16x32xf32>
    tpu.vector_store %arg9[%c0_209, %c0_210], %328 {strides = array<i32>} : memref<16x32xf32, #tpu.memory_space<vmem>>, vector<16x32xf32>,
    %c16_i32 = arith.constant 16 : i32
    %330 = vector.broadcast %c16_i32 : i32 to vector<1x24xi32>
    %331 = arith.cmpi sle, %6, %330 : vector<1x24xi32>
    %332 = vector.extract_strided_slice %290 {offsets = [0, 0], sizes = [8, 32], strides = [1, 1]} : vector<16x32xf32> to vector<8x32xf32>
    %c0_211 = arith.constant 0 : index
    %c0_212 = arith.constant 0 : index
    %c0_213 = arith.constant 0 : index
    %333 = vector.load %arg7[%c0_211, %c0_212, %c0_213] : memref<2x24x32xf32, #tpu.memory_space<vmem>>, vector<1x24x32xf32>
    %334 = vector.shape_cast %333 : vector<1x24x32xf32> to vector<24x32xf32>
    %c0_214 = arith.constant 0 : index
    %c0_215 = arith.constant 0 : index
    %c0_216 = arith.constant 0 : index
    %335 = vector.load %arg8[%c0_214, %c0_215, %c0_216] : memref<2x24x32xf32, #tpu.memory_space<vmem>>, vector<1x24x32xf32>
    %336 = vector.shape_cast %335 : vector<1x24x32xf32> to vector<24x32xf32>
    %337 = vector.extract_strided_slice %332 {offsets = [0, 0], sizes = [8, 8], strides = [1, 1]} : vector<8x32xf32> to vector<8x8xf32>
    %338 = vector.extract_strided_slice %334 {offsets = [0, 0], sizes = [24, 8], strides = [1, 1]} : vector<24x32xf32> to vector<24x8xf32>
    %cst_217 = arith.constant dense<0.000000e+00> : vector<8x24xf32>
    %339 = tpu.matmul %337, %338, %cst_217 {dimension_numbers = #tpu.dot_dimension_numbers<[1], [1], [0], [0], [0, 0, 1, 0], [], []>} : vector<8x8xf32>, vector<24x8xf32>, vector<8x24xf32> -> vector<8x24xf32>
    %cst_218 = arith.constant -1.000000e+30 : f32
    %340 = vector.shape_cast %331 : vector<1x24xi1> to vector<1x24xi1>
    %341 = vector.broadcast %340 : vector<1x24xi1> to vector<8x24xi1>
    %342 = vector.broadcast %cst_218 : f32 to vector<8x24xf32>
    %343 = arith.select %341, %339, %342 : vector<8x24xi1>, vector<8x24xf32>
    %cst_219 = arith.constant dense<0xFF800000> : vector<8xf32>
    %344 = vector.multi_reduction <maximumf>, %343, %cst_219 [1] : vector<8x24xf32> to vector<8xf32>
    %345 = vector.shape_cast %344 : vector<8xf32> to vector<8x1xf32>
    %346 = vector.broadcast %345 : vector<8x1xf32> to vector<8x24xf32>
    %347 = arith.subf %343, %346 : vector<8x24xf32>
    %348 = math.exp %347 : vector<8x24xf32>
    %cst_220 = arith.constant dense<0.000000e+00> : vector<8xf32>
    %349 = vector.multi_reduction <add>, %348, %cst_220 [1] : vector<8x24xf32> to vector<8xf32>
    %350 = vector.shape_cast %349 : vector<8xf32> to vector<8x1xf32>
    %351 = vector.extract_strided_slice %336 {offsets = [0, 0], sizes = [24, 8], strides = [1, 1]} : vector<24x32xf32> to vector<24x8xf32>
    %cst_221 = arith.constant dense<0.000000e+00> : vector<8x8xf32>
    %352 = tpu.matmul %348, %351, %cst_221 {dimension_numbers = #tpu.dot_dimension_numbers<[1], [0], [0], [1], [0, 0, 1, 1], [], []>} : vector<8x24xf32>, vector<24x8xf32>, vector<8x8xf32> -> vector<8x8xf32>
    %cst_222 = arith.constant 1.000000e+00 : f32
    %353 = vector.broadcast %cst_222 : f32 to vector<8x1xf32>
    %354 = arith.divf %353, %350 : vector<8x1xf32>
    %355 = vector.broadcast %354 : vector<8x1xf32> to vector<8x8xf32>
    %356 = arith.mulf %352, %355 : vector<8x8xf32>
    %c0_223 = arith.constant 0 : index
    %c0_224 = arith.constant 0 : index
    %357 = vector.load %arg9[%c0_223, %c0_224] : memref<16x32xf32, #tpu.memory_space<vmem>>, vector<8x32xf32>
    %c0_225 = arith.constant 0 : index
    %c224_226 = arith.constant 224 : index
    %358 = vector.load %arg3[%c0_225, %c224_226] : memref<32x320xf32, #tpu.memory_space<vmem>>, vector<8x32xf32>
    %cst_227 = arith.constant dense<0.000000e+00> : vector<8x32xf32>
    %359 = tpu.matmul %356, %358, %cst_227 {dimension_numbers = #tpu.dot_dimension_numbers<[1], [0], [0], [1], [0, 0, 1, 1], [], []>} : vector<8x8xf32>, vector<8x32xf32>, vector<8x32xf32> -> vector<8x32xf32>
    %360 = arith.addf %357, %359 : vector<8x32xf32>
    %c0_228 = arith.constant 0 : index
    %c0_229 = arith.constant 0 : index
    %361 = vector.load %arg9[%c0_228, %c0_229] : memref<16x32xf32, #tpu.memory_space<vmem>>, vector<8x32xf32>
    tpu.vector_store %arg9[%c0_228, %c0_229], %360 {strides = array<i32>} : memref<16x32xf32, #tpu.memory_space<vmem>>, vector<8x32xf32>,
    %362 = vector.extract_strided_slice %332 {offsets = [0, 8], sizes = [8, 8], strides = [1, 1]} : vector<8x32xf32> to vector<8x8xf32>
    %363 = vector.extract_strided_slice %334 {offsets = [0, 8], sizes = [24, 8], strides = [1, 1]} : vector<24x32xf32> to vector<24x8xf32>
    %cst_230 = arith.constant dense<0.000000e+00> : vector<8x24xf32>
    %364 = tpu.matmul %362, %363, %cst_230 {dimension_numbers = #tpu.dot_dimension_numbers<[1], [1], [0], [0], [0, 0, 1, 0], [], []>} : vector<8x8xf32>, vector<24x8xf32>, vector<8x24xf32> -> vector<8x24xf32>
    %cst_231 = arith.constant -1.000000e+30 : f32
    %365 = vector.shape_cast %331 : vector<1x24xi1> to vector<1x24xi1>
    %366 = vector.broadcast %365 : vector<1x24xi1> to vector<8x24xi1>
    %367 = vector.broadcast %cst_231 : f32 to vector<8x24xf32>
    %368 = arith.select %366, %364, %367 : vector<8x24xi1>, vector<8x24xf32>
    %cst_232 = arith.constant dense<0xFF800000> : vector<8xf32>
    %369 = vector.multi_reduction <maximumf>, %368, %cst_232 [1] : vector<8x24xf32> to vector<8xf32>
    %370 = vector.shape_cast %369 : vector<8xf32> to vector<8x1xf32>
    %371 = vector.broadcast %370 : vector<8x1xf32> to vector<8x24xf32>
    %372 = arith.subf %368, %371 : vector<8x24xf32>
    %373 = math.exp %372 : vector<8x24xf32>
    %cst_233 = arith.constant dense<0.000000e+00> : vector<8xf32>
    %374 = vector.multi_reduction <add>, %373, %cst_233 [1] : vector<8x24xf32> to vector<8xf32>
    %375 = vector.shape_cast %374 : vector<8xf32> to vector<8x1xf32>
    %376 = vector.extract_strided_slice %336 {offsets = [0, 8], sizes = [24, 8], strides = [1, 1]} : vector<24x32xf32> to vector<24x8xf32>
    %cst_234 = arith.constant dense<0.000000e+00> : vector<8x8xf32>
    %377 = tpu.matmul %373, %376, %cst_234 {dimension_numbers = #tpu.dot_dimension_numbers<[1], [0], [0], [1], [0, 0, 1, 1], [], []>} : vector<8x24xf32>, vector<24x8xf32>, vector<8x8xf32> -> vector<8x8xf32>
    %cst_235 = arith.constant 1.000000e+00 : f32
    %378 = vector.broadcast %cst_235 : f32 to vector<8x1xf32>
    %379 = arith.divf %378, %375 : vector<8x1xf32>
    %380 = vector.broadcast %379 : vector<8x1xf32> to vector<8x8xf32>
    %381 = arith.mulf %377, %380 : vector<8x8xf32>
    %c0_236 = arith.constant 0 : index
    %c0_237 = arith.constant 0 : index
    %382 = vector.load %arg9[%c0_236, %c0_237] : memref<16x32xf32, #tpu.memory_space<vmem>>, vector<8x32xf32>
    %c8_238 = arith.constant 8 : index
    %c224_239 = arith.constant 224 : index
    %383 = vector.load %arg3[%c8_238, %c224_239] : memref<32x320xf32, #tpu.memory_space<vmem>>, vector<8x32xf32>
    %cst_240 = arith.constant dense<0.000000e+00> : vector<8x32xf32>
    %384 = tpu.matmul %381, %383, %cst_240 {dimension_numbers = #tpu.dot_dimension_numbers<[1], [0], [0], [1], [0, 0, 1, 1], [], []>} : vector<8x8xf32>, vector<8x32xf32>, vector<8x32xf32> -> vector<8x32xf32>
    %385 = arith.addf %382, %384 : vector<8x32xf32>
    %c0_241 = arith.constant 0 : index
    %c0_242 = arith.constant 0 : index
    %386 = vector.load %arg9[%c0_241, %c0_242] : memref<16x32xf32, #tpu.memory_space<vmem>>, vector<8x32xf32>
    tpu.vector_store %arg9[%c0_241, %c0_242], %385 {strides = array<i32>} : memref<16x32xf32, #tpu.memory_space<vmem>>, vector<8x32xf32>,
    %387 = vector.extract_strided_slice %332 {offsets = [0, 16], sizes = [8, 8], strides = [1, 1]} : vector<8x32xf32> to vector<8x8xf32>
    %388 = vector.extract_strided_slice %334 {offsets = [0, 16], sizes = [24, 8], strides = [1, 1]} : vector<24x32xf32> to vector<24x8xf32>
    %cst_243 = arith.constant dense<0.000000e+00> : vector<8x24xf32>
    %389 = tpu.matmul %387, %388, %cst_243 {dimension_numbers = #tpu.dot_dimension_numbers<[1], [1], [0], [0], [0, 0, 1, 0], [], []>} : vector<8x8xf32>, vector<24x8xf32>, vector<8x24xf32> -> vector<8x24xf32>
    %cst_244 = arith.constant -1.000000e+30 : f32
    %390 = vector.shape_cast %331 : vector<1x24xi1> to vector<1x24xi1>
    %391 = vector.broadcast %390 : vector<1x24xi1> to vector<8x24xi1>
    %392 = vector.broadcast %cst_244 : f32 to vector<8x24xf32>
    %393 = arith.select %391, %389, %392 : vector<8x24xi1>, vector<8x24xf32>
    %cst_245 = arith.constant dense<0xFF800000> : vector<8xf32>
    %394 = vector.multi_reduction <maximumf>, %393, %cst_245 [1] : vector<8x24xf32> to vector<8xf32>
    %395 = vector.shape_cast %394 : vector<8xf32> to vector<8x1xf32>
    %396 = vector.broadcast %395 : vector<8x1xf32> to vector<8x24xf32>
    %397 = arith.subf %393, %396 : vector<8x24xf32>
    %398 = math.exp %397 : vector<8x24xf32>
    %cst_246 = arith.constant dense<0.000000e+00> : vector<8xf32>
    %399 = vector.multi_reduction <add>, %398, %cst_246 [1] : vector<8x24xf32> to vector<8xf32>
    %400 = vector.shape_cast %399 : vector<8xf32> to vector<8x1xf32>
    %401 = vector.extract_strided_slice %336 {offsets = [0, 16], sizes = [24, 8], strides = [1, 1]} : vector<24x32xf32> to vector<24x8xf32>
    %cst_247 = arith.constant dense<0.000000e+00> : vector<8x8xf32>
    %402 = tpu.matmul %398, %401, %cst_247 {dimension_numbers = #tpu.dot_dimension_numbers<[1], [0], [0], [1], [0, 0, 1, 1], [], []>} : vector<8x24xf32>, vector<24x8xf32>, vector<8x8xf32> -> vector<8x8xf32>
    %cst_248 = arith.constant 1.000000e+00 : f32
    %403 = vector.broadcast %cst_248 : f32 to vector<8x1xf32>
    %404 = arith.divf %403, %400 : vector<8x1xf32>
    %405 = vector.broadcast %404 : vector<8x1xf32> to vector<8x8xf32>
    %406 = arith.mulf %402, %405 : vector<8x8xf32>
    %c0_249 = arith.constant 0 : index
    %c0_250 = arith.constant 0 : index
    %407 = vector.load %arg9[%c0_249, %c0_250] : memref<16x32xf32, #tpu.memory_space<vmem>>, vector<8x32xf32>
    %c16_251 = arith.constant 16 : index
    %c224_252 = arith.constant 224 : index
    %408 = vector.load %arg3[%c16_251, %c224_252] : memref<32x320xf32, #tpu.memory_space<vmem>>, vector<8x32xf32>
    %cst_253 = arith.constant dense<0.000000e+00> : vector<8x32xf32>
    %409 = tpu.matmul %406, %408, %cst_253 {dimension_numbers = #tpu.dot_dimension_numbers<[1], [0], [0], [1], [0, 0, 1, 1], [], []>} : vector<8x8xf32>, vector<8x32xf32>, vector<8x32xf32> -> vector<8x32xf32>
    %410 = arith.addf %407, %409 : vector<8x32xf32>
    %c0_254 = arith.constant 0 : index
    %c0_255 = arith.constant 0 : index
    %411 = vector.load %arg9[%c0_254, %c0_255] : memref<16x32xf32, #tpu.memory_space<vmem>>, vector<8x32xf32>
    tpu.vector_store %arg9[%c0_254, %c0_255], %410 {strides = array<i32>} : memref<16x32xf32, #tpu.memory_space<vmem>>, vector<8x32xf32>,
    %412 = vector.extract_strided_slice %332 {offsets = [0, 24], sizes = [8, 8], strides = [1, 1]} : vector<8x32xf32> to vector<8x8xf32>
    %413 = vector.extract_strided_slice %334 {offsets = [0, 24], sizes = [24, 8], strides = [1, 1]} : vector<24x32xf32> to vector<24x8xf32>
    %cst_256 = arith.constant dense<0.000000e+00> : vector<8x24xf32>
    %414 = tpu.matmul %412, %413, %cst_256 {dimension_numbers = #tpu.dot_dimension_numbers<[1], [1], [0], [0], [0, 0, 1, 0], [], []>} : vector<8x8xf32>, vector<24x8xf32>, vector<8x24xf32> -> vector<8x24xf32>
    %cst_257 = arith.constant -1.000000e+30 : f32
    %415 = vector.shape_cast %331 : vector<1x24xi1> to vector<1x24xi1>
    %416 = vector.broadcast %415 : vector<1x24xi1> to vector<8x24xi1>
    %417 = vector.broadcast %cst_257 : f32 to vector<8x24xf32>
    %418 = arith.select %416, %414, %417 : vector<8x24xi1>, vector<8x24xf32>
    %cst_258 = arith.constant dense<0xFF800000> : vector<8xf32>
    %419 = vector.multi_reduction <maximumf>, %418, %cst_258 [1] : vector<8x24xf32> to vector<8xf32>
    %420 = vector.shape_cast %419 : vector<8xf32> to vector<8x1xf32>
    %421 = vector.broadcast %420 : vector<8x1xf32> to vector<8x24xf32>
    %422 = arith.subf %418, %421 : vector<8x24xf32>
    %423 = math.exp %422 : vector<8x24xf32>
    %cst_259 = arith.constant dense<0.000000e+00> : vector<8xf32>
    %424 = vector.multi_reduction <add>, %423, %cst_259 [1] : vector<8x24xf32> to vector<8xf32>
    %425 = vector.shape_cast %424 : vector<8xf32> to vector<8x1xf32>
    %426 = vector.extract_strided_slice %336 {offsets = [0, 24], sizes = [24, 8], strides = [1, 1]} : vector<24x32xf32> to vector<24x8xf32>
    %cst_260 = arith.constant dense<0.000000e+00> : vector<8x8xf32>
    %427 = tpu.matmul %423, %426, %cst_260 {dimension_numbers = #tpu.dot_dimension_numbers<[1], [0], [0], [1], [0, 0, 1, 1], [], []>} : vector<8x24xf32>, vector<24x8xf32>, vector<8x8xf32> -> vector<8x8xf32>
    %cst_261 = arith.constant 1.000000e+00 : f32
    %428 = vector.broadcast %cst_261 : f32 to vector<8x1xf32>
    %429 = arith.divf %428, %425 : vector<8x1xf32>
    %430 = vector.broadcast %429 : vector<8x1xf32> to vector<8x8xf32>
    %431 = arith.mulf %427, %430 : vector<8x8xf32>
    %c0_262 = arith.constant 0 : index
    %c0_263 = arith.constant 0 : index
    %432 = vector.load %arg9[%c0_262, %c0_263] : memref<16x32xf32, #tpu.memory_space<vmem>>, vector<8x32xf32>
    %c24_264 = arith.constant 24 : index
    %c224_265 = arith.constant 224 : index
    %433 = vector.load %arg3[%c24_264, %c224_265] : memref<32x320xf32, #tpu.memory_space<vmem>>, vector<8x32xf32>
    %cst_266 = arith.constant dense<0.000000e+00> : vector<8x32xf32>
    %434 = tpu.matmul %431, %433, %cst_266 {dimension_numbers = #tpu.dot_dimension_numbers<[1], [0], [0], [1], [0, 0, 1, 1], [], []>} : vector<8x8xf32>, vector<8x32xf32>, vector<8x32xf32> -> vector<8x32xf32>
    %435 = arith.addf %432, %434 : vector<8x32xf32>
    %c0_267 = arith.constant 0 : index
    %c0_268 = arith.constant 0 : index
    %436 = vector.load %arg9[%c0_267, %c0_268] : memref<16x32xf32, #tpu.memory_space<vmem>>, vector<8x32xf32>
    tpu.vector_store %arg9[%c0_267, %c0_268], %435 {strides = array<i32>} : memref<16x32xf32, #tpu.memory_space<vmem>>, vector<8x32xf32>,
    %437 = vector.extract_strided_slice %290 {offsets = [8, 0], sizes = [8, 32], strides = [1, 1]} : vector<16x32xf32> to vector<8x32xf32>
    %c1_269 = arith.constant 1 : index
    %c0_270 = arith.constant 0 : index
    %c0_271 = arith.constant 0 : index
    %438 = vector.load %arg7[%c1_269, %c0_270, %c0_271] : memref<2x24x32xf32, #tpu.memory_space<vmem>>, vector<1x24x32xf32>
    %439 = vector.shape_cast %438 : vector<1x24x32xf32> to vector<24x32xf32>
    %c1_272 = arith.constant 1 : index
    %c0_273 = arith.constant 0 : index
    %c0_274 = arith.constant 0 : index
    %440 = vector.load %arg8[%c1_272, %c0_273, %c0_274] : memref<2x24x32xf32, #tpu.memory_space<vmem>>, vector<1x24x32xf32>
    %441 = vector.shape_cast %440 : vector<1x24x32xf32> to vector<24x32xf32>
    %442 = vector.extract_strided_slice %437 {offsets = [0, 0], sizes = [8, 8], strides = [1, 1]} : vector<8x32xf32> to vector<8x8xf32>
    %443 = vector.extract_strided_slice %439 {offsets = [0, 0], sizes = [24, 8], strides = [1, 1]} : vector<24x32xf32> to vector<24x8xf32>
    %cst_275 = arith.constant dense<0.000000e+00> : vector<8x24xf32>
    %444 = tpu.matmul %442, %443, %cst_275 {dimension_numbers = #tpu.dot_dimension_numbers<[1], [1], [0], [0], [0, 0, 1, 0], [], []>} : vector<8x8xf32>, vector<24x8xf32>, vector<8x24xf32> -> vector<8x24xf32>
    %cst_276 = arith.constant -1.000000e+30 : f32
    %445 = vector.shape_cast %331 : vector<1x24xi1> to vector<1x24xi1>
    %446 = vector.broadcast %445 : vector<1x24xi1> to vector<8x24xi1>
    %447 = vector.broadcast %cst_276 : f32 to vector<8x24xf32>
    %448 = arith.select %446, %444, %447 : vector<8x24xi1>, vector<8x24xf32>
    %cst_277 = arith.constant dense<0xFF800000> : vector<8xf32>
    %449 = vector.multi_reduction <maximumf>, %448, %cst_277 [1] : vector<8x24xf32> to vector<8xf32>
    %450 = vector.shape_cast %449 : vector<8xf32> to vector<8x1xf32>
    %451 = vector.broadcast %450 : vector<8x1xf32> to vector<8x24xf32>
    %452 = arith.subf %448, %451 : vector<8x24xf32>
    %453 = math.exp %452 : vector<8x24xf32>
    %cst_278 = arith.constant dense<0.000000e+00> : vector<8xf32>
    %454 = vector.multi_reduction <add>, %453, %cst_278 [1] : vector<8x24xf32> to vector<8xf32>
    %455 = vector.shape_cast %454 : vector<8xf32> to vector<8x1xf32>
    %456 = vector.extract_strided_slice %441 {offsets = [0, 0], sizes = [24, 8], strides = [1, 1]} : vector<24x32xf32> to vector<24x8xf32>
    %cst_279 = arith.constant dense<0.000000e+00> : vector<8x8xf32>
    %457 = tpu.matmul %453, %456, %cst_279 {dimension_numbers = #tpu.dot_dimension_numbers<[1], [0], [0], [1], [0, 0, 1, 1], [], []>} : vector<8x24xf32>, vector<24x8xf32>, vector<8x8xf32> -> vector<8x8xf32>
    %cst_280 = arith.constant 1.000000e+00 : f32
    %458 = vector.broadcast %cst_280 : f32 to vector<8x1xf32>
    %459 = arith.divf %458, %455 : vector<8x1xf32>
    %460 = vector.broadcast %459 : vector<8x1xf32> to vector<8x8xf32>
    %461 = arith.mulf %457, %460 : vector<8x8xf32>
    %c8_281 = arith.constant 8 : index
    %c0_282 = arith.constant 0 : index
    %462 = vector.load %arg9[%c8_281, %c0_282] : memref<16x32xf32, #tpu.memory_space<vmem>>, vector<8x32xf32>
    %c0_283 = arith.constant 0 : index
    %c224_284 = arith.constant 224 : index
    %463 = vector.load %arg3[%c0_283, %c224_284] : memref<32x320xf32, #tpu.memory_space<vmem>>, vector<8x32xf32>
    %cst_285 = arith.constant dense<0.000000e+00> : vector<8x32xf32>
    %464 = tpu.matmul %461, %463, %cst_285 {dimension_numbers = #tpu.dot_dimension_numbers<[1], [0], [0], [1], [0, 0, 1, 1], [], []>} : vector<8x8xf32>, vector<8x32xf32>, vector<8x32xf32> -> vector<8x32xf32>
    %465 = arith.addf %462, %464 : vector<8x32xf32>
    %c8_286 = arith.constant 8 : index
    %c0_287 = arith.constant 0 : index
    %466 = vector.load %arg9[%c8_286, %c0_287] : memref<16x32xf32, #tpu.memory_space<vmem>>, vector<8x32xf32>
    tpu.vector_store %arg9[%c8_286, %c0_287], %465 {strides = array<i32>} : memref<16x32xf32, #tpu.memory_space<vmem>>, vector<8x32xf32>,
    %467 = vector.extract_strided_slice %437 {offsets = [0, 8], sizes = [8, 8], strides = [1, 1]} : vector<8x32xf32> to vector<8x8xf32>
    %468 = vector.extract_strided_slice %439 {offsets = [0, 8], sizes = [24, 8], strides = [1, 1]} : vector<24x32xf32> to vector<24x8xf32>
    %cst_288 = arith.constant dense<0.000000e+00> : vector<8x24xf32>
    %469 = tpu.matmul %467, %468, %cst_288 {dimension_numbers = #tpu.dot_dimension_numbers<[1], [1], [0], [0], [0, 0, 1, 0], [], []>} : vector<8x8xf32>, vector<24x8xf32>, vector<8x24xf32> -> vector<8x24xf32>
    %cst_289 = arith.constant -1.000000e+30 : f32
    %470 = vector.shape_cast %331 : vector<1x24xi1> to vector<1x24xi1>
    %471 = vector.broadcast %470 : vector<1x24xi1> to vector<8x24xi1>
    %472 = vector.broadcast %cst_289 : f32 to vector<8x24xf32>
    %473 = arith.select %471, %469, %472 : vector<8x24xi1>, vector<8x24xf32>
    %cst_290 = arith.constant dense<0xFF800000> : vector<8xf32>
    %474 = vector.multi_reduction <maximumf>, %473, %cst_290 [1] : vector<8x24xf32> to vector<8xf32>
    %475 = vector.shape_cast %474 : vector<8xf32> to vector<8x1xf32>
    %476 = vector.broadcast %475 : vector<8x1xf32> to vector<8x24xf32>
    %477 = arith.subf %473, %476 : vector<8x24xf32>
    %478 = math.exp %477 : vector<8x24xf32>
    %cst_291 = arith.constant dense<0.000000e+00> : vector<8xf32>
    %479 = vector.multi_reduction <add>, %478, %cst_291 [1] : vector<8x24xf32> to vector<8xf32>
    %480 = vector.shape_cast %479 : vector<8xf32> to vector<8x1xf32>
    %481 = vector.extract_strided_slice %441 {offsets = [0, 8], sizes = [24, 8], strides = [1, 1]} : vector<24x32xf32> to vector<24x8xf32>
    %cst_292 = arith.constant dense<0.000000e+00> : vector<8x8xf32>
    %482 = tpu.matmul %478, %481, %cst_292 {dimension_numbers = #tpu.dot_dimension_numbers<[1], [0], [0], [1], [0, 0, 1, 1], [], []>} : vector<8x24xf32>, vector<24x8xf32>, vector<8x8xf32> -> vector<8x8xf32>
    %cst_293 = arith.constant 1.000000e+00 : f32
    %483 = vector.broadcast %cst_293 : f32 to vector<8x1xf32>
    %484 = arith.divf %483, %480 : vector<8x1xf32>
    %485 = vector.broadcast %484 : vector<8x1xf32> to vector<8x8xf32>
    %486 = arith.mulf %482, %485 : vector<8x8xf32>
    %c8_294 = arith.constant 8 : index
    %c0_295 = arith.constant 0 : index
    %487 = vector.load %arg9[%c8_294, %c0_295] : memref<16x32xf32, #tpu.memory_space<vmem>>, vector<8x32xf32>
    %c8_296 = arith.constant 8 : index
    %c224_297 = arith.constant 224 : index
    %488 = vector.load %arg3[%c8_296, %c224_297] : memref<32x320xf32, #tpu.memory_space<vmem>>, vector<8x32xf32>
    %cst_298 = arith.constant dense<0.000000e+00> : vector<8x32xf32>
    %489 = tpu.matmul %486, %488, %cst_298 {dimension_numbers = #tpu.dot_dimension_numbers<[1], [0], [0], [1], [0, 0, 1, 1], [], []>} : vector<8x8xf32>, vector<8x32xf32>, vector<8x32xf32> -> vector<8x32xf32>
    %490 = arith.addf %487, %489 : vector<8x32xf32>
    %c8_299 = arith.constant 8 : index
    %c0_300 = arith.constant 0 : index
    %491 = vector.load %arg9[%c8_299, %c0_300] : memref<16x32xf32, #tpu.memory_space<vmem>>, vector<8x32xf32>
    tpu.vector_store %arg9[%c8_299, %c0_300], %490 {strides = array<i32>} : memref<16x32xf32, #tpu.memory_space<vmem>>, vector<8x32xf32>,
    %492 = vector.extract_strided_slice %437 {offsets = [0, 16], sizes = [8, 8], strides = [1, 1]} : vector<8x32xf32> to vector<8x8xf32>
    %493 = vector.extract_strided_slice %439 {offsets = [0, 16], sizes = [24, 8], strides = [1, 1]} : vector<24x32xf32> to vector<24x8xf32>
    %cst_301 = arith.constant dense<0.000000e+00> : vector<8x24xf32>
    %494 = tpu.matmul %492, %493, %cst_301 {dimension_numbers = #tpu.dot_dimension_numbers<[1], [1], [0], [0], [0, 0, 1, 0], [], []>} : vector<8x8xf32>, vector<24x8xf32>, vector<8x24xf32> -> vector<8x24xf32>
    %cst_302 = arith.constant -1.000000e+30 : f32
    %495 = vector.shape_cast %331 : vector<1x24xi1> to vector<1x24xi1>
    %496 = vector.broadcast %495 : vector<1x24xi1> to vector<8x24xi1>
    %497 = vector.broadcast %cst_302 : f32 to vector<8x24xf32>
    %498 = arith.select %496, %494, %497 : vector<8x24xi1>, vector<8x24xf32>
    %cst_303 = arith.constant dense<0xFF800000> : vector<8xf32>
    %499 = vector.multi_reduction <maximumf>, %498, %cst_303 [1] : vector<8x24xf32> to vector<8xf32>
    %500 = vector.shape_cast %499 : vector<8xf32> to vector<8x1xf32>
    %501 = vector.broadcast %500 : vector<8x1xf32> to vector<8x24xf32>
    %502 = arith.subf %498, %501 : vector<8x24xf32>
    %503 = math.exp %502 : vector<8x24xf32>
    %cst_304 = arith.constant dense<0.000000e+00> : vector<8xf32>
    %504 = vector.multi_reduction <add>, %503, %cst_304 [1] : vector<8x24xf32> to vector<8xf32>
    %505 = vector.shape_cast %504 : vector<8xf32> to vector<8x1xf32>
    %506 = vector.extract_strided_slice %441 {offsets = [0, 16], sizes = [24, 8], strides = [1, 1]} : vector<24x32xf32> to vector<24x8xf32>
    %cst_305 = arith.constant dense<0.000000e+00> : vector<8x8xf32>
    %507 = tpu.matmul %503, %506, %cst_305 {dimension_numbers = #tpu.dot_dimension_numbers<[1], [0], [0], [1], [0, 0, 1, 1], [], []>} : vector<8x24xf32>, vector<24x8xf32>, vector<8x8xf32> -> vector<8x8xf32>
    %cst_306 = arith.constant 1.000000e+00 : f32
    %508 = vector.broadcast %cst_306 : f32 to vector<8x1xf32>
    %509 = arith.divf %508, %505 : vector<8x1xf32>
    %510 = vector.broadcast %509 : vector<8x1xf32> to vector<8x8xf32>
    %511 = arith.mulf %507, %510 : vector<8x8xf32>
    %c8_307 = arith.constant 8 : index
    %c0_308 = arith.constant 0 : index
    %512 = vector.load %arg9[%c8_307, %c0_308] : memref<16x32xf32, #tpu.memory_space<vmem>>, vector<8x32xf32>
    %c16_309 = arith.constant 16 : index
    %c224_310 = arith.constant 224 : index
    %513 = vector.load %arg3[%c16_309, %c224_310] : memref<32x320xf32, #tpu.memory_space<vmem>>, vector<8x32xf32>
    %cst_311 = arith.constant dense<0.000000e+00> : vector<8x32xf32>
    %514 = tpu.matmul %511, %513, %cst_311 {dimension_numbers = #tpu.dot_dimension_numbers<[1], [0], [0], [1], [0, 0, 1, 1], [], []>} : vector<8x8xf32>, vector<8x32xf32>, vector<8x32xf32> -> vector<8x32xf32>
    %515 = arith.addf %512, %514 : vector<8x32xf32>
    %c8_312 = arith.constant 8 : index
    %c0_313 = arith.constant 0 : index
    %516 = vector.load %arg9[%c8_312, %c0_313] : memref<16x32xf32, #tpu.memory_space<vmem>>, vector<8x32xf32>
    tpu.vector_store %arg9[%c8_312, %c0_313], %515 {strides = array<i32>} : memref<16x32xf32, #tpu.memory_space<vmem>>, vector<8x32xf32>,
    %517 = vector.extract_strided_slice %437 {offsets = [0, 24], sizes = [8, 8], strides = [1, 1]} : vector<8x32xf32> to vector<8x8xf32>
    %518 = vector.extract_strided_slice %439 {offsets = [0, 24], sizes = [24, 8], strides = [1, 1]} : vector<24x32xf32> to vector<24x8xf32>
    %cst_314 = arith.constant dense<0.000000e+00> : vector<8x24xf32>
    %519 = tpu.matmul %517, %518, %cst_314 {dimension_numbers = #tpu.dot_dimension_numbers<[1], [1], [0], [0], [0, 0, 1, 0], [], []>} : vector<8x8xf32>, vector<24x8xf32>, vector<8x24xf32> -> vector<8x24xf32>
    %cst_315 = arith.constant -1.000000e+30 : f32
    %520 = vector.shape_cast %331 : vector<1x24xi1> to vector<1x24xi1>
    %521 = vector.broadcast %520 : vector<1x24xi1> to vector<8x24xi1>
    %522 = vector.broadcast %cst_315 : f32 to vector<8x24xf32>
    %523 = arith.select %521, %519, %522 : vector<8x24xi1>, vector<8x24xf32>
    %cst_316 = arith.constant dense<0xFF800000> : vector<8xf32>
    %524 = vector.multi_reduction <maximumf>, %523, %cst_316 [1] : vector<8x24xf32> to vector<8xf32>
    %525 = vector.shape_cast %524 : vector<8xf32> to vector<8x1xf32>
    %526 = vector.broadcast %525 : vector<8x1xf32> to vector<8x24xf32>
    %527 = arith.subf %523, %526 : vector<8x24xf32>
    %528 = math.exp %527 : vector<8x24xf32>
    %cst_317 = arith.constant dense<0.000000e+00> : vector<8xf32>
    %529 = vector.multi_reduction <add>, %528, %cst_317 [1] : vector<8x24xf32> to vector<8xf32>
    %530 = vector.shape_cast %529 : vector<8xf32> to vector<8x1xf32>
    %531 = vector.extract_strided_slice %441 {offsets = [0, 24], sizes = [24, 8], strides = [1, 1]} : vector<24x32xf32> to vector<24x8xf32>
    %cst_318 = arith.constant dense<0.000000e+00> : vector<8x8xf32>
    %532 = tpu.matmul %528, %531, %cst_318 {dimension_numbers = #tpu.dot_dimension_numbers<[1], [0], [0], [1], [0, 0, 1, 1], [], []>} : vector<8x24xf32>, vector<24x8xf32>, vector<8x8xf32> -> vector<8x8xf32>
    %cst_319 = arith.constant 1.000000e+00 : f32
    %533 = vector.broadcast %cst_319 : f32 to vector<8x1xf32>
    %534 = arith.divf %533, %530 : vector<8x1xf32>
    %535 = vector.broadcast %534 : vector<8x1xf32> to vector<8x8xf32>
    %536 = arith.mulf %532, %535 : vector<8x8xf32>
    %c8_320 = arith.constant 8 : index
    %c0_321 = arith.constant 0 : index
    %537 = vector.load %arg9[%c8_320, %c0_321] : memref<16x32xf32, #tpu.memory_space<vmem>>, vector<8x32xf32>
    %c24_322 = arith.constant 24 : index
    %c224_323 = arith.constant 224 : index
    %538 = vector.load %arg3[%c24_322, %c224_323] : memref<32x320xf32, #tpu.memory_space<vmem>>, vector<8x32xf32>
    %cst_324 = arith.constant dense<0.000000e+00> : vector<8x32xf32>
    %539 = tpu.matmul %536, %538, %cst_324 {dimension_numbers = #tpu.dot_dimension_numbers<[1], [0], [0], [1], [0, 0, 1, 1], [], []>} : vector<8x8xf32>, vector<8x32xf32>, vector<8x32xf32> -> vector<8x32xf32>
    %540 = arith.addf %537, %539 : vector<8x32xf32>
    %c8_325 = arith.constant 8 : index
    %c0_326 = arith.constant 0 : index
    %541 = vector.load %arg9[%c8_325, %c0_326] : memref<16x32xf32, #tpu.memory_space<vmem>>, vector<8x32xf32>
    tpu.vector_store %arg9[%c8_325, %c0_326], %540 {strides = array<i32>} : memref<16x32xf32, #tpu.memory_space<vmem>>, vector<8x32xf32>,
    %c0_327 = arith.constant 0 : index
    %c0_328 = arith.constant 0 : index
    %542 = vector.load %arg9[%c0_327, %c0_328] : memref<16x32xf32, #tpu.memory_space<vmem>>, vector<16x32xf32>
    %543 = arith.addf %285, %542 : vector<16x32xf32>
    %c0_329 = arith.constant 0 : index
    %c352 = arith.constant 352 : index
    %544 = vector.load %arg5[%c0_329, %c352] : memref<1x672xf32, #tpu.memory_space<vmem>>, vector<1x32xf32>
    %545 = vector.broadcast %544 : vector<1x32xf32> to vector<16x32xf32>
    %546 = arith.addf %543, %545 : vector<16x32xf32>
    %c0_330 = arith.constant 0 : index
    %c448 = arith.constant 448 : index
    %547 = vector.load %arg5[%c0_330, %c448] : memref<1x672xf32, #tpu.memory_space<vmem>>, vector<1x32xf32>
    %c0_331 = arith.constant 0 : index
    %c480 = arith.constant 480 : index
    %548 = vector.load %arg5[%c0_331, %c480] : memref<1x672xf32, #tpu.memory_space<vmem>>, vector<1x32xf32>
    %cst_332 = arith.constant dense<0.000000e+00> : vector<16xf32>
    %549 = vector.multi_reduction <add>, %546, %cst_332 [1] : vector<16x32xf32> to vector<16xf32>
    %550 = vector.shape_cast %549 : vector<16xf32> to vector<16x1xf32>
    %cst_333 = arith.constant 3.200000e+01 : f32
    %551 = vector.broadcast %cst_333 : f32 to vector<16x1xf32>
    %552 = arith.divf %550, %551 : vector<16x1xf32>
    %553 = vector.broadcast %552 : vector<16x1xf32> to vector<16x32xf32>
    %554 = arith.subf %546, %553 : vector<16x32xf32>
    %555 = arith.mulf %554, %554 : vector<16x32xf32>
    %cst_334 = arith.constant dense<0.000000e+00> : vector<16xf32>
    %556 = vector.multi_reduction <add>, %555, %cst_334 [1] : vector<16x32xf32> to vector<16xf32>
    %557 = vector.shape_cast %556 : vector<16xf32> to vector<16x1xf32>
    %cst_335 = arith.constant 3.200000e+01 : f32
    %558 = vector.broadcast %cst_335 : f32 to vector<16x1xf32>
    %559 = arith.divf %557, %558 : vector<16x1xf32>
    %cst_336 = arith.constant 9.99999974E-6 : f32
    %560 = vector.broadcast %cst_336 : f32 to vector<16x1xf32>
    %561 = arith.addf %559, %560 : vector<16x1xf32>
    %562 = math.rsqrt %561 : vector<16x1xf32>
    %563 = vector.broadcast %562 : vector<16x1xf32> to vector<16x32xf32>
    %564 = arith.mulf %554, %563 : vector<16x32xf32>
    %565 = vector.broadcast %547 : vector<1x32xf32> to vector<16x32xf32>
    %566 = arith.mulf %564, %565 : vector<16x32xf32>
    %567 = vector.broadcast %548 : vector<1x32xf32> to vector<16x32xf32>
    %568 = arith.addf %566, %567 : vector<16x32xf32>
    %c0_337 = arith.constant 0 : index
    %c256 = arith.constant 256 : index
    %569 = vector.load %arg3[%c0_337, %c256] : memref<32x320xf32, #tpu.memory_space<vmem>>, vector<32x64xf32>
    %cst_338 = arith.constant dense<0.000000e+00> : vector<16x64xf32>
    %570 = tpu.matmul %568, %569, %cst_338 {dimension_numbers = #tpu.dot_dimension_numbers<[1], [0], [0], [1], [0, 0, 1, 1], [], []>} : vector<16x32xf32>, vector<32x64xf32>, vector<16x64xf32> -> vector<16x64xf32>
    %c0_339 = arith.constant 0 : index
    %c576 = arith.constant 576 : index
    %571 = vector.load %arg5[%c0_339, %c576] : memref<1x672xf32, #tpu.memory_space<vmem>>, vector<1x64xf32>
    %572 = vector.broadcast %571 : vector<1x64xf32> to vector<16x64xf32>
    %573 = arith.addf %570, %572 : vector<16x64xf32>
    %cst_340 = arith.constant 0.000000e+00 : f32
    %574 = vector.broadcast %cst_340 : f32 to vector<16x64xf32>
    %575 = arith.maximumf %573, %574 : vector<16x64xf32>
    %c0_341 = arith.constant 0 : index
    %c0_342 = arith.constant 0 : index
    %576 = vector.load %arg4[%c0_341, %c0_342] : memref<64x32xf32, #tpu.memory_space<vmem>>, vector<64x32xf32>
    %cst_343 = arith.constant dense<0.000000e+00> : vector<16x32xf32>
    %577 = tpu.matmul %575, %576, %cst_343 {dimension_numbers = #tpu.dot_dimension_numbers<[1], [0], [0], [1], [0, 0, 1, 1], [], []>} : vector<16x64xf32>, vector<64x32xf32>, vector<16x32xf32> -> vector<16x32xf32>
    %c0_344 = arith.constant 0 : index
    %c640 = arith.constant 640 : index
    %578 = vector.load %arg5[%c0_344, %c640] : memref<1x672xf32, #tpu.memory_space<vmem>>, vector<1x32xf32>
    %579 = vector.broadcast %578 : vector<1x32xf32> to vector<16x32xf32>
    %580 = arith.addf %577, %579 : vector<16x32xf32>
    %581 = arith.addf %568, %580 : vector<16x32xf32>
    %c0_345 = arith.constant 0 : index
    %c512 = arith.constant 512 : index
    %582 = vector.load %arg5[%c0_345, %c512] : memref<1x672xf32, #tpu.memory_space<vmem>>, vector<1x32xf32>
    %c0_346 = arith.constant 0 : index
    %c544 = arith.constant 544 : index
    %583 = vector.load %arg5[%c0_346, %c544] : memref<1x672xf32, #tpu.memory_space<vmem>>, vector<1x32xf32>
    %cst_347 = arith.constant dense<0.000000e+00> : vector<16xf32>
    %584 = vector.multi_reduction <add>, %581, %cst_347 [1] : vector<16x32xf32> to vector<16xf32>
    %585 = vector.shape_cast %584 : vector<16xf32> to vector<16x1xf32>
    %cst_348 = arith.constant 3.200000e+01 : f32
    %586 = vector.broadcast %cst_348 : f32 to vector<16x1xf32>
    %587 = arith.divf %585, %586 : vector<16x1xf32>
    %588 = vector.broadcast %587 : vector<16x1xf32> to vector<16x32xf32>
    %589 = arith.subf %581, %588 : vector<16x32xf32>
    %590 = arith.mulf %589, %589 : vector<16x32xf32>
    %cst_349 = arith.constant dense<0.000000e+00> : vector<16xf32>
    %591 = vector.multi_reduction <add>, %590, %cst_349 [1] : vector<16x32xf32> to vector<16xf32>
    %592 = vector.shape_cast %591 : vector<16xf32> to vector<16x1xf32>
    %cst_350 = arith.constant 3.200000e+01 : f32
    %593 = vector.broadcast %cst_350 : f32 to vector<16x1xf32>
    %594 = arith.divf %592, %593 : vector<16x1xf32>
    %cst_351 = arith.constant 9.99999974E-6 : f32
    %595 = vector.broadcast %cst_351 : f32 to vector<16x1xf32>
    %596 = arith.addf %594, %595 : vector<16x1xf32>
    %597 = math.rsqrt %596 : vector<16x1xf32>
    %598 = vector.broadcast %597 : vector<16x1xf32> to vector<16x32xf32>
    %599 = arith.mulf %589, %598 : vector<16x32xf32>
    %600 = vector.broadcast %582 : vector<1x32xf32> to vector<16x32xf32>
    %601 = arith.mulf %599, %600 : vector<16x32xf32>
    %602 = vector.broadcast %583 : vector<1x32xf32> to vector<16x32xf32>
    %603 = arith.addf %601, %602 : vector<16x32xf32>
    %c0_352 = arith.constant 0 : index
    %c0_353 = arith.constant 0 : index
    %604 = vector.load %arg6[%c0_352, %c0_353] : memref<16x32xf32, #tpu.memory_space<vmem>>, vector<16x32xf32>
    tpu.vector_store %arg6[%c0_352, %c0_353], %603 {strides = array<i32>} : memref<16x32xf32, #tpu.memory_space<vmem>>, vector<16x32xf32>,
    return
  }
  func.func @transform_0(%arg0: i32) -> (i32, i32) {
    %c0_i32 = arith.constant 0 : i32
    %c0_i32_0 = arith.constant 0 : i32
    %c0_i32_1 = arith.constant 0 : i32
    return %c0_i32, %c0_i32_0 : i32, i32
  }
  func.func @transform_1(%arg0: i32) -> (i32, i32) {
    %c0_i32 = arith.constant 0 : i32
    %c0_i32_0 = arith.constant 0 : i32
    %c0_i32_1 = arith.constant 0 : i32
    return %c0_i32, %c0_i32_0 : i32, i32
  }
  func.func @transform_2(%arg0: i32) -> (i32, i32) {
    %c0_i32 = arith.constant 0 : i32
    %c0_i32_0 = arith.constant 0 : i32
    %c0_i32_1 = arith.constant 0 : i32
    return %c0_i32, %c0_i32_0 : i32, i32
  }
  func.func @transform_3(%arg0: i32) -> (i32, i32) {
    %c0_i32 = arith.constant 0 : i32
    %c0_i32_0 = arith.constant 0 : i32
    %c0_i32_1 = arith.constant 0 : i32
    return %c0_i32, %c0_i32_0 : i32, i32
  }
  func.func @transform_4(%arg0: i32) -> (i32, i32) {
    %c0_i32 = arith.constant 0 : i32
    %c0_i32_0 = arith.constant 0 : i32
    %c0_i32_1 = arith.constant 0 : i32
    return %c0_i32, %c0_i32_0 : i32, i32
  }
  func.func @transform_5(%arg0: i32) -> (i32, i32) {
    %c0_i32 = arith.constant 0 : i32
    %c0_i32_0 = arith.constant 0 : i32
    %c0_i32_1 = arith.constant 0 : i32
    return %c0_i32, %c0_i32_0 : i32, i32
  }
}

</mosaic_0001>

<llo_original>
// kernel: decoder_layer_pallas.1
$region0: #{decoder_layer_pallas.1}
  #allocation0 [shape = 'u32[]', space=smem, size = 0x4, offset = 0x4, fixed_abs, tag = 'smem constant byte address 0x4 - core index']
  #allocation1 [shape = 'u32[144,128]{1,0:T(1,128)}', space=vmem, size = 0x12000, scoped, tag = 'internal scratch']
  #allocation2 [shape = 'f32[2,24,32]{2,1,0:T(8,128)}', space=vmem, size = 0x6000, scoped, tag = 'scratch operand']
  #allocation3 [shape = 'f32[2,24,32]{2,1,0:T(8,128)}', space=vmem, size = 0x6000, scoped, tag = 'scratch operand']
  #allocation4 [shape = 'f32[16,32]{1,0:T(8,128)}', space=vmem, size = 0x2000, scoped, tag = 'scratch operand']
  %s0 = inlined_call_operand.hbm [shape: f32[16,32], index: 0, kind: input, shape index: {}]
  %s1 = inlined_call_operand.hbm [shape: f32[32,32], index: 1, kind: input, shape index: {}]
  %s2 = inlined_call_operand.vmem [shape: f32[32,320], index: 2, kind: input, shape index: {}]
  %s3 = inlined_call_operand.vmem [shape: f32[64,32], index: 3, kind: input, shape index: {}]
  %s4 = inlined_call_operand.vmem [shape: f32[1,672], index: 4, kind: input, shape index: {}]
  %s5 = inlined_call_operand.hbm [shape: f32[16,32], index: 5, kind: output, shape index: {}]
  %s6 = sld [smem:[#allocation0]]
  $region38: #{decoder_layer_pallas.1} parent=0
    _
  %s8 = ssub.s32 1, %s6
  %s9 = scalar_select 0, %s8, %s6
  $region1: #{decoder_layer_pallas.1} parent=0
    #allocation5 [shape = 'u8[8192]{0}', space=vmem, size = 0x2000, scoped, tag = 'input window, operand 0, single buffered']
    #allocation6 [shape = 's32[1]{0}', space=sflag, size = 0x4, scoped, tag = 'scoped memory for decoder_layer_pallas.1']
    #allocation7 [shape = 's32[1]{0}', space=sflag, size = 0x4, scoped, tag = 'scoped memory for decoder_layer_pallas.1']
    #allocation8 [shape = 'u8[16384]{0}', space=vmem, size = 0x4000, scoped, tag = 'input window, operand 1, single buffered']
    #allocation9 [shape = 's32[1]{0}', space=sflag, size = 0x4, scoped, tag = 'scoped memory for decoder_layer_pallas.1']
    #allocation10 [shape = 'u8[8192]{0}', space=vmem, size = 0x2000, scoped, tag = 'output window, operand 0, single buffered']
    %10 = vsyncpa [#allocation6], 0
    %11 = vsyncpa [#allocation9], 0
    %12 = vsyncpa [#allocation7], 0
    // Predicated region
    $region2: #{decoder_layer_pallas.1} parent=1 // pred_check
      _
    $region3: #{decoder_layer_pallas.1} parent=1 // pred_check_branch
      %14 = sbr.rel (0) target = $region5
    $region4: #{decoder_layer_pallas.1} parent=1 // pred_region
      %s16 = ssub.s32 256, 256
      %17 = vsyncadd [#allocation6], %s16
      %s18 = sshll.u32 [#allocation5], 4
      %s19 = int_to_ptr.vmem [resolvable:$true] %s18
      %24 = dma.hbm_to_vmem [thread:$0]  %s0, 256, %s19, [#allocation6], 128, 128, 8
    $region5: #{decoder_layer_pallas.1} parent=1 // pred_fallthru
      _
    // Predicated region
    $region6: #{decoder_layer_pallas.1} parent=1 // pred_check
      _
    $region7: #{decoder_layer_pallas.1} parent=1 // pred_check_branch
      %26 = sbr.rel (0) target = $region9
    $region8: #{decoder_layer_pallas.1} parent=1 // pred_region
      %s28 = ssub.s32 512, 512
      %29 = vsyncadd [#allocation9], %s28
      %s30 = sshll.u32 [#allocation8], 4
      %s31 = int_to_ptr.vmem [resolvable:$true] %s30
      %36 = dma.hbm_to_vmem [thread:$0]  %s1, 512, %s31, [#allocation9], 128, 128, 8
    $region9: #{decoder_layer_pallas.1} parent=1 // pred_fallthru
      _
    // Predicated region
    $region10: #{decoder_layer_pallas.1} parent=1 // pred_check
      _
    $region11: #{decoder_layer_pallas.1} parent=1 // pred_check_branch
      %38 = sbr.rel (0) target = $region13
    $region12: #{decoder_layer_pallas.1} parent=1 // pred_region
      _
    $region13: #{decoder_layer_pallas.1} parent=1 // pred_fallthru
      _
    // Predicated region
    $region14: #{decoder_layer_pallas.1} parent=1 // pred_check
      _
    $region15: #{decoder_layer_pallas.1} parent=1 // pred_check_branch
      %40 = sbr.rel (0) target = $region17
    $region16: #{decoder_layer_pallas.1} parent=1 // pred_region
      _
    $region17: #{decoder_layer_pallas.1} parent=1 // pred_fallthru
      _
    // Predicated region
    $region18: #{decoder_layer_pallas.1} parent=1 // pred_check
      _
    $region19: #{decoder_layer_pallas.1} parent=1 // pred_check_branch
      %42 = sbr.rel (0) target = $region21
    $region20: #{decoder_layer_pallas.1} parent=1 // pred_region
      _
    $region21: #{decoder_layer_pallas.1} parent=1 // pred_fallthru
      _
    // Predicated region
    $region22: #{decoder_layer_pallas.1} parent=1 // pred_check
      _
    $region23: #{decoder_layer_pallas.1} parent=1 // pred_check_branch
      %44 = sbr.rel (0) target = $region25
    $region24: #{decoder_layer_pallas.1} parent=1 // pred_region
      %45 = dma.done [#allocation6], 256
    $region25: #{decoder_layer_pallas.1} parent=1 // pred_fallthru
      _
    // Predicated region
    $region26: #{decoder_layer_pallas.1} parent=1 // pred_check
      _
    $region27: #{decoder_layer_pallas.1} parent=1 // pred_check_branch
      %47 = sbr.rel (0) target = $region29
    $region28: #{decoder_layer_pallas.1} parent=1 // pred_region
      %48 = dma.done [#allocation9], 512
    $region29: #{decoder_layer_pallas.1} parent=1 // pred_fallthru
      _
    %v49 = vld [vmem:[#allocation5] sm:$0xff]
    %v50 = vld [vmem:[#allocation5 + $0x8] sm:$0xff]
    %v51 = vld [vmem:[#allocation8] sm:$0xff]
    %v52 = vld [vmem:[#allocation8 + $0x8] sm:$0xff]
    %v53 = vld [vmem:[#allocation8 + $0x10] sm:$0xff]
    %v54 = vld [vmem:[#allocation8 + $0x18] sm:$0xff]
    %vm55 = vcmask 261120
    %56 = vst.msk [vmem:[#allocation2] sm:$0xff] %vm55, 0.0
    %57 = vst.msk [vmem:[#allocation2 + $0x8] sm:$0xff] %vm55, 0.0
    %58 = vst.msk [vmem:[#allocation2 + $0x10] sm:$0xff] %vm55, 0.0
    %59 = vst.msk [vmem:[#allocation2 + $0x18] sm:$0xff] %vm55, 0.0
    %60 = vst.msk [vmem:[#allocation2 + $0x20] sm:$0xff] %vm55, 0.0
    %61 = vst.msk [vmem:[#allocation2 + $0x28] sm:$0xff] %vm55, 0.0
    %62 = vst.msk [vmem:[#allocation3] sm:$0xff] %vm55, 0.0
    %63 = vst.msk [vmem:[#allocation3 + $0x8] sm:$0xff] %vm55, 0.0
    %64 = vst.msk [vmem:[#allocation3 + $0x10] sm:$0xff] %vm55, 0.0
    %65 = vst.msk [vmem:[#allocation3 + $0x18] sm:$0xff] %vm55, 0.0
    %66 = vst.msk [vmem:[#allocation3 + $0x20] sm:$0xff] %vm55, 0.0
    %67 = vst.msk [vmem:[#allocation3 + $0x28] sm:$0xff] %vm55, 0.0
    %v68 = vlaneseq
    %v69 = vand.u32 %v68, 127
    %v70 = vld [vmem:[%s2] sm:$0xff]
    %v71 = vld [vmem:[%s2 + $0x18] sm:$0xff]
    %v72 = vld [vmem:[%s2 + $0x30] sm:$0xff]
    %v73 = vld [vmem:[%s2 + $0x48] sm:$0xff]
    %v74 = vld [vmem:[%s4] sm:$0x1]
    %v76 = vlaneseq
    %v77 = vshrl.u32 %v76, 7
    %v78 = vsub.s32 0, %v77
    %v79 = vrot.slane %v74, %v78
    %v82 = vsel %vm55, %v49, 0
    %v85 = vsel %vm55, %v50, 0
    %87 = vmatprep.subr.mxu0 0.0
    %88 = vmatpush1.msra.mxu0 0.0
    %89 = vmatprep.subr.mxu0 0.0
    %90 = vmatpush1.msra.mxu0 0.0
    %91 = vmatprep.subr.mxu0 0.0
    %92 = vmatpush1.msra.mxu0 0.0
    %93 = vmatprep.subr.mxu0 0.0
    %94 = vmatpush1.msra.mxu0 0.0
    %95 = vmatprep.subr.mxu0 0.0
    %96 = vmatpush1.msra.mxu0 0.0
    %97 = vmatprep.subr.mxu0 0.0
    %98 = vmatpush1.msra.mxu0 0.0
    %99 = vmatprep.subr.mxu0 0.0
    %100 = vmatpush1.msra.mxu0 0.0
    %101 = vmatprep.subr.mxu0 0.0
    %102 = vmatpush1.msra.mxu0 0.0
    %103 = vmatprep.subr.mxu0 0.0
    %104 = vmatpush1.msra.mxu0 0.0
    %105 = vmatprep.subr.mxu0 0.0
    %106 = vmatpush1.msra.mxu0 0.0
    %107 = vmatprep.subr.mxu0 0.0
    %108 = vmatpush1.msra.mxu0 0.0
    %109 = vmatprep.subr.mxu0 0.0
    %110 = vmatpush1.msra.mxu0 0.0
    %111 = vmatprep.subr.mxu0 0.0
    %112 = vmatpush1.msra.mxu0 %v73
    %113 = vmatprep.subr.mxu0 0.0
    %114 = vmatpush1.msra.mxu0 %v72
    %115 = vmatprep.subr.mxu0 0.0
    %116 = vmatpush1.msra.mxu0 %v71
    %117 = vmatprep.subr.mxu0 0.0
    %118 = vmatpush1.msra.mxu0 %v70
    %119 = vmatprep.subr.mxu0 0.0
    %120 = vmatpush2.msra.mxu0 0.0
    %121 = vmatprep.subr.mxu0 0.0
    %122 = vmatpush2.msra.mxu0 0.0
    %123 = vmatprep.subr.mxu0 0.0
    %124 = vmatpush2.msra.mxu0 0.0
    %125 = vmatprep.subr.mxu0 0.0
    %126 = vmatpush2.msra.mxu0 0.0
    %127 = vmatprep.subr.mxu0 0.0
    %128 = vmatpush2.msra.mxu0 0.0
    %129 = vmatprep.subr.mxu0 0.0
    %130 = vmatpush2.msra.mxu0 0.0
    %131 = vmatprep.subr.mxu0 0.0
    %132 = vmatpush2.msra.mxu0 0.0
    %133 = vmatprep.subr.mxu0 0.0
    %134 = vmatpush2.msra.mxu0 0.0
    %135 = vmatprep.subr.mxu0 0.0
    %136 = vmatpush2.msra.mxu0 0.0
    %137 = vmatprep.subr.mxu0 0.0
    %138 = vmatpush2.msra.mxu0 0.0
    %139 = vmatprep.subr.mxu0 0.0
    %140 = vmatpush2.msra.mxu0 0.0
    %141 = vmatprep.subr.mxu0 0.0
    %142 = vmatpush2.msra.mxu0 0.0
    %143 = vmatprep.subr.mxu0 0.0
    %144 = vmatpush2.msra.mxu0 0.0
    %145 = vmatprep.subr.mxu0 0.0
    %146 = vmatpush2.msra.mxu0 0.0
    %147 = vmatprep.subr.mxu0 0.0
    %148 = vmatpush2.msra.mxu0 0.0
    %149 = vmatprep.subr.mxu0 0.0
    %150 = vmatpush2.msra.mxu0 0.0
    %151 = vmatprep.mubr.f32.mxu0 0.0
    %152 = vmatmul.mubr.f32.gmra.mxu0 %v82
    %v153 = vpop.f32.mrf.mxu0
    %v154 = vadd.f32 %v79, %v153
    %v155 = vpop.f32.mrf.mxu0
    %156 = vmatprep.mubr.f32.mxu0 0.0
    %157 = vmatmul.mubr.f32.gmra.mxu0 %v85
    %v158 = vpop.f32.mrf.mxu0
    %v159 = vadd.f32 %v79, %v158
    %v160 = vpop.f32.mrf.mxu0
    %161 = vdwg.mxu0
    %163 = vrot.lane.b32.xlu0 %v154, 96
    %v164 = vpop.permute.xlu0 %163
    %166 = vst.msk [vmem:[#allocation2] sm:$0xff] %vm55, %v164
    %167 = vrot.lane.b32.xlu0 %v154, 64
    %v168 = vpop.permute.xlu0 %167
    %170 = vst.msk [vmem:[#allocation3] sm:$0xff] %vm55, %v168
    %v171 = vld [vmem:[%s4] sm:$0x1]
    %v173 = vlaneseq
    %v174 = vshrl.u32 %v173, 7
    %v175 = vsub.s32 0, %v174
    %v176 = vrot.slane %v171, %v175
    %177 = vrot.lane.b32.xlu0 %v176, 32
    %v178 = vpop.permute.xlu0 %177
    %vm180 = vcmask 253952
    %181 = vst.msk [vmem:[#allocation2 + $0x8] sm:$0x1] %vm180, %v178
    %v182 = vld [vmem:[%s4 + $0x1] sm:$0x1]
    %183 = vst.msk [vmem:[#allocation3 + $0x8] sm:$0x1] %vm180, %v182
    %185 = vrot.lane.b32.xlu0 %v159, 96
    %v186 = vpop.permute.xlu0 %185
    %s188 = scalar_lea.vmem [#allocation2], 24
    %189 = vst.msk [vmem:[%s188] sm:$0xff] %vm55, %v186
    %190 = vrot.lane.b32.xlu0 %v159, 64
    %v191 = vpop.permute.xlu0 %190
    %s193 = scalar_lea.vmem [#allocation3], 24
    %194 = vst.msk [vmem:[%s193] sm:$0xff] %vm55, %v191
    %v195 = vld [vmem:[%s4] sm:$0x1]
    %v197 = vlaneseq
    %v198 = vshrl.u32 %v197, 7
    %v199 = vsub.s32 0, %v198
    %v200 = vrot.slane %v195, %v199
    %201 = vrot.lane.b32.xlu0 %v200, 32
    %v202 = vpop.permute.xlu0 %201
    %204 = vst.msk [vmem:[%s188 + $0x8] sm:$0x1] %vm180, %v202
    %v205 = vld [vmem:[%s4 + $0x1] sm:$0x1]
    %206 = vst.msk [vmem:[%s193 + $0x8] sm:$0x1] %vm180, %v205
    %207 = vst.msk [vmem:[#allocation4] sm:$0xff] %vm55, 0.0
    %208 = vst.msk [vmem:[#allocation4 + $0x8] sm:$0xff] %vm55, 0.0
    %vm209 = vcmp.le.s32.totalorder %v69, 8
    %v210 = vld [vmem:[#allocation2] sm:$0xff]
    %v211 = vld [vmem:[#allocation2 + $0x8] sm:$0xff]
    %v212 = vld [vmem:[#allocation2 + $0x10] sm:$0xff]
    %v213 = vld [vmem:[#allocation3] sm:$0xff]
    %v214 = vld [vmem:[#allocation3 + $0x8] sm:$0xff]
    %v215 = vld [vmem:[#allocation3 + $0x10] sm:$0xff]
    %vm216 = vcmask 64512
    %v217 = vsel %vm216, %v154, 0
    %v220 = vsel %vm216, %v210, 0
    %v223 = vsel %vm216, %v211, 0
    %v226 = vsel %vm216, %v212, 0
    %228 = vmatprep.subr.mxu0 0.0
    %229 = vmatpush1.xpose.msra.mxu0 0.0
    %230 = vmatprep.subr.mxu0 0.0
    %231 = vmatpush1.xpose.msra.mxu0 0.0
    %232 = vmatprep.subr.mxu0 0.0
    %233 = vmatpush1.xpose.msra.mxu0 0.0
    %234 = vmatprep.subr.mxu0 0.0
    %235 = vmatpush1.xpose.msra.mxu0 0.0
    %236 = vmatprep.subr.mxu0 0.0
    %237 = vmatpush1.xpose.msra.mxu0 0.0
    %238 = vmatprep.subr.mxu0 0.0
    %239 = vmatpush1.xpose.msra.mxu0 0.0
    %240 = vmatprep.subr.mxu0 0.0
    %241 = vmatpush1.xpose.msra.mxu0 0.0
    %242 = vmatprep.subr.mxu0 0.0
    %243 = vmatpush1.xpose.msra.mxu0 0.0
    %244 = vmatprep.subr.mxu0 0.0
    %245 = vmatpush1.xpose.msra.mxu0 0.0
    %246 = vmatprep.subr.mxu0 0.0
    %247 = vmatpush1.xpose.msra.mxu0 0.0
    %248 = vmatprep.subr.mxu0 0.0
    %249 = vmatpush1.xpose.msra.mxu0 0.0
    %250 = vmatprep.subr.mxu0 0.0
    %251 = vmatpush1.xpose.msra.mxu0 0.0
    %252 = vmatprep.subr.mxu0 0.0
    %253 = vmatpush1.xpose.msra.mxu0 0.0
    %254 = vmatprep.subr.mxu0 0.0
    %255 = vmatpush1.xpose.msra.mxu0 %v226
    %256 = vmatprep.subr.mxu0 0.0
    %257 = vmatpush1.xpose.msra.mxu0 %v223
    %258 = vmatprep.subr.mxu0 0.0
    %259 = vmatpush1.xpose.msra.mxu0 %v220
    %260 = vmatprep.subr.mxu0 0.0
    %261 = vmatpush2.xpose.msra.mxu0 0.0
    %262 = vmatprep.subr.mxu0 0.0
    %263 = vmatpush2.xpose.msra.mxu0 0.0
    %264 = vmatprep.subr.mxu0 0.0
    %265 = vmatpush2.xpose.msra.mxu0 0.0
    %266 = vmatprep.subr.mxu0 0.0
    %267 = vmatpush2.xpose.msra.mxu0 0.0
    %268 = vmatprep.subr.mxu0 0.0
    %269 = vmatpush2.xpose.msra.mxu0 0.0
    %270 = vmatprep.subr.mxu0 0.0
    %271 = vmatpush2.xpose.msra.mxu0 0.0
    %272 = vmatprep.subr.mxu0 0.0
    %273 = vmatpush2.xpose.msra.mxu0 0.0
    %274 = vmatprep.subr.mxu0 0.0
    %275 = vmatpush2.xpose.msra.mxu0 0.0
    %276 = vmatprep.subr.mxu0 0.0
    %277 = vmatpush2.xpose.msra.mxu0 0.0
    %278 = vmatprep.subr.mxu0 0.0
    %279 = vmatpush2.xpose.msra.mxu0 0.0
    %280 = vmatprep.subr.mxu0 0.0
    %281 = vmatpush2.xpose.msra.mxu0 0.0
    %282 = vmatprep.subr.mxu0 0.0
    %283 = vmatpush2.xpose.msra.mxu0 0.0
    %284 = vmatprep.subr.mxu0 0.0
    %285 = vmatpush2.xpose.msra.mxu0 0.0
    %286 = vmatprep.subr.mxu0 0.0
    %287 = vmatpush2.xpose.msra.mxu0 0.0
    %288 = vmatprep.subr.mxu0 0.0
    %289 = vmatpush2.xpose.msra.mxu0 0.0
    %290 = vmatprep.subr.mxu0 0.0
    %291 = vmatpush2.xpose.msra.mxu0 0.0
    %292 = vmatprep.mubr.f32.mxu0 0.0
    %293 = vmatmul.mubr.f32.gmra.mxu0 %v217
    %v294 = vpop.f32.mrf.mxu0
    %v295 = vadd.f32 0.0, %v294
    %v296 = vpop.f32.mrf.mxu0
    %297 = vdwg.mxu0
    %v298 = vsel %vm209, 1, 0
    %vm299 = vcmp.eq.s32.totalorder %v298, 1
    %v300 = vsel %vm299, %v295, -1e+30
    %vm301 = vcmask 195584
    %v302 = vsel %vm301, %v300, -inf
    %303 = vmax.xlane.f32.xlu0 %v302
    %v304 = vpop.xlane.xlu0 %303
    %v305 = vsub.f32 %v300, %v304
    %v306 = vmul.f32 %v305, 1.442695
    %v307 = vpow.pop %v306
    %v308 = vsel %vm301, %v307, 0.0
    %309 = vadd.xlane.f32.xlu0 %v308
    %v310 = vpop.xlane.xlu0 %309
    %v312 = vsel %vm301, %v307, 0
    %314 = vmatprep.subr.mxu0 0.0
    %315 = vmatpush1.msra.mxu0 0.0
    %316 = vmatprep.subr.mxu0 0.0
    %317 = vmatpush1.msra.mxu0 0.0
    %318 = vmatprep.subr.mxu0 0.0
    %319 = vmatpush1.msra.mxu0 0.0
    %320 = vmatprep.subr.mxu0 0.0
    %321 = vmatpush1.msra.mxu0 0.0
    %322 = vmatprep.subr.mxu0 0.0
    %323 = vmatpush1.msra.mxu0 0.0
    %324 = vmatprep.subr.mxu0 0.0
    %325 = vmatpush1.msra.mxu0 0.0
    %326 = vmatprep.subr.mxu0 0.0
    %327 = vmatpush1.msra.mxu0 0.0
    %328 = vmatprep.subr.mxu0 0.0
    %329 = vmatpush1.msra.mxu0 0.0
    %330 = vmatprep.subr.mxu0 0.0
    %331 = vmatpush1.msra.mxu0 0.0
    %332 = vmatprep.subr.mxu0 0.0
    %333 = vmatpush1.msra.mxu0 0.0
    %334 = vmatprep.subr.mxu0 0.0
    %335 = vmatpush1.msra.mxu0 0.0
    %336 = vmatprep.subr.mxu0 0.0
    %337 = vmatpush1.msra.mxu0 0.0
    %338 = vmatprep.subr.mxu0 0.0
    %339 = vmatpush1.msra.mxu0 0.0
    %340 = vmatprep.subr.mxu0 0.0
    %341 = vmatpush1.msra.mxu0 %v215
    %342 = vmatprep.subr.mxu0 0.0
    %343 = vmatpush1.msra.mxu0 %v214
    %344 = vmatprep.subr.mxu0 0.0
    %345 = vmatpush1.msra.mxu0 %v213
    %346 = vmatprep.subr.mxu0 0.0
    %347 = vmatpush2.msra.mxu0 0.0
    %348 = vmatprep.subr.mxu0 0.0
    %349 = vmatpush2.msra.mxu0 0.0
    %350 = vmatprep.subr.mxu0 0.0
    %351 = vmatpush2.msra.mxu0 0.0
    %352 = vmatprep.subr.mxu0 0.0
    %353 = vmatpush2.msra.mxu0 0.0
    %354 = vmatprep.subr.mxu0 0.0
    %355 = vmatpush2.msra.mxu0 0.0
    %356 = vmatprep.subr.mxu0 0.0
    %357 = vmatpush2.msra.mxu0 0.0
    %358 = vmatprep.subr.mxu0 0.0
    %359 = vmatpush2.msra.mxu0 0.0
    %360 = vmatprep.subr.mxu0 0.0
    %361 = vmatpush2.msra.mxu0 0.0
    %362 = vmatprep.subr.mxu0 0.0
    %363 = vmatpush2.msra.mxu0 0.0
    %364 = vmatprep.subr.mxu0 0.0
    %365 = vmatpush2.msra.mxu0 0.0
    %366 = vmatprep.subr.mxu0 0.0
    %367 = vmatpush2.msra.mxu0 0.0
    %368 = vmatprep.subr.mxu0 0.0
    %369 = vmatpush2.msra.mxu0 0.0
    %370 = vmatprep.subr.mxu0 0.0
    %371 = vmatpush2.msra.mxu0 0.0
    %372 = vmatprep.subr.mxu0 0.0
    %373 = vmatpush2.msra.mxu0 0.0
    %374 = vmatprep.subr.mxu0 0.0
    %375 = vmatpush2.msra.mxu0 0.0
    %376 = vmatprep.subr.mxu0 0.0
    %377 = vmatpush2.msra.mxu0 0.0
    %378 = vmatprep.mubr.f32.mxu0 0.0
    %379 = vmatmul.mubr.f32.gmra.mxu0 %v312
    %v380 = vpop.f32.mrf.mxu0
    %v381 = vadd.f32 0.0, %v380
    %v382 = vpop.f32.mrf.mxu0
    %383 = vdwg.mxu0
    %v384 = vrcp.pop %v310
    %v385 = vmul.f32 1.0, %v384
    %v386 = vmul.f32 %v381, %v385
    %v387 = vld [vmem:[#allocation4] sm:$0xff]
    %v388 = vld [vmem:[%s2] sm:$0xff]
    %390 = vrot.lane.b32.xlu0 %v388, 32
    %v391 = vpop.permute.xlu0 %390
    %v394 = vsel %vm216, %v386, 0
    %396 = vmatprep.subr.mxu0 0.0
    %397 = vmatpush1.msra.mxu0 0.0
    %398 = vmatprep.subr.mxu0 0.0
    %399 = vmatpush1.msra.mxu0 0.0
    %400 = vmatprep.subr.mxu0 0.0
    %401 = vmatpush1.msra.mxu0 0.0
    %402 = vmatprep.subr.mxu0 0.0
    %403 = vmatpush1.msra.mxu0 0.0
    %404 = vmatprep.subr.mxu0 0.0
    %405 = vmatpush1.msra.mxu0 0.0
    %406 = vmatprep.subr.mxu0 0.0
    %407 = vmatpush1.msra.mxu0 0.0
    %408 = vmatprep.subr.mxu0 0.0
    %409 = vmatpush1.msra.mxu0 0.0
    %410 = vmatprep.subr.mxu0 0.0
    %411 = vmatpush1.msra.mxu0 0.0
    %412 = vmatprep.subr.mxu0 0.0
    %413 = vmatpush1.msra.mxu0 0.0
    %414 = vmatprep.subr.mxu0 0.0
    %415 = vmatpush1.msra.mxu0 0.0
    %416 = vmatprep.subr.mxu0 0.0
    %417 = vmatpush1.msra.mxu0 0.0
    %418 = vmatprep.subr.mxu0 0.0
    %419 = vmatpush1.msra.mxu0 0.0
    %420 = vmatprep.subr.mxu0 0.0
    %421 = vmatpush1.msra.mxu0 0.0
    %422 = vmatprep.subr.mxu0 0.0
    %423 = vmatpush1.msra.mxu0 0.0
    %424 = vmatprep.subr.mxu0 0.0
    %425 = vmatpush1.msra.mxu0 0.0
    %426 = vmatprep.subr.mxu0 0.0
    %427 = vmatpush1.msra.mxu0 %v391
    %428 = vmatprep.subr.mxu0 0.0
    %429 = vmatpush2.msra.mxu0 0.0
    %430 = vmatprep.subr.mxu0 0.0
    %431 = vmatpush2.msra.mxu0 0.0
    %432 = vmatprep.subr.mxu0 0.0
    %433 = vmatpush2.msra.mxu0 0.0
    %434 = vmatprep.subr.mxu0 0.0
    %435 = vmatpush2.msra.mxu0 0.0
    %436 = vmatprep.subr.mxu0 0.0
    %437 = vmatpush2.msra.mxu0 0.0
    %438 = vmatprep.subr.mxu0 0.0
    %439 = vmatpush2.msra.mxu0 0.0
    %440 = vmatprep.subr.mxu0 0.0
    %441 = vmatpush2.msra.mxu0 0.0
    %442 = vmatprep.subr.mxu0 0.0
    %443 = vmatpush2.msra.mxu0 0.0
    %444 = vmatprep.subr.mxu0 0.0
    %445 = vmatpush2.msra.mxu0 0.0
    %446 = vmatprep.subr.mxu0 0.0
    %447 = vmatpush2.msra.mxu0 0.0
    %448 = vmatprep.subr.mxu0 0.0
    %449 = vmatpush2.msra.mxu0 0.0
    %450 = vmatprep.subr.mxu0 0.0
    %451 = vmatpush2.msra.mxu0 0.0
    %452 = vmatprep.subr.mxu0 0.0
    %453 = vmatpush2.msra.mxu0 0.0
    %454 = vmatprep.subr.mxu0 0.0
    %455 = vmatpush2.msra.mxu0 0.0
    %456 = vmatprep.subr.mxu0 0.0
    %457 = vmatpush2.msra.mxu0 0.0
    %458 = vmatprep.subr.mxu0 0.0
    %459 = vmatpush2.msra.mxu0 0.0
    %460 = vmatprep.mubr.f32.mxu0 0.0
    %461 = vmatmul.mubr.f32.gmra.mxu0 %v394
    %v462 = vpop.f32.mrf.mxu0
    %v463 = vadd.f32 0.0, %v462
    %v464 = vpop.f32.mrf.mxu0
    %465 = vdwg.mxu0
    %v466 = vadd.f32 %v387, %v463
    %467 = vst.msk [vmem:[#allocation4] sm:$0xff] %vm55, %v466
    %468 = vrot.lane.b32.xlu0 %v154, 120
    %v469 = vpop.permute.xlu0 %468
    %470 = vrot.lane.b32.xlu0 %v210, 120
    %v471 = vpop.permute.xlu0 %470
    %472 = vrot.lane.b32.xlu0 %v211, 120
    %v473 = vpop.permute.xlu0 %472
    %474 = vrot.lane.b32.xlu0 %v212, 120
    %v475 = vpop.permute.xlu0 %474
    %v476 = vsel %vm216, %v469, 0
    %v478 = vsel %vm216, %v471, 0
    %v480 = vsel %vm216, %v473, 0
    %v482 = vsel %vm216, %v475, 0
    %484 = vmatprep.subr.mxu0 0.0
    %485 = vmatpush1.xpose.msra.mxu0 0.0
    %486 = vmatprep.subr.mxu0 0.0
    %487 = vmatpush1.xpose.msra.mxu0 0.0
    %488 = vmatprep.subr.mxu0 0.0
    %489 = vmatpush1.xpose.msra.mxu0 0.0
    %490 = vmatprep.subr.mxu0 0.0
    %491 = vmatpush1.xpose.msra.mxu0 0.0
    %492 = vmatprep.subr.mxu0 0.0
    %493 = vmatpush1.xpose.msra.mxu0 0.0
    %494 = vmatprep.subr.mxu0 0.0
    %495 = vmatpush1.xpose.msra.mxu0 0.0
    %496 = vmatprep.subr.mxu0 0.0
    %497 = vmatpush1.xpose.msra.mxu0 0.0
    %498 = vmatprep.subr.mxu0 0.0
    %499 = vmatpush1.xpose.msra.mxu0 0.0
    %500 = vmatprep.subr.mxu0 0.0
    %501 = vmatpush1.xpose.msra.mxu0 0.0
    %502 = vmatprep.subr.mxu0 0.0
    %503 = vmatpush1.xpose.msra.mxu0 0.0
    %504 = vmatprep.subr.mxu0 0.0
    %505 = vmatpush1.xpose.msra.mxu0 0.0
    %506 = vmatprep.subr.mxu0 0.0
    %507 = vmatpush1.xpose.msra.mxu0 0.0
    %508 = vmatprep.subr.mxu0 0.0
    %509 = vmatpush1.xpose.msra.mxu0 0.0
    %510 = vmatprep.subr.mxu0 0.0
    %511 = vmatpush1.xpose.msra.mxu0 %v482
    %512 = vmatprep.subr.mxu0 0.0
    %513 = vmatpush1.xpose.msra.mxu0 %v480
    %514 = vmatprep.subr.mxu0 0.0
    %515 = vmatpush1.xpose.msra.mxu0 %v478
    %516 = vmatprep.subr.mxu0 0.0
    %517 = vmatpush2.xpose.msra.mxu0 0.0
    %518 = vmatprep.subr.mxu0 0.0
    %519 = vmatpush2.xpose.msra.mxu0 0.0
    %520 = vmatprep.subr.mxu0 0.0
    %521 = vmatpush2.xpose.msra.mxu0 0.0
    %522 = vmatprep.subr.mxu0 0.0
    %523 = vmatpush2.xpose.msra.mxu0 0.0
    %524 = vmatprep.subr.mxu0 0.0
    %525 = vmatpush2.xpose.msra.mxu0 0.0
    %526 = vmatprep.subr.mxu0 0.0
    %527 = vmatpush2.xpose.msra.mxu0 0.0
    %528 = vmatprep.subr.mxu0 0.0
    %529 = vmatpush2.xpose.msra.mxu0 0.0
    %530 = vmatprep.subr.mxu0 0.0
    %531 = vmatpush2.xpose.msra.mxu0 0.0
    %532 = vmatprep.subr.mxu0 0.0
    %533 = vmatpush2.xpose.msra.mxu0 0.0
    %534 = vmatprep.subr.mxu0 0.0
    %535 = vmatpush2.xpose.msra.mxu0 0.0
    %536 = vmatprep.subr.mxu0 0.0
    %537 = vmatpush2.xpose.msra.mxu0 0.0
    %538 = vmatprep.subr.mxu0 0.0
    %539 = vmatpush2.xpose.msra.mxu0 0.0
    %540 = vmatprep.subr.mxu0 0.0
    %541 = vmatpush2.xpose.msra.mxu0 0.0
    %542 = vmatprep.subr.mxu0 0.0
    %543 = vmatpush2.xpose.msra.mxu0 0.0
    %544 = vmatprep.subr.mxu0 0.0
    %545 = vmatpush2.xpose.msra.mxu0 0.0
    %546 = vmatprep.subr.mxu0 0.0
    %547 = vmatpush2.xpose.msra.mxu0 0.0
    %548 = vmatprep.mubr.f32.mxu0 0.0
    %549 = vmatmul.mubr.f32.gmra.mxu0 %v476
    %v550 = vpop.f32.mrf.mxu0
    %v551 = vadd.f32 0.0, %v550
    %v552 = vpop.f32.mrf.mxu0
    %553 = vdwg.mxu0
    %v554 = vsel %vm299, %v551, -1e+30
    %v555 = vsel %vm301, %v554, -inf
    %556 = vmax.xlane.f32.xlu0 %v555
    %v557 = vpop.xlane.xlu0 %556
    %v558 = vsub.f32 %v554, %v557
    %v559 = vmul.f32 %v558, 1.442695
    %v560 = vpow.pop %v559
    %v561 = vsel %vm301, %v560, 0.0
    %562 = vadd.xlane.f32.xlu0 %v561
    %v563 = vpop.xlane.xlu0 %562
    %567 = vrot.lane.b32.xlu0 %v213, 120
    %v568 = vpop.permute.xlu0 %567
    %569 = vrot.lane.b32.xlu0 %v214, 120
    %v570 = vpop.permute.xlu0 %569
    %571 = vrot.lane.b32.xlu0 %v215, 120
    %v572 = vpop.permute.xlu0 %571
    %v577 = vsel %vm301, %v560, 0
    %579 = vmatprep.subr.mxu0 0.0
    %580 = vmatpush1.msra.mxu0 0.0
    %581 = vmatprep.subr.mxu0 0.0
    %582 = vmatpush1.msra.mxu0 0.0
    %583 = vmatprep.subr.mxu0 0.0
    %584 = vmatpush1.msra.mxu0 0.0
    %585 = vmatprep.subr.mxu0 0.0
    %586 = vmatpush1.msra.mxu0 0.0
    %587 = vmatprep.subr.mxu0 0.0
    %588 = vmatpush1.msra.mxu0 0.0
    %589 = vmatprep.subr.mxu0 0.0
    %590 = vmatpush1.msra.mxu0 0.0
    %591 = vmatprep.subr.mxu0 0.0
    %592 = vmatpush1.msra.mxu0 0.0
    %593 = vmatprep.subr.mxu0 0.0
    %594 = vmatpush1.msra.mxu0 0.0
    %595 = vmatprep.subr.mxu0 0.0
    %596 = vmatpush1.msra.mxu0 0.0
    %597 = vmatprep.subr.mxu0 0.0
    %598 = vmatpush1.msra.mxu0 0.0
    %599 = vmatprep.subr.mxu0 0.0
    %600 = vmatpush1.msra.mxu0 0.0
    %601 = vmatprep.subr.mxu0 0.0
    %602 = vmatpush1.msra.mxu0 0.0
    %603 = vmatprep.subr.mxu0 0.0
    %604 = vmatpush1.msra.mxu0 0.0
    %605 = vmatprep.subr.mxu0 0.0
    %606 = vmatpush1.msra.mxu0 %v572
    %607 = vmatprep.subr.mxu0 0.0
    %608 = vmatpush1.msra.mxu0 %v570
    %609 = vmatprep.subr.mxu0 0.0
    %610 = vmatpush1.msra.mxu0 %v568
    %611 = vmatprep.subr.mxu0 0.0
    %612 = vmatpush2.msra.mxu0 0.0
    %613 = vmatprep.subr.mxu0 0.0
    %614 = vmatpush2.msra.mxu0 0.0
    %615 = vmatprep.subr.mxu0 0.0
    %616 = vmatpush2.msra.mxu0 0.0
    %617 = vmatprep.subr.mxu0 0.0
    %618 = vmatpush2.msra.mxu0 0.0
    %619 = vmatprep.subr.mxu0 0.0
    %620 = vmatpush2.msra.mxu0 0.0
    %621 = vmatprep.subr.mxu0 0.0
    %622 = vmatpush2.msra.mxu0 0.0
    %623 = vmatprep.subr.mxu0 0.0
    %624 = vmatpush2.msra.mxu0 0.0
    %625 = vmatprep.subr.mxu0 0.0
    %626 = vmatpush2.msra.mxu0 0.0
    %627 = vmatprep.subr.mxu0 0.0
    %628 = vmatpush2.msra.mxu0 0.0
    %629 = vmatprep.subr.mxu0 0.0
    %630 = vmatpush2.msra.mxu0 0.0
    %631 = vmatprep.subr.mxu0 0.0
    %632 = vmatpush2.msra.mxu0 0.0
    %633 = vmatprep.subr.mxu0 0.0
    %634 = vmatpush2.msra.mxu0 0.0
    %635 = vmatprep.subr.mxu0 0.0
    %636 = vmatpush2.msra.mxu0 0.0
    %637 = vmatprep.subr.mxu0 0.0
    %638 = vmatpush2.msra.mxu0 0.0
    %639 = vmatprep.subr.mxu0 0.0
    %640 = vmatpush2.msra.mxu0 0.0
    %641 = vmatprep.subr.mxu0 0.0
    %642 = vmatpush2.msra.mxu0 0.0
    %643 = vmatprep.mubr.f32.mxu0 0.0
    %644 = vmatmul.mubr.f32.gmra.mxu0 %v577
    %v645 = vpop.f32.mrf.mxu0
    %v646 = vadd.f32 0.0, %v645
    %v647 = vpop.f32.mrf.mxu0
    %648 = vdwg.mxu0
    %v649 = vrcp.pop %v563
    %v650 = vmul.f32 1.0, %v649
    %v651 = vmul.f32 %v646, %v650
    %v652 = vld [vmem:[#allocation4] sm:$0xff]
    %v653 = vld [vmem:[%s2 + $0x18] sm:$0xff]
    %655 = vrot.lane.b32.xlu0 %v653, 32
    %v656 = vpop.permute.xlu0 %655
    %v659 = vsel %vm216, %v651, 0
    %661 = vmatprep.subr.mxu0 0.0
    %662 = vmatpush1.msra.mxu0 0.0
    %663 = vmatprep.subr.mxu0 0.0
    %664 = vmatpush1.msra.mxu0 0.0
    %665 = vmatprep.subr.mxu0 0.0
    %666 = vmatpush1.msra.mxu0 0.0
    %667 = vmatprep.subr.mxu0 0.0
    %668 = vmatpush1.msra.mxu0 0.0
    %669 = vmatprep.subr.mxu0 0.0
    %670 = vmatpush1.msra.mxu0 0.0
    %671 = vmatprep.subr.mxu0 0.0
    %672 = vmatpush1.msra.mxu0 0.0
    %673 = vmatprep.subr.mxu0 0.0
    %674 = vmatpush1.msra.mxu0 0.0
    %675 = vmatprep.subr.mxu0 0.0
    %676 = vmatpush1.msra.mxu0 0.0
    %677 = vmatprep.subr.mxu0 0.0
    %678 = vmatpush1.msra.mxu0 0.0
    %679 = vmatprep.subr.mxu0 0.0
    %680 = vmatpush1.msra.mxu0 0.0
    %681 = vmatprep.subr.mxu0 0.0
    %682 = vmatpush1.msra.mxu0 0.0
    %683 = vmatprep.subr.mxu0 0.0
    %684 = vmatpush1.msra.mxu0 0.0
    %685 = vmatprep.subr.mxu0 0.0
    %686 = vmatpush1.msra.mxu0 0.0
    %687 = vmatprep.subr.mxu0 0.0
    %688 = vmatpush1.msra.mxu0 0.0
    %689 = vmatprep.subr.mxu0 0.0
    %690 = vmatpush1.msra.mxu0 0.0
    %691 = vmatprep.subr.mxu0 0.0
    %692 = vmatpush1.msra.mxu0 %v656
    %693 = vmatprep.subr.mxu0 0.0
    %694 = vmatpush2.msra.mxu0 0.0
    %695 = vmatprep.subr.mxu0 0.0
    %696 = vmatpush2.msra.mxu0 0.0
    %697 = vmatprep.subr.mxu0 0.0
    %698 = vmatpush2.msra.mxu0 0.0
    %699 = vmatprep.subr.mxu0 0.0
    %700 = vmatpush2.msra.mxu0 0.0
    %701 = vmatprep.subr.mxu0 0.0
    %702 = vmatpush2.msra.mxu0 0.0
    %703 = vmatprep.subr.mxu0 0.0
    %704 = vmatpush2.msra.mxu0 0.0
    %705 = vmatprep.subr.mxu0 0.0
    %706 = vmatpush2.msra.mxu0 0.0
    %707 = vmatprep.subr.mxu0 0.0
    %708 = vmatpush2.msra.mxu0 0.0
    %709 = vmatprep.subr.mxu0 0.0
    %710 = vmatpush2.msra.mxu0 0.0
    %711 = vmatprep.subr.mxu0 0.0
    %712 = vmatpush2.msra.mxu0 0.0
    %713 = vmatprep.subr.mxu0 0.0
    %714 = vmatpush2.msra.mxu0 0.0
    %715 = vmatprep.subr.mxu0 0.0
    %716 = vmatpush2.msra.mxu0 0.0
    %717 = vmatprep.subr.mxu0 0.0
    %718 = vmatpush2.msra.mxu0 0.0
    %719 = vmatprep.subr.mxu0 0.0
    %720 = vmatpush2.msra.mxu0 0.0
    %721 = vmatprep.subr.mxu0 0.0
    %722 = vmatpush2.msra.mxu0 0.0
    %723 = vmatprep.subr.mxu0 0.0
    %724 = vmatpush2.msra.mxu0 0.0
    %725 = vmatprep.mubr.f32.mxu0 0.0
    %726 = vmatmul.mubr.f32.gmra.mxu0 %v659
    %v727 = vpop.f32.mrf.mxu0
    %v728 = vadd.f32 0.0, %v727
    %v729 = vpop.f32.mrf.mxu0
    %730 = vdwg.mxu0
    %v731 = vadd.f32 %v652, %v728
    %732 = vst.msk [vmem:[#allocation4] sm:$0xff] %vm55, %v731
    %733 = vrot.lane.b32.xlu0 %v154, 112
    %v734 = vpop.permute.xlu0 %733
    %735 = vrot.lane.b32.xlu0 %v210, 112
    %v736 = vpop.permute.xlu0 %735
    %737 = vrot.lane.b32.xlu0 %v211, 112
    %v738 = vpop.permute.xlu0 %737
    %739 = vrot.lane.b32.xlu0 %v212, 112
    %v740 = vpop.permute.xlu0 %739
    %v741 = vsel %vm216, %v734, 0
    %v743 = vsel %vm216, %v736, 0
    %v745 = vsel %vm216, %v738, 0
    %v747 = vsel %vm216, %v740, 0
    %749 = vmatprep.subr.mxu0 0.0
    %750 = vmatpush1.xpose.msra.mxu0 0.0
    %751 = vmatprep.subr.mxu0 0.0
    %752 = vmatpush1.xpose.msra.mxu0 0.0
    %753 = vmatprep.subr.mxu0 0.0
    %754 = vmatpush1.xpose.msra.mxu0 0.0
    %755 = vmatprep.subr.mxu0 0.0
    %756 = vmatpush1.xpose.msra.mxu0 0.0
    %757 = vmatprep.subr.mxu0 0.0
    %758 = vmatpush1.xpose.msra.mxu0 0.0
    %759 = vmatprep.subr.mxu0 0.0
    %760 = vmatpush1.xpose.msra.mxu0 0.0
    %761 = vmatprep.subr.mxu0 0.0
    %762 = vmatpush1.xpose.msra.mxu0 0.0
    %763 = vmatprep.subr.mxu0 0.0
    %764 = vmatpush1.xpose.msra.mxu0 0.0
    %765 = vmatprep.subr.mxu0 0.0
    %766 = vmatpush1.xpose.msra.mxu0 0.0
    %767 = vmatprep.subr.mxu0 0.0
    %768 = vmatpush1.xpose.msra.mxu0 0.0
    %769 = vmatprep.subr.mxu0 0.0
    %770 = vmatpush1.xpose.msra.mxu0 0.0
    %771 = vmatprep.subr.mxu0 0.0
    %772 = vmatpush1.xpose.msra.mxu0 0.0
    %773 = vmatprep.subr.mxu0 0.0
    %774 = vmatpush1.xpose.msra.mxu0 0.0
    %775 = vmatprep.subr.mxu0 0.0
    %776 = vmatpush1.xpose.msra.mxu0 %v747
    %777 = vmatprep.subr.mxu0 0.0
    %778 = vmatpush1.xpose.msra.mxu0 %v745
    %779 = vmatprep.subr.mxu0 0.0
    %780 = vmatpush1.xpose.msra.mxu0 %v743
    %781 = vmatprep.subr.mxu0 0.0
    %782 = vmatpush2.xpose.msra.mxu0 0.0
    %783 = vmatprep.subr.mxu0 0.0
    %784 = vmatpush2.xpose.msra.mxu0 0.0
    %785 = vmatprep.subr.mxu0 0.0
    %786 = vmatpush2.xpose.msra.mxu0 0.0
    %787 = vmatprep.subr.mxu0 0.0
    %788 = vmatpush2.xpose.msra.mxu0 0.0
    %789 = vmatprep.subr.mxu0 0.0
    %790 = vmatpush2.xpose.msra.mxu0 0.0
    %791 = vmatprep.subr.mxu0 0.0
    %792 = vmatpush2.xpose.msra.mxu0 0.0
    %793 = vmatprep.subr.mxu0 0.0
    %794 = vmatpush2.xpose.msra.mxu0 0.0
    %795 = vmatprep.subr.mxu0 0.0
    %796 = vmatpush2.xpose.msra.mxu0 0.0
    %797 = vmatprep.subr.mxu0 0.0
    %798 = vmatpush2.xpose.msra.mxu0 0.0
    %799 = vmatprep.subr.mxu0 0.0
    %800 = vmatpush2.xpose.msra.mxu0 0.0
    %801 = vmatprep.subr.mxu0 0.0
    %802 = vmatpush2.xpose.msra.mxu0 0.0
    %803 = vmatprep.subr.mxu0 0.0
    %804 = vmatpush2.xpose.msra.mxu0 0.0
    %805 = vmatprep.subr.mxu0 0.0
    %806 = vmatpush2.xpose.msra.mxu0 0.0
    %807 = vmatprep.subr.mxu0 0.0
    %808 = vmatpush2.xpose.msra.mxu0 0.0
    %809 = vmatprep.subr.mxu0 0.0
    %810 = vmatpush2.xpose.msra.mxu0 0.0
    %811 = vmatprep.subr.mxu0 0.0
    %812 = vmatpush2.xpose.msra.mxu0 0.0
    %813 = vmatprep.mubr.f32.mxu0 0.0
    %814 = vmatmul.mubr.f32.gmra.mxu0 %v741
    %v815 = vpop.f32.mrf.mxu0
    %v816 = vadd.f32 0.0, %v815
    %v817 = vpop.f32.mrf.mxu0
    %818 = vdwg.mxu0
    %v819 = vsel %vm299, %v816, -1e+30
    %v820 = vsel %vm301, %v819, -inf
    %821 = vmax.xlane.f32.xlu0 %v820
    %v822 = vpop.xlane.xlu0 %821
    %v823 = vsub.f32 %v819, %v822
    %v824 = vmul.f32 %v823, 1.442695
    %v825 = vpow.pop %v824
    %v826 = vsel %vm301, %v825, 0.0
    %827 = vadd.xlane.f32.xlu0 %v826
    %v828 = vpop.xlane.xlu0 %827
    %829 = vrot.lane.b32.xlu0 %v213, 112
    %v830 = vpop.permute.xlu0 %829
    %831 = vrot.lane.b32.xlu0 %v214, 112
    %v832 = vpop.permute.xlu0 %831
    %833 = vrot.lane.b32.xlu0 %v215, 112
    %v834 = vpop.permute.xlu0 %833
    %v839 = vsel %vm301, %v825, 0
    %841 = vmatprep.subr.mxu0 0.0
    %842 = vmatpush1.msra.mxu0 0.0
    %843 = vmatprep.subr.mxu0 0.0
    %844 = vmatpush1.msra.mxu0 0.0
    %845 = vmatprep.subr.mxu0 0.0
    %846 = vmatpush1.msra.mxu0 0.0
    %847 = vmatprep.subr.mxu0 0.0
    %848 = vmatpush1.msra.mxu0 0.0
    %849 = vmatprep.subr.mxu0 0.0
    %850 = vmatpush1.msra.mxu0 0.0
    %851 = vmatprep.subr.mxu0 0.0
    %852 = vmatpush1.msra.mxu0 0.0
    %853 = vmatprep.subr.mxu0 0.0
    %854 = vmatpush1.msra.mxu0 0.0
    %855 = vmatprep.subr.mxu0 0.0
    %856 = vmatpush1.msra.mxu0 0.0
    %857 = vmatprep.subr.mxu0 0.0
    %858 = vmatpush1.msra.mxu0 0.0
    %859 = vmatprep.subr.mxu0 0.0
    %860 = vmatpush1.msra.mxu0 0.0
    %861 = vmatprep.subr.mxu0 0.0
    %862 = vmatpush1.msra.mxu0 0.0
    %863 = vmatprep.subr.mxu0 0.0
    %864 = vmatpush1.msra.mxu0 0.0
    %865 = vmatprep.subr.mxu0 0.0
    %866 = vmatpush1.msra.mxu0 0.0
    %867 = vmatprep.subr.mxu0 0.0
    %868 = vmatpush1.msra.mxu0 %v834
    %869 = vmatprep.subr.mxu0 0.0
    %870 = vmatpush1.msra.mxu0 %v832
    %871 = vmatprep.subr.mxu0 0.0
    %872 = vmatpush1.msra.mxu0 %v830
    %873 = vmatprep.subr.mxu0 0.0
    %874 = vmatpush2.msra.mxu0 0.0
    %875 = vmatprep.subr.mxu0 0.0
    %876 = vmatpush2.msra.mxu0 0.0
    %877 = vmatprep.subr.mxu0 0.0
    %878 = vmatpush2.msra.mxu0 0.0
    %879 = vmatprep.subr.mxu0 0.0
    %880 = vmatpush2.msra.mxu0 0.0
    %881 = vmatprep.subr.mxu0 0.0
    %882 = vmatpush2.msra.mxu0 0.0
    %883 = vmatprep.subr.mxu0 0.0
    %884 = vmatpush2.msra.mxu0 0.0
    %885 = vmatprep.subr.mxu0 0.0
    %886 = vmatpush2.msra.mxu0 0.0
    %887 = vmatprep.subr.mxu0 0.0
    %888 = vmatpush2.msra.mxu0 0.0
    %889 = vmatprep.subr.mxu0 0.0
    %890 = vmatpush2.msra.mxu0 0.0
    %891 = vmatprep.subr.mxu0 0.0
    %892 = vmatpush2.msra.mxu0 0.0
    %893 = vmatprep.subr.mxu0 0.0
    %894 = vmatpush2.msra.mxu0 0.0
    %895 = vmatprep.subr.mxu0 0.0
    %896 = vmatpush2.msra.mxu0 0.0
    %897 = vmatprep.subr.mxu0 0.0
    %898 = vmatpush2.msra.mxu0 0.0
    %899 = vmatprep.subr.mxu0 0.0
    %900 = vmatpush2.msra.mxu0 0.0
    %901 = vmatprep.subr.mxu0 0.0
    %902 = vmatpush2.msra.mxu0 0.0
    %903 = vmatprep.subr.mxu0 0.0
    %904 = vmatpush2.msra.mxu0 0.0
    %905 = vmatprep.mubr.f32.mxu0 0.0
    %906 = vmatmul.mubr.f32.gmra.mxu0 %v839
    %v907 = vpop.f32.mrf.mxu0
    %v908 = vadd.f32 0.0, %v907
    %v909 = vpop.f32.mrf.mxu0
    %910 = vdwg.mxu0
    %v911 = vrcp.pop %v828
    %v912 = vmul.f32 1.0, %v911
    %v913 = vmul.f32 %v908, %v912
    %v914 = vld [vmem:[#allocation4] sm:$0xff]
    %v915 = vld [vmem:[%s2 + $0x30] sm:$0xff]
    %917 = vrot.lane.b32.xlu0 %v915, 32
    %v918 = vpop.permute.xlu0 %917
    %v921 = vsel %vm216, %v913, 0
    %923 = vmatprep.subr.mxu0 0.0
    %924 = vmatpush1.msra.mxu0 0.0
    %925 = vmatprep.subr.mxu0 0.0
    %926 = vmatpush1.msra.mxu0 0.0
    %927 = vmatprep.subr.mxu0 0.0
    %928 = vmatpush1.msra.mxu0 0.0
    %929 = vmatprep.subr.mxu0 0.0
    %930 = vmatpush1.msra.mxu0 0.0
    %931 = vmatprep.subr.mxu0 0.0
    %932 = vmatpush1.msra.mxu0 0.0
    %933 = vmatprep.subr.mxu0 0.0
    %934 = vmatpush1.msra.mxu0 0.0
    %935 = vmatprep.subr.mxu0 0.0
    %936 = vmatpush1.msra.mxu0 0.0
    %937 = vmatprep.subr.mxu0 0.0
    %938 = vmatpush1.msra.mxu0 0.0
    %939 = vmatprep.subr.mxu0 0.0
    %940 = vmatpush1.msra.mxu0 0.0
    %941 = vmatprep.subr.mxu0 0.0
    %942 = vmatpush1.msra.mxu0 0.0
    %943 = vmatprep.subr.mxu0 0.0
    %944 = vmatpush1.msra.mxu0 0.0
    %945 = vmatprep.subr.mxu0 0.0
    %946 = vmatpush1.msra.mxu0 0.0
    %947 = vmatprep.subr.mxu0 0.0
    %948 = vmatpush1.msra.mxu0 0.0
    %949 = vmatprep.subr.mxu0 0.0
    %950 = vmatpush1.msra.mxu0 0.0
    %951 = vmatprep.subr.mxu0 0.0
    %952 = vmatpush1.msra.mxu0 0.0
    %953 = vmatprep.subr.mxu0 0.0
    %954 = vmatpush1.msra.mxu0 %v918
    %955 = vmatprep.subr.mxu0 0.0
    %956 = vmatpush2.msra.mxu0 0.0
    %957 = vmatprep.subr.mxu0 0.0
    %958 = vmatpush2.msra.mxu0 0.0
    %959 = vmatprep.subr.mxu0 0.0
    %960 = vmatpush2.msra.mxu0 0.0
    %961 = vmatprep.subr.mxu0 0.0
    %962 = vmatpush2.msra.mxu0 0.0
    %963 = vmatprep.subr.mxu0 0.0
    %964 = vmatpush2.msra.mxu0 0.0
    %965 = vmatprep.subr.mxu0 0.0
    %966 = vmatpush2.msra.mxu0 0.0
    %967 = vmatprep.subr.mxu0 0.0
    %968 = vmatpush2.msra.mxu0 0.0
    %969 = vmatprep.subr.mxu0 0.0
    %970 = vmatpush2.msra.mxu0 0.0
    %971 = vmatprep.subr.mxu0 0.0
    %972 = vmatpush2.msra.mxu0 0.0
    %973 = vmatprep.subr.mxu0 0.0
    %974 = vmatpush2.msra.mxu0 0.0
    %975 = vmatprep.subr.mxu0 0.0
    %976 = vmatpush2.msra.mxu0 0.0
    %977 = vmatprep.subr.mxu0 0.0
    %978 = vmatpush2.msra.mxu0 0.0
    %979 = vmatprep.subr.mxu0 0.0
    %980 = vmatpush2.msra.mxu0 0.0
    %981 = vmatprep.subr.mxu0 0.0
    %982 = vmatpush2.msra.mxu0 0.0
    %983 = vmatprep.subr.mxu0 0.0
    %984 = vmatpush2.msra.mxu0 0.0
    %985 = vmatprep.subr.mxu0 0.0
    %986 = vmatpush2.msra.mxu0 0.0
    %987 = vmatprep.mubr.f32.mxu0 0.0
    %988 = vmatmul.mubr.f32.gmra.mxu0 %v921
    %v989 = vpop.f32.mrf.mxu0
    %v990 = vadd.f32 0.0, %v989
    %v991 = vpop.f32.mrf.mxu0
    %992 = vdwg.mxu0
    %v993 = vadd.f32 %v914, %v990
    %994 = vst.msk [vmem:[#allocation4] sm:$0xff] %vm55, %v993
    %995 = vrot.lane.b32.xlu0 %v154, 104
    %v996 = vpop.permute.xlu0 %995
    %997 = vrot.lane.b32.xlu0 %v210, 104
    %v998 = vpop.permute.xlu0 %997
    %999 = vrot.lane.b32.xlu0 %v211, 104
    %v1000 = vpop.permute.xlu0 %999
    %1001 = vrot.lane.b32.xlu0 %v212, 104
    %v1002 = vpop.permute.xlu0 %1001
    %v1003 = vsel %vm216, %v996, 0
    %v1005 = vsel %vm216, %v998, 0
    %v1007 = vsel %vm216, %v1000, 0
    %v1009 = vsel %vm216, %v1002, 0
    %1011 = vmatprep.subr.mxu0 0.0
    %1012 = vmatpush1.xpose.msra.mxu0 0.0
    %1013 = vmatprep.subr.mxu0 0.0
    %1014 = vmatpush1.xpose.msra.mxu0 0.0
    %1015 = vmatprep.subr.mxu0 0.0
    %1016 = vmatpush1.xpose.msra.mxu0 0.0
    %1017 = vmatprep.subr.mxu0 0.0
    %1018 = vmatpush1.xpose.msra.mxu0 0.0
    %1019 = vmatprep.subr.mxu0 0.0
    %1020 = vmatpush1.xpose.msra.mxu0 0.0
    %1021 = vmatprep.subr.mxu0 0.0
    %1022 = vmatpush1.xpose.msra.mxu0 0.0
    %1023 = vmatprep.subr.mxu0 0.0
    %1024 = vmatpush1.xpose.msra.mxu0 0.0
    %1025 = vmatprep.subr.mxu0 0.0
    %1026 = vmatpush1.xpose.msra.mxu0 0.0
    %1027 = vmatprep.subr.mxu0 0.0
    %1028 = vmatpush1.xpose.msra.mxu0 0.0
    %1029 = vmatprep.subr.mxu0 0.0
    %1030 = vmatpush1.xpose.msra.mxu0 0.0
    %1031 = vmatprep.subr.mxu0 0.0
    %1032 = vmatpush1.xpose.msra.mxu0 0.0
    %1033 = vmatprep.subr.mxu0 0.0
    %1034 = vmatpush1.xpose.msra.mxu0 0.0
    %1035 = vmatprep.subr.mxu0 0.0
    %1036 = vmatpush1.xpose.msra.mxu0 0.0
    %1037 = vmatprep.subr.mxu0 0.0
    %1038 = vmatpush1.xpose.msra.mxu0 %v1009
    %1039 = vmatprep.subr.mxu0 0.0
    %1040 = vmatpush1.xpose.msra.mxu0 %v1007
    %1041 = vmatprep.subr.mxu0 0.0
    %1042 = vmatpush1.xpose.msra.mxu0 %v1005
    %1043 = vmatprep.subr.mxu0 0.0
    %1044 = vmatpush2.xpose.msra.mxu0 0.0
    %1045 = vmatprep.subr.mxu0 0.0
    %1046 = vmatpush2.xpose.msra.mxu0 0.0
    %1047 = vmatprep.subr.mxu0 0.0
    %1048 = vmatpush2.xpose.msra.mxu0 0.0
    %1049 = vmatprep.subr.mxu0 0.0
    %1050 = vmatpush2.xpose.msra.mxu0 0.0
    %1051 = vmatprep.subr.mxu0 0.0
    %1052 = vmatpush2.xpose.msra.mxu0 0.0
    %1053 = vmatprep.subr.mxu0 0.0
    %1054 = vmatpush2.xpose.msra.mxu0 0.0
    %1055 = vmatprep.subr.mxu0 0.0
    %1056 = vmatpush2.xpose.msra.mxu0 0.0
    %1057 = vmatprep.subr.mxu0 0.0
    %1058 = vmatpush2.xpose.msra.mxu0 0.0
    %1059 = vmatprep.subr.mxu0 0.0
    %1060 = vmatpush2.xpose.msra.mxu0 0.0
    %1061 = vmatprep.subr.mxu0 0.0
    %1062 = vmatpush2.xpose.msra.mxu0 0.0
    %1063 = vmatprep.subr.mxu0 0.0
    %1064 = vmatpush2.xpose.msra.mxu0 0.0
    %1065 = vmatprep.subr.mxu0 0.0
    %1066 = vmatpush2.xpose.msra.mxu0 0.0
    %1067 = vmatprep.subr.mxu0 0.0
    %1068 = vmatpush2.xpose.msra.mxu0 0.0
    %1069 = vmatprep.subr.mxu0 0.0
    %1070 = vmatpush2.xpose.msra.mxu0 0.0
    %1071 = vmatprep.subr.mxu0 0.0
    %1072 = vmatpush2.xpose.msra.mxu0 0.0
    %1073 = vmatprep.subr.mxu0 0.0
    %1074 = vmatpush2.xpose.msra.mxu0 0.0
    %1075 = vmatprep.mubr.f32.mxu0 0.0
    %1076 = vmatmul.mubr.f32.gmra.mxu0 %v1003
    %v1077 = vpop.f32.mrf.mxu0
    %v1078 = vadd.f32 0.0, %v1077
    %v1079 = vpop.f32.mrf.mxu0
    %1080 = vdwg.mxu0
    %v1081 = vsel %vm299, %v1078, -1e+30
    %v1082 = vsel %vm301, %v1081, -inf
    %1083 = vmax.xlane.f32.xlu0 %v1082
    %v1084 = vpop.xlane.xlu0 %1083
    %v1085 = vsub.f32 %v1081, %v1084
    %v1086 = vmul.f32 %v1085, 1.442695
    %v1087 = vpow.pop %v1086
    %v1088 = vsel %vm301, %v1087, 0.0
    %1089 = vadd.xlane.f32.xlu0 %v1088
    %v1090 = vpop.xlane.xlu0 %1089
    %1091 = vrot.lane.b32.xlu0 %v213, 104
    %v1092 = vpop.permute.xlu0 %1091
    %1093 = vrot.lane.b32.xlu0 %v214, 104
    %v1094 = vpop.permute.xlu0 %1093
    %1095 = vrot.lane.b32.xlu0 %v215, 104
    %v1096 = vpop.permute.xlu0 %1095
    %v1101 = vsel %vm301, %v1087, 0
    %1103 = vmatprep.subr.mxu0 0.0
    %1104 = vmatpush1.msra.mxu0 0.0
    %1105 = vmatprep.subr.mxu0 0.0
    %1106 = vmatpush1.msra.mxu0 0.0
    %1107 = vmatprep.subr.mxu0 0.0
    %1108 = vmatpush1.msra.mxu0 0.0
    %1109 = vmatprep.subr.mxu0 0.0
    %1110 = vmatpush1.msra.mxu0 0.0
    %1111 = vmatprep.subr.mxu0 0.0
    %1112 = vmatpush1.msra.mxu0 0.0
    %1113 = vmatprep.subr.mxu0 0.0
    %1114 = vmatpush1.msra.mxu0 0.0
    %1115 = vmatprep.subr.mxu0 0.0
    %1116 = vmatpush1.msra.mxu0 0.0
    %1117 = vmatprep.subr.mxu0 0.0
    %1118 = vmatpush1.msra.mxu0 0.0
    %1119 = vmatprep.subr.mxu0 0.0
    %1120 = vmatpush1.msra.mxu0 0.0
    %1121 = vmatprep.subr.mxu0 0.0
    %1122 = vmatpush1.msra.mxu0 0.0
    %1123 = vmatprep.subr.mxu0 0.0
    %1124 = vmatpush1.msra.mxu0 0.0
    %1125 = vmatprep.subr.mxu0 0.0
    %1126 = vmatpush1.msra.mxu0 0.0
    %1127 = vmatprep.subr.mxu0 0.0
    %1128 = vmatpush1.msra.mxu0 0.0
    %1129 = vmatprep.subr.mxu0 0.0
    %1130 = vmatpush1.msra.mxu0 %v1096
    %1131 = vmatprep.subr.mxu0 0.0
    %1132 = vmatpush1.msra.mxu0 %v1094
    %1133 = vmatprep.subr.mxu0 0.0
    %1134 = vmatpush1.msra.mxu0 %v1092
    %1135 = vmatprep.subr.mxu0 0.0
    %1136 = vmatpush2.msra.mxu0 0.0
    %1137 = vmatprep.subr.mxu0 0.0
    %1138 = vmatpush2.msra.mxu0 0.0
    %1139 = vmatprep.subr.mxu0 0.0
    %1140 = vmatpush2.msra.mxu0 0.0
    %1141 = vmatprep.subr.mxu0 0.0
    %1142 = vmatpush2.msra.mxu0 0.0
    %1143 = vmatprep.subr.mxu0 0.0
    %1144 = vmatpush2.msra.mxu0 0.0
    %1145 = vmatprep.subr.mxu0 0.0
    %1146 = vmatpush2.msra.mxu0 0.0
    %1147 = vmatprep.subr.mxu0 0.0
    %1148 = vmatpush2.msra.mxu0 0.0
    %1149 = vmatprep.subr.mxu0 0.0
    %1150 = vmatpush2.msra.mxu0 0.0
    %1151 = vmatprep.subr.mxu0 0.0
    %1152 = vmatpush2.msra.mxu0 0.0
    %1153 = vmatprep.subr.mxu0 0.0
    %1154 = vmatpush2.msra.mxu0 0.0
    %1155 = vmatprep.subr.mxu0 0.0
    %1156 = vmatpush2.msra.mxu0 0.0
    %1157 = vmatprep.subr.mxu0 0.0
    %1158 = vmatpush2.msra.mxu0 0.0
    %1159 = vmatprep.subr.mxu0 0.0
    %1160 = vmatpush2.msra.mxu0 0.0
    %1161 = vmatprep.subr.mxu0 0.0
    %1162 = vmatpush2.msra.mxu0 0.0
    %1163 = vmatprep.subr.mxu0 0.0
    %1164 = vmatpush2.msra.mxu0 0.0
    %1165 = vmatprep.subr.mxu0 0.0
    %1166 = vmatpush2.msra.mxu0 0.0
    %1167 = vmatprep.mubr.f32.mxu0 0.0
    %1168 = vmatmul.mubr.f32.gmra.mxu0 %v1101
    %v1169 = vpop.f32.mrf.mxu0
    %v1170 = vadd.f32 0.0, %v1169
    %v1171 = vpop.f32.mrf.mxu0
    %1172 = vdwg.mxu0
    %v1173 = vrcp.pop %v1090
    %v1174 = vmul.f32 1.0, %v1173
    %v1175 = vmul.f32 %v1170, %v1174
    %v1176 = vld [vmem:[#allocation4] sm:$0xff]
    %v1177 = vld [vmem:[%s2 + $0x48] sm:$0xff]
    %1179 = vrot.lane.b32.xlu0 %v1177, 32
    %v1180 = vpop.permute.xlu0 %1179
    %v1183 = vsel %vm216, %v1175, 0
    %1185 = vmatprep.subr.mxu0 0.0
    %1186 = vmatpush1.msra.mxu0 0.0
    %1187 = vmatprep.subr.mxu0 0.0
    %1188 = vmatpush1.msra.mxu0 0.0
    %1189 = vmatprep.subr.mxu0 0.0
    %1190 = vmatpush1.msra.mxu0 0.0
    %1191 = vmatprep.subr.mxu0 0.0
    %1192 = vmatpush1.msra.mxu0 0.0
    %1193 = vmatprep.subr.mxu0 0.0
    %1194 = vmatpush1.msra.mxu0 0.0
    %1195 = vmatprep.subr.mxu0 0.0
    %1196 = vmatpush1.msra.mxu0 0.0
    %1197 = vmatprep.subr.mxu0 0.0
    %1198 = vmatpush1.msra.mxu0 0.0
    %1199 = vmatprep.subr.mxu0 0.0
    %1200 = vmatpush1.msra.mxu0 0.0
    %1201 = vmatprep.subr.mxu0 0.0
    %1202 = vmatpush1.msra.mxu0 0.0
    %1203 = vmatprep.subr.mxu0 0.0
    %1204 = vmatpush1.msra.mxu0 0.0
    %1205 = vmatprep.subr.mxu0 0.0
    %1206 = vmatpush1.msra.mxu0 0.0
    %1207 = vmatprep.subr.mxu0 0.0
    %1208 = vmatpush1.msra.mxu0 0.0
    %1209 = vmatprep.subr.mxu0 0.0
    %1210 = vmatpush1.msra.mxu0 0.0
    %1211 = vmatprep.subr.mxu0 0.0
    %1212 = vmatpush1.msra.mxu0 0.0
    %1213 = vmatprep.subr.mxu0 0.0
    %1214 = vmatpush1.msra.mxu0 0.0
    %1215 = vmatprep.subr.mxu0 0.0
    %1216 = vmatpush1.msra.mxu0 %v1180
    %1217 = vmatprep.subr.mxu0 0.0
    %1218 = vmatpush2.msra.mxu0 0.0
    %1219 = vmatprep.subr.mxu0 0.0
    %1220 = vmatpush2.msra.mxu0 0.0
    %1221 = vmatprep.subr.mxu0 0.0
    %1222 = vmatpush2.msra.mxu0 0.0
    %1223 = vmatprep.subr.mxu0 0.0
    %1224 = vmatpush2.msra.mxu0 0.0
    %1225 = vmatprep.subr.mxu0 0.0
    %1226 = vmatpush2.msra.mxu0 0.0
    %1227 = vmatprep.subr.mxu0 0.0
    %1228 = vmatpush2.msra.mxu0 0.0
    %1229 = vmatprep.subr.mxu0 0.0
    %1230 = vmatpush2.msra.mxu0 0.0
    %1231 = vmatprep.subr.mxu0 0.0
    %1232 = vmatpush2.msra.mxu0 0.0
    %1233 = vmatprep.subr.mxu0 0.0
    %1234 = vmatpush2.msra.mxu0 0.0
    %1235 = vmatprep.subr.mxu0 0.0
    %1236 = vmatpush2.msra.mxu0 0.0
    %1237 = vmatprep.subr.mxu0 0.0
    %1238 = vmatpush2.msra.mxu0 0.0
    %1239 = vmatprep.subr.mxu0 0.0
    %1240 = vmatpush2.msra.mxu0 0.0
    %1241 = vmatprep.subr.mxu0 0.0
    %1242 = vmatpush2.msra.mxu0 0.0
    %1243 = vmatprep.subr.mxu0 0.0
    %1244 = vmatpush2.msra.mxu0 0.0
    %1245 = vmatprep.subr.mxu0 0.0
    %1246 = vmatpush2.msra.mxu0 0.0
    %1247 = vmatprep.subr.mxu0 0.0
    %1248 = vmatpush2.msra.mxu0 0.0
    %1249 = vmatprep.mubr.f32.mxu0 0.0
    %1250 = vmatmul.mubr.f32.gmra.mxu0 %v1183
    %v1251 = vpop.f32.mrf.mxu0
    %v1252 = vadd.f32 0.0, %v1251
    %v1253 = vpop.f32.mrf.mxu0
    %1254 = vdwg.mxu0
    %v1255 = vadd.f32 %v1176, %v1252
    %1256 = vst.msk [vmem:[#allocation4] sm:$0xff] %vm55, %v1255
    %v1257 = vld [vmem:[%s188] sm:$0xff]
    %v1258 = vld [vmem:[%s188 + $0x8] sm:$0xff]
    %v1259 = vld [vmem:[%s188 + $0x10] sm:$0xff]
    %v1260 = vld [vmem:[%s193] sm:$0xff]
    %v1261 = vld [vmem:[%s193 + $0x8] sm:$0xff]
    %v1262 = vld [vmem:[%s193 + $0x10] sm:$0xff]
    %v1263 = vsel %vm216, %v159, 0
    %v1266 = vsel %vm216, %v1257, 0
    %v1269 = vsel %vm216, %v1258, 0
    %v1272 = vsel %vm216, %v1259, 0
    %1274 = vmatprep.subr.mxu0 0.0
    %1275 = vmatpush1.xpose.msra.mxu0 0.0
    %1276 = vmatprep.subr.mxu0 0.0
    %1277 = vmatpush1.xpose.msra.mxu0 0.0
    %1278 = vmatprep.subr.mxu0 0.0
    %1279 = vmatpush1.xpose.msra.mxu0 0.0
    %1280 = vmatprep.subr.mxu0 0.0
    %1281 = vmatpush1.xpose.msra.mxu0 0.0
    %1282 = vmatprep.subr.mxu0 0.0
    %1283 = vmatpush1.xpose.msra.mxu0 0.0
    %1284 = vmatprep.subr.mxu0 0.0
    %1285 = vmatpush1.xpose.msra.mxu0 0.0
    %1286 = vmatprep.subr.mxu0 0.0
    %1287 = vmatpush1.xpose.msra.mxu0 0.0
    %1288 = vmatprep.subr.mxu0 0.0
    %1289 = vmatpush1.xpose.msra.mxu0 0.0
    %1290 = vmatprep.subr.mxu0 0.0
    %1291 = vmatpush1.xpose.msra.mxu0 0.0
    %1292 = vmatprep.subr.mxu0 0.0
    %1293 = vmatpush1.xpose.msra.mxu0 0.0
    %1294 = vmatprep.subr.mxu0 0.0
    %1295 = vmatpush1.xpose.msra.mxu0 0.0
    %1296 = vmatprep.subr.mxu0 0.0
    %1297 = vmatpush1.xpose.msra.mxu0 0.0
    %1298 = vmatprep.subr.mxu0 0.0
    %1299 = vmatpush1.xpose.msra.mxu0 0.0
    %1300 = vmatprep.subr.mxu0 0.0
    %1301 = vmatpush1.xpose.msra.mxu0 %v1272
    %1302 = vmatprep.subr.mxu0 0.0
    %1303 = vmatpush1.xpose.msra.mxu0 %v1269
    %1304 = vmatprep.subr.mxu0 0.0
    %1305 = vmatpush1.xpose.msra.mxu0 %v1266
    %1306 = vmatprep.subr.mxu0 0.0
    %1307 = vmatpush2.xpose.msra.mxu0 0.0
    %1308 = vmatprep.subr.mxu0 0.0
    %1309 = vmatpush2.xpose.msra.mxu0 0.0
    %1310 = vmatprep.subr.mxu0 0.0
    %1311 = vmatpush2.xpose.msra.mxu0 0.0
    %1312 = vmatprep.subr.mxu0 0.0
    %1313 = vmatpush2.xpose.msra.mxu0 0.0
    %1314 = vmatprep.subr.mxu0 0.0
    %1315 = vmatpush2.xpose.msra.mxu0 0.0
    %1316 = vmatprep.subr.mxu0 0.0
    %1317 = vmatpush2.xpose.msra.mxu0 0.0
    %1318 = vmatprep.subr.mxu0 0.0
    %1319 = vmatpush2.xpose.msra.mxu0 0.0
    %1320 = vmatprep.subr.mxu0 0.0
    %1321 = vmatpush2.xpose.msra.mxu0 0.0
    %1322 = vmatprep.subr.mxu0 0.0
    %1323 = vmatpush2.xpose.msra.mxu0 0.0
    %1324 = vmatprep.subr.mxu0 0.0
    %1325 = vmatpush2.xpose.msra.mxu0 0.0
    %1326 = vmatprep.subr.mxu0 0.0
    %1327 = vmatpush2.xpose.msra.mxu0 0.0
    %1328 = vmatprep.subr.mxu0 0.0
    %1329 = vmatpush2.xpose.msra.mxu0 0.0
    %1330 = vmatprep.subr.mxu0 0.0
    %1331 = vmatpush2.xpose.msra.mxu0 0.0
    %1332 = vmatprep.subr.mxu0 0.0
    %1333 = vmatpush2.xpose.msra.mxu0 0.0
    %1334 = vmatprep.subr.mxu0 0.0
    %1335 = vmatpush2.xpose.msra.mxu0 0.0
    %1336 = vmatprep.subr.mxu0 0.0
    %1337 = vmatpush2.xpose.msra.mxu0 0.0
    %1338 = vmatprep.mubr.f32.mxu0 0.0
    %1339 = vmatmul.mubr.f32.gmra.mxu0 %v1263
    %v1340 = vpop.f32.mrf.mxu0
    %v1341 = vadd.f32 0.0, %v1340
    %v1342 = vpop.f32.mrf.mxu0
    %1343 = vdwg.mxu0
    %v1344 = vsel %vm299, %v1341, -1e+30
    %v1345 = vsel %vm301, %v1344, -inf
    %1346 = vmax.xlane.f32.xlu0 %v1345
    %v1347 = vpop.xlane.xlu0 %1346
    %v1348 = vsub.f32 %v1344, %v1347
    %v1349 = vmul.f32 %v1348, 1.442695
    %v1350 = vpow.pop %v1349
    %v1351 = vsel %vm301, %v1350, 0.0
    %1352 = vadd.xlane.f32.xlu0 %v1351
    %v1353 = vpop.xlane.xlu0 %1352
    %v1355 = vsel %vm301, %v1350, 0
    %1357 = vmatprep.subr.mxu0 0.0
    %1358 = vmatpush1.msra.mxu0 0.0
    %1359 = vmatprep.subr.mxu0 0.0
    %1360 = vmatpush1.msra.mxu0 0.0
    %1361 = vmatprep.subr.mxu0 0.0
    %1362 = vmatpush1.msra.mxu0 0.0
    %1363 = vmatprep.subr.mxu0 0.0
    %1364 = vmatpush1.msra.mxu0 0.0
    %1365 = vmatprep.subr.mxu0 0.0
    %1366 = vmatpush1.msra.mxu0 0.0
    %1367 = vmatprep.subr.mxu0 0.0
    %1368 = vmatpush1.msra.mxu0 0.0
    %1369 = vmatprep.subr.mxu0 0.0
    %1370 = vmatpush1.msra.mxu0 0.0
    %1371 = vmatprep.subr.mxu0 0.0
    %1372 = vmatpush1.msra.mxu0 0.0
    %1373 = vmatprep.subr.mxu0 0.0
    %1374 = vmatpush1.msra.mxu0 0.0
    %1375 = vmatprep.subr.mxu0 0.0
    %1376 = vmatpush1.msra.mxu0 0.0
    %1377 = vmatprep.subr.mxu0 0.0
    %1378 = vmatpush1.msra.mxu0 0.0
    %1379 = vmatprep.subr.mxu0 0.0
    %1380 = vmatpush1.msra.mxu0 0.0
    %1381 = vmatprep.subr.mxu0 0.0
    %1382 = vmatpush1.msra.mxu0 0.0
    %1383 = vmatprep.subr.mxu0 0.0
    %1384 = vmatpush1.msra.mxu0 %v1262
    %1385 = vmatprep.subr.mxu0 0.0
    %1386 = vmatpush1.msra.mxu0 %v1261
    %1387 = vmatprep.subr.mxu0 0.0
    %1388 = vmatpush1.msra.mxu0 %v1260
    %1389 = vmatprep.subr.mxu0 0.0
    %1390 = vmatpush2.msra.mxu0 0.0
    %1391 = vmatprep.subr.mxu0 0.0
    %1392 = vmatpush2.msra.mxu0 0.0
    %1393 = vmatprep.subr.mxu0 0.0
    %1394 = vmatpush2.msra.mxu0 0.0
    %1395 = vmatprep.subr.mxu0 0.0
    %1396 = vmatpush2.msra.mxu0 0.0
    %1397 = vmatprep.subr.mxu0 0.0
    %1398 = vmatpush2.msra.mxu0 0.0
    %1399 = vmatprep.subr.mxu0 0.0
    %1400 = vmatpush2.msra.mxu0 0.0
    %1401 = vmatprep.subr.mxu0 0.0
    %1402 = vmatpush2.msra.mxu0 0.0
    %1403 = vmatprep.subr.mxu0 0.0
    %1404 = vmatpush2.msra.mxu0 0.0
    %1405 = vmatprep.subr.mxu0 0.0
    %1406 = vmatpush2.msra.mxu0 0.0
    %1407 = vmatprep.subr.mxu0 0.0
    %1408 = vmatpush2.msra.mxu0 0.0
    %1409 = vmatprep.subr.mxu0 0.0
    %1410 = vmatpush2.msra.mxu0 0.0
    %1411 = vmatprep.subr.mxu0 0.0
    %1412 = vmatpush2.msra.mxu0 0.0
    %1413 = vmatprep.subr.mxu0 0.0
    %1414 = vmatpush2.msra.mxu0 0.0
    %1415 = vmatprep.subr.mxu0 0.0
    %1416 = vmatpush2.msra.mxu0 0.0
    %1417 = vmatprep.subr.mxu0 0.0
    %1418 = vmatpush2.msra.mxu0 0.0
    %1419 = vmatprep.subr.mxu0 0.0
    %1420 = vmatpush2.msra.mxu0 0.0
    %1421 = vmatprep.mubr.f32.mxu0 0.0
    %1422 = vmatmul.mubr.f32.gmra.mxu0 %v1355
    %v1423 = vpop.f32.mrf.mxu0
    %v1424 = vadd.f32 0.0, %v1423
    %v1425 = vpop.f32.mrf.mxu0
    %1426 = vdwg.mxu0
    %v1427 = vrcp.pop %v1353
    %v1428 = vmul.f32 1.0, %v1427
    %v1429 = vmul.f32 %v1424, %v1428
    %v1430 = vld [vmem:[#allocation4 + $0x8] sm:$0xff]
    %v1431 = vld [vmem:[%s2] sm:$0xff]
    %1433 = vrot.lane.b32.xlu0 %v1431, 32
    %v1434 = vpop.permute.xlu0 %1433
    %v1437 = vsel %vm216, %v1429, 0
    %1439 = vmatprep.subr.mxu0 0.0
    %1440 = vmatpush1.msra.mxu0 0.0
    %1441 = vmatprep.subr.mxu0 0.0
    %1442 = vmatpush1.msra.mxu0 0.0
    %1443 = vmatprep.subr.mxu0 0.0
    %1444 = vmatpush1.msra.mxu0 0.0
    %1445 = vmatprep.subr.mxu0 0.0
    %1446 = vmatpush1.msra.mxu0 0.0
    %1447 = vmatprep.subr.mxu0 0.0
    %1448 = vmatpush1.msra.mxu0 0.0
    %1449 = vmatprep.subr.mxu0 0.0
    %1450 = vmatpush1.msra.mxu0 0.0
    %1451 = vmatprep.subr.mxu0 0.0
    %1452 = vmatpush1.msra.mxu0 0.0
    %1453 = vmatprep.subr.mxu0 0.0
    %1454 = vmatpush1.msra.mxu0 0.0
    %1455 = vmatprep.subr.mxu0 0.0
    %1456 = vmatpush1.msra.mxu0 0.0
    %1457 = vmatprep.subr.mxu0 0.0
    %1458 = vmatpush1.msra.mxu0 0.0
    %1459 = vmatprep.subr.mxu0 0.0
    %1460 = vmatpush1.msra.mxu0 0.0
    %1461 = vmatprep.subr.mxu0 0.0
    %1462 = vmatpush1.msra.mxu0 0.0
    %1463 = vmatprep.subr.mxu0 0.0
    %1464 = vmatpush1.msra.mxu0 0.0
    %1465 = vmatprep.subr.mxu0 0.0
    %1466 = vmatpush1.msra.mxu0 0.0
    %1467 = vmatprep.subr.mxu0 0.0
    %1468 = vmatpush1.msra.mxu0 0.0
    %1469 = vmatprep.subr.mxu0 0.0
    %1470 = vmatpush1.msra.mxu0 %v1434
    %1471 = vmatprep.subr.mxu0 0.0
    %1472 = vmatpush2.msra.mxu0 0.0
    %1473 = vmatprep.subr.mxu0 0.0
    %1474 = vmatpush2.msra.mxu0 0.0
    %1475 = vmatprep.subr.mxu0 0.0
    %1476 = vmatpush2.msra.mxu0 0.0
    %1477 = vmatprep.subr.mxu0 0.0
    %1478 = vmatpush2.msra.mxu0 0.0
    %1479 = vmatprep.subr.mxu0 0.0
    %1480 = vmatpush2.msra.mxu0 0.0
    %1481 = vmatprep.subr.mxu0 0.0
    %1482 = vmatpush2.msra.mxu0 0.0
    %1483 = vmatprep.subr.mxu0 0.0
    %1484 = vmatpush2.msra.mxu0 0.0
    %1485 = vmatprep.subr.mxu0 0.0
    %1486 = vmatpush2.msra.mxu0 0.0
    %1487 = vmatprep.subr.mxu0 0.0
    %1488 = vmatpush2.msra.mxu0 0.0
    %1489 = vmatprep.subr.mxu0 0.0
    %1490 = vmatpush2.msra.mxu0 0.0
    %1491 = vmatprep.subr.mxu0 0.0
    %1492 = vmatpush2.msra.mxu0 0.0
    %1493 = vmatprep.subr.mxu0 0.0
    %1494 = vmatpush2.msra.mxu0 0.0
    %1495 = vmatprep.subr.mxu0 0.0
    %1496 = vmatpush2.msra.mxu0 0.0
    %1497 = vmatprep.subr.mxu0 0.0
    %1498 = vmatpush2.msra.mxu0 0.0
    %1499 = vmatprep.subr.mxu0 0.0
    %1500 = vmatpush2.msra.mxu0 0.0
    %1501 = vmatprep.subr.mxu0 0.0
    %1502 = vmatpush2.msra.mxu0 0.0
    %1503 = vmatprep.mubr.f32.mxu0 0.0
    %1504 = vmatmul.mubr.f32.gmra.mxu0 %v1437
    %v1505 = vpop.f32.mrf.mxu0
    %v1506 = vadd.f32 0.0, %v1505
    %v1507 = vpop.f32.mrf.mxu0
    %1508 = vdwg.mxu0
    %v1509 = vadd.f32 %v1430, %v1506
    %1510 = vst.msk [vmem:[#allocation4 + $0x8] sm:$0xff] %vm55, %v1509
    %1511 = vrot.lane.b32.xlu0 %v159, 120
    %v1512 = vpop.permute.xlu0 %1511
    %1513 = vrot.lane.b32.xlu0 %v1257, 120
    %v1514 = vpop.permute.xlu0 %1513
    %1515 = vrot.lane.b32.xlu0 %v1258, 120
    %v1516 = vpop.permute.xlu0 %1515
    %1517 = vrot.lane.b32.xlu0 %v1259, 120
    %v1518 = vpop.permute.xlu0 %1517
    %v1519 = vsel %vm216, %v1512, 0
    %v1521 = vsel %vm216, %v1514, 0
    %v1523 = vsel %vm216, %v1516, 0
    %v1525 = vsel %vm216, %v1518, 0
    %1527 = vmatprep.subr.mxu0 0.0
    %1528 = vmatpush1.xpose.msra.mxu0 0.0
    %1529 = vmatprep.subr.mxu0 0.0
    %1530 = vmatpush1.xpose.msra.mxu0 0.0
    %1531 = vmatprep.subr.mxu0 0.0
    %1532 = vmatpush1.xpose.msra.mxu0 0.0
    %1533 = vmatprep.subr.mxu0 0.0
    %1534 = vmatpush1.xpose.msra.mxu0 0.0
    %1535 = vmatprep.subr.mxu0 0.0
    %1536 = vmatpush1.xpose.msra.mxu0 0.0
    %1537 = vmatprep.subr.mxu0 0.0
    %1538 = vmatpush1.xpose.msra.mxu0 0.0
    %1539 = vmatprep.subr.mxu0 0.0
    %1540 = vmatpush1.xpose.msra.mxu0 0.0
    %1541 = vmatprep.subr.mxu0 0.0
    %1542 = vmatpush1.xpose.msra.mxu0 0.0
    %1543 = vmatprep.subr.mxu0 0.0
    %1544 = vmatpush1.xpose.msra.mxu0 0.0
    %1545 = vmatprep.subr.mxu0 0.0
    %1546 = vmatpush1.xpose.msra.mxu0 0.0
    %1547 = vmatprep.subr.mxu0 0.0
    %1548 = vmatpush1.xpose.msra.mxu0 0.0
    %1549 = vmatprep.subr.mxu0 0.0
    %1550 = vmatpush1.xpose.msra.mxu0 0.0
    %1551 = vmatprep.subr.mxu0 0.0
    %1552 = vmatpush1.xpose.msra.mxu0 0.0
    %1553 = vmatprep.subr.mxu0 0.0
    %1554 = vmatpush1.xpose.msra.mxu0 %v1525
    %1555 = vmatprep.subr.mxu0 0.0
    %1556 = vmatpush1.xpose.msra.mxu0 %v1523
    %1557 = vmatprep.subr.mxu0 0.0
    %1558 = vmatpush1.xpose.msra.mxu0 %v1521
    %1559 = vmatprep.subr.mxu0 0.0
    %1560 = vmatpush2.xpose.msra.mxu0 0.0
    %1561 = vmatprep.subr.mxu0 0.0
    %1562 = vmatpush2.xpose.msra.mxu0 0.0
    %1563 = vmatprep.subr.mxu0 0.0
    %1564 = vmatpush2.xpose.msra.mxu0 0.0
    %1565 = vmatprep.subr.mxu0 0.0
    %1566 = vmatpush2.xpose.msra.mxu0 0.0
    %1567 = vmatprep.subr.mxu0 0.0
    %1568 = vmatpush2.xpose.msra.mxu0 0.0
    %1569 = vmatprep.subr.mxu0 0.0
    %1570 = vmatpush2.xpose.msra.mxu0 0.0
    %1571 = vmatprep.subr.mxu0 0.0
    %1572 = vmatpush2.xpose.msra.mxu0 0.0
    %1573 = vmatprep.subr.mxu0 0.0
    %1574 = vmatpush2.xpose.msra.mxu0 0.0
    %1575 = vmatprep.subr.mxu0 0.0
    %1576 = vmatpush2.xpose.msra.mxu0 0.0
    %1577 = vmatprep.subr.mxu0 0.0
    %1578 = vmatpush2.xpose.msra.mxu0 0.0
    %1579 = vmatprep.subr.mxu0 0.0
    %1580 = vmatpush2.xpose.msra.mxu0 0.0
    %1581 = vmatprep.subr.mxu0 0.0
    %1582 = vmatpush2.xpose.msra.mxu0 0.0
    %1583 = vmatprep.subr.mxu0 0.0
    %1584 = vmatpush2.xpose.msra.mxu0 0.0
    %1585 = vmatprep.subr.mxu0 0.0
    %1586 = vmatpush2.xpose.msra.mxu0 0.0
    %1587 = vmatprep.subr.mxu0 0.0
    %1588 = vmatpush2.xpose.msra.mxu0 0.0
    %1589 = vmatprep.subr.mxu0 0.0
    %1590 = vmatpush2.xpose.msra.mxu0 0.0
    %1591 = vmatprep.mubr.f32.mxu0 0.0
    %1592 = vmatmul.mubr.f32.gmra.mxu0 %v1519
    %v1593 = vpop.f32.mrf.mxu0
    %v1594 = vadd.f32 0.0, %v1593
    %v1595 = vpop.f32.mrf.mxu0
    %1596 = vdwg.mxu0
    %v1597 = vsel %vm299, %v1594, -1e+30
    %v1598 = vsel %vm301, %v1597, -inf
    %1599 = vmax.xlane.f32.xlu0 %v1598
    %v1600 = vpop.xlane.xlu0 %1599
    %v1601 = vsub.f32 %v1597, %v1600
    %v1602 = vmul.f32 %v1601, 1.442695
    %v1603 = vpow.pop %v1602
    %v1604 = vsel %vm301, %v1603, 0.0
    %1605 = vadd.xlane.f32.xlu0 %v1604
    %v1606 = vpop.xlane.xlu0 %1605
    %1610 = vrot.lane.b32.xlu0 %v1260, 120
    %v1611 = vpop.permute.xlu0 %1610
    %1612 = vrot.lane.b32.xlu0 %v1261, 120
    %v1613 = vpop.permute.xlu0 %1612
    %1614 = vrot.lane.b32.xlu0 %v1262, 120
    %v1615 = vpop.permute.xlu0 %1614
    %v1620 = vsel %vm301, %v1603, 0
    %1622 = vmatprep.subr.mxu0 0.0
    %1623 = vmatpush1.msra.mxu0 0.0
    %1624 = vmatprep.subr.mxu0 0.0
    %1625 = vmatpush1.msra.mxu0 0.0
    %1626 = vmatprep.subr.mxu0 0.0
    %1627 = vmatpush1.msra.mxu0 0.0
    %1628 = vmatprep.subr.mxu0 0.0
    %1629 = vmatpush1.msra.mxu0 0.0
    %1630 = vmatprep.subr.mxu0 0.0
    %1631 = vmatpush1.msra.mxu0 0.0
    %1632 = vmatprep.subr.mxu0 0.0
    %1633 = vmatpush1.msra.mxu0 0.0
    %1634 = vmatprep.subr.mxu0 0.0
    %1635 = vmatpush1.msra.mxu0 0.0
    %1636 = vmatprep.subr.mxu0 0.0
    %1637 = vmatpush1.msra.mxu0 0.0
    %1638 = vmatprep.subr.mxu0 0.0
    %1639 = vmatpush1.msra.mxu0 0.0
    %1640 = vmatprep.subr.mxu0 0.0
    %1641 = vmatpush1.msra.mxu0 0.0
    %1642 = vmatprep.subr.mxu0 0.0
    %1643 = vmatpush1.msra.mxu0 0.0
    %1644 = vmatprep.subr.mxu0 0.0
    %1645 = vmatpush1.msra.mxu0 0.0
    %1646 = vmatprep.subr.mxu0 0.0
    %1647 = vmatpush1.msra.mxu0 0.0
    %1648 = vmatprep.subr.mxu0 0.0
    %1649 = vmatpush1.msra.mxu0 %v1615
    %1650 = vmatprep.subr.mxu0 0.0
    %1651 = vmatpush1.msra.mxu0 %v1613
    %1652 = vmatprep.subr.mxu0 0.0
    %1653 = vmatpush1.msra.mxu0 %v1611
    %1654 = vmatprep.subr.mxu0 0.0
    %1655 = vmatpush2.msra.mxu0 0.0
    %1656 = vmatprep.subr.mxu0 0.0
    %1657 = vmatpush2.msra.mxu0 0.0
    %1658 = vmatprep.subr.mxu0 0.0
    %1659 = vmatpush2.msra.mxu0 0.0
    %1660 = vmatprep.subr.mxu0 0.0
    %1661 = vmatpush2.msra.mxu0 0.0
    %1662 = vmatprep.subr.mxu0 0.0
    %1663 = vmatpush2.msra.mxu0 0.0
    %1664 = vmatprep.subr.mxu0 0.0
    %1665 = vmatpush2.msra.mxu0 0.0
    %1666 = vmatprep.subr.mxu0 0.0
    %1667 = vmatpush2.msra.mxu0 0.0
    %1668 = vmatprep.subr.mxu0 0.0
    %1669 = vmatpush2.msra.mxu0 0.0
    %1670 = vmatprep.subr.mxu0 0.0
    %1671 = vmatpush2.msra.mxu0 0.0
    %1672 = vmatprep.subr.mxu0 0.0
    %1673 = vmatpush2.msra.mxu0 0.0
    %1674 = vmatprep.subr.mxu0 0.0
    %1675 = vmatpush2.msra.mxu0 0.0
    %1676 = vmatprep.subr.mxu0 0.0
    %1677 = vmatpush2.msra.mxu0 0.0
    %1678 = vmatprep.subr.mxu0 0.0
    %1679 = vmatpush2.msra.mxu0 0.0
    %1680 = vmatprep.subr.mxu0 0.0
    %1681 = vmatpush2.msra.mxu0 0.0
    %1682 = vmatprep.subr.mxu0 0.0
    %1683 = vmatpush2.msra.mxu0 0.0
    %1684 = vmatprep.subr.mxu0 0.0
    %1685 = vmatpush2.msra.mxu0 0.0
    %1686 = vmatprep.mubr.f32.mxu0 0.0
    %1687 = vmatmul.mubr.f32.gmra.mxu0 %v1620
    %v1688 = vpop.f32.mrf.mxu0
    %v1689 = vadd.f32 0.0, %v1688
    %v1690 = vpop.f32.mrf.mxu0
    %1691 = vdwg.mxu0
    %v1692 = vrcp.pop %v1606
    %v1693 = vmul.f32 1.0, %v1692
    %v1694 = vmul.f32 %v1689, %v1693
    %v1695 = vld [vmem:[#allocation4 + $0x8] sm:$0xff]
    %v1696 = vld [vmem:[%s2 + $0x18] sm:$0xff]
    %1698 = vrot.lane.b32.xlu0 %v1696, 32
    %v1699 = vpop.permute.xlu0 %1698
    %v1702 = vsel %vm216, %v1694, 0
    %1704 = vmatprep.subr.mxu0 0.0
    %1705 = vmatpush1.msra.mxu0 0.0
    %1706 = vmatprep.subr.mxu0 0.0
    %1707 = vmatpush1.msra.mxu0 0.0
    %1708 = vmatprep.subr.mxu0 0.0
    %1709 = vmatpush1.msra.mxu0 0.0
    %1710 = vmatprep.subr.mxu0 0.0
    %1711 = vmatpush1.msra.mxu0 0.0
    %1712 = vmatprep.subr.mxu0 0.0
    %1713 = vmatpush1.msra.mxu0 0.0
    %1714 = vmatprep.subr.mxu0 0.0
    %1715 = vmatpush1.msra.mxu0 0.0
    %1716 = vmatprep.subr.mxu0 0.0
    %1717 = vmatpush1.msra.mxu0 0.0
    %1718 = vmatprep.subr.mxu0 0.0
    %1719 = vmatpush1.msra.mxu0 0.0
    %1720 = vmatprep.subr.mxu0 0.0
    %1721 = vmatpush1.msra.mxu0 0.0
    %1722 = vmatprep.subr.mxu0 0.0
    %1723 = vmatpush1.msra.mxu0 0.0
    %1724 = vmatprep.subr.mxu0 0.0
    %1725 = vmatpush1.msra.mxu0 0.0
    %1726 = vmatprep.subr.mxu0 0.0
    %1727 = vmatpush1.msra.mxu0 0.0
    %1728 = vmatprep.subr.mxu0 0.0
    %1729 = vmatpush1.msra.mxu0 0.0
    %1730 = vmatprep.subr.mxu0 0.0
    %1731 = vmatpush1.msra.mxu0 0.0
    %1732 = vmatprep.subr.mxu0 0.0
    %1733 = vmatpush1.msra.mxu0 0.0
    %1734 = vmatprep.subr.mxu0 0.0
    %1735 = vmatpush1.msra.mxu0 %v1699
    %1736 = vmatprep.subr.mxu0 0.0
    %1737 = vmatpush2.msra.mxu0 0.0
    %1738 = vmatprep.subr.mxu0 0.0
    %1739 = vmatpush2.msra.mxu0 0.0
    %1740 = vmatprep.subr.mxu0 0.0
    %1741 = vmatpush2.msra.mxu0 0.0
    %1742 = vmatprep.subr.mxu0 0.0
    %1743 = vmatpush2.msra.mxu0 0.0
    %1744 = vmatprep.subr.mxu0 0.0
    %1745 = vmatpush2.msra.mxu0 0.0
    %1746 = vmatprep.subr.mxu0 0.0
    %1747 = vmatpush2.msra.mxu0 0.0
    %1748 = vmatprep.subr.mxu0 0.0
    %1749 = vmatpush2.msra.mxu0 0.0
    %1750 = vmatprep.subr.mxu0 0.0
    %1751 = vmatpush2.msra.mxu0 0.0
    %1752 = vmatprep.subr.mxu0 0.0
    %1753 = vmatpush2.msra.mxu0 0.0
    %1754 = vmatprep.subr.mxu0 0.0
    %1755 = vmatpush2.msra.mxu0 0.0
    %1756 = vmatprep.subr.mxu0 0.0
    %1757 = vmatpush2.msra.mxu0 0.0
    %1758 = vmatprep.subr.mxu0 0.0
    %1759 = vmatpush2.msra.mxu0 0.0
    %1760 = vmatprep.subr.mxu0 0.0
    %1761 = vmatpush2.msra.mxu0 0.0
    %1762 = vmatprep.subr.mxu0 0.0
    %1763 = vmatpush2.msra.mxu0 0.0
    %1764 = vmatprep.subr.mxu0 0.0
    %1765 = vmatpush2.msra.mxu0 0.0
    %1766 = vmatprep.subr.mxu0 0.0
    %1767 = vmatpush2.msra.mxu0 0.0
    %1768 = vmatprep.mubr.f32.mxu0 0.0
    %1769 = vmatmul.mubr.f32.gmra.mxu0 %v1702
    %v1770 = vpop.f32.mrf.mxu0
    %v1771 = vadd.f32 0.0, %v1770
    %v1772 = vpop.f32.mrf.mxu0
    %1773 = vdwg.mxu0
    %v1774 = vadd.f32 %v1695, %v1771
    %1775 = vst.msk [vmem:[#allocation4 + $0x8] sm:$0xff] %vm55, %v1774
    %1776 = vrot.lane.b32.xlu0 %v159, 112
    %v1777 = vpop.permute.xlu0 %1776
    %1778 = vrot.lane.b32.xlu0 %v1257, 112
    %v1779 = vpop.permute.xlu0 %1778
    %1780 = vrot.lane.b32.xlu0 %v1258, 112
    %v1781 = vpop.permute.xlu0 %1780
    %1782 = vrot.lane.b32.xlu0 %v1259, 112
    %v1783 = vpop.permute.xlu0 %1782
    %v1784 = vsel %vm216, %v1777, 0
    %v1786 = vsel %vm216, %v1779, 0
    %v1788 = vsel %vm216, %v1781, 0
    %v1790 = vsel %vm216, %v1783, 0
    %1792 = vmatprep.subr.mxu0 0.0
    %1793 = vmatpush1.xpose.msra.mxu0 0.0
    %1794 = vmatprep.subr.mxu0 0.0
    %1795 = vmatpush1.xpose.msra.mxu0 0.0
    %1796 = vmatprep.subr.mxu0 0.0
    %1797 = vmatpush1.xpose.msra.mxu0 0.0
    %1798 = vmatprep.subr.mxu0 0.0
    %1799 = vmatpush1.xpose.msra.mxu0 0.0
    %1800 = vmatprep.subr.mxu0 0.0
    %1801 = vmatpush1.xpose.msra.mxu0 0.0
    %1802 = vmatprep.subr.mxu0 0.0
    %1803 = vmatpush1.xpose.msra.mxu0 0.0
    %1804 = vmatprep.subr.mxu0 0.0
    %1805 = vmatpush1.xpose.msra.mxu0 0.0
    %1806 = vmatprep.subr.mxu0 0.0
    %1807 = vmatpush1.xpose.msra.mxu0 0.0
    %1808 = vmatprep.subr.mxu0 0.0
    %1809 = vmatpush1.xpose.msra.mxu0 0.0
    %1810 = vmatprep.subr.mxu0 0.0
    %1811 = vmatpush1.xpose.msra.mxu0 0.0
    %1812 = vmatprep.subr.mxu0 0.0
    %1813 = vmatpush1.xpose.msra.mxu0 0.0
    %1814 = vmatprep.subr.mxu0 0.0
    %1815 = vmatpush1.xpose.msra.mxu0 0.0
    %1816 = vmatprep.subr.mxu0 0.0
    %1817 = vmatpush1.xpose.msra.mxu0 0.0
    %1818 = vmatprep.subr.mxu0 0.0
    %1819 = vmatpush1.xpose.msra.mxu0 %v1790
    %1820 = vmatprep.subr.mxu0 0.0
    %1821 = vmatpush1.xpose.msra.mxu0 %v1788
    %1822 = vmatprep.subr.mxu0 0.0
    %1823 = vmatpush1.xpose.msra.mxu0 %v1786
    %1824 = vmatprep.subr.mxu0 0.0
    %1825 = vmatpush2.xpose.msra.mxu0 0.0
    %1826 = vmatprep.subr.mxu0 0.0
    %1827 = vmatpush2.xpose.msra.mxu0 0.0
    %1828 = vmatprep.subr.mxu0 0.0
    %1829 = vmatpush2.xpose.msra.mxu0 0.0
    %1830 = vmatprep.subr.mxu0 0.0
    %1831 = vmatpush2.xpose.msra.mxu0 0.0
    %1832 = vmatprep.subr.mxu0 0.0
    %1833 = vmatpush2.xpose.msra.mxu0 0.0
    %1834 = vmatprep.subr.mxu0 0.0
    %1835 = vmatpush2.xpose.msra.mxu0 0.0
    %1836 = vmatprep.subr.mxu0 0.0
    %1837 = vmatpush2.xpose.msra.mxu0 0.0
    %1838 = vmatprep.subr.mxu0 0.0
    %1839 = vmatpush2.xpose.msra.mxu0 0.0
    %1840 = vmatprep.subr.mxu0 0.0
    %1841 = vmatpush2.xpose.msra.mxu0 0.0
    %1842 = vmatprep.subr.mxu0 0.0
    %1843 = vmatpush2.xpose.msra.mxu0 0.0
    %1844 = vmatprep.subr.mxu0 0.0
    %1845 = vmatpush2.xpose.msra.mxu0 0.0
    %1846 = vmatprep.subr.mxu0 0.0
    %1847 = vmatpush2.xpose.msra.mxu0 0.0
    %1848 = vmatprep.subr.mxu0 0.0
    %1849 = vmatpush2.xpose.msra.mxu0 0.0
    %1850 = vmatprep.subr.mxu0 0.0
    %1851 = vmatpush2.xpose.msra.mxu0 0.0
    %1852 = vmatprep.subr.mxu0 0.0
    %1853 = vmatpush2.xpose.msra.mxu0 0.0
    %1854 = vmatprep.subr.mxu0 0.0
    %1855 = vmatpush2.xpose.msra.mxu0 0.0
    %1856 = vmatprep.mubr.f32.mxu0 0.0
    %1857 = vmatmul.mubr.f32.gmra.mxu0 %v1784
    %v1858 = vpop.f32.mrf.mxu0
    %v1859 = vadd.f32 0.0, %v1858
    %v1860 = vpop.f32.mrf.mxu0
    %1861 = vdwg.mxu0
    %v1862 = vsel %vm299, %v1859, -1e+30
    %v1863 = vsel %vm301, %v1862, -inf
    %1864 = vmax.xlane.f32.xlu0 %v1863
    %v1865 = vpop.xlane.xlu0 %1864
    %v1866 = vsub.f32 %v1862, %v1865
    %v1867 = vmul.f32 %v1866, 1.442695
    %v1868 = vpow.pop %v1867
    %v1869 = vsel %vm301, %v1868, 0.0
    %1870 = vadd.xlane.f32.xlu0 %v1869
    %v1871 = vpop.xlane.xlu0 %1870
    %1872 = vrot.lane.b32.xlu0 %v1260, 112
    %v1873 = vpop.permute.xlu0 %1872
    %1874 = vrot.lane.b32.xlu0 %v1261, 112
    %v1875 = vpop.permute.xlu0 %1874
    %1876 = vrot.lane.b32.xlu0 %v1262, 112
    %v1877 = vpop.permute.xlu0 %1876
    %v1882 = vsel %vm301, %v1868, 0
    %1884 = vmatprep.subr.mxu0 0.0
    %1885 = vmatpush1.msra.mxu0 0.0
    %1886 = vmatprep.subr.mxu0 0.0
    %1887 = vmatpush1.msra.mxu0 0.0
    %1888 = vmatprep.subr.mxu0 0.0
    %1889 = vmatpush1.msra.mxu0 0.0
    %1890 = vmatprep.subr.mxu0 0.0
    %1891 = vmatpush1.msra.mxu0 0.0
    %1892 = vmatprep.subr.mxu0 0.0
    %1893 = vmatpush1.msra.mxu0 0.0
    %1894 = vmatprep.subr.mxu0 0.0
    %1895 = vmatpush1.msra.mxu0 0.0
    %1896 = vmatprep.subr.mxu0 0.0
    %1897 = vmatpush1.msra.mxu0 0.0
    %1898 = vmatprep.subr.mxu0 0.0
    %1899 = vmatpush1.msra.mxu0 0.0
    %1900 = vmatprep.subr.mxu0 0.0
    %1901 = vmatpush1.msra.mxu0 0.0
    %1902 = vmatprep.subr.mxu0 0.0
    %1903 = vmatpush1.msra.mxu0 0.0
    %1904 = vmatprep.subr.mxu0 0.0
    %1905 = vmatpush1.msra.mxu0 0.0
    %1906 = vmatprep.subr.mxu0 0.0
    %1907 = vmatpush1.msra.mxu0 0.0
    %1908 = vmatprep.subr.mxu0 0.0
    %1909 = vmatpush1.msra.mxu0 0.0
    %1910 = vmatprep.subr.mxu0 0.0
    %1911 = vmatpush1.msra.mxu0 %v1877
    %1912 = vmatprep.subr.mxu0 0.0
    %1913 = vmatpush1.msra.mxu0 %v1875
    %1914 = vmatprep.subr.mxu0 0.0
    %1915 = vmatpush1.msra.mxu0 %v1873
    %1916 = vmatprep.subr.mxu0 0.0
    %1917 = vmatpush2.msra.mxu0 0.0
    %1918 = vmatprep.subr.mxu0 0.0
    %1919 = vmatpush2.msra.mxu0 0.0
    %1920 = vmatprep.subr.mxu0 0.0
    %1921 = vmatpush2.msra.mxu0 0.0
    %1922 = vmatprep.subr.mxu0 0.0
    %1923 = vmatpush2.msra.mxu0 0.0
    %1924 = vmatprep.subr.mxu0 0.0
    %1925 = vmatpush2.msra.mxu0 0.0
    %1926 = vmatprep.subr.mxu0 0.0
    %1927 = vmatpush2.msra.mxu0 0.0
    %1928 = vmatprep.subr.mxu0 0.0
    %1929 = vmatpush2.msra.mxu0 0.0
    %1930 = vmatprep.subr.mxu0 0.0
    %1931 = vmatpush2.msra.mxu0 0.0
    %1932 = vmatprep.subr.mxu0 0.0
    %1933 = vmatpush2.msra.mxu0 0.0
    %1934 = vmatprep.subr.mxu0 0.0
    %1935 = vmatpush2.msra.mxu0 0.0
    %1936 = vmatprep.subr.mxu0 0.0
    %1937 = vmatpush2.msra.mxu0 0.0
    %1938 = vmatprep.subr.mxu0 0.0
    %1939 = vmatpush2.msra.mxu0 0.0
    %1940 = vmatprep.subr.mxu0 0.0
    %1941 = vmatpush2.msra.mxu0 0.0
    %1942 = vmatprep.subr.mxu0 0.0
    %1943 = vmatpush2.msra.mxu0 0.0
    %1944 = vmatprep.subr.mxu0 0.0
    %1945 = vmatpush2.msra.mxu0 0.0
    %1946 = vmatprep.subr.mxu0 0.0
    %1947 = vmatpush2.msra.mxu0 0.0
    %1948 = vmatprep.mubr.f32.mxu0 0.0
    %1949 = vmatmul.mubr.f32.gmra.mxu0 %v1882
    %v1950 = vpop.f32.mrf.mxu0
    %v1951 = vadd.f32 0.0, %v1950
    %v1952 = vpop.f32.mrf.mxu0
    %1953 = vdwg.mxu0
    %v1954 = vrcp.pop %v1871
    %v1955 = vmul.f32 1.0, %v1954
    %v1956 = vmul.f32 %v1951, %v1955
    %v1957 = vld [vmem:[#allocation4 + $0x8] sm:$0xff]
    %v1958 = vld [vmem:[%s2 + $0x30] sm:$0xff]
    %1960 = vrot.lane.b32.xlu0 %v1958, 32
    %v1961 = vpop.permute.xlu0 %1960
    %v1964 = vsel %vm216, %v1956, 0
    %1966 = vmatprep.subr.mxu0 0.0
    %1967 = vmatpush1.msra.mxu0 0.0
    %1968 = vmatprep.subr.mxu0 0.0
    %1969 = vmatpush1.msra.mxu0 0.0
    %1970 = vmatprep.subr.mxu0 0.0
    %1971 = vmatpush1.msra.mxu0 0.0
    %1972 = vmatprep.subr.mxu0 0.0
    %1973 = vmatpush1.msra.mxu0 0.0
    %1974 = vmatprep.subr.mxu0 0.0
    %1975 = vmatpush1.msra.mxu0 0.0
    %1976 = vmatprep.subr.mxu0 0.0
    %1977 = vmatpush1.msra.mxu0 0.0
    %1978 = vmatprep.subr.mxu0 0.0
    %1979 = vmatpush1.msra.mxu0 0.0
    %1980 = vmatprep.subr.mxu0 0.0
    %1981 = vmatpush1.msra.mxu0 0.0
    %1982 = vmatprep.subr.mxu0 0.0
    %1983 = vmatpush1.msra.mxu0 0.0
    %1984 = vmatprep.subr.mxu0 0.0
    %1985 = vmatpush1.msra.mxu0 0.0
    %1986 = vmatprep.subr.mxu0 0.0
    %1987 = vmatpush1.msra.mxu0 0.0
    %1988 = vmatprep.subr.mxu0 0.0
    %1989 = vmatpush1.msra.mxu0 0.0
    %1990 = vmatprep.subr.mxu0 0.0
    %1991 = vmatpush1.msra.mxu0 0.0
    %1992 = vmatprep.subr.mxu0 0.0
    %1993 = vmatpush1.msra.mxu0 0.0
    %1994 = vmatprep.subr.mxu0 0.0
    %1995 = vmatpush1.msra.mxu0 0.0
    %1996 = vmatprep.subr.mxu0 0.0
    %1997 = vmatpush1.msra.mxu0 %v1961
    %1998 = vmatprep.subr.mxu0 0.0
    %1999 = vmatpush2.msra.mxu0 0.0
    %2000 = vmatprep.subr.mxu0 0.0
    %2001 = vmatpush2.msra.mxu0 0.0
    %2002 = vmatprep.subr.mxu0 0.0
    %2003 = vmatpush2.msra.mxu0 0.0
    %2004 = vmatprep.subr.mxu0 0.0
    %2005 = vmatpush2.msra.mxu0 0.0
    %2006 = vmatprep.subr.mxu0 0.0
    %2007 = vmatpush2.msra.mxu0 0.0
    %2008 = vmatprep.subr.mxu0 0.0
    %2009 = vmatpush2.msra.mxu0 0.0
    %2010 = vmatprep.subr.mxu0 0.0
    %2011 = vmatpush2.msra.mxu0 0.0
    %2012 = vmatprep.subr.mxu0 0.0
    %2013 = vmatpush2.msra.mxu0 0.0
    %2014 = vmatprep.subr.mxu0 0.0
    %2015 = vmatpush2.msra.mxu0 0.0
    %2016 = vmatprep.subr.mxu0 0.0
    %2017 = vmatpush2.msra.mxu0 0.0
    %2018 = vmatprep.subr.mxu0 0.0
    %2019 = vmatpush2.msra.mxu0 0.0
    %2020 = vmatprep.subr.mxu0 0.0
    %2021 = vmatpush2.msra.mxu0 0.0
    %2022 = vmatprep.subr.mxu0 0.0
    %2023 = vmatpush2.msra.mxu0 0.0
    %2024 = vmatprep.subr.mxu0 0.0
    %2025 = vmatpush2.msra.mxu0 0.0
    %2026 = vmatprep.subr.mxu0 0.0
    %2027 = vmatpush2.msra.mxu0 0.0
    %2028 = vmatprep.subr.mxu0 0.0
    %2029 = vmatpush2.msra.mxu0 0.0
    %2030 = vmatprep.mubr.f32.mxu0 0.0
    %2031 = vmatmul.mubr.f32.gmra.mxu0 %v1964
    %v2032 = vpop.f32.mrf.mxu0
    %v2033 = vadd.f32 0.0, %v2032
    %v2034 = vpop.f32.mrf.mxu0
    %2035 = vdwg.mxu0
    %v2036 = vadd.f32 %v1957, %v2033
    %2037 = vst.msk [vmem:[#allocation4 + $0x8] sm:$0xff] %vm55, %v2036
    %2038 = vrot.lane.b32.xlu0 %v159, 104
    %v2039 = vpop.permute.xlu0 %2038
    %2040 = vrot.lane.b32.xlu0 %v1257, 104
    %v2041 = vpop.permute.xlu0 %2040
    %2042 = vrot.lane.b32.xlu0 %v1258, 104
    %v2043 = vpop.permute.xlu0 %2042
    %2044 = vrot.lane.b32.xlu0 %v1259, 104
    %v2045 = vpop.permute.xlu0 %2044
    %v2046 = vsel %vm216, %v2039, 0
    %v2048 = vsel %vm216, %v2041, 0
    %v2050 = vsel %vm216, %v2043, 0
    %v2052 = vsel %vm216, %v2045, 0
    %2054 = vmatprep.subr.mxu0 0.0
    %2055 = vmatpush1.xpose.msra.mxu0 0.0
    %2056 = vmatprep.subr.mxu0 0.0
    %2057 = vmatpush1.xpose.msra.mxu0 0.0
    %2058 = vmatprep.subr.mxu0 0.0
    %2059 = vmatpush1.xpose.msra.mxu0 0.0
    %2060 = vmatprep.subr.mxu0 0.0
    %2061 = vmatpush1.xpose.msra.mxu0 0.0
    %2062 = vmatprep.subr.mxu0 0.0
    %2063 = vmatpush1.xpose.msra.mxu0 0.0
    %2064 = vmatprep.subr.mxu0 0.0
    %2065 = vmatpush1.xpose.msra.mxu0 0.0
    %2066 = vmatprep.subr.mxu0 0.0
    %2067 = vmatpush1.xpose.msra.mxu0 0.0
    %2068 = vmatprep.subr.mxu0 0.0
    %2069 = vmatpush1.xpose.msra.mxu0 0.0
    %2070 = vmatprep.subr.mxu0 0.0
    %2071 = vmatpush1.xpose.msra.mxu0 0.0
    %2072 = vmatprep.subr.mxu0 0.0
    %2073 = vmatpush1.xpose.msra.mxu0 0.0
    %2074 = vmatprep.subr.mxu0 0.0
    %2075 = vmatpush1.xpose.msra.mxu0 0.0
    %2076 = vmatprep.subr.mxu0 0.0
    %2077 = vmatpush1.xpose.msra.mxu0 0.0
    %2078 = vmatprep.subr.mxu0 0.0
    %2079 = vmatpush1.xpose.msra.mxu0 0.0
    %2080 = vmatprep.subr.mxu0 0.0
    %2081 = vmatpush1.xpose.msra.mxu0 %v2052
    %2082 = vmatprep.subr.mxu0 0.0
    %2083 = vmatpush1.xpose.msra.mxu0 %v2050
    %2084 = vmatprep.subr.mxu0 0.0
    %2085 = vmatpush1.xpose.msra.mxu0 %v2048
    %2086 = vmatprep.subr.mxu0 0.0
    %2087 = vmatpush2.xpose.msra.mxu0 0.0
    %2088 = vmatprep.subr.mxu0 0.0
    %2089 = vmatpush2.xpose.msra.mxu0 0.0
    %2090 = vmatprep.subr.mxu0 0.0
    %2091 = vmatpush2.xpose.msra.mxu0 0.0
    %2092 = vmatprep.subr.mxu0 0.0
    %2093 = vmatpush2.xpose.msra.mxu0 0.0
    %2094 = vmatprep.subr.mxu0 0.0
    %2095 = vmatpush2.xpose.msra.mxu0 0.0
    %2096 = vmatprep.subr.mxu0 0.0
    %2097 = vmatpush2.xpose.msra.mxu0 0.0
    %2098 = vmatprep.subr.mxu0 0.0
    %2099 = vmatpush2.xpose.msra.mxu0 0.0
    %2100 = vmatprep.subr.mxu0 0.0
    %2101 = vmatpush2.xpose.msra.mxu0 0.0
    %2102 = vmatprep.subr.mxu0 0.0
    %2103 = vmatpush2.xpose.msra.mxu0 0.0
    %2104 = vmatprep.subr.mxu0 0.0
    %2105 = vmatpush2.xpose.msra.mxu0 0.0
    %2106 = vmatprep.subr.mxu0 0.0
    %2107 = vmatpush2.xpose.msra.mxu0 0.0
    %2108 = vmatprep.subr.mxu0 0.0
    %2109 = vmatpush2.xpose.msra.mxu0 0.0
    %2110 = vmatprep.subr.mxu0 0.0
    %2111 = vmatpush2.xpose.msra.mxu0 0.0
    %2112 = vmatprep.subr.mxu0 0.0
    %2113 = vmatpush2.xpose.msra.mxu0 0.0
    %2114 = vmatprep.subr.mxu0 0.0
    %2115 = vmatpush2.xpose.msra.mxu0 0.0
    %2116 = vmatprep.subr.mxu0 0.0
    %2117 = vmatpush2.xpose.msra.mxu0 0.0
    %2118 = vmatprep.mubr.f32.mxu0 0.0
    %2119 = vmatmul.mubr.f32.gmra.mxu0 %v2046
    %v2120 = vpop.f32.mrf.mxu0
    %v2121 = vadd.f32 0.0, %v2120
    %v2122 = vpop.f32.mrf.mxu0
    %2123 = vdwg.mxu0
    %v2124 = vsel %vm299, %v2121, -1e+30
    %v2125 = vsel %vm301, %v2124, -inf
    %2126 = vmax.xlane.f32.xlu0 %v2125
    %v2127 = vpop.xlane.xlu0 %2126
    %v2128 = vsub.f32 %v2124, %v2127
    %v2129 = vmul.f32 %v2128, 1.442695
    %v2130 = vpow.pop %v2129
    %v2131 = vsel %vm301, %v2130, 0.0
    %2132 = vadd.xlane.f32.xlu0 %v2131
    %v2133 = vpop.xlane.xlu0 %2132
    %2134 = vrot.lane.b32.xlu0 %v1260, 104
    %v2135 = vpop.permute.xlu0 %2134
    %2136 = vrot.lane.b32.xlu0 %v1261, 104
    %v2137 = vpop.permute.xlu0 %2136
    %2138 = vrot.lane.b32.xlu0 %v1262, 104
    %v2139 = vpop.permute.xlu0 %2138
    %v2144 = vsel %vm301, %v2130, 0
    %2146 = vmatprep.subr.mxu0 0.0
    %2147 = vmatpush1.msra.mxu0 0.0
    %2148 = vmatprep.subr.mxu0 0.0
    %2149 = vmatpush1.msra.mxu0 0.0
    %2150 = vmatprep.subr.mxu0 0.0
    %2151 = vmatpush1.msra.mxu0 0.0
    %2152 = vmatprep.subr.mxu0 0.0
    %2153 = vmatpush1.msra.mxu0 0.0
    %2154 = vmatprep.subr.mxu0 0.0
    %2155 = vmatpush1.msra.mxu0 0.0
    %2156 = vmatprep.subr.mxu0 0.0
    %2157 = vmatpush1.msra.mxu0 0.0
    %2158 = vmatprep.subr.mxu0 0.0
    %2159 = vmatpush1.msra.mxu0 0.0
    %2160 = vmatprep.subr.mxu0 0.0
    %2161 = vmatpush1.msra.mxu0 0.0
    %2162 = vmatprep.subr.mxu0 0.0
    %2163 = vmatpush1.msra.mxu0 0.0
    %2164 = vmatprep.subr.mxu0 0.0
    %2165 = vmatpush1.msra.mxu0 0.0
    %2166 = vmatprep.subr.mxu0 0.0
    %2167 = vmatpush1.msra.mxu0 0.0
    %2168 = vmatprep.subr.mxu0 0.0
    %2169 = vmatpush1.msra.mxu0 0.0
    %2170 = vmatprep.subr.mxu0 0.0
    %2171 = vmatpush1.msra.mxu0 0.0
    %2172 = vmatprep.subr.mxu0 0.0
    %2173 = vmatpush1.msra.mxu0 %v2139
    %2174 = vmatprep.subr.mxu0 0.0
    %2175 = vmatpush1.msra.mxu0 %v2137
    %2176 = vmatprep.subr.mxu0 0.0
    %2177 = vmatpush1.msra.mxu0 %v2135
    %2178 = vmatprep.subr.mxu0 0.0
    %2179 = vmatpush2.msra.mxu0 0.0
    %2180 = vmatprep.subr.mxu0 0.0
    %2181 = vmatpush2.msra.mxu0 0.0
    %2182 = vmatprep.subr.mxu0 0.0
    %2183 = vmatpush2.msra.mxu0 0.0
    %2184 = vmatprep.subr.mxu0 0.0
    %2185 = vmatpush2.msra.mxu0 0.0
    %2186 = vmatprep.subr.mxu0 0.0
    %2187 = vmatpush2.msra.mxu0 0.0
    %2188 = vmatprep.subr.mxu0 0.0
    %2189 = vmatpush2.msra.mxu0 0.0
    %2190 = vmatprep.subr.mxu0 0.0
    %2191 = vmatpush2.msra.mxu0 0.0
    %2192 = vmatprep.subr.mxu0 0.0
    %2193 = vmatpush2.msra.mxu0 0.0
    %2194 = vmatprep.subr.mxu0 0.0
    %2195 = vmatpush2.msra.mxu0 0.0
    %2196 = vmatprep.subr.mxu0 0.0
    %2197 = vmatpush2.msra.mxu0 0.0
    %2198 = vmatprep.subr.mxu0 0.0
    %2199 = vmatpush2.msra.mxu0 0.0
    %2200 = vmatprep.subr.mxu0 0.0
    %2201 = vmatpush2.msra.mxu0 0.0
    %2202 = vmatprep.subr.mxu0 0.0
    %2203 = vmatpush2.msra.mxu0 0.0
    %2204 = vmatprep.subr.mxu0 0.0
    %2205 = vmatpush2.msra.mxu0 0.0
    %2206 = vmatprep.subr.mxu0 0.0
    %2207 = vmatpush2.msra.mxu0 0.0
    %2208 = vmatprep.subr.mxu0 0.0
    %2209 = vmatpush2.msra.mxu0 0.0
    %2210 = vmatprep.mubr.f32.mxu0 0.0
    %2211 = vmatmul.mubr.f32.gmra.mxu0 %v2144
    %v2212 = vpop.f32.mrf.mxu0
    %v2213 = vadd.f32 0.0, %v2212
    %v2214 = vpop.f32.mrf.mxu0
    %2215 = vdwg.mxu0
    %v2216 = vrcp.pop %v2133
    %v2217 = vmul.f32 1.0, %v2216
    %v2218 = vmul.f32 %v2213, %v2217
    %v2219 = vld [vmem:[#allocation4 + $0x8] sm:$0xff]
    %v2220 = vld [vmem:[%s2 + $0x48] sm:$0xff]
    %2222 = vrot.lane.b32.xlu0 %v2220, 32
    %v2223 = vpop.permute.xlu0 %2222
    %v2226 = vsel %vm216, %v2218, 0
    %2228 = vmatprep.subr.mxu0 0.0
    %2229 = vmatpush1.msra.mxu0 0.0
    %2230 = vmatprep.subr.mxu0 0.0
    %2231 = vmatpush1.msra.mxu0 0.0
    %2232 = vmatprep.subr.mxu0 0.0
    %2233 = vmatpush1.msra.mxu0 0.0
    %2234 = vmatprep.subr.mxu0 0.0
    %2235 = vmatpush1.msra.mxu0 0.0
    %2236 = vmatprep.subr.mxu0 0.0
    %2237 = vmatpush1.msra.mxu0 0.0
    %2238 = vmatprep.subr.mxu0 0.0
    %2239 = vmatpush1.msra.mxu0 0.0
    %2240 = vmatprep.subr.mxu0 0.0
    %2241 = vmatpush1.msra.mxu0 0.0
    %2242 = vmatprep.subr.mxu0 0.0
    %2243 = vmatpush1.msra.mxu0 0.0
    %2244 = vmatprep.subr.mxu0 0.0
    %2245 = vmatpush1.msra.mxu0 0.0
    %2246 = vmatprep.subr.mxu0 0.0
    %2247 = vmatpush1.msra.mxu0 0.0
    %2248 = vmatprep.subr.mxu0 0.0
    %2249 = vmatpush1.msra.mxu0 0.0
    %2250 = vmatprep.subr.mxu0 0.0
    %2251 = vmatpush1.msra.mxu0 0.0
    %2252 = vmatprep.subr.mxu0 0.0
    %2253 = vmatpush1.msra.mxu0 0.0
    %2254 = vmatprep.subr.mxu0 0.0
    %2255 = vmatpush1.msra.mxu0 0.0
    %2256 = vmatprep.subr.mxu0 0.0
    %2257 = vmatpush1.msra.mxu0 0.0
    %2258 = vmatprep.subr.mxu0 0.0
    %2259 = vmatpush1.msra.mxu0 %v2223
    %2260 = vmatprep.subr.mxu0 0.0
    %2261 = vmatpush2.msra.mxu0 0.0
    %2262 = vmatprep.subr.mxu0 0.0
    %2263 = vmatpush2.msra.mxu0 0.0
    %2264 = vmatprep.subr.mxu0 0.0
    %2265 = vmatpush2.msra.mxu0 0.0
    %2266 = vmatprep.subr.mxu0 0.0
    %2267 = vmatpush2.msra.mxu0 0.0
    %2268 = vmatprep.subr.mxu0 0.0
    %2269 = vmatpush2.msra.mxu0 0.0
    %2270 = vmatprep.subr.mxu0 0.0
    %2271 = vmatpush2.msra.mxu0 0.0
    %2272 = vmatprep.subr.mxu0 0.0
    %2273 = vmatpush2.msra.mxu0 0.0
    %2274 = vmatprep.subr.mxu0 0.0
    %2275 = vmatpush2.msra.mxu0 0.0
    %2276 = vmatprep.subr.mxu0 0.0
    %2277 = vmatpush2.msra.mxu0 0.0
    %2278 = vmatprep.subr.mxu0 0.0
    %2279 = vmatpush2.msra.mxu0 0.0
    %2280 = vmatprep.subr.mxu0 0.0
    %2281 = vmatpush2.msra.mxu0 0.0
    %2282 = vmatprep.subr.mxu0 0.0
    %2283 = vmatpush2.msra.mxu0 0.0
    %2284 = vmatprep.subr.mxu0 0.0
    %2285 = vmatpush2.msra.mxu0 0.0
    %2286 = vmatprep.subr.mxu0 0.0
    %2287 = vmatpush2.msra.mxu0 0.0
    %2288 = vmatprep.subr.mxu0 0.0
    %2289 = vmatpush2.msra.mxu0 0.0
    %2290 = vmatprep.subr.mxu0 0.0
    %2291 = vmatpush2.msra.mxu0 0.0
    %2292 = vmatprep.mubr.f32.mxu0 0.0
    %2293 = vmatmul.mubr.f32.gmra.mxu0 %v2226
    %v2294 = vpop.f32.mrf.mxu0
    %v2295 = vadd.f32 0.0, %v2294
    %v2296 = vpop.f32.mrf.mxu0
    %2297 = vdwg.mxu0
    %v2298 = vadd.f32 %v2219, %v2295
    %2299 = vst.msk [vmem:[#allocation4 + $0x8] sm:$0xff] %vm55, %v2298
    %v2300 = vld [vmem:[#allocation4] sm:$0xff]
    %v2301 = vld [vmem:[#allocation4 + $0x8] sm:$0xff]
    %v2302 = vadd.f32 %v49, %v2300
    %v2303 = vadd.f32 %v50, %v2301
    %v2304 = vld [vmem:[%s4 + $0x1] sm:$0x1]
    %v2306 = vlaneseq
    %v2307 = vshrl.u32 %v2306, 7
    %v2308 = vsub.s32 0, %v2307
    %v2309 = vrot.slane %v2304, %v2308
    %2310 = vrot.lane.b32.xlu0 %v2309, 96
    %v2311 = vpop.permute.xlu0 %2310
    %v2313 = vadd.f32 %v2302, %v2311
    %v2314 = vadd.f32 %v2303, %v2311
    %v2315 = vld [vmem:[%s4 + $0x3] sm:$0x1]
    %v2316 = vsel %vm55, %v2313, 0.0
    %2317 = vadd.xlane.f32.xlu0 %v2316
    %v2318 = vpop.xlane.xlu0 %2317
    %v2319 = vsel %vm55, %v2314, 0.0
    %2320 = vadd.xlane.f32.xlu0 %v2319
    %v2321 = vpop.xlane.xlu0 %2320
    %v2322 = vrcp.pop 32.0
    %v2323 = vmul.f32 %v2318, %v2322
    %v2324 = vmul.f32 %v2321, %v2322
    %v2325 = vsub.f32 %v2313, %v2323
    %v2326 = vsub.f32 %v2314, %v2324
    %v2327 = vmul.f32 %v2325, %v2325
    %v2328 = vmul.f32 %v2326, %v2326
    %v2329 = vsel %vm55, %v2327, 0.0
    %2330 = vadd.xlane.f32.xlu0 %v2329
    %v2331 = vpop.xlane.xlu0 %2330
    %v2332 = vsel %vm55, %v2328, 0.0
    %2333 = vadd.xlane.f32.xlu0 %v2332
    %v2334 = vpop.xlane.xlu0 %2333
    %v2335 = vmul.f32 %v2331, %v2322
    %v2336 = vmul.f32 %v2334, %v2322
    %v2337 = vadd.f32 %v2335, 1e-05
    %v2338 = vadd.f32 %v2336, 1e-05
    %v2339 = vrsqrt.pop %v2337
    %v2340 = vrsqrt.pop %v2338
    %v2341 = vmul.f32 %v2325, %v2339
    %v2342 = vmul.f32 %v2326, %v2340
    %v2344 = vlaneseq
    %v2345 = vshrl.u32 %v2344, 7
    %v2346 = vsub.s32 0, %v2345
    %v2347 = vrot.slane %v2315, %v2346
    %v2349 = vmul.f32 %v2341, %v2347
    %v2350 = vmul.f32 %v2342, %v2347
    %2351 = vrot.lane.b32.xlu0 %v2347, 96
    %v2352 = vpop.permute.xlu0 %2351
    %v2354 = vadd.f32 %v2349, %v2352
    %v2355 = vadd.f32 %v2350, %v2352
    %v2356 = vld [vmem:[%s2 + $0x8] sm:$0xff]
    %v2357 = vld [vmem:[%s2 + $0x20] sm:$0xff]
    %v2358 = vld [vmem:[%s2 + $0x38] sm:$0xff]
    %v2359 = vld [vmem:[%s2 + $0x50] sm:$0xff]
    %2360 = vrot.lane.b32.xlu0 %v2309, 64
    %v2361 = vpop.permute.xlu0 %2360
    %v2364 = vsel %vm55, %v2354, 0
    %v2367 = vsel %vm55, %v2355, 0
    %2369 = vmatprep.subr.mxu0 0.0
    %2370 = vmatpush1.msra.mxu0 0.0
    %2371 = vmatprep.subr.mxu0 0.0
    %2372 = vmatpush1.msra.mxu0 0.0
    %2373 = vmatprep.subr.mxu0 0.0
    %2374 = vmatpush1.msra.mxu0 0.0
    %2375 = vmatprep.subr.mxu0 0.0
    %2376 = vmatpush1.msra.mxu0 0.0
    %2377 = vmatprep.subr.mxu0 0.0
    %2378 = vmatpush1.msra.mxu0 0.0
    %2379 = vmatprep.subr.mxu0 0.0
    %2380 = vmatpush1.msra.mxu0 0.0
    %2381 = vmatprep.subr.mxu0 0.0
    %2382 = vmatpush1.msra.mxu0 0.0
    %2383 = vmatprep.subr.mxu0 0.0
    %2384 = vmatpush1.msra.mxu0 0.0
    %2385 = vmatprep.subr.mxu0 0.0
    %2386 = vmatpush1.msra.mxu0 0.0
    %2387 = vmatprep.subr.mxu0 0.0
    %2388 = vmatpush1.msra.mxu0 0.0
    %2389 = vmatprep.subr.mxu0 0.0
    %2390 = vmatpush1.msra.mxu0 0.0
    %2391 = vmatprep.subr.mxu0 0.0
    %2392 = vmatpush1.msra.mxu0 0.0
    %2393 = vmatprep.subr.mxu0 0.0
    %2394 = vmatpush1.msra.mxu0 %v2359
    %2395 = vmatprep.subr.mxu0 0.0
    %2396 = vmatpush1.msra.mxu0 %v2358
    %2397 = vmatprep.subr.mxu0 0.0
    %2398 = vmatpush1.msra.mxu0 %v2357
    %2399 = vmatprep.subr.mxu0 0.0
    %2400 = vmatpush1.msra.mxu0 %v2356
    %2401 = vmatprep.subr.mxu0 0.0
    %2402 = vmatpush2.msra.mxu0 0.0
    %2403 = vmatprep.subr.mxu0 0.0
    %2404 = vmatpush2.msra.mxu0 0.0
    %2405 = vmatprep.subr.mxu0 0.0
    %2406 = vmatpush2.msra.mxu0 0.0
    %2407 = vmatprep.subr.mxu0 0.0
    %2408 = vmatpush2.msra.mxu0 0.0
    %2409 = vmatprep.subr.mxu0 0.0
    %2410 = vmatpush2.msra.mxu0 0.0
    %2411 = vmatprep.subr.mxu0 0.0
    %2412 = vmatpush2.msra.mxu0 0.0
    %2413 = vmatprep.subr.mxu0 0.0
    %2414 = vmatpush2.msra.mxu0 0.0
    %2415 = vmatprep.subr.mxu0 0.0
    %2416 = vmatpush2.msra.mxu0 0.0
    %2417 = vmatprep.subr.mxu0 0.0
    %2418 = vmatpush2.msra.mxu0 0.0
    %2419 = vmatprep.subr.mxu0 0.0
    %2420 = vmatpush2.msra.mxu0 0.0
    %2421 = vmatprep.subr.mxu0 0.0
    %2422 = vmatpush2.msra.mxu0 0.0
    %2423 = vmatprep.subr.mxu0 0.0
    %2424 = vmatpush2.msra.mxu0 0.0
    %2425 = vmatprep.subr.mxu0 0.0
    %2426 = vmatpush2.msra.mxu0 0.0
    %2427 = vmatprep.subr.mxu0 0.0
    %2428 = vmatpush2.msra.mxu0 0.0
    %2429 = vmatprep.subr.mxu0 0.0
    %2430 = vmatpush2.msra.mxu0 0.0
    %2431 = vmatprep.subr.mxu0 0.0
    %2432 = vmatpush2.msra.mxu0 0.0
    %2433 = vmatprep.mubr.f32.mxu0 0.0
    %2434 = vmatmul.mubr.f32.gmra.mxu0 %v2364
    %v2435 = vpop.f32.mrf.mxu0
    %v2436 = vadd.f32 %v2361, %v2435
    %v2437 = vpop.f32.mrf.mxu0
    %2438 = vmatprep.mubr.f32.mxu0 0.0
    %2439 = vmatmul.mubr.f32.gmra.mxu0 %v2367
    %v2440 = vpop.f32.mrf.mxu0
    %v2441 = vadd.f32 %v2361, %v2440
    %v2442 = vpop.f32.mrf.mxu0
    %2443 = vdwg.mxu0
    %v2444 = vld [vmem:[%s4 + $0x1] sm:$0x3]
    %v2446 = vlaneseq
    %v2447 = vshrl.u32 %v2446, 7
    %v2448 = vsub.s32 0, %v2447
    %v2449 = vrot.slane %v2444, %v2448
    %v2450 = vlaneseq
    %v2451 = vshrl.u32 %v2450, 7
    %v2452 = vsub.s32 1, %v2451
    %v2453 = vrot.slane %v2444, %v2452
    %2458 = vrot.lane.b32.xlu0 %v2356, 96
    %v2459 = vpop.permute.xlu0 %2458
    %2460 = vrot.lane.b32.xlu0 %v2357, 96
    %v2461 = vpop.permute.xlu0 %2460
    %2462 = vrot.lane.b32.xlu0 %v2358, 96
    %v2463 = vpop.permute.xlu0 %2462
    %2464 = vrot.lane.b32.xlu0 %v2359, 96
    %v2465 = vpop.permute.xlu0 %2464
    %2470 = vrot.lane.b32.xlu0 %v2449, 32
    %v2471 = vpop.permute.xlu0 %2470
    %2472 = vrot.lane.b32.xlu0 %v2453, 32
    %v2473 = vpop.permute.xlu0 %2472
    %v2474 = vsel %vm55, %v2471, %v2473
    %v2477 = vsel %vm55, %v51, 0
    %v2480 = vsel %vm55, %v52, 0
    %v2483 = vsel %vm55, %v53, 0
    %v2486 = vsel %vm55, %v54, 0
    %2488 = vmatprep.subr.mxu0 0.0
    %2489 = vmatpush1.msra.mxu0 0.0
    %2490 = vmatprep.subr.mxu0 0.0
    %2491 = vmatpush1.msra.mxu0 0.0
    %2492 = vmatprep.subr.mxu0 0.0
    %2493 = vmatpush1.msra.mxu0 0.0
    %2494 = vmatprep.subr.mxu0 0.0
    %2495 = vmatpush1.msra.mxu0 0.0
    %2496 = vmatprep.subr.mxu0 0.0
    %2497 = vmatpush1.msra.mxu0 0.0
    %2498 = vmatprep.subr.mxu0 0.0
    %2499 = vmatpush1.msra.mxu0 0.0
    %2500 = vmatprep.subr.mxu0 0.0
    %2501 = vmatpush1.msra.mxu0 0.0
    %2502 = vmatprep.subr.mxu0 0.0
    %2503 = vmatpush1.msra.mxu0 0.0
    %2504 = vmatprep.subr.mxu0 0.0
    %2505 = vmatpush1.msra.mxu0 0.0
    %2506 = vmatprep.subr.mxu0 0.0
    %2507 = vmatpush1.msra.mxu0 0.0
    %2508 = vmatprep.subr.mxu0 0.0
    %2509 = vmatpush1.msra.mxu0 0.0
    %2510 = vmatprep.subr.mxu0 0.0
    %2511 = vmatpush1.msra.mxu0 0.0
    %2512 = vmatprep.subr.mxu0 0.0
    %2513 = vmatpush1.msra.mxu0 %v2465
    %2514 = vmatprep.subr.mxu0 0.0
    %2515 = vmatpush1.msra.mxu0 %v2463
    %2516 = vmatprep.subr.mxu0 0.0
    %2517 = vmatpush1.msra.mxu0 %v2461
    %2518 = vmatprep.subr.mxu0 0.0
    %2519 = vmatpush1.msra.mxu0 %v2459
    %2520 = vmatprep.subr.mxu0 0.0
    %2521 = vmatpush2.msra.mxu0 0.0
    %2522 = vmatprep.subr.mxu0 0.0
    %2523 = vmatpush2.msra.mxu0 0.0
    %2524 = vmatprep.subr.mxu0 0.0
    %2525 = vmatpush2.msra.mxu0 0.0
    %2526 = vmatprep.subr.mxu0 0.0
    %2527 = vmatpush2.msra.mxu0 0.0
    %2528 = vmatprep.subr.mxu0 0.0
    %2529 = vmatpush2.msra.mxu0 0.0
    %2530 = vmatprep.subr.mxu0 0.0
    %2531 = vmatpush2.msra.mxu0 0.0
    %2532 = vmatprep.subr.mxu0 0.0
    %2533 = vmatpush2.msra.mxu0 0.0
    %2534 = vmatprep.subr.mxu0 0.0
    %2535 = vmatpush2.msra.mxu0 0.0
    %2536 = vmatprep.subr.mxu0 0.0
    %2537 = vmatpush2.msra.mxu0 0.0
    %2538 = vmatprep.subr.mxu0 0.0
    %2539 = vmatpush2.msra.mxu0 0.0
    %2540 = vmatprep.subr.mxu0 0.0
    %2541 = vmatpush2.msra.mxu0 0.0
    %2542 = vmatprep.subr.mxu0 0.0
    %2543 = vmatpush2.msra.mxu0 0.0
    %2544 = vmatprep.subr.mxu0 0.0
    %2545 = vmatpush2.msra.mxu0 0.0
    %2546 = vmatprep.subr.mxu0 0.0
    %2547 = vmatpush2.msra.mxu0 0.0
    %2548 = vmatprep.subr.mxu0 0.0
    %2549 = vmatpush2.msra.mxu0 0.0
    %2550 = vmatprep.subr.mxu0 0.0
    %2551 = vmatpush2.msra.mxu0 0.0
    %2552 = vmatprep.mubr.f32.mxu0 0.0
    %2553 = vmatmul.mubr.f32.gmra.mxu0 %v2477
    %v2554 = vpop.f32.mrf.mxu0
    %v2555 = vadd.f32 %v2474, %v2554
    %v2556 = vpop.f32.mrf.mxu0
    %2557 = vmatprep.mubr.f32.mxu0 0.0
    %2558 = vmatmul.mubr.f32.gmra.mxu0 %v2480
    %v2559 = vpop.f32.mrf.mxu0
    %v2560 = vadd.f32 %v2474, %v2559
    %v2561 = vpop.f32.mrf.mxu0
    %2562 = vmatprep.mubr.f32.mxu0 0.0
    %2563 = vmatmul.mubr.f32.gmra.mxu0 %v2483
    %v2564 = vpop.f32.mrf.mxu0
    %v2565 = vadd.f32 %v2474, %v2564
    %v2566 = vpop.f32.mrf.mxu0
    %2567 = vmatprep.mubr.f32.mxu0 0.0
    %2568 = vmatmul.mubr.f32.gmra.mxu0 %v2486
    %v2569 = vpop.f32.mrf.mxu0
    %v2570 = vadd.f32 %v2474, %v2569
    %v2571 = vpop.f32.mrf.mxu0
    %2572 = vdwg.mxu0
    %2573 = vst.msk [vmem:[#allocation2] sm:$0xff] %vm55, %v2555
    %2574 = vst.msk [vmem:[#allocation2 + $0x8] sm:$0xff] %vm55, %v2560
    %2577 = vrot.lane.b32.xlu0 %v2555, 96
    %v2578 = vpop.permute.xlu0 %2577
    %2579 = vrot.lane.b32.xlu0 %v2560, 96
    %v2580 = vpop.permute.xlu0 %2579
    %2583 = vst.msk [vmem:[#allocation3] sm:$0xff] %vm55, %v2578
    %2584 = vst.msk [vmem:[#allocation3 + $0x8] sm:$0xff] %vm55, %v2580
    %v2585 = vld [vmem:[%s4 + $0x2] sm:$0x1]
    %v2587 = vlaneseq
    %v2588 = vshrl.u32 %v2587, 7
    %v2589 = vsub.s32 0, %v2588
    %v2590 = vrot.slane %v2585, %v2589
    %2591 = vrot.lane.b32.xlu0 %v2590, 96
    %v2592 = vpop.permute.xlu0 %2591
    %2594 = vst.msk [vmem:[#allocation2 + $0x10] sm:$0x1] %vm180, %v2592
    %v2595 = vld [vmem:[%s4 + $0x2] sm:$0x1]
    %v2597 = vlaneseq
    %v2598 = vshrl.u32 %v2597, 7
    %v2599 = vsub.s32 0, %v2598
    %v2600 = vrot.slane %v2595, %v2599
    %2601 = vrot.lane.b32.xlu0 %v2600, 64
    %v2602 = vpop.permute.xlu0 %2601
    %2604 = vst.msk [vmem:[#allocation3 + $0x10] sm:$0x1] %vm180, %v2602
    %2605 = vst.msk [vmem:[%s188] sm:$0xff] %vm55, %v2565
    %2606 = vst.msk [vmem:[%s188 + $0x8] sm:$0xff] %vm55, %v2570
    %2609 = vrot.lane.b32.xlu0 %v2565, 96
    %v2610 = vpop.permute.xlu0 %2609
    %2611 = vrot.lane.b32.xlu0 %v2570, 96
    %v2612 = vpop.permute.xlu0 %2611
    %2615 = vst.msk [vmem:[%s193] sm:$0xff] %vm55, %v2610
    %2616 = vst.msk [vmem:[%s193 + $0x8] sm:$0xff] %vm55, %v2612
    %v2617 = vld [vmem:[%s4 + $0x2] sm:$0x1]
    %v2619 = vlaneseq
    %v2620 = vshrl.u32 %v2619, 7
    %v2621 = vsub.s32 0, %v2620
    %v2622 = vrot.slane %v2617, %v2621
    %2623 = vrot.lane.b32.xlu0 %v2622, 96
    %v2624 = vpop.permute.xlu0 %2623
    %2626 = vst.msk [vmem:[%s188 + $0x10] sm:$0x1] %vm180, %v2624
    %v2627 = vld [vmem:[%s4 + $0x2] sm:$0x1]
    %v2629 = vlaneseq
    %v2630 = vshrl.u32 %v2629, 7
    %v2631 = vsub.s32 0, %v2630
    %v2632 = vrot.slane %v2627, %v2631
    %2633 = vrot.lane.b32.xlu0 %v2632, 64
    %v2634 = vpop.permute.xlu0 %2633
    %2636 = vst.msk [vmem:[%s193 + $0x10] sm:$0x1] %vm180, %v2634
    %2637 = vst.msk [vmem:[#allocation4] sm:$0xff] %vm55, 0.0
    %2638 = vst.msk [vmem:[#allocation4 + $0x8] sm:$0xff] %vm55, 0.0
    %vm2639 = vcmp.le.s32.totalorder %v69, 16
    %v2640 = vld [vmem:[#allocation2] sm:$0xff]
    %v2641 = vld [vmem:[#allocation2 + $0x8] sm:$0xff]
    %v2642 = vld [vmem:[#allocation2 + $0x10] sm:$0xff]
    %v2643 = vld [vmem:[#allocation3] sm:$0xff]
    %v2644 = vld [vmem:[#allocation3 + $0x8] sm:$0xff]
    %v2645 = vld [vmem:[#allocation3 + $0x10] sm:$0xff]
    %v2647 = vsel %vm216, %v2436, 0
    %v2650 = vsel %vm216, %v2640, 0
    %v2653 = vsel %vm216, %v2641, 0
    %v2656 = vsel %vm216, %v2642, 0
    %2658 = vmatprep.subr.mxu0 0.0
    %2659 = vmatpush1.xpose.msra.mxu0 0.0
    %2660 = vmatprep.subr.mxu0 0.0
    %2661 = vmatpush1.xpose.msra.mxu0 0.0
    %2662 = vmatprep.subr.mxu0 0.0
    %2663 = vmatpush1.xpose.msra.mxu0 0.0
    %2664 = vmatprep.subr.mxu0 0.0
    %2665 = vmatpush1.xpose.msra.mxu0 0.0
    %2666 = vmatprep.subr.mxu0 0.0
    %2667 = vmatpush1.xpose.msra.mxu0 0.0
    %2668 = vmatprep.subr.mxu0 0.0
    %2669 = vmatpush1.xpose.msra.mxu0 0.0
    %2670 = vmatprep.subr.mxu0 0.0
    %2671 = vmatpush1.xpose.msra.mxu0 0.0
    %2672 = vmatprep.subr.mxu0 0.0
    %2673 = vmatpush1.xpose.msra.mxu0 0.0
    %2674 = vmatprep.subr.mxu0 0.0
    %2675 = vmatpush1.xpose.msra.mxu0 0.0
    %2676 = vmatprep.subr.mxu0 0.0
    %2677 = vmatpush1.xpose.msra.mxu0 0.0
    %2678 = vmatprep.subr.mxu0 0.0
    %2679 = vmatpush1.xpose.msra.mxu0 0.0
    %2680 = vmatprep.subr.mxu0 0.0
    %2681 = vmatpush1.xpose.msra.mxu0 0.0
    %2682 = vmatprep.subr.mxu0 0.0
    %2683 = vmatpush1.xpose.msra.mxu0 0.0
    %2684 = vmatprep.subr.mxu0 0.0
    %2685 = vmatpush1.xpose.msra.mxu0 %v2656
    %2686 = vmatprep.subr.mxu0 0.0
    %2687 = vmatpush1.xpose.msra.mxu0 %v2653
    %2688 = vmatprep.subr.mxu0 0.0
    %2689 = vmatpush1.xpose.msra.mxu0 %v2650
    %2690 = vmatprep.subr.mxu0 0.0
    %2691 = vmatpush2.xpose.msra.mxu0 0.0
    %2692 = vmatprep.subr.mxu0 0.0
    %2693 = vmatpush2.xpose.msra.mxu0 0.0
    %2694 = vmatprep.subr.mxu0 0.0
    %2695 = vmatpush2.xpose.msra.mxu0 0.0
    %2696 = vmatprep.subr.mxu0 0.0
    %2697 = vmatpush2.xpose.msra.mxu0 0.0
    %2698 = vmatprep.subr.mxu0 0.0
    %2699 = vmatpush2.xpose.msra.mxu0 0.0
    %2700 = vmatprep.subr.mxu0 0.0
    %2701 = vmatpush2.xpose.msra.mxu0 0.0
    %2702 = vmatprep.subr.mxu0 0.0
    %2703 = vmatpush2.xpose.msra.mxu0 0.0
    %2704 = vmatprep.subr.mxu0 0.0
    %2705 = vmatpush2.xpose.msra.mxu0 0.0
    %2706 = vmatprep.subr.mxu0 0.0
    %2707 = vmatpush2.xpose.msra.mxu0 0.0
    %2708 = vmatprep.subr.mxu0 0.0
    %2709 = vmatpush2.xpose.msra.mxu0 0.0
    %2710 = vmatprep.subr.mxu0 0.0
    %2711 = vmatpush2.xpose.msra.mxu0 0.0
    %2712 = vmatprep.subr.mxu0 0.0
    %2713 = vmatpush2.xpose.msra.mxu0 0.0
    %2714 = vmatprep.subr.mxu0 0.0
    %2715 = vmatpush2.xpose.msra.mxu0 0.0
    %2716 = vmatprep.subr.mxu0 0.0
    %2717 = vmatpush2.xpose.msra.mxu0 0.0
    %2718 = vmatprep.subr.mxu0 0.0
    %2719 = vmatpush2.xpose.msra.mxu0 0.0
    %2720 = vmatprep.subr.mxu0 0.0
    %2721 = vmatpush2.xpose.msra.mxu0 0.0
    %2722 = vmatprep.mubr.f32.mxu0 0.0
    %2723 = vmatmul.mubr.f32.gmra.mxu0 %v2647
    %v2724 = vpop.f32.mrf.mxu0
    %v2725 = vadd.f32 0.0, %v2724
    %v2726 = vpop.f32.mrf.mxu0
    %2727 = vdwg.mxu0
    %v2728 = vsel %vm2639, 1, 0
    %vm2729 = vcmp.eq.s32.totalorder %v2728, 1
    %v2730 = vsel %vm2729, %v2725, -1e+30
    %v2731 = vsel %vm301, %v2730, -inf
    %2732 = vmax.xlane.f32.xlu0 %v2731
    %v2733 = vpop.xlane.xlu0 %2732
    %v2734 = vsub.f32 %v2730, %v2733
    %v2735 = vmul.f32 %v2734, 1.442695
    %v2736 = vpow.pop %v2735
    %v2737 = vsel %vm301, %v2736, 0.0
    %2738 = vadd.xlane.f32.xlu0 %v2737
    %v2739 = vpop.xlane.xlu0 %2738
    %v2741 = vsel %vm301, %v2736, 0
    %2743 = vmatprep.subr.mxu0 0.0
    %2744 = vmatpush1.msra.mxu0 0.0
    %2745 = vmatprep.subr.mxu0 0.0
    %2746 = vmatpush1.msra.mxu0 0.0
    %2747 = vmatprep.subr.mxu0 0.0
    %2748 = vmatpush1.msra.mxu0 0.0
    %2749 = vmatprep.subr.mxu0 0.0
    %2750 = vmatpush1.msra.mxu0 0.0
    %2751 = vmatprep.subr.mxu0 0.0
    %2752 = vmatpush1.msra.mxu0 0.0
    %2753 = vmatprep.subr.mxu0 0.0
    %2754 = vmatpush1.msra.mxu0 0.0
    %2755 = vmatprep.subr.mxu0 0.0
    %2756 = vmatpush1.msra.mxu0 0.0
    %2757 = vmatprep.subr.mxu0 0.0
    %2758 = vmatpush1.msra.mxu0 0.0
    %2759 = vmatprep.subr.mxu0 0.0
    %2760 = vmatpush1.msra.mxu0 0.0
    %2761 = vmatprep.subr.mxu0 0.0
    %2762 = vmatpush1.msra.mxu0 0.0
    %2763 = vmatprep.subr.mxu0 0.0
    %2764 = vmatpush1.msra.mxu0 0.0
    %2765 = vmatprep.subr.mxu0 0.0
    %2766 = vmatpush1.msra.mxu0 0.0
    %2767 = vmatprep.subr.mxu0 0.0
    %2768 = vmatpush1.msra.mxu0 0.0
    %2769 = vmatprep.subr.mxu0 0.0
    %2770 = vmatpush1.msra.mxu0 %v2645
    %2771 = vmatprep.subr.mxu0 0.0
    %2772 = vmatpush1.msra.mxu0 %v2644
    %2773 = vmatprep.subr.mxu0 0.0
    %2774 = vmatpush1.msra.mxu0 %v2643
    %2775 = vmatprep.subr.mxu0 0.0
    %2776 = vmatpush2.msra.mxu0 0.0
    %2777 = vmatprep.subr.mxu0 0.0
    %2778 = vmatpush2.msra.mxu0 0.0
    %2779 = vmatprep.subr.mxu0 0.0
    %2780 = vmatpush2.msra.mxu0 0.0
    %2781 = vmatprep.subr.mxu0 0.0
    %2782 = vmatpush2.msra.mxu0 0.0
    %2783 = vmatprep.subr.mxu0 0.0
    %2784 = vmatpush2.msra.mxu0 0.0
    %2785 = vmatprep.subr.mxu0 0.0
    %2786 = vmatpush2.msra.mxu0 0.0
    %2787 = vmatprep.subr.mxu0 0.0
    %2788 = vmatpush2.msra.mxu0 0.0
    %2789 = vmatprep.subr.mxu0 0.0
    %2790 = vmatpush2.msra.mxu0 0.0
    %2791 = vmatprep.subr.mxu0 0.0
    %2792 = vmatpush2.msra.mxu0 0.0
    %2793 = vmatprep.subr.mxu0 0.0
    %2794 = vmatpush2.msra.mxu0 0.0
    %2795 = vmatprep.subr.mxu0 0.0
    %2796 = vmatpush2.msra.mxu0 0.0
    %2797 = vmatprep.subr.mxu0 0.0
    %2798 = vmatpush2.msra.mxu0 0.0
    %2799 = vmatprep.subr.mxu0 0.0
    %2800 = vmatpush2.msra.mxu0 0.0
    %2801 = vmatprep.subr.mxu0 0.0
    %2802 = vmatpush2.msra.mxu0 0.0
    %2803 = vmatprep.subr.mxu0 0.0
    %2804 = vmatpush2.msra.mxu0 0.0
    %2805 = vmatprep.subr.mxu0 0.0
    %2806 = vmatpush2.msra.mxu0 0.0
    %2807 = vmatprep.mubr.f32.mxu0 0.0
    %2808 = vmatmul.mubr.f32.gmra.mxu0 %v2741
    %v2809 = vpop.f32.mrf.mxu0
    %v2810 = vadd.f32 0.0, %v2809
    %v2811 = vpop.f32.mrf.mxu0
    %2812 = vdwg.mxu0
    %v2813 = vrcp.pop %v2739
    %v2814 = vmul.f32 1.0, %v2813
    %v2815 = vmul.f32 %v2810, %v2814
    %v2816 = vld [vmem:[#allocation4] sm:$0xff]
    %v2817 = vld [vmem:[%s2 + $0x8] sm:$0xff]
    %2819 = vrot.lane.b32.xlu0 %v2817, 32
    %v2820 = vpop.permute.xlu0 %2819
    %v2823 = vsel %vm216, %v2815, 0
    %2825 = vmatprep.subr.mxu0 0.0
    %2826 = vmatpush1.msra.mxu0 0.0
    %2827 = vmatprep.subr.mxu0 0.0
    %2828 = vmatpush1.msra.mxu0 0.0
    %2829 = vmatprep.subr.mxu0 0.0
    %2830 = vmatpush1.msra.mxu0 0.0
    %2831 = vmatprep.subr.mxu0 0.0
    %2832 = vmatpush1.msra.mxu0 0.0
    %2833 = vmatprep.subr.mxu0 0.0
    %2834 = vmatpush1.msra.mxu0 0.0
    %2835 = vmatprep.subr.mxu0 0.0
    %2836 = vmatpush1.msra.mxu0 0.0
    %2837 = vmatprep.subr.mxu0 0.0
    %2838 = vmatpush1.msra.mxu0 0.0
    %2839 = vmatprep.subr.mxu0 0.0
    %2840 = vmatpush1.msra.mxu0 0.0
    %2841 = vmatprep.subr.mxu0 0.0
    %2842 = vmatpush1.msra.mxu0 0.0
    %2843 = vmatprep.subr.mxu0 0.0
    %2844 = vmatpush1.msra.mxu0 0.0
    %2845 = vmatprep.subr.mxu0 0.0
    %2846 = vmatpush1.msra.mxu0 0.0
    %2847 = vmatprep.subr.mxu0 0.0
    %2848 = vmatpush1.msra.mxu0 0.0
    %2849 = vmatprep.subr.mxu0 0.0
    %2850 = vmatpush1.msra.mxu0 0.0
    %2851 = vmatprep.subr.mxu0 0.0
    %2852 = vmatpush1.msra.mxu0 0.0
    %2853 = vmatprep.subr.mxu0 0.0
    %2854 = vmatpush1.msra.mxu0 0.0
    %2855 = vmatprep.subr.mxu0 0.0
    %2856 = vmatpush1.msra.mxu0 %v2820
    %2857 = vmatprep.subr.mxu0 0.0
    %2858 = vmatpush2.msra.mxu0 0.0
    %2859 = vmatprep.subr.mxu0 0.0
    %2860 = vmatpush2.msra.mxu0 0.0
    %2861 = vmatprep.subr.mxu0 0.0
    %2862 = vmatpush2.msra.mxu0 0.0
    %2863 = vmatprep.subr.mxu0 0.0
    %2864 = vmatpush2.msra.mxu0 0.0
    %2865 = vmatprep.subr.mxu0 0.0
    %2866 = vmatpush2.msra.mxu0 0.0
    %2867 = vmatprep.subr.mxu0 0.0
    %2868 = vmatpush2.msra.mxu0 0.0
    %2869 = vmatprep.subr.mxu0 0.0
    %2870 = vmatpush2.msra.mxu0 0.0
    %2871 = vmatprep.subr.mxu0 0.0
    %2872 = vmatpush2.msra.mxu0 0.0
    %2873 = vmatprep.subr.mxu0 0.0
    %2874 = vmatpush2.msra.mxu0 0.0
    %2875 = vmatprep.subr.mxu0 0.0
    %2876 = vmatpush2.msra.mxu0 0.0
    %2877 = vmatprep.subr.mxu0 0.0
    %2878 = vmatpush2.msra.mxu0 0.0
    %2879 = vmatprep.subr.mxu0 0.0
    %2880 = vmatpush2.msra.mxu0 0.0
    %2881 = vmatprep.subr.mxu0 0.0
    %2882 = vmatpush2.msra.mxu0 0.0
    %2883 = vmatprep.subr.mxu0 0.0
    %2884 = vmatpush2.msra.mxu0 0.0
    %2885 = vmatprep.subr.mxu0 0.0
    %2886 = vmatpush2.msra.mxu0 0.0
    %2887 = vmatprep.subr.mxu0 0.0
    %2888 = vmatpush2.msra.mxu0 0.0
    %2889 = vmatprep.mubr.f32.mxu0 0.0
    %2890 = vmatmul.mubr.f32.gmra.mxu0 %v2823
    %v2891 = vpop.f32.mrf.mxu0
    %v2892 = vadd.f32 0.0, %v2891
    %v2893 = vpop.f32.mrf.mxu0
    %2894 = vdwg.mxu0
    %v2895 = vadd.f32 %v2816, %v2892
    %2896 = vst.msk [vmem:[#allocation4] sm:$0xff] %vm55, %v2895
    %2897 = vrot.lane.b32.xlu0 %v2436, 120
    %v2898 = vpop.permute.xlu0 %2897
    %2899 = vrot.lane.b32.xlu0 %v2640, 120
    %v2900 = vpop.permute.xlu0 %2899
    %2901 = vrot.lane.b32.xlu0 %v2641, 120
    %v2902 = vpop.permute.xlu0 %2901
    %2903 = vrot.lane.b32.xlu0 %v2642, 120
    %v2904 = vpop.permute.xlu0 %2903
    %v2905 = vsel %vm216, %v2898, 0
    %v2907 = vsel %vm216, %v2900, 0
    %v2909 = vsel %vm216, %v2902, 0
    %v2911 = vsel %vm216, %v2904, 0
    %2913 = vmatprep.subr.mxu0 0.0
    %2914 = vmatpush1.xpose.msra.mxu0 0.0
    %2915 = vmatprep.subr.mxu0 0.0
    %2916 = vmatpush1.xpose.msra.mxu0 0.0
    %2917 = vmatprep.subr.mxu0 0.0
    %2918 = vmatpush1.xpose.msra.mxu0 0.0
    %2919 = vmatprep.subr.mxu0 0.0
    %2920 = vmatpush1.xpose.msra.mxu0 0.0
    %2921 = vmatprep.subr.mxu0 0.0
    %2922 = vmatpush1.xpose.msra.mxu0 0.0
    %2923 = vmatprep.subr.mxu0 0.0
    %2924 = vmatpush1.xpose.msra.mxu0 0.0
    %2925 = vmatprep.subr.mxu0 0.0
    %2926 = vmatpush1.xpose.msra.mxu0 0.0
    %2927 = vmatprep.subr.mxu0 0.0
    %2928 = vmatpush1.xpose.msra.mxu0 0.0
    %2929 = vmatprep.subr.mxu0 0.0
    %2930 = vmatpush1.xpose.msra.mxu0 0.0
    %2931 = vmatprep.subr.mxu0 0.0
    %2932 = vmatpush1.xpose.msra.mxu0 0.0
    %2933 = vmatprep.subr.mxu0 0.0
    %2934 = vmatpush1.xpose.msra.mxu0 0.0
    %2935 = vmatprep.subr.mxu0 0.0
    %2936 = vmatpush1.xpose.msra.mxu0 0.0
    %2937 = vmatprep.subr.mxu0 0.0
    %2938 = vmatpush1.xpose.msra.mxu0 0.0
    %2939 = vmatprep.subr.mxu0 0.0
    %2940 = vmatpush1.xpose.msra.mxu0 %v2911
    %2941 = vmatprep.subr.mxu0 0.0
    %2942 = vmatpush1.xpose.msra.mxu0 %v2909
    %2943 = vmatprep.subr.mxu0 0.0
    %2944 = vmatpush1.xpose.msra.mxu0 %v2907
    %2945 = vmatprep.subr.mxu0 0.0
    %2946 = vmatpush2.xpose.msra.mxu0 0.0
    %2947 = vmatprep.subr.mxu0 0.0
    %2948 = vmatpush2.xpose.msra.mxu0 0.0
    %2949 = vmatprep.subr.mxu0 0.0
    %2950 = vmatpush2.xpose.msra.mxu0 0.0
    %2951 = vmatprep.subr.mxu0 0.0
    %2952 = vmatpush2.xpose.msra.mxu0 0.0
    %2953 = vmatprep.subr.mxu0 0.0
    %2954 = vmatpush2.xpose.msra.mxu0 0.0
    %2955 = vmatprep.subr.mxu0 0.0
    %2956 = vmatpush2.xpose.msra.mxu0 0.0
    %2957 = vmatprep.subr.mxu0 0.0
    %2958 = vmatpush2.xpose.msra.mxu0 0.0
    %2959 = vmatprep.subr.mxu0 0.0
    %2960 = vmatpush2.xpose.msra.mxu0 0.0
    %2961 = vmatprep.subr.mxu0 0.0
    %2962 = vmatpush2.xpose.msra.mxu0 0.0
    %2963 = vmatprep.subr.mxu0 0.0
    %2964 = vmatpush2.xpose.msra.mxu0 0.0
    %2965 = vmatprep.subr.mxu0 0.0
    %2966 = vmatpush2.xpose.msra.mxu0 0.0
    %2967 = vmatprep.subr.mxu0 0.0
    %2968 = vmatpush2.xpose.msra.mxu0 0.0
    %2969 = vmatprep.subr.mxu0 0.0
    %2970 = vmatpush2.xpose.msra.mxu0 0.0
    %2971 = vmatprep.subr.mxu0 0.0
    %2972 = vmatpush2.xpose.msra.mxu0 0.0
    %2973 = vmatprep.subr.mxu0 0.0
    %2974 = vmatpush2.xpose.msra.mxu0 0.0
    %2975 = vmatprep.subr.mxu0 0.0
    %2976 = vmatpush2.xpose.msra.mxu0 0.0
    %2977 = vmatprep.mubr.f32.mxu0 0.0
    %2978 = vmatmul.mubr.f32.gmra.mxu0 %v2905
    %v2979 = vpop.f32.mrf.mxu0
    %v2980 = vadd.f32 0.0, %v2979
    %v2981 = vpop.f32.mrf.mxu0
    %2982 = vdwg.mxu0
    %v2983 = vsel %vm2729, %v2980, -1e+30
    %v2984 = vsel %vm301, %v2983, -inf
    %2985 = vmax.xlane.f32.xlu0 %v2984
    %v2986 = vpop.xlane.xlu0 %2985
    %v2987 = vsub.f32 %v2983, %v2986
    %v2988 = vmul.f32 %v2987, 1.442695
    %v2989 = vpow.pop %v2988
    %v2990 = vsel %vm301, %v2989, 0.0
    %2991 = vadd.xlane.f32.xlu0 %v2990
    %v2992 = vpop.xlane.xlu0 %2991
    %2996 = vrot.lane.b32.xlu0 %v2643, 120
    %v2997 = vpop.permute.xlu0 %2996
    %2998 = vrot.lane.b32.xlu0 %v2644, 120
    %v2999 = vpop.permute.xlu0 %2998
    %3000 = vrot.lane.b32.xlu0 %v2645, 120
    %v3001 = vpop.permute.xlu0 %3000
    %v3006 = vsel %vm301, %v2989, 0
    %3008 = vmatprep.subr.mxu0 0.0
    %3009 = vmatpush1.msra.mxu0 0.0
    %3010 = vmatprep.subr.mxu0 0.0
    %3011 = vmatpush1.msra.mxu0 0.0
    %3012 = vmatprep.subr.mxu0 0.0
    %3013 = vmatpush1.msra.mxu0 0.0
    %3014 = vmatprep.subr.mxu0 0.0
    %3015 = vmatpush1.msra.mxu0 0.0
    %3016 = vmatprep.subr.mxu0 0.0
    %3017 = vmatpush1.msra.mxu0 0.0
    %3018 = vmatprep.subr.mxu0 0.0
    %3019 = vmatpush1.msra.mxu0 0.0
    %3020 = vmatprep.subr.mxu0 0.0
    %3021 = vmatpush1.msra.mxu0 0.0
    %3022 = vmatprep.subr.mxu0 0.0
    %3023 = vmatpush1.msra.mxu0 0.0
    %3024 = vmatprep.subr.mxu0 0.0
    %3025 = vmatpush1.msra.mxu0 0.0
    %3026 = vmatprep.subr.mxu0 0.0
    %3027 = vmatpush1.msra.mxu0 0.0
    %3028 = vmatprep.subr.mxu0 0.0
    %3029 = vmatpush1.msra.mxu0 0.0
    %3030 = vmatprep.subr.mxu0 0.0
    %3031 = vmatpush1.msra.mxu0 0.0
    %3032 = vmatprep.subr.mxu0 0.0
    %3033 = vmatpush1.msra.mxu0 0.0
    %3034 = vmatprep.subr.mxu0 0.0
    %3035 = vmatpush1.msra.mxu0 %v3001
    %3036 = vmatprep.subr.mxu0 0.0
    %3037 = vmatpush1.msra.mxu0 %v2999
    %3038 = vmatprep.subr.mxu0 0.0
    %3039 = vmatpush1.msra.mxu0 %v2997
    %3040 = vmatprep.subr.mxu0 0.0
    %3041 = vmatpush2.msra.mxu0 0.0
    %3042 = vmatprep.subr.mxu0 0.0
    %3043 = vmatpush2.msra.mxu0 0.0
    %3044 = vmatprep.subr.mxu0 0.0
    %3045 = vmatpush2.msra.mxu0 0.0
    %3046 = vmatprep.subr.mxu0 0.0
    %3047 = vmatpush2.msra.mxu0 0.0
    %3048 = vmatprep.subr.mxu0 0.0
    %3049 = vmatpush2.msra.mxu0 0.0
    %3050 = vmatprep.subr.mxu0 0.0
    %3051 = vmatpush2.msra.mxu0 0.0
    %3052 = vmatprep.subr.mxu0 0.0
    %3053 = vmatpush2.msra.mxu0 0.0
    %3054 = vmatprep.subr.mxu0 0.0
    %3055 = vmatpush2.msra.mxu0 0.0
    %3056 = vmatprep.subr.mxu0 0.0
    %3057 = vmatpush2.msra.mxu0 0.0
    %3058 = vmatprep.subr.mxu0 0.0
    %3059 = vmatpush2.msra.mxu0 0.0
    %3060 = vmatprep.subr.mxu0 0.0
    %3061 = vmatpush2.msra.mxu0 0.0
    %3062 = vmatprep.subr.mxu0 0.0
    %3063 = vmatpush2.msra.mxu0 0.0
    %3064 = vmatprep.subr.mxu0 0.0
    %3065 = vmatpush2.msra.mxu0 0.0
    %3066 = vmatprep.subr.mxu0 0.0
    %3067 = vmatpush2.msra.mxu0 0.0
    %3068 = vmatprep.subr.mxu0 0.0
    %3069 = vmatpush2.msra.mxu0 0.0
    %3070 = vmatprep.subr.mxu0 0.0
    %3071 = vmatpush2.msra.mxu0 0.0
    %3072 = vmatprep.mubr.f32.mxu0 0.0
    %3073 = vmatmul.mubr.f32.gmra.mxu0 %v3006
    %v3074 = vpop.f32.mrf.mxu0
    %v3075 = vadd.f32 0.0, %v3074
    %v3076 = vpop.f32.mrf.mxu0
    %3077 = vdwg.mxu0
    %v3078 = vrcp.pop %v2992
    %v3079 = vmul.f32 1.0, %v3078
    %v3080 = vmul.f32 %v3075, %v3079
    %v3081 = vld [vmem:[#allocation4] sm:$0xff]
    %v3082 = vld [vmem:[%s2 + $0x20] sm:$0xff]
    %3084 = vrot.lane.b32.xlu0 %v3082, 32
    %v3085 = vpop.permute.xlu0 %3084
    %v3088 = vsel %vm216, %v3080, 0
    %3090 = vmatprep.subr.mxu0 0.0
    %3091 = vmatpush1.msra.mxu0 0.0
    %3092 = vmatprep.subr.mxu0 0.0
    %3093 = vmatpush1.msra.mxu0 0.0
    %3094 = vmatprep.subr.mxu0 0.0
    %3095 = vmatpush1.msra.mxu0 0.0
    %3096 = vmatprep.subr.mxu0 0.0
    %3097 = vmatpush1.msra.mxu0 0.0
    %3098 = vmatprep.subr.mxu0 0.0
    %3099 = vmatpush1.msra.mxu0 0.0
    %3100 = vmatprep.subr.mxu0 0.0
    %3101 = vmatpush1.msra.mxu0 0.0
    %3102 = vmatprep.subr.mxu0 0.0
    %3103 = vmatpush1.msra.mxu0 0.0
    %3104 = vmatprep.subr.mxu0 0.0
    %3105 = vmatpush1.msra.mxu0 0.0
    %3106 = vmatprep.subr.mxu0 0.0
    %3107 = vmatpush1.msra.mxu0 0.0
    %3108 = vmatprep.subr.mxu0 0.0
    %3109 = vmatpush1.msra.mxu0 0.0
    %3110 = vmatprep.subr.mxu0 0.0
    %3111 = vmatpush1.msra.mxu0 0.0
    %3112 = vmatprep.subr.mxu0 0.0
    %3113 = vmatpush1.msra.mxu0 0.0
    %3114 = vmatprep.subr.mxu0 0.0
    %3115 = vmatpush1.msra.mxu0 0.0
    %3116 = vmatprep.subr.mxu0 0.0
    %3117 = vmatpush1.msra.mxu0 0.0
    %3118 = vmatprep.subr.mxu0 0.0
    %3119 = vmatpush1.msra.mxu0 0.0
    %3120 = vmatprep.subr.mxu0 0.0
    %3121 = vmatpush1.msra.mxu0 %v3085
    %3122 = vmatprep.subr.mxu0 0.0
    %3123 = vmatpush2.msra.mxu0 0.0
    %3124 = vmatprep.subr.mxu0 0.0
    %3125 = vmatpush2.msra.mxu0 0.0
    %3126 = vmatprep.subr.mxu0 0.0
    %3127 = vmatpush2.msra.mxu0 0.0
    %3128 = vmatprep.subr.mxu0 0.0
    %3129 = vmatpush2.msra.mxu0 0.0
    %3130 = vmatprep.subr.mxu0 0.0
    %3131 = vmatpush2.msra.mxu0 0.0
    %3132 = vmatprep.subr.mxu0 0.0
    %3133 = vmatpush2.msra.mxu0 0.0
    %3134 = vmatprep.subr.mxu0 0.0
    %3135 = vmatpush2.msra.mxu0 0.0
    %3136 = vmatprep.subr.mxu0 0.0
    %3137 = vmatpush2.msra.mxu0 0.0
    %3138 = vmatprep.subr.mxu0 0.0
    %3139 = vmatpush2.msra.mxu0 0.0
    %3140 = vmatprep.subr.mxu0 0.0
    %3141 = vmatpush2.msra.mxu0 0.0
    %3142 = vmatprep.subr.mxu0 0.0
    %3143 = vmatpush2.msra.mxu0 0.0
    %3144 = vmatprep.subr.mxu0 0.0
    %3145 = vmatpush2.msra.mxu0 0.0
    %3146 = vmatprep.subr.mxu0 0.0
    %3147 = vmatpush2.msra.mxu0 0.0
    %3148 = vmatprep.subr.mxu0 0.0
    %3149 = vmatpush2.msra.mxu0 0.0
    %3150 = vmatprep.subr.mxu0 0.0
    %3151 = vmatpush2.msra.mxu0 0.0
    %3152 = vmatprep.subr.mxu0 0.0
    %3153 = vmatpush2.msra.mxu0 0.0
    %3154 = vmatprep.mubr.f32.mxu0 0.0
    %3155 = vmatmul.mubr.f32.gmra.mxu0 %v3088
    %v3156 = vpop.f32.mrf.mxu0
    %v3157 = vadd.f32 0.0, %v3156
    %v3158 = vpop.f32.mrf.mxu0
    %3159 = vdwg.mxu0
    %v3160 = vadd.f32 %v3081, %v3157
    %3161 = vst.msk [vmem:[#allocation4] sm:$0xff] %vm55, %v3160
    %3162 = vrot.lane.b32.xlu0 %v2436, 112
    %v3163 = vpop.permute.xlu0 %3162
    %3164 = vrot.lane.b32.xlu0 %v2640, 112
    %v3165 = vpop.permute.xlu0 %3164
    %3166 = vrot.lane.b32.xlu0 %v2641, 112
    %v3167 = vpop.permute.xlu0 %3166
    %3168 = vrot.lane.b32.xlu0 %v2642, 112
    %v3169 = vpop.permute.xlu0 %3168
    %v3170 = vsel %vm216, %v3163, 0
    %v3172 = vsel %vm216, %v3165, 0
    %v3174 = vsel %vm216, %v3167, 0
    %v3176 = vsel %vm216, %v3169, 0
    %3178 = vmatprep.subr.mxu0 0.0
    %3179 = vmatpush1.xpose.msra.mxu0 0.0
    %3180 = vmatprep.subr.mxu0 0.0
    %3181 = vmatpush1.xpose.msra.mxu0 0.0
    %3182 = vmatprep.subr.mxu0 0.0
    %3183 = vmatpush1.xpose.msra.mxu0 0.0
    %3184 = vmatprep.subr.mxu0 0.0
    %3185 = vmatpush1.xpose.msra.mxu0 0.0
    %3186 = vmatprep.subr.mxu0 0.0
    %3187 = vmatpush1.xpose.msra.mxu0 0.0
    %3188 = vmatprep.subr.mxu0 0.0
    %3189 = vmatpush1.xpose.msra.mxu0 0.0
    %3190 = vmatprep.subr.mxu0 0.0
    %3191 = vmatpush1.xpose.msra.mxu0 0.0
    %3192 = vmatprep.subr.mxu0 0.0
    %3193 = vmatpush1.xpose.msra.mxu0 0.0
    %3194 = vmatprep.subr.mxu0 0.0
    %3195 = vmatpush1.xpose.msra.mxu0 0.0
    %3196 = vmatprep.subr.mxu0 0.0
    %3197 = vmatpush1.xpose.msra.mxu0 0.0
    %3198 = vmatprep.subr.mxu0 0.0
    %3199 = vmatpush1.xpose.msra.mxu0 0.0
    %3200 = vmatprep.subr.mxu0 0.0
    %3201 = vmatpush1.xpose.msra.mxu0 0.0
    %3202 = vmatprep.subr.mxu0 0.0
    %3203 = vmatpush1.xpose.msra.mxu0 0.0
    %3204 = vmatprep.subr.mxu0 0.0
    %3205 = vmatpush1.xpose.msra.mxu0 %v3176
    %3206 = vmatprep.subr.mxu0 0.0
    %3207 = vmatpush1.xpose.msra.mxu0 %v3174
    %3208 = vmatprep.subr.mxu0 0.0
    %3209 = vmatpush1.xpose.msra.mxu0 %v3172
    %3210 = vmatprep.subr.mxu0 0.0
    %3211 = vmatpush2.xpose.msra.mxu0 0.0
    %3212 = vmatprep.subr.mxu0 0.0
    %3213 = vmatpush2.xpose.msra.mxu0 0.0
    %3214 = vmatprep.subr.mxu0 0.0
    %3215 = vmatpush2.xpose.msra.mxu0 0.0
    %3216 = vmatprep.subr.mxu0 0.0
    %3217 = vmatpush2.xpose.msra.mxu0 0.0
    %3218 = vmatprep.subr.mxu0 0.0
    %3219 = vmatpush2.xpose.msra.mxu0 0.0
    %3220 = vmatprep.subr.mxu0 0.0
    %3221 = vmatpush2.xpose.msra.mxu0 0.0
    %3222 = vmatprep.subr.mxu0 0.0
    %3223 = vmatpush2.xpose.msra.mxu0 0.0
    %3224 = vmatprep.subr.mxu0 0.0
    %3225 = vmatpush2.xpose.msra.mxu0 0.0
    %3226 = vmatprep.subr.mxu0 0.0
    %3227 = vmatpush2.xpose.msra.mxu0 0.0
    %3228 = vmatprep.subr.mxu0 0.0
    %3229 = vmatpush2.xpose.msra.mxu0 0.0
    %3230 = vmatprep.subr.mxu0 0.0
    %3231 = vmatpush2.xpose.msra.mxu0 0.0
    %3232 = vmatprep.subr.mxu0 0.0
    %3233 = vmatpush2.xpose.msra.mxu0 0.0
    %3234 = vmatprep.subr.mxu0 0.0
    %3235 = vmatpush2.xpose.msra.mxu0 0.0
    %3236 = vmatprep.subr.mxu0 0.0
    %3237 = vmatpush2.xpose.msra.mxu0 0.0
    %3238 = vmatprep.subr.mxu0 0.0
    %3239 = vmatpush2.xpose.msra.mxu0 0.0
    %3240 = vmatprep.subr.mxu0 0.0
    %3241 = vmatpush2.xpose.msra.mxu0 0.0
    %3242 = vmatprep.mubr.f32.mxu0 0.0
    %3243 = vmatmul.mubr.f32.gmra.mxu0 %v3170
    %v3244 = vpop.f32.mrf.mxu0
    %v3245 = vadd.f32 0.0, %v3244
    %v3246 = vpop.f32.mrf.mxu0
    %3247 = vdwg.mxu0
    %v3248 = vsel %vm2729, %v3245, -1e+30
    %v3249 = vsel %vm301, %v3248, -inf
    %3250 = vmax.xlane.f32.xlu0 %v3249
    %v3251 = vpop.xlane.xlu0 %3250
    %v3252 = vsub.f32 %v3248, %v3251
    %v3253 = vmul.f32 %v3252, 1.442695
    %v3254 = vpow.pop %v3253
    %v3255 = vsel %vm301, %v3254, 0.0
    %3256 = vadd.xlane.f32.xlu0 %v3255
    %v3257 = vpop.xlane.xlu0 %3256
    %3258 = vrot.lane.b32.xlu0 %v2643, 112
    %v3259 = vpop.permute.xlu0 %3258
    %3260 = vrot.lane.b32.xlu0 %v2644, 112
    %v3261 = vpop.permute.xlu0 %3260
    %3262 = vrot.lane.b32.xlu0 %v2645, 112
    %v3263 = vpop.permute.xlu0 %3262
    %v3268 = vsel %vm301, %v3254, 0
    %3270 = vmatprep.subr.mxu0 0.0
    %3271 = vmatpush1.msra.mxu0 0.0
    %3272 = vmatprep.subr.mxu0 0.0
    %3273 = vmatpush1.msra.mxu0 0.0
    %3274 = vmatprep.subr.mxu0 0.0
    %3275 = vmatpush1.msra.mxu0 0.0
    %3276 = vmatprep.subr.mxu0 0.0
    %3277 = vmatpush1.msra.mxu0 0.0
    %3278 = vmatprep.subr.mxu0 0.0
    %3279 = vmatpush1.msra.mxu0 0.0
    %3280 = vmatprep.subr.mxu0 0.0
    %3281 = vmatpush1.msra.mxu0 0.0
    %3282 = vmatprep.subr.mxu0 0.0
    %3283 = vmatpush1.msra.mxu0 0.0
    %3284 = vmatprep.subr.mxu0 0.0
    %3285 = vmatpush1.msra.mxu0 0.0
    %3286 = vmatprep.subr.mxu0 0.0
    %3287 = vmatpush1.msra.mxu0 0.0
    %3288 = vmatprep.subr.mxu0 0.0
    %3289 = vmatpush1.msra.mxu0 0.0
    %3290 = vmatprep.subr.mxu0 0.0
    %3291 = vmatpush1.msra.mxu0 0.0
    %3292 = vmatprep.subr.mxu0 0.0
    %3293 = vmatpush1.msra.mxu0 0.0
    %3294 = vmatprep.subr.mxu0 0.0
    %3295 = vmatpush1.msra.mxu0 0.0
    %3296 = vmatprep.subr.mxu0 0.0
    %3297 = vmatpush1.msra.mxu0 %v3263
    %3298 = vmatprep.subr.mxu0 0.0
    %3299 = vmatpush1.msra.mxu0 %v3261
    %3300 = vmatprep.subr.mxu0 0.0
    %3301 = vmatpush1.msra.mxu0 %v3259
    %3302 = vmatprep.subr.mxu0 0.0
    %3303 = vmatpush2.msra.mxu0 0.0
    %3304 = vmatprep.subr.mxu0 0.0
    %3305 = vmatpush2.msra.mxu0 0.0
    %3306 = vmatprep.subr.mxu0 0.0
    %3307 = vmatpush2.msra.mxu0 0.0
    %3308 = vmatprep.subr.mxu0 0.0
    %3309 = vmatpush2.msra.mxu0 0.0
    %3310 = vmatprep.subr.mxu0 0.0
    %3311 = vmatpush2.msra.mxu0 0.0
    %3312 = vmatprep.subr.mxu0 0.0
    %3313 = vmatpush2.msra.mxu0 0.0
    %3314 = vmatprep.subr.mxu0 0.0
    %3315 = vmatpush2.msra.mxu0 0.0
    %3316 = vmatprep.subr.mxu0 0.0
    %3317 = vmatpush2.msra.mxu0 0.0
    %3318 = vmatprep.subr.mxu0 0.0
    %3319 = vmatpush2.msra.mxu0 0.0
    %3320 = vmatprep.subr.mxu0 0.0
    %3321 = vmatpush2.msra.mxu0 0.0
    %3322 = vmatprep.subr.mxu0 0.0
    %3323 = vmatpush2.msra.mxu0 0.0
    %3324 = vmatprep.subr.mxu0 0.0
    %3325 = vmatpush2.msra.mxu0 0.0
    %3326 = vmatprep.subr.mxu0 0.0
    %3327 = vmatpush2.msra.mxu0 0.0
    %3328 = vmatprep.subr.mxu0 0.0
    %3329 = vmatpush2.msra.mxu0 0.0
    %3330 = vmatprep.subr.mxu0 0.0
    %3331 = vmatpush2.msra.mxu0 0.0
    %3332 = vmatprep.subr.mxu0 0.0
    %3333 = vmatpush2.msra.mxu0 0.0
    %3334 = vmatprep.mubr.f32.mxu0 0.0
    %3335 = vmatmul.mubr.f32.gmra.mxu0 %v3268
    %v3336 = vpop.f32.mrf.mxu0
    %v3337 = vadd.f32 0.0, %v3336
    %v3338 = vpop.f32.mrf.mxu0
    %3339 = vdwg.mxu0
    %v3340 = vrcp.pop %v3257
    %v3341 = vmul.f32 1.0, %v3340
    %v3342 = vmul.f32 %v3337, %v3341
    %v3343 = vld [vmem:[#allocation4] sm:$0xff]
    %v3344 = vld [vmem:[%s2 + $0x38] sm:$0xff]
    %3346 = vrot.lane.b32.xlu0 %v3344, 32
    %v3347 = vpop.permute.xlu0 %3346
    %v3350 = vsel %vm216, %v3342, 0
    %3352 = vmatprep.subr.mxu0 0.0
    %3353 = vmatpush1.msra.mxu0 0.0
    %3354 = vmatprep.subr.mxu0 0.0
    %3355 = vmatpush1.msra.mxu0 0.0
    %3356 = vmatprep.subr.mxu0 0.0
    %3357 = vmatpush1.msra.mxu0 0.0
    %3358 = vmatprep.subr.mxu0 0.0
    %3359 = vmatpush1.msra.mxu0 0.0
    %3360 = vmatprep.subr.mxu0 0.0
    %3361 = vmatpush1.msra.mxu0 0.0
    %3362 = vmatprep.subr.mxu0 0.0
    %3363 = vmatpush1.msra.mxu0 0.0
    %3364 = vmatprep.subr.mxu0 0.0
    %3365 = vmatpush1.msra.mxu0 0.0
    %3366 = vmatprep.subr.mxu0 0.0
    %3367 = vmatpush1.msra.mxu0 0.0
    %3368 = vmatprep.subr.mxu0 0.0
    %3369 = vmatpush1.msra.mxu0 0.0
    %3370 = vmatprep.subr.mxu0 0.0
    %3371 = vmatpush1.msra.mxu0 0.0
    %3372 = vmatprep.subr.mxu0 0.0
    %3373 = vmatpush1.msra.mxu0 0.0
    %3374 = vmatprep.subr.mxu0 0.0
    %3375 = vmatpush1.msra.mxu0 0.0
    %3376 = vmatprep.subr.mxu0 0.0
    %3377 = vmatpush1.msra.mxu0 0.0
    %3378 = vmatprep.subr.mxu0 0.0
    %3379 = vmatpush1.msra.mxu0 0.0
    %3380 = vmatprep.subr.mxu0 0.0
    %3381 = vmatpush1.msra.mxu0 0.0
    %3382 = vmatprep.subr.mxu0 0.0
    %3383 = vmatpush1.msra.mxu0 %v3347
    %3384 = vmatprep.subr.mxu0 0.0
    %3385 = vmatpush2.msra.mxu0 0.0
    %3386 = vmatprep.subr.mxu0 0.0
    %3387 = vmatpush2.msra.mxu0 0.0
    %3388 = vmatprep.subr.mxu0 0.0
    %3389 = vmatpush2.msra.mxu0 0.0
    %3390 = vmatprep.subr.mxu0 0.0
    %3391 = vmatpush2.msra.mxu0 0.0
    %3392 = vmatprep.subr.mxu0 0.0
    %3393 = vmatpush2.msra.mxu0 0.0
    %3394 = vmatprep.subr.mxu0 0.0
    %3395 = vmatpush2.msra.mxu0 0.0
    %3396 = vmatprep.subr.mxu0 0.0
    %3397 = vmatpush2.msra.mxu0 0.0
    %3398 = vmatprep.subr.mxu0 0.0
    %3399 = vmatpush2.msra.mxu0 0.0
    %3400 = vmatprep.subr.mxu0 0.0
    %3401 = vmatpush2.msra.mxu0 0.0
    %3402 = vmatprep.subr.mxu0 0.0
    %3403 = vmatpush2.msra.mxu0 0.0
    %3404 = vmatprep.subr.mxu0 0.0
    %3405 = vmatpush2.msra.mxu0 0.0
    %3406 = vmatprep.subr.mxu0 0.0
    %3407 = vmatpush2.msra.mxu0 0.0
    %3408 = vmatprep.subr.mxu0 0.0
    %3409 = vmatpush2.msra.mxu0 0.0
    %3410 = vmatprep.subr.mxu0 0.0
    %3411 = vmatpush2.msra.mxu0 0.0
    %3412 = vmatprep.subr.mxu0 0.0
    %3413 = vmatpush2.msra.mxu0 0.0
    %3414 = vmatprep.subr.mxu0 0.0
    %3415 = vmatpush2.msra.mxu0 0.0
    %3416 = vmatprep.mubr.f32.mxu0 0.0
    %3417 = vmatmul.mubr.f32.gmra.mxu0 %v3350
    %v3418 = vpop.f32.mrf.mxu0
    %v3419 = vadd.f32 0.0, %v3418
    %v3420 = vpop.f32.mrf.mxu0
    %3421 = vdwg.mxu0
    %v3422 = vadd.f32 %v3343, %v3419
    %3423 = vst.msk [vmem:[#allocation4] sm:$0xff] %vm55, %v3422
    %3424 = vrot.lane.b32.xlu0 %v2436, 104
    %v3425 = vpop.permute.xlu0 %3424
    %3426 = vrot.lane.b32.xlu0 %v2640, 104
    %v3427 = vpop.permute.xlu0 %3426
    %3428 = vrot.lane.b32.xlu0 %v2641, 104
    %v3429 = vpop.permute.xlu0 %3428
    %3430 = vrot.lane.b32.xlu0 %v2642, 104
    %v3431 = vpop.permute.xlu0 %3430
    %v3432 = vsel %vm216, %v3425, 0
    %v3434 = vsel %vm216, %v3427, 0
    %v3436 = vsel %vm216, %v3429, 0
    %v3438 = vsel %vm216, %v3431, 0
    %3440 = vmatprep.subr.mxu0 0.0
    %3441 = vmatpush1.xpose.msra.mxu0 0.0
    %3442 = vmatprep.subr.mxu0 0.0
    %3443 = vmatpush1.xpose.msra.mxu0 0.0
    %3444 = vmatprep.subr.mxu0 0.0
    %3445 = vmatpush1.xpose.msra.mxu0 0.0
    %3446 = vmatprep.subr.mxu0 0.0
    %3447 = vmatpush1.xpose.msra.mxu0 0.0
    %3448 = vmatprep.subr.mxu0 0.0
    %3449 = vmatpush1.xpose.msra.mxu0 0.0
    %3450 = vmatprep.subr.mxu0 0.0
    %3451 = vmatpush1.xpose.msra.mxu0 0.0
    %3452 = vmatprep.subr.mxu0 0.0
    %3453 = vmatpush1.xpose.msra.mxu0 0.0
    %3454 = vmatprep.subr.mxu0 0.0
    %3455 = vmatpush1.xpose.msra.mxu0 0.0
    %3456 = vmatprep.subr.mxu0 0.0
    %3457 = vmatpush1.xpose.msra.mxu0 0.0
    %3458 = vmatprep.subr.mxu0 0.0
    %3459 = vmatpush1.xpose.msra.mxu0 0.0
    %3460 = vmatprep.subr.mxu0 0.0
    %3461 = vmatpush1.xpose.msra.mxu0 0.0
    %3462 = vmatprep.subr.mxu0 0.0
    %3463 = vmatpush1.xpose.msra.mxu0 0.0
    %3464 = vmatprep.subr.mxu0 0.0
    %3465 = vmatpush1.xpose.msra.mxu0 0.0
    %3466 = vmatprep.subr.mxu0 0.0
    %3467 = vmatpush1.xpose.msra.mxu0 %v3438
    %3468 = vmatprep.subr.mxu0 0.0
    %3469 = vmatpush1.xpose.msra.mxu0 %v3436
    %3470 = vmatprep.subr.mxu0 0.0
    %3471 = vmatpush1.xpose.msra.mxu0 %v3434
    %3472 = vmatprep.subr.mxu0 0.0
    %3473 = vmatpush2.xpose.msra.mxu0 0.0
    %3474 = vmatprep.subr.mxu0 0.0
    %3475 = vmatpush2.xpose.msra.mxu0 0.0
    %3476 = vmatprep.subr.mxu0 0.0
    %3477 = vmatpush2.xpose.msra.mxu0 0.0
    %3478 = vmatprep.subr.mxu0 0.0
    %3479 = vmatpush2.xpose.msra.mxu0 0.0
    %3480 = vmatprep.subr.mxu0 0.0
    %3481 = vmatpush2.xpose.msra.mxu0 0.0
    %3482 = vmatprep.subr.mxu0 0.0
    %3483 = vmatpush2.xpose.msra.mxu0 0.0
    %3484 = vmatprep.subr.mxu0 0.0
    %3485 = vmatpush2.xpose.msra.mxu0 0.0
    %3486 = vmatprep.subr.mxu0 0.0
    %3487 = vmatpush2.xpose.msra.mxu0 0.0
    %3488 = vmatprep.subr.mxu0 0.0
    %3489 = vmatpush2.xpose.msra.mxu0 0.0
    %3490 = vmatprep.subr.mxu0 0.0
    %3491 = vmatpush2.xpose.msra.mxu0 0.0
    %3492 = vmatprep.subr.mxu0 0.0
    %3493 = vmatpush2.xpose.msra.mxu0 0.0
    %3494 = vmatprep.subr.mxu0 0.0
    %3495 = vmatpush2.xpose.msra.mxu0 0.0
    %3496 = vmatprep.subr.mxu0 0.0
    %3497 = vmatpush2.xpose.msra.mxu0 0.0
    %3498 = vmatprep.subr.mxu0 0.0
    %3499 = vmatpush2.xpose.msra.mxu0 0.0
    %3500 = vmatprep.subr.mxu0 0.0
    %3501 = vmatpush2.xpose.msra.mxu0 0.0
    %3502 = vmatprep.subr.mxu0 0.0
    %3503 = vmatpush2.xpose.msra.mxu0 0.0
    %3504 = vmatprep.mubr.f32.mxu0 0.0
    %3505 = vmatmul.mubr.f32.gmra.mxu0 %v3432
    %v3506 = vpop.f32.mrf.mxu0
    %v3507 = vadd.f32 0.0, %v3506
    %v3508 = vpop.f32.mrf.mxu0
    %3509 = vdwg.mxu0
    %v3510 = vsel %vm2729, %v3507, -1e+30
    %v3511 = vsel %vm301, %v3510, -inf
    %3512 = vmax.xlane.f32.xlu0 %v3511
    %v3513 = vpop.xlane.xlu0 %3512
    %v3514 = vsub.f32 %v3510, %v3513
    %v3515 = vmul.f32 %v3514, 1.442695
    %v3516 = vpow.pop %v3515
    %v3517 = vsel %vm301, %v3516, 0.0
    %3518 = vadd.xlane.f32.xlu0 %v3517
    %v3519 = vpop.xlane.xlu0 %3518
    %3520 = vrot.lane.b32.xlu0 %v2643, 104
    %v3521 = vpop.permute.xlu0 %3520
    %3522 = vrot.lane.b32.xlu0 %v2644, 104
    %v3523 = vpop.permute.xlu0 %3522
    %3524 = vrot.lane.b32.xlu0 %v2645, 104
    %v3525 = vpop.permute.xlu0 %3524
    %v3530 = vsel %vm301, %v3516, 0
    %3532 = vmatprep.subr.mxu0 0.0
    %3533 = vmatpush1.msra.mxu0 0.0
    %3534 = vmatprep.subr.mxu0 0.0
    %3535 = vmatpush1.msra.mxu0 0.0
    %3536 = vmatprep.subr.mxu0 0.0
    %3537 = vmatpush1.msra.mxu0 0.0
    %3538 = vmatprep.subr.mxu0 0.0
    %3539 = vmatpush1.msra.mxu0 0.0
    %3540 = vmatprep.subr.mxu0 0.0
    %3541 = vmatpush1.msra.mxu0 0.0
    %3542 = vmatprep.subr.mxu0 0.0
    %3543 = vmatpush1.msra.mxu0 0.0
    %3544 = vmatprep.subr.mxu0 0.0
    %3545 = vmatpush1.msra.mxu0 0.0
    %3546 = vmatprep.subr.mxu0 0.0
    %3547 = vmatpush1.msra.mxu0 0.0
    %3548 = vmatprep.subr.mxu0 0.0
    %3549 = vmatpush1.msra.mxu0 0.0
    %3550 = vmatprep.subr.mxu0 0.0
    %3551 = vmatpush1.msra.mxu0 0.0
    %3552 = vmatprep.subr.mxu0 0.0
    %3553 = vmatpush1.msra.mxu0 0.0
    %3554 = vmatprep.subr.mxu0 0.0
    %3555 = vmatpush1.msra.mxu0 0.0
    %3556 = vmatprep.subr.mxu0 0.0
    %3557 = vmatpush1.msra.mxu0 0.0
    %3558 = vmatprep.subr.mxu0 0.0
    %3559 = vmatpush1.msra.mxu0 %v3525
    %3560 = vmatprep.subr.mxu0 0.0
    %3561 = vmatpush1.msra.mxu0 %v3523
    %3562 = vmatprep.subr.mxu0 0.0
    %3563 = vmatpush1.msra.mxu0 %v3521
    %3564 = vmatprep.subr.mxu0 0.0
    %3565 = vmatpush2.msra.mxu0 0.0
    %3566 = vmatprep.subr.mxu0 0.0
    %3567 = vmatpush2.msra.mxu0 0.0
    %3568 = vmatprep.subr.mxu0 0.0
    %3569 = vmatpush2.msra.mxu0 0.0
    %3570 = vmatprep.subr.mxu0 0.0
    %3571 = vmatpush2.msra.mxu0 0.0
    %3572 = vmatprep.subr.mxu0 0.0
    %3573 = vmatpush2.msra.mxu0 0.0
    %3574 = vmatprep.subr.mxu0 0.0
    %3575 = vmatpush2.msra.mxu0 0.0
    %3576 = vmatprep.subr.mxu0 0.0
    %3577 = vmatpush2.msra.mxu0 0.0
    %3578 = vmatprep.subr.mxu0 0.0
    %3579 = vmatpush2.msra.mxu0 0.0
    %3580 = vmatprep.subr.mxu0 0.0
    %3581 = vmatpush2.msra.mxu0 0.0
    %3582 = vmatprep.subr.mxu0 0.0
    %3583 = vmatpush2.msra.mxu0 0.0
    %3584 = vmatprep.subr.mxu0 0.0
    %3585 = vmatpush2.msra.mxu0 0.0
    %3586 = vmatprep.subr.mxu0 0.0
    %3587 = vmatpush2.msra.mxu0 0.0
    %3588 = vmatprep.subr.mxu0 0.0
    %3589 = vmatpush2.msra.mxu0 0.0
    %3590 = vmatprep.subr.mxu0 0.0
    %3591 = vmatpush2.msra.mxu0 0.0
    %3592 = vmatprep.subr.mxu0 0.0
    %3593 = vmatpush2.msra.mxu0 0.0
    %3594 = vmatprep.subr.mxu0 0.0
    %3595 = vmatpush2.msra.mxu0 0.0
    %3596 = vmatprep.mubr.f32.mxu0 0.0
    %3597 = vmatmul.mubr.f32.gmra.mxu0 %v3530
    %v3598 = vpop.f32.mrf.mxu0
    %v3599 = vadd.f32 0.0, %v3598
    %v3600 = vpop.f32.mrf.mxu0
    %3601 = vdwg.mxu0
    %v3602 = vrcp.pop %v3519
    %v3603 = vmul.f32 1.0, %v3602
    %v3604 = vmul.f32 %v3599, %v3603
    %v3605 = vld [vmem:[#allocation4] sm:$0xff]
    %v3606 = vld [vmem:[%s2 + $0x50] sm:$0xff]
    %3608 = vrot.lane.b32.xlu0 %v3606, 32
    %v3609 = vpop.permute.xlu0 %3608
    %v3612 = vsel %vm216, %v3604, 0
    %3614 = vmatprep.subr.mxu0 0.0
    %3615 = vmatpush1.msra.mxu0 0.0
    %3616 = vmatprep.subr.mxu0 0.0
    %3617 = vmatpush1.msra.mxu0 0.0
    %3618 = vmatprep.subr.mxu0 0.0
    %3619 = vmatpush1.msra.mxu0 0.0
    %3620 = vmatprep.subr.mxu0 0.0
    %3621 = vmatpush1.msra.mxu0 0.0
    %3622 = vmatprep.subr.mxu0 0.0
    %3623 = vmatpush1.msra.mxu0 0.0
    %3624 = vmatprep.subr.mxu0 0.0
    %3625 = vmatpush1.msra.mxu0 0.0
    %3626 = vmatprep.subr.mxu0 0.0
    %3627 = vmatpush1.msra.mxu0 0.0
    %3628 = vmatprep.subr.mxu0 0.0
    %3629 = vmatpush1.msra.mxu0 0.0
    %3630 = vmatprep.subr.mxu0 0.0
    %3631 = vmatpush1.msra.mxu0 0.0
    %3632 = vmatprep.subr.mxu0 0.0
    %3633 = vmatpush1.msra.mxu0 0.0
    %3634 = vmatprep.subr.mxu0 0.0
    %3635 = vmatpush1.msra.mxu0 0.0
    %3636 = vmatprep.subr.mxu0 0.0
    %3637 = vmatpush1.msra.mxu0 0.0
    %3638 = vmatprep.subr.mxu0 0.0
    %3639 = vmatpush1.msra.mxu0 0.0
    %3640 = vmatprep.subr.mxu0 0.0
    %3641 = vmatpush1.msra.mxu0 0.0
    %3642 = vmatprep.subr.mxu0 0.0
    %3643 = vmatpush1.msra.mxu0 0.0
    %3644 = vmatprep.subr.mxu0 0.0
    %3645 = vmatpush1.msra.mxu0 %v3609
    %3646 = vmatprep.subr.mxu0 0.0
    %3647 = vmatpush2.msra.mxu0 0.0
    %3648 = vmatprep.subr.mxu0 0.0
    %3649 = vmatpush2.msra.mxu0 0.0
    %3650 = vmatprep.subr.mxu0 0.0
    %3651 = vmatpush2.msra.mxu0 0.0
    %3652 = vmatprep.subr.mxu0 0.0
    %3653 = vmatpush2.msra.mxu0 0.0
    %3654 = vmatprep.subr.mxu0 0.0
    %3655 = vmatpush2.msra.mxu0 0.0
    %3656 = vmatprep.subr.mxu0 0.0
    %3657 = vmatpush2.msra.mxu0 0.0
    %3658 = vmatprep.subr.mxu0 0.0
    %3659 = vmatpush2.msra.mxu0 0.0
    %3660 = vmatprep.subr.mxu0 0.0
    %3661 = vmatpush2.msra.mxu0 0.0
    %3662 = vmatprep.subr.mxu0 0.0
    %3663 = vmatpush2.msra.mxu0 0.0
    %3664 = vmatprep.subr.mxu0 0.0
    %3665 = vmatpush2.msra.mxu0 0.0
    %3666 = vmatprep.subr.mxu0 0.0
    %3667 = vmatpush2.msra.mxu0 0.0
    %3668 = vmatprep.subr.mxu0 0.0
    %3669 = vmatpush2.msra.mxu0 0.0
    %3670 = vmatprep.subr.mxu0 0.0
    %3671 = vmatpush2.msra.mxu0 0.0
    %3672 = vmatprep.subr.mxu0 0.0
    %3673 = vmatpush2.msra.mxu0 0.0
    %3674 = vmatprep.subr.mxu0 0.0
    %3675 = vmatpush2.msra.mxu0 0.0
    %3676 = vmatprep.subr.mxu0 0.0
    %3677 = vmatpush2.msra.mxu0 0.0
    %3678 = vmatprep.mubr.f32.mxu0 0.0
    %3679 = vmatmul.mubr.f32.gmra.mxu0 %v3612
    %v3680 = vpop.f32.mrf.mxu0
    %v3681 = vadd.f32 0.0, %v3680
    %v3682 = vpop.f32.mrf.mxu0
    %3683 = vdwg.mxu0
    %v3684 = vadd.f32 %v3605, %v3681
    %3685 = vst.msk [vmem:[#allocation4] sm:$0xff] %vm55, %v3684
    %v3686 = vld [vmem:[%s188] sm:$0xff]
    %v3687 = vld [vmem:[%s188 + $0x8] sm:$0xff]
    %v3688 = vld [vmem:[%s188 + $0x10] sm:$0xff]
    %v3689 = vld [vmem:[%s193] sm:$0xff]
    %v3690 = vld [vmem:[%s193 + $0x8] sm:$0xff]
    %v3691 = vld [vmem:[%s193 + $0x10] sm:$0xff]
    %v3693 = vsel %vm216, %v2441, 0
    %v3696 = vsel %vm216, %v3686, 0
    %v3699 = vsel %vm216, %v3687, 0
    %v3702 = vsel %vm216, %v3688, 0
    %3704 = vmatprep.subr.mxu0 0.0
    %3705 = vmatpush1.xpose.msra.mxu0 0.0
    %3706 = vmatprep.subr.mxu0 0.0
    %3707 = vmatpush1.xpose.msra.mxu0 0.0
    %3708 = vmatprep.subr.mxu0 0.0
    %3709 = vmatpush1.xpose.msra.mxu0 0.0
    %3710 = vmatprep.subr.mxu0 0.0
    %3711 = vmatpush1.xpose.msra.mxu0 0.0
    %3712 = vmatprep.subr.mxu0 0.0
    %3713 = vmatpush1.xpose.msra.mxu0 0.0
    %3714 = vmatprep.subr.mxu0 0.0
    %3715 = vmatpush1.xpose.msra.mxu0 0.0
    %3716 = vmatprep.subr.mxu0 0.0
    %3717 = vmatpush1.xpose.msra.mxu0 0.0
    %3718 = vmatprep.subr.mxu0 0.0
    %3719 = vmatpush1.xpose.msra.mxu0 0.0
    %3720 = vmatprep.subr.mxu0 0.0
    %3721 = vmatpush1.xpose.msra.mxu0 0.0
    %3722 = vmatprep.subr.mxu0 0.0
    %3723 = vmatpush1.xpose.msra.mxu0 0.0
    %3724 = vmatprep.subr.mxu0 0.0
    %3725 = vmatpush1.xpose.msra.mxu0 0.0
    %3726 = vmatprep.subr.mxu0 0.0
    %3727 = vmatpush1.xpose.msra.mxu0 0.0
    %3728 = vmatprep.subr.mxu0 0.0
    %3729 = vmatpush1.xpose.msra.mxu0 0.0
    %3730 = vmatprep.subr.mxu0 0.0
    %3731 = vmatpush1.xpose.msra.mxu0 %v3702
    %3732 = vmatprep.subr.mxu0 0.0
    %3733 = vmatpush1.xpose.msra.mxu0 %v3699
    %3734 = vmatprep.subr.mxu0 0.0
    %3735 = vmatpush1.xpose.msra.mxu0 %v3696
    %3736 = vmatprep.subr.mxu0 0.0
    %3737 = vmatpush2.xpose.msra.mxu0 0.0
    %3738 = vmatprep.subr.mxu0 0.0
    %3739 = vmatpush2.xpose.msra.mxu0 0.0
    %3740 = vmatprep.subr.mxu0 0.0
    %3741 = vmatpush2.xpose.msra.mxu0 0.0
    %3742 = vmatprep.subr.mxu0 0.0
    %3743 = vmatpush2.xpose.msra.mxu0 0.0
    %3744 = vmatprep.subr.mxu0 0.0
    %3745 = vmatpush2.xpose.msra.mxu0 0.0
    %3746 = vmatprep.subr.mxu0 0.0
    %3747 = vmatpush2.xpose.msra.mxu0 0.0
    %3748 = vmatprep.subr.mxu0 0.0
    %3749 = vmatpush2.xpose.msra.mxu0 0.0
    %3750 = vmatprep.subr.mxu0 0.0
    %3751 = vmatpush2.xpose.msra.mxu0 0.0
    %3752 = vmatprep.subr.mxu0 0.0
    %3753 = vmatpush2.xpose.msra.mxu0 0.0
    %3754 = vmatprep.subr.mxu0 0.0
    %3755 = vmatpush2.xpose.msra.mxu0 0.0
    %3756 = vmatprep.subr.mxu0 0.0
    %3757 = vmatpush2.xpose.msra.mxu0 0.0
    %3758 = vmatprep.subr.mxu0 0.0
    %3759 = vmatpush2.xpose.msra.mxu0 0.0
    %3760 = vmatprep.subr.mxu0 0.0
    %3761 = vmatpush2.xpose.msra.mxu0 0.0
    %3762 = vmatprep.subr.mxu0 0.0
    %3763 = vmatpush2.xpose.msra.mxu0 0.0
    %3764 = vmatprep.subr.mxu0 0.0
    %3765 = vmatpush2.xpose.msra.mxu0 0.0
    %3766 = vmatprep.subr.mxu0 0.0
    %3767 = vmatpush2.xpose.msra.mxu0 0.0
    %3768 = vmatprep.mubr.f32.mxu0 0.0
    %3769 = vmatmul.mubr.f32.gmra.mxu0 %v3693
    %v3770 = vpop.f32.mrf.mxu0
    %v3771 = vadd.f32 0.0, %v3770
    %v3772 = vpop.f32.mrf.mxu0
    %3773 = vdwg.mxu0
    %v3774 = vsel %vm2729, %v3771, -1e+30
    %v3775 = vsel %vm301, %v3774, -inf
    %3776 = vmax.xlane.f32.xlu0 %v3775
    %v3777 = vpop.xlane.xlu0 %3776
    %v3778 = vsub.f32 %v3774, %v3777
    %v3779 = vmul.f32 %v3778, 1.442695
    %v3780 = vpow.pop %v3779
    %v3781 = vsel %vm301, %v3780, 0.0
    %3782 = vadd.xlane.f32.xlu0 %v3781
    %v3783 = vpop.xlane.xlu0 %3782
    %v3785 = vsel %vm301, %v3780, 0
    %3787 = vmatprep.subr.mxu0 0.0
    %3788 = vmatpush1.msra.mxu0 0.0
    %3789 = vmatprep.subr.mxu0 0.0
    %3790 = vmatpush1.msra.mxu0 0.0
    %3791 = vmatprep.subr.mxu0 0.0
    %3792 = vmatpush1.msra.mxu0 0.0
    %3793 = vmatprep.subr.mxu0 0.0
    %3794 = vmatpush1.msra.mxu0 0.0
    %3795 = vmatprep.subr.mxu0 0.0
    %3796 = vmatpush1.msra.mxu0 0.0
    %3797 = vmatprep.subr.mxu0 0.0
    %3798 = vmatpush1.msra.mxu0 0.0
    %3799 = vmatprep.subr.mxu0 0.0
    %3800 = vmatpush1.msra.mxu0 0.0
    %3801 = vmatprep.subr.mxu0 0.0
    %3802 = vmatpush1.msra.mxu0 0.0
    %3803 = vmatprep.subr.mxu0 0.0
    %3804 = vmatpush1.msra.mxu0 0.0
    %3805 = vmatprep.subr.mxu0 0.0
    %3806 = vmatpush1.msra.mxu0 0.0
    %3807 = vmatprep.subr.mxu0 0.0
    %3808 = vmatpush1.msra.mxu0 0.0
    %3809 = vmatprep.subr.mxu0 0.0
    %3810 = vmatpush1.msra.mxu0 0.0
    %3811 = vmatprep.subr.mxu0 0.0
    %3812 = vmatpush1.msra.mxu0 0.0
    %3813 = vmatprep.subr.mxu0 0.0
    %3814 = vmatpush1.msra.mxu0 %v3691
    %3815 = vmatprep.subr.mxu0 0.0
    %3816 = vmatpush1.msra.mxu0 %v3690
    %3817 = vmatprep.subr.mxu0 0.0
    %3818 = vmatpush1.msra.mxu0 %v3689
    %3819 = vmatprep.subr.mxu0 0.0
    %3820 = vmatpush2.msra.mxu0 0.0
    %3821 = vmatprep.subr.mxu0 0.0
    %3822 = vmatpush2.msra.mxu0 0.0
    %3823 = vmatprep.subr.mxu0 0.0
    %3824 = vmatpush2.msra.mxu0 0.0
    %3825 = vmatprep.subr.mxu0 0.0
    %3826 = vmatpush2.msra.mxu0 0.0
    %3827 = vmatprep.subr.mxu0 0.0
    %3828 = vmatpush2.msra.mxu0 0.0
    %3829 = vmatprep.subr.mxu0 0.0
    %3830 = vmatpush2.msra.mxu0 0.0
    %3831 = vmatprep.subr.mxu0 0.0
    %3832 = vmatpush2.msra.mxu0 0.0
    %3833 = vmatprep.subr.mxu0 0.0
    %3834 = vmatpush2.msra.mxu0 0.0
    %3835 = vmatprep.subr.mxu0 0.0
    %3836 = vmatpush2.msra.mxu0 0.0
    %3837 = vmatprep.subr.mxu0 0.0
    %3838 = vmatpush2.msra.mxu0 0.0
    %3839 = vmatprep.subr.mxu0 0.0
    %3840 = vmatpush2.msra.mxu0 0.0
    %3841 = vmatprep.subr.mxu0 0.0
    %3842 = vmatpush2.msra.mxu0 0.0
    %3843 = vmatprep.subr.mxu0 0.0
    %3844 = vmatpush2.msra.mxu0 0.0
    %3845 = vmatprep.subr.mxu0 0.0
    %3846 = vmatpush2.msra.mxu0 0.0
    %3847 = vmatprep.subr.mxu0 0.0
    %3848 = vmatpush2.msra.mxu0 0.0
    %3849 = vmatprep.subr.mxu0 0.0
    %3850 = vmatpush2.msra.mxu0 0.0
    %3851 = vmatprep.mubr.f32.mxu0 0.0
    %3852 = vmatmul.mubr.f32.gmra.mxu0 %v3785
    %v3853 = vpop.f32.mrf.mxu0
    %v3854 = vadd.f32 0.0, %v3853
    %v3855 = vpop.f32.mrf.mxu0
    %3856 = vdwg.mxu0
    %v3857 = vrcp.pop %v3783
    %v3858 = vmul.f32 1.0, %v3857
    %v3859 = vmul.f32 %v3854, %v3858
    %v3860 = vld [vmem:[#allocation4 + $0x8] sm:$0xff]
    %v3861 = vld [vmem:[%s2 + $0x8] sm:$0xff]
    %3863 = vrot.lane.b32.xlu0 %v3861, 32
    %v3864 = vpop.permute.xlu0 %3863
    %v3867 = vsel %vm216, %v3859, 0
    %3869 = vmatprep.subr.mxu0 0.0
    %3870 = vmatpush1.msra.mxu0 0.0
    %3871 = vmatprep.subr.mxu0 0.0
    %3872 = vmatpush1.msra.mxu0 0.0
    %3873 = vmatprep.subr.mxu0 0.0
    %3874 = vmatpush1.msra.mxu0 0.0
    %3875 = vmatprep.subr.mxu0 0.0
    %3876 = vmatpush1.msra.mxu0 0.0
    %3877 = vmatprep.subr.mxu0 0.0
    %3878 = vmatpush1.msra.mxu0 0.0
    %3879 = vmatprep.subr.mxu0 0.0
    %3880 = vmatpush1.msra.mxu0 0.0
    %3881 = vmatprep.subr.mxu0 0.0
    %3882 = vmatpush1.msra.mxu0 0.0
    %3883 = vmatprep.subr.mxu0 0.0
    %3884 = vmatpush1.msra.mxu0 0.0
    %3885 = vmatprep.subr.mxu0 0.0
    %3886 = vmatpush1.msra.mxu0 0.0
    %3887 = vmatprep.subr.mxu0 0.0
    %3888 = vmatpush1.msra.mxu0 0.0
    %3889 = vmatprep.subr.mxu0 0.0
    %3890 = vmatpush1.msra.mxu0 0.0
    %3891 = vmatprep.subr.mxu0 0.0
    %3892 = vmatpush1.msra.mxu0 0.0
    %3893 = vmatprep.subr.mxu0 0.0
    %3894 = vmatpush1.msra.mxu0 0.0
    %3895 = vmatprep.subr.mxu0 0.0
    %3896 = vmatpush1.msra.mxu0 0.0
    %3897 = vmatprep.subr.mxu0 0.0
    %3898 = vmatpush1.msra.mxu0 0.0
    %3899 = vmatprep.subr.mxu0 0.0
    %3900 = vmatpush1.msra.mxu0 %v3864
    %3901 = vmatprep.subr.mxu0 0.0
    %3902 = vmatpush2.msra.mxu0 0.0
    %3903 = vmatprep.subr.mxu0 0.0
    %3904 = vmatpush2.msra.mxu0 0.0
    %3905 = vmatprep.subr.mxu0 0.0
    %3906 = vmatpush2.msra.mxu0 0.0
    %3907 = vmatprep.subr.mxu0 0.0
    %3908 = vmatpush2.msra.mxu0 0.0
    %3909 = vmatprep.subr.mxu0 0.0
    %3910 = vmatpush2.msra.mxu0 0.0
    %3911 = vmatprep.subr.mxu0 0.0
    %3912 = vmatpush2.msra.mxu0 0.0
    %3913 = vmatprep.subr.mxu0 0.0
    %3914 = vmatpush2.msra.mxu0 0.0
    %3915 = vmatprep.subr.mxu0 0.0
    %3916 = vmatpush2.msra.mxu0 0.0
    %3917 = vmatprep.subr.mxu0 0.0
    %3918 = vmatpush2.msra.mxu0 0.0
    %3919 = vmatprep.subr.mxu0 0.0
    %3920 = vmatpush2.msra.mxu0 0.0
    %3921 = vmatprep.subr.mxu0 0.0
    %3922 = vmatpush2.msra.mxu0 0.0
    %3923 = vmatprep.subr.mxu0 0.0
    %3924 = vmatpush2.msra.mxu0 0.0
    %3925 = vmatprep.subr.mxu0 0.0
    %3926 = vmatpush2.msra.mxu0 0.0
    %3927 = vmatprep.subr.mxu0 0.0
    %3928 = vmatpush2.msra.mxu0 0.0
    %3929 = vmatprep.subr.mxu0 0.0
    %3930 = vmatpush2.msra.mxu0 0.0
    %3931 = vmatprep.subr.mxu0 0.0
    %3932 = vmatpush2.msra.mxu0 0.0
    %3933 = vmatprep.mubr.f32.mxu0 0.0
    %3934 = vmatmul.mubr.f32.gmra.mxu0 %v3867
    %v3935 = vpop.f32.mrf.mxu0
    %v3936 = vadd.f32 0.0, %v3935
    %v3937 = vpop.f32.mrf.mxu0
    %3938 = vdwg.mxu0
    %v3939 = vadd.f32 %v3860, %v3936
    %3940 = vst.msk [vmem:[#allocation4 + $0x8] sm:$0xff] %vm55, %v3939
    %3941 = vrot.lane.b32.xlu0 %v2441, 120
    %v3942 = vpop.permute.xlu0 %3941
    %3943 = vrot.lane.b32.xlu0 %v3686, 120
    %v3944 = vpop.permute.xlu0 %3943
    %3945 = vrot.lane.b32.xlu0 %v3687, 120
    %v3946 = vpop.permute.xlu0 %3945
    %3947 = vrot.lane.b32.xlu0 %v3688, 120
    %v3948 = vpop.permute.xlu0 %3947
    %v3949 = vsel %vm216, %v3942, 0
    %v3951 = vsel %vm216, %v3944, 0
    %v3953 = vsel %vm216, %v3946, 0
    %v3955 = vsel %vm216, %v3948, 0
    %3957 = vmatprep.subr.mxu0 0.0
    %3958 = vmatpush1.xpose.msra.mxu0 0.0
    %3959 = vmatprep.subr.mxu0 0.0
    %3960 = vmatpush1.xpose.msra.mxu0 0.0
    %3961 = vmatprep.subr.mxu0 0.0
    %3962 = vmatpush1.xpose.msra.mxu0 0.0
    %3963 = vmatprep.subr.mxu0 0.0
    %3964 = vmatpush1.xpose.msra.mxu0 0.0
    %3965 = vmatprep.subr.mxu0 0.0
    %3966 = vmatpush1.xpose.msra.mxu0 0.0
    %3967 = vmatprep.subr.mxu0 0.0
    %3968 = vmatpush1.xpose.msra.mxu0 0.0
    %3969 = vmatprep.subr.mxu0 0.0
    %3970 = vmatpush1.xpose.msra.mxu0 0.0
    %3971 = vmatprep.subr.mxu0 0.0
    %3972 = vmatpush1.xpose.msra.mxu0 0.0
    %3973 = vmatprep.subr.mxu0 0.0
    %3974 = vmatpush1.xpose.msra.mxu0 0.0
    %3975 = vmatprep.subr.mxu0 0.0
    %3976 = vmatpush1.xpose.msra.mxu0 0.0
    %3977 = vmatprep.subr.mxu0 0.0
    %3978 = vmatpush1.xpose.msra.mxu0 0.0
    %3979 = vmatprep.subr.mxu0 0.0
    %3980 = vmatpush1.xpose.msra.mxu0 0.0
    %3981 = vmatprep.subr.mxu0 0.0
    %3982 = vmatpush1.xpose.msra.mxu0 0.0
    %3983 = vmatprep.subr.mxu0 0.0
    %3984 = vmatpush1.xpose.msra.mxu0 %v3955
    %3985 = vmatprep.subr.mxu0 0.0
    %3986 = vmatpush1.xpose.msra.mxu0 %v3953
    %3987 = vmatprep.subr.mxu0 0.0
    %3988 = vmatpush1.xpose.msra.mxu0 %v3951
    %3989 = vmatprep.subr.mxu0 0.0
    %3990 = vmatpush2.xpose.msra.mxu0 0.0
    %3991 = vmatprep.subr.mxu0 0.0
    %3992 = vmatpush2.xpose.msra.mxu0 0.0
    %3993 = vmatprep.subr.mxu0 0.0
    %3994 = vmatpush2.xpose.msra.mxu0 0.0
    %3995 = vmatprep.subr.mxu0 0.0
    %3996 = vmatpush2.xpose.msra.mxu0 0.0
    %3997 = vmatprep.subr.mxu0 0.0
    %3998 = vmatpush2.xpose.msra.mxu0 0.0
    %3999 = vmatprep.subr.mxu0 0.0
    %4000 = vmatpush2.xpose.msra.mxu0 0.0
    %4001 = vmatprep.subr.mxu0 0.0
    %4002 = vmatpush2.xpose.msra.mxu0 0.0
    %4003 = vmatprep.subr.mxu0 0.0
    %4004 = vmatpush2.xpose.msra.mxu0 0.0
    %4005 = vmatprep.subr.mxu0 0.0
    %4006 = vmatpush2.xpose.msra.mxu0 0.0
    %4007 = vmatprep.subr.mxu0 0.0
    %4008 = vmatpush2.xpose.msra.mxu0 0.0
    %4009 = vmatprep.subr.mxu0 0.0
    %4010 = vmatpush2.xpose.msra.mxu0 0.0
    %4011 = vmatprep.subr.mxu0 0.0
    %4012 = vmatpush2.xpose.msra.mxu0 0.0
    %4013 = vmatprep.subr.mxu0 0.0
    %4014 = vmatpush2.xpose.msra.mxu0 0.0
    %4015 = vmatprep.subr.mxu0 0.0
    %4016 = vmatpush2.xpose.msra.mxu0 0.0
    %4017 = vmatprep.subr.mxu0 0.0
    %4018 = vmatpush2.xpose.msra.mxu0 0.0
    %4019 = vmatprep.subr.mxu0 0.0
    %4020 = vmatpush2.xpose.msra.mxu0 0.0
    %4021 = vmatprep.mubr.f32.mxu0 0.0
    %4022 = vmatmul.mubr.f32.gmra.mxu0 %v3949
    %v4023 = vpop.f32.mrf.mxu0
    %v4024 = vadd.f32 0.0, %v4023
    %v4025 = vpop.f32.mrf.mxu0
    %4026 = vdwg.mxu0
    %v4027 = vsel %vm2729, %v4024, -1e+30
    %v4028 = vsel %vm301, %v4027, -inf
    %4029 = vmax.xlane.f32.xlu0 %v4028
    %v4030 = vpop.xlane.xlu0 %4029
    %v4031 = vsub.f32 %v4027, %v4030
    %v4032 = vmul.f32 %v4031, 1.442695
    %v4033 = vpow.pop %v4032
    %v4034 = vsel %vm301, %v4033, 0.0
    %4035 = vadd.xlane.f32.xlu0 %v4034
    %v4036 = vpop.xlane.xlu0 %4035
    %4040 = vrot.lane.b32.xlu0 %v3689, 120
    %v4041 = vpop.permute.xlu0 %4040
    %4042 = vrot.lane.b32.xlu0 %v3690, 120
    %v4043 = vpop.permute.xlu0 %4042
    %4044 = vrot.lane.b32.xlu0 %v3691, 120
    %v4045 = vpop.permute.xlu0 %4044
    %v4050 = vsel %vm301, %v4033, 0
    %4052 = vmatprep.subr.mxu0 0.0
    %4053 = vmatpush1.msra.mxu0 0.0
    %4054 = vmatprep.subr.mxu0 0.0
    %4055 = vmatpush1.msra.mxu0 0.0
    %4056 = vmatprep.subr.mxu0 0.0
    %4057 = vmatpush1.msra.mxu0 0.0
    %4058 = vmatprep.subr.mxu0 0.0
    %4059 = vmatpush1.msra.mxu0 0.0
    %4060 = vmatprep.subr.mxu0 0.0
    %4061 = vmatpush1.msra.mxu0 0.0
    %4062 = vmatprep.subr.mxu0 0.0
    %4063 = vmatpush1.msra.mxu0 0.0
    %4064 = vmatprep.subr.mxu0 0.0
    %4065 = vmatpush1.msra.mxu0 0.0
    %4066 = vmatprep.subr.mxu0 0.0
    %4067 = vmatpush1.msra.mxu0 0.0
    %4068 = vmatprep.subr.mxu0 0.0
    %4069 = vmatpush1.msra.mxu0 0.0
    %4070 = vmatprep.subr.mxu0 0.0
    %4071 = vmatpush1.msra.mxu0 0.0
    %4072 = vmatprep.subr.mxu0 0.0
    %4073 = vmatpush1.msra.mxu0 0.0
    %4074 = vmatprep.subr.mxu0 0.0
    %4075 = vmatpush1.msra.mxu0 0.0
    %4076 = vmatprep.subr.mxu0 0.0
    %4077 = vmatpush1.msra.mxu0 0.0
    %4078 = vmatprep.subr.mxu0 0.0
    %4079 = vmatpush1.msra.mxu0 %v4045
    %4080 = vmatprep.subr.mxu0 0.0
    %4081 = vmatpush1.msra.mxu0 %v4043
    %4082 = vmatprep.subr.mxu0 0.0
    %4083 = vmatpush1.msra.mxu0 %v4041
    %4084 = vmatprep.subr.mxu0 0.0
    %4085 = vmatpush2.msra.mxu0 0.0
    %4086 = vmatprep.subr.mxu0 0.0
    %4087 = vmatpush2.msra.mxu0 0.0
    %4088 = vmatprep.subr.mxu0 0.0
    %4089 = vmatpush2.msra.mxu0 0.0
    %4090 = vmatprep.subr.mxu0 0.0
    %4091 = vmatpush2.msra.mxu0 0.0
    %4092 = vmatprep.subr.mxu0 0.0
    %4093 = vmatpush2.msra.mxu0 0.0
    %4094 = vmatprep.subr.mxu0 0.0
    %4095 = vmatpush2.msra.mxu0 0.0
    %4096 = vmatprep.subr.mxu0 0.0
    %4097 = vmatpush2.msra.mxu0 0.0
    %4098 = vmatprep.subr.mxu0 0.0
    %4099 = vmatpush2.msra.mxu0 0.0
    %4100 = vmatprep.subr.mxu0 0.0
    %4101 = vmatpush2.msra.mxu0 0.0
    %4102 = vmatprep.subr.mxu0 0.0
    %4103 = vmatpush2.msra.mxu0 0.0
    %4104 = vmatprep.subr.mxu0 0.0
    %4105 = vmatpush2.msra.mxu0 0.0
    %4106 = vmatprep.subr.mxu0 0.0
    %4107 = vmatpush2.msra.mxu0 0.0
    %4108 = vmatprep.subr.mxu0 0.0
    %4109 = vmatpush2.msra.mxu0 0.0
    %4110 = vmatprep.subr.mxu0 0.0
    %4111 = vmatpush2.msra.mxu0 0.0
    %4112 = vmatprep.subr.mxu0 0.0
    %4113 = vmatpush2.msra.mxu0 0.0
    %4114 = vmatprep.subr.mxu0 0.0
    %4115 = vmatpush2.msra.mxu0 0.0
    %4116 = vmatprep.mubr.f32.mxu0 0.0
    %4117 = vmatmul.mubr.f32.gmra.mxu0 %v4050
    %v4118 = vpop.f32.mrf.mxu0
    %v4119 = vadd.f32 0.0, %v4118
    %v4120 = vpop.f32.mrf.mxu0
    %4121 = vdwg.mxu0
    %v4122 = vrcp.pop %v4036
    %v4123 = vmul.f32 1.0, %v4122
    %v4124 = vmul.f32 %v4119, %v4123
    %v4125 = vld [vmem:[#allocation4 + $0x8] sm:$0xff]
    %v4126 = vld [vmem:[%s2 + $0x20] sm:$0xff]
    %4128 = vrot.lane.b32.xlu0 %v4126, 32
    %v4129 = vpop.permute.xlu0 %4128
    %v4132 = vsel %vm216, %v4124, 0
    %4134 = vmatprep.subr.mxu0 0.0
    %4135 = vmatpush1.msra.mxu0 0.0
    %4136 = vmatprep.subr.mxu0 0.0
    %4137 = vmatpush1.msra.mxu0 0.0
    %4138 = vmatprep.subr.mxu0 0.0
    %4139 = vmatpush1.msra.mxu0 0.0
    %4140 = vmatprep.subr.mxu0 0.0
    %4141 = vmatpush1.msra.mxu0 0.0
    %4142 = vmatprep.subr.mxu0 0.0
    %4143 = vmatpush1.msra.mxu0 0.0
    %4144 = vmatprep.subr.mxu0 0.0
    %4145 = vmatpush1.msra.mxu0 0.0
    %4146 = vmatprep.subr.mxu0 0.0
    %4147 = vmatpush1.msra.mxu0 0.0
    %4148 = vmatprep.subr.mxu0 0.0
    %4149 = vmatpush1.msra.mxu0 0.0
    %4150 = vmatprep.subr.mxu0 0.0
    %4151 = vmatpush1.msra.mxu0 0.0
    %4152 = vmatprep.subr.mxu0 0.0
    %4153 = vmatpush1.msra.mxu0 0.0
    %4154 = vmatprep.subr.mxu0 0.0
    %4155 = vmatpush1.msra.mxu0 0.0
    %4156 = vmatprep.subr.mxu0 0.0
    %4157 = vmatpush1.msra.mxu0 0.0
    %4158 = vmatprep.subr.mxu0 0.0
    %4159 = vmatpush1.msra.mxu0 0.0
    %4160 = vmatprep.subr.mxu0 0.0
    %4161 = vmatpush1.msra.mxu0 0.0
    %4162 = vmatprep.subr.mxu0 0.0
    %4163 = vmatpush1.msra.mxu0 0.0
    %4164 = vmatprep.subr.mxu0 0.0
    %4165 = vmatpush1.msra.mxu0 %v4129
    %4166 = vmatprep.subr.mxu0 0.0
    %4167 = vmatpush2.msra.mxu0 0.0
    %4168 = vmatprep.subr.mxu0 0.0
    %4169 = vmatpush2.msra.mxu0 0.0
    %4170 = vmatprep.subr.mxu0 0.0
    %4171 = vmatpush2.msra.mxu0 0.0
    %4172 = vmatprep.subr.mxu0 0.0
    %4173 = vmatpush2.msra.mxu0 0.0
    %4174 = vmatprep.subr.mxu0 0.0
    %4175 = vmatpush2.msra.mxu0 0.0
    %4176 = vmatprep.subr.mxu0 0.0
    %4177 = vmatpush2.msra.mxu0 0.0
    %4178 = vmatprep.subr.mxu0 0.0
    %4179 = vmatpush2.msra.mxu0 0.0
    %4180 = vmatprep.subr.mxu0 0.0
    %4181 = vmatpush2.msra.mxu0 0.0
    %4182 = vmatprep.subr.mxu0 0.0
    %4183 = vmatpush2.msra.mxu0 0.0
    %4184 = vmatprep.subr.mxu0 0.0
    %4185 = vmatpush2.msra.mxu0 0.0
    %4186 = vmatprep.subr.mxu0 0.0
    %4187 = vmatpush2.msra.mxu0 0.0
    %4188 = vmatprep.subr.mxu0 0.0
    %4189 = vmatpush2.msra.mxu0 0.0
    %4190 = vmatprep.subr.mxu0 0.0
    %4191 = vmatpush2.msra.mxu0 0.0
    %4192 = vmatprep.subr.mxu0 0.0
    %4193 = vmatpush2.msra.mxu0 0.0
    %4194 = vmatprep.subr.mxu0 0.0
    %4195 = vmatpush2.msra.mxu0 0.0
    %4196 = vmatprep.subr.mxu0 0.0
    %4197 = vmatpush2.msra.mxu0 0.0
    %4198 = vmatprep.mubr.f32.mxu0 0.0
    %4199 = vmatmul.mubr.f32.gmra.mxu0 %v4132
    %v4200 = vpop.f32.mrf.mxu0
    %v4201 = vadd.f32 0.0, %v4200
    %v4202 = vpop.f32.mrf.mxu0
    %4203 = vdwg.mxu0
    %v4204 = vadd.f32 %v4125, %v4201
    %4205 = vst.msk [vmem:[#allocation4 + $0x8] sm:$0xff] %vm55, %v4204
    %4206 = vrot.lane.b32.xlu0 %v2441, 112
    %v4207 = vpop.permute.xlu0 %4206
    %4208 = vrot.lane.b32.xlu0 %v3686, 112
    %v4209 = vpop.permute.xlu0 %4208
    %4210 = vrot.lane.b32.xlu0 %v3687, 112
    %v4211 = vpop.permute.xlu0 %4210
    %4212 = vrot.lane.b32.xlu0 %v3688, 112
    %v4213 = vpop.permute.xlu0 %4212
    %v4214 = vsel %vm216, %v4207, 0
    %v4216 = vsel %vm216, %v4209, 0
    %v4218 = vsel %vm216, %v4211, 0
    %v4220 = vsel %vm216, %v4213, 0
    %4222 = vmatprep.subr.mxu0 0.0
    %4223 = vmatpush1.xpose.msra.mxu0 0.0
    %4224 = vmatprep.subr.mxu0 0.0
    %4225 = vmatpush1.xpose.msra.mxu0 0.0
    %4226 = vmatprep.subr.mxu0 0.0
    %4227 = vmatpush1.xpose.msra.mxu0 0.0
    %4228 = vmatprep.subr.mxu0 0.0
    %4229 = vmatpush1.xpose.msra.mxu0 0.0
    %4230 = vmatprep.subr.mxu0 0.0
    %4231 = vmatpush1.xpose.msra.mxu0 0.0
    %4232 = vmatprep.subr.mxu0 0.0
    %4233 = vmatpush1.xpose.msra.mxu0 0.0
    %4234 = vmatprep.subr.mxu0 0.0
    %4235 = vmatpush1.xpose.msra.mxu0 0.0
    %4236 = vmatprep.subr.mxu0 0.0
    %4237 = vmatpush1.xpose.msra.mxu0 0.0
    %4238 = vmatprep.subr.mxu0 0.0
    %4239 = vmatpush1.xpose.msra.mxu0 0.0
    %4240 = vmatprep.subr.mxu0 0.0
    %4241 = vmatpush1.xpose.msra.mxu0 0.0
    %4242 = vmatprep.subr.mxu0 0.0
    %4243 = vmatpush1.xpose.msra.mxu0 0.0
    %4244 = vmatprep.subr.mxu0 0.0
    %4245 = vmatpush1.xpose.msra.mxu0 0.0
    %4246 = vmatprep.subr.mxu0 0.0
    %4247 = vmatpush1.xpose.msra.mxu0 0.0
    %4248 = vmatprep.subr.mxu0 0.0
    %4249 = vmatpush1.xpose.msra.mxu0 %v4220
    %4250 = vmatprep.subr.mxu0 0.0
    %4251 = vmatpush1.xpose.msra.mxu0 %v4218
    %4252 = vmatprep.subr.mxu0 0.0
    %4253 = vmatpush1.xpose.msra.mxu0 %v4216
    %4254 = vmatprep.subr.mxu0 0.0
    %4255 = vmatpush2.xpose.msra.mxu0 0.0
    %4256 = vmatprep.subr.mxu0 0.0
    %4257 = vmatpush2.xpose.msra.mxu0 0.0
    %4258 = vmatprep.subr.mxu0 0.0
    %4259 = vmatpush2.xpose.msra.mxu0 0.0
    %4260 = vmatprep.subr.mxu0 0.0
    %4261 = vmatpush2.xpose.msra.mxu0 0.0
    %4262 = vmatprep.subr.mxu0 0.0
    %4263 = vmatpush2.xpose.msra.mxu0 0.0
    %4264 = vmatprep.subr.mxu0 0.0
    %4265 = vmatpush2.xpose.msra.mxu0 0.0
    %4266 = vmatprep.subr.mxu0 0.0
    %4267 = vmatpush2.xpose.msra.mxu0 0.0
    %4268 = vmatprep.subr.mxu0 0.0
    %4269 = vmatpush2.xpose.msra.mxu0 0.0
    %4270 = vmatprep.subr.mxu0 0.0
    %4271 = vmatpush2.xpose.msra.mxu0 0.0
    %4272 = vmatprep.subr.mxu0 0.0
    %4273 = vmatpush2.xpose.msra.mxu0 0.0
    %4274 = vmatprep.subr.mxu0 0.0
    %4275 = vmatpush2.xpose.msra.mxu0 0.0
    %4276 = vmatprep.subr.mxu0 0.0
    %4277 = vmatpush2.xpose.msra.mxu0 0.0
    %4278 = vmatprep.subr.mxu0 0.0
    %4279 = vmatpush2.xpose.msra.mxu0 0.0
    %4280 = vmatprep.subr.mxu0 0.0
    %4281 = vmatpush2.xpose.msra.mxu0 0.0
    %4282 = vmatprep.subr.mxu0 0.0
    %4283 = vmatpush2.xpose.msra.mxu0 0.0
    %4284 = vmatprep.subr.mxu0 0.0
    %4285 = vmatpush2.xpose.msra.mxu0 0.0
    %4286 = vmatprep.mubr.f32.mxu0 0.0
    %4287 = vmatmul.mubr.f32.gmra.mxu0 %v4214
    %v4288 = vpop.f32.mrf.mxu0
    %v4289 = vadd.f32 0.0, %v4288
    %v4290 = vpop.f32.mrf.mxu0
    %4291 = vdwg.mxu0
    %v4292 = vsel %vm2729, %v4289, -1e+30
    %v4293 = vsel %vm301, %v4292, -inf
    %4294 = vmax.xlane.f32.xlu0 %v4293
    %v4295 = vpop.xlane.xlu0 %4294
    %v4296 = vsub.f32 %v4292, %v4295
    %v4297 = vmul.f32 %v4296, 1.442695
    %v4298 = vpow.pop %v4297
    %v4299 = vsel %vm301, %v4298, 0.0
    %4300 = vadd.xlane.f32.xlu0 %v4299
    %v4301 = vpop.xlane.xlu0 %4300
    %4302 = vrot.lane.b32.xlu0 %v3689, 112
    %v4303 = vpop.permute.xlu0 %4302
    %4304 = vrot.lane.b32.xlu0 %v3690, 112
    %v4305 = vpop.permute.xlu0 %4304
    %4306 = vrot.lane.b32.xlu0 %v3691, 112
    %v4307 = vpop.permute.xlu0 %4306
    %v4312 = vsel %vm301, %v4298, 0
    %4314 = vmatprep.subr.mxu0 0.0
    %4315 = vmatpush1.msra.mxu0 0.0
    %4316 = vmatprep.subr.mxu0 0.0
    %4317 = vmatpush1.msra.mxu0 0.0
    %4318 = vmatprep.subr.mxu0 0.0
    %4319 = vmatpush1.msra.mxu0 0.0
    %4320 = vmatprep.subr.mxu0 0.0
    %4321 = vmatpush1.msra.mxu0 0.0
    %4322 = vmatprep.subr.mxu0 0.0
    %4323 = vmatpush1.msra.mxu0 0.0
    %4324 = vmatprep.subr.mxu0 0.0
    %4325 = vmatpush1.msra.mxu0 0.0
    %4326 = vmatprep.subr.mxu0 0.0
    %4327 = vmatpush1.msra.mxu0 0.0
    %4328 = vmatprep.subr.mxu0 0.0
    %4329 = vmatpush1.msra.mxu0 0.0
    %4330 = vmatprep.subr.mxu0 0.0
    %4331 = vmatpush1.msra.mxu0 0.0
    %4332 = vmatprep.subr.mxu0 0.0
    %4333 = vmatpush1.msra.mxu0 0.0
    %4334 = vmatprep.subr.mxu0 0.0
    %4335 = vmatpush1.msra.mxu0 0.0
    %4336 = vmatprep.subr.mxu0 0.0
    %4337 = vmatpush1.msra.mxu0 0.0
    %4338 = vmatprep.subr.mxu0 0.0
    %4339 = vmatpush1.msra.mxu0 0.0
    %4340 = vmatprep.subr.mxu0 0.0
    %4341 = vmatpush1.msra.mxu0 %v4307
    %4342 = vmatprep.subr.mxu0 0.0
    %4343 = vmatpush1.msra.mxu0 %v4305
    %4344 = vmatprep.subr.mxu0 0.0
    %4345 = vmatpush1.msra.mxu0 %v4303
    %4346 = vmatprep.subr.mxu0 0.0
    %4347 = vmatpush2.msra.mxu0 0.0
    %4348 = vmatprep.subr.mxu0 0.0
    %4349 = vmatpush2.msra.mxu0 0.0
    %4350 = vmatprep.subr.mxu0 0.0
    %4351 = vmatpush2.msra.mxu0 0.0
    %4352 = vmatprep.subr.mxu0 0.0
    %4353 = vmatpush2.msra.mxu0 0.0
    %4354 = vmatprep.subr.mxu0 0.0
    %4355 = vmatpush2.msra.mxu0 0.0
    %4356 = vmatprep.subr.mxu0 0.0
    %4357 = vmatpush2.msra.mxu0 0.0
    %4358 = vmatprep.subr.mxu0 0.0
    %4359 = vmatpush2.msra.mxu0 0.0
    %4360 = vmatprep.subr.mxu0 0.0
    %4361 = vmatpush2.msra.mxu0 0.0
    %4362 = vmatprep.subr.mxu0 0.0
    %4363 = vmatpush2.msra.mxu0 0.0
    %4364 = vmatprep.subr.mxu0 0.0
    %4365 = vmatpush2.msra.mxu0 0.0
    %4366 = vmatprep.subr.mxu0 0.0
    %4367 = vmatpush2.msra.mxu0 0.0
    %4368 = vmatprep.subr.mxu0 0.0
    %4369 = vmatpush2.msra.mxu0 0.0
    %4370 = vmatprep.subr.mxu0 0.0
    %4371 = vmatpush2.msra.mxu0 0.0
    %4372 = vmatprep.subr.mxu0 0.0
    %4373 = vmatpush2.msra.mxu0 0.0
    %4374 = vmatprep.subr.mxu0 0.0
    %4375 = vmatpush2.msra.mxu0 0.0
    %4376 = vmatprep.subr.mxu0 0.0
    %4377 = vmatpush2.msra.mxu0 0.0
    %4378 = vmatprep.mubr.f32.mxu0 0.0
    %4379 = vmatmul.mubr.f32.gmra.mxu0 %v4312
    %v4380 = vpop.f32.mrf.mxu0
    %v4381 = vadd.f32 0.0, %v4380
    %v4382 = vpop.f32.mrf.mxu0
    %4383 = vdwg.mxu0
    %v4384 = vrcp.pop %v4301
    %v4385 = vmul.f32 1.0, %v4384
    %v4386 = vmul.f32 %v4381, %v4385
    %v4387 = vld [vmem:[#allocation4 + $0x8] sm:$0xff]
    %v4388 = vld [vmem:[%s2 + $0x38] sm:$0xff]
    %4390 = vrot.lane.b32.xlu0 %v4388, 32
    %v4391 = vpop.permute.xlu0 %4390
    %v4394 = vsel %vm216, %v4386, 0
    %4396 = vmatprep.subr.mxu0 0.0
    %4397 = vmatpush1.msra.mxu0 0.0
    %4398 = vmatprep.subr.mxu0 0.0
    %4399 = vmatpush1.msra.mxu0 0.0
    %4400 = vmatprep.subr.mxu0 0.0
    %4401 = vmatpush1.msra.mxu0 0.0
    %4402 = vmatprep.subr.mxu0 0.0
    %4403 = vmatpush1.msra.mxu0 0.0
    %4404 = vmatprep.subr.mxu0 0.0
    %4405 = vmatpush1.msra.mxu0 0.0
    %4406 = vmatprep.subr.mxu0 0.0
    %4407 = vmatpush1.msra.mxu0 0.0
    %4408 = vmatprep.subr.mxu0 0.0
    %4409 = vmatpush1.msra.mxu0 0.0
    %4410 = vmatprep.subr.mxu0 0.0
    %4411 = vmatpush1.msra.mxu0 0.0
    %4412 = vmatprep.subr.mxu0 0.0
    %4413 = vmatpush1.msra.mxu0 0.0
    %4414 = vmatprep.subr.mxu0 0.0
    %4415 = vmatpush1.msra.mxu0 0.0
    %4416 = vmatprep.subr.mxu0 0.0
    %4417 = vmatpush1.msra.mxu0 0.0
    %4418 = vmatprep.subr.mxu0 0.0
    %4419 = vmatpush1.msra.mxu0 0.0
    %4420 = vmatprep.subr.mxu0 0.0
    %4421 = vmatpush1.msra.mxu0 0.0
    %4422 = vmatprep.subr.mxu0 0.0
    %4423 = vmatpush1.msra.mxu0 0.0
    %4424 = vmatprep.subr.mxu0 0.0
    %4425 = vmatpush1.msra.mxu0 0.0
    %4426 = vmatprep.subr.mxu0 0.0
    %4427 = vmatpush1.msra.mxu0 %v4391
    %4428 = vmatprep.subr.mxu0 0.0
    %4429 = vmatpush2.msra.mxu0 0.0
    %4430 = vmatprep.subr.mxu0 0.0
    %4431 = vmatpush2.msra.mxu0 0.0
    %4432 = vmatprep.subr.mxu0 0.0
    %4433 = vmatpush2.msra.mxu0 0.0
    %4434 = vmatprep.subr.mxu0 0.0
    %4435 = vmatpush2.msra.mxu0 0.0
    %4436 = vmatprep.subr.mxu0 0.0
    %4437 = vmatpush2.msra.mxu0 0.0
    %4438 = vmatprep.subr.mxu0 0.0
    %4439 = vmatpush2.msra.mxu0 0.0
    %4440 = vmatprep.subr.mxu0 0.0
    %4441 = vmatpush2.msra.mxu0 0.0
    %4442 = vmatprep.subr.mxu0 0.0
    %4443 = vmatpush2.msra.mxu0 0.0
    %4444 = vmatprep.subr.mxu0 0.0
    %4445 = vmatpush2.msra.mxu0 0.0
    %4446 = vmatprep.subr.mxu0 0.0
    %4447 = vmatpush2.msra.mxu0 0.0
    %4448 = vmatprep.subr.mxu0 0.0
    %4449 = vmatpush2.msra.mxu0 0.0
    %4450 = vmatprep.subr.mxu0 0.0
    %4451 = vmatpush2.msra.mxu0 0.0
    %4452 = vmatprep.subr.mxu0 0.0
    %4453 = vmatpush2.msra.mxu0 0.0
    %4454 = vmatprep.subr.mxu0 0.0
    %4455 = vmatpush2.msra.mxu0 0.0
    %4456 = vmatprep.subr.mxu0 0.0
    %4457 = vmatpush2.msra.mxu0 0.0
    %4458 = vmatprep.subr.mxu0 0.0
    %4459 = vmatpush2.msra.mxu0 0.0
    %4460 = vmatprep.mubr.f32.mxu0 0.0
    %4461 = vmatmul.mubr.f32.gmra.mxu0 %v4394
    %v4462 = vpop.f32.mrf.mxu0
    %v4463 = vadd.f32 0.0, %v4462
    %v4464 = vpop.f32.mrf.mxu0
    %4465 = vdwg.mxu0
    %v4466 = vadd.f32 %v4387, %v4463
    %4467 = vst.msk [vmem:[#allocation4 + $0x8] sm:$0xff] %vm55, %v4466
    %4468 = vrot.lane.b32.xlu0 %v2441, 104
    %v4469 = vpop.permute.xlu0 %4468
    %4470 = vrot.lane.b32.xlu0 %v3686, 104
    %v4471 = vpop.permute.xlu0 %4470
    %4472 = vrot.lane.b32.xlu0 %v3687, 104
    %v4473 = vpop.permute.xlu0 %4472
    %4474 = vrot.lane.b32.xlu0 %v3688, 104
    %v4475 = vpop.permute.xlu0 %4474
    %v4476 = vsel %vm216, %v4469, 0
    %v4478 = vsel %vm216, %v4471, 0
    %v4480 = vsel %vm216, %v4473, 0
    %v4482 = vsel %vm216, %v4475, 0
    %4484 = vmatprep.subr.mxu0 0.0
    %4485 = vmatpush1.xpose.msra.mxu0 0.0
    %4486 = vmatprep.subr.mxu0 0.0
    %4487 = vmatpush1.xpose.msra.mxu0 0.0
    %4488 = vmatprep.subr.mxu0 0.0
    %4489 = vmatpush1.xpose.msra.mxu0 0.0
    %4490 = vmatprep.subr.mxu0 0.0
    %4491 = vmatpush1.xpose.msra.mxu0 0.0
    %4492 = vmatprep.subr.mxu0 0.0
    %4493 = vmatpush1.xpose.msra.mxu0 0.0
    %4494 = vmatprep.subr.mxu0 0.0
    %4495 = vmatpush1.xpose.msra.mxu0 0.0
    %4496 = vmatprep.subr.mxu0 0.0
    %4497 = vmatpush1.xpose.msra.mxu0 0.0
    %4498 = vmatprep.subr.mxu0 0.0
    %4499 = vmatpush1.xpose.msra.mxu0 0.0
    %4500 = vmatprep.subr.mxu0 0.0
    %4501 = vmatpush1.xpose.msra.mxu0 0.0
    %4502 = vmatprep.subr.mxu0 0.0
    %4503 = vmatpush1.xpose.msra.mxu0 0.0
    %4504 = vmatprep.subr.mxu0 0.0
    %4505 = vmatpush1.xpose.msra.mxu0 0.0
    %4506 = vmatprep.subr.mxu0 0.0
    %4507 = vmatpush1.xpose.msra.mxu0 0.0
    %4508 = vmatprep.subr.mxu0 0.0
    %4509 = vmatpush1.xpose.msra.mxu0 0.0
    %4510 = vmatprep.subr.mxu0 0.0
    %4511 = vmatpush1.xpose.msra.mxu0 %v4482
    %4512 = vmatprep.subr.mxu0 0.0
    %4513 = vmatpush1.xpose.msra.mxu0 %v4480
    %4514 = vmatprep.subr.mxu0 0.0
    %4515 = vmatpush1.xpose.msra.mxu0 %v4478
    %4516 = vmatprep.subr.mxu0 0.0
    %4517 = vmatpush2.xpose.msra.mxu0 0.0
    %4518 = vmatprep.subr.mxu0 0.0
    %4519 = vmatpush2.xpose.msra.mxu0 0.0
    %4520 = vmatprep.subr.mxu0 0.0
    %4521 = vmatpush2.xpose.msra.mxu0 0.0
    %4522 = vmatprep.subr.mxu0 0.0
    %4523 = vmatpush2.xpose.msra.mxu0 0.0
    %4524 = vmatprep.subr.mxu0 0.0
    %4525 = vmatpush2.xpose.msra.mxu0 0.0
    %4526 = vmatprep.subr.mxu0 0.0
    %4527 = vmatpush2.xpose.msra.mxu0 0.0
    %4528 = vmatprep.subr.mxu0 0.0
    %4529 = vmatpush2.xpose.msra.mxu0 0.0
    %4530 = vmatprep.subr.mxu0 0.0
    %4531 = vmatpush2.xpose.msra.mxu0 0.0
    %4532 = vmatprep.subr.mxu0 0.0
    %4533 = vmatpush2.xpose.msra.mxu0 0.0
    %4534 = vmatprep.subr.mxu0 0.0
    %4535 = vmatpush2.xpose.msra.mxu0 0.0
    %4536 = vmatprep.subr.mxu0 0.0
    %4537 = vmatpush2.xpose.msra.mxu0 0.0
    %4538 = vmatprep.subr.mxu0 0.0
    %4539 = vmatpush2.xpose.msra.mxu0 0.0
    %4540 = vmatprep.subr.mxu0 0.0
    %4541 = vmatpush2.xpose.msra.mxu0 0.0
    %4542 = vmatprep.subr.mxu0 0.0
    %4543 = vmatpush2.xpose.msra.mxu0 0.0
    %4544 = vmatprep.subr.mxu0 0.0
    %4545 = vmatpush2.xpose.msra.mxu0 0.0
    %4546 = vmatprep.subr.mxu0 0.0
    %4547 = vmatpush2.xpose.msra.mxu0 0.0
    %4548 = vmatprep.mubr.f32.mxu0 0.0
    %4549 = vmatmul.mubr.f32.gmra.mxu0 %v4476
    %v4550 = vpop.f32.mrf.mxu0
    %v4551 = vadd.f32 0.0, %v4550
    %v4552 = vpop.f32.mrf.mxu0
    %4553 = vdwg.mxu0
    %v4554 = vsel %vm2729, %v4551, -1e+30
    %v4555 = vsel %vm301, %v4554, -inf
    %4556 = vmax.xlane.f32.xlu0 %v4555
    %v4557 = vpop.xlane.xlu0 %4556
    %v4558 = vsub.f32 %v4554, %v4557
    %v4559 = vmul.f32 %v4558, 1.442695
    %v4560 = vpow.pop %v4559
    %v4561 = vsel %vm301, %v4560, 0.0
    %4562 = vadd.xlane.f32.xlu0 %v4561
    %v4563 = vpop.xlane.xlu0 %4562
    %4564 = vrot.lane.b32.xlu0 %v3689, 104
    %v4565 = vpop.permute.xlu0 %4564
    %4566 = vrot.lane.b32.xlu0 %v3690, 104
    %v4567 = vpop.permute.xlu0 %4566
    %4568 = vrot.lane.b32.xlu0 %v3691, 104
    %v4569 = vpop.permute.xlu0 %4568
    %v4574 = vsel %vm301, %v4560, 0
    %4576 = vmatprep.subr.mxu0 0.0
    %4577 = vmatpush1.msra.mxu0 0.0
    %4578 = vmatprep.subr.mxu0 0.0
    %4579 = vmatpush1.msra.mxu0 0.0
    %4580 = vmatprep.subr.mxu0 0.0
    %4581 = vmatpush1.msra.mxu0 0.0
    %4582 = vmatprep.subr.mxu0 0.0
    %4583 = vmatpush1.msra.mxu0 0.0
    %4584 = vmatprep.subr.mxu0 0.0
    %4585 = vmatpush1.msra.mxu0 0.0
    %4586 = vmatprep.subr.mxu0 0.0
    %4587 = vmatpush1.msra.mxu0 0.0
    %4588 = vmatprep.subr.mxu0 0.0
    %4589 = vmatpush1.msra.mxu0 0.0
    %4590 = vmatprep.subr.mxu0 0.0
    %4591 = vmatpush1.msra.mxu0 0.0
    %4592 = vmatprep.subr.mxu0 0.0
    %4593 = vmatpush1.msra.mxu0 0.0
    %4594 = vmatprep.subr.mxu0 0.0
    %4595 = vmatpush1.msra.mxu0 0.0
    %4596 = vmatprep.subr.mxu0 0.0
    %4597 = vmatpush1.msra.mxu0 0.0
    %4598 = vmatprep.subr.mxu0 0.0
    %4599 = vmatpush1.msra.mxu0 0.0
    %4600 = vmatprep.subr.mxu0 0.0
    %4601 = vmatpush1.msra.mxu0 0.0
    %4602 = vmatprep.subr.mxu0 0.0
    %4603 = vmatpush1.msra.mxu0 %v4569
    %4604 = vmatprep.subr.mxu0 0.0
    %4605 = vmatpush1.msra.mxu0 %v4567
    %4606 = vmatprep.subr.mxu0 0.0
    %4607 = vmatpush1.msra.mxu0 %v4565
    %4608 = vmatprep.subr.mxu0 0.0
    %4609 = vmatpush2.msra.mxu0 0.0
    %4610 = vmatprep.subr.mxu0 0.0
    %4611 = vmatpush2.msra.mxu0 0.0
    %4612 = vmatprep.subr.mxu0 0.0
    %4613 = vmatpush2.msra.mxu0 0.0
    %4614 = vmatprep.subr.mxu0 0.0
    %4615 = vmatpush2.msra.mxu0 0.0
    %4616 = vmatprep.subr.mxu0 0.0
    %4617 = vmatpush2.msra.mxu0 0.0
    %4618 = vmatprep.subr.mxu0 0.0
    %4619 = vmatpush2.msra.mxu0 0.0
    %4620 = vmatprep.subr.mxu0 0.0
    %4621 = vmatpush2.msra.mxu0 0.0
    %4622 = vmatprep.subr.mxu0 0.0
    %4623 = vmatpush2.msra.mxu0 0.0
    %4624 = vmatprep.subr.mxu0 0.0
    %4625 = vmatpush2.msra.mxu0 0.0
    %4626 = vmatprep.subr.mxu0 0.0
    %4627 = vmatpush2.msra.mxu0 0.0
    %4628 = vmatprep.subr.mxu0 0.0
    %4629 = vmatpush2.msra.mxu0 0.0
    %4630 = vmatprep.subr.mxu0 0.0
    %4631 = vmatpush2.msra.mxu0 0.0
    %4632 = vmatprep.subr.mxu0 0.0
    %4633 = vmatpush2.msra.mxu0 0.0
    %4634 = vmatprep.subr.mxu0 0.0
    %4635 = vmatpush2.msra.mxu0 0.0
    %4636 = vmatprep.subr.mxu0 0.0
    %4637 = vmatpush2.msra.mxu0 0.0
    %4638 = vmatprep.subr.mxu0 0.0
    %4639 = vmatpush2.msra.mxu0 0.0
    %4640 = vmatprep.mubr.f32.mxu0 0.0
    %4641 = vmatmul.mubr.f32.gmra.mxu0 %v4574
    %v4642 = vpop.f32.mrf.mxu0
    %v4643 = vadd.f32 0.0, %v4642
    %v4644 = vpop.f32.mrf.mxu0
    %4645 = vdwg.mxu0
    %v4646 = vrcp.pop %v4563
    %v4647 = vmul.f32 1.0, %v4646
    %v4648 = vmul.f32 %v4643, %v4647
    %v4649 = vld [vmem:[#allocation4 + $0x8] sm:$0xff]
    %v4650 = vld [vmem:[%s2 + $0x50] sm:$0xff]
    %4652 = vrot.lane.b32.xlu0 %v4650, 32
    %v4653 = vpop.permute.xlu0 %4652
    %v4656 = vsel %vm216, %v4648, 0
    %4658 = vmatprep.subr.mxu0 0.0
    %4659 = vmatpush1.msra.mxu0 0.0
    %4660 = vmatprep.subr.mxu0 0.0
    %4661 = vmatpush1.msra.mxu0 0.0
    %4662 = vmatprep.subr.mxu0 0.0
    %4663 = vmatpush1.msra.mxu0 0.0
    %4664 = vmatprep.subr.mxu0 0.0
    %4665 = vmatpush1.msra.mxu0 0.0
    %4666 = vmatprep.subr.mxu0 0.0
    %4667 = vmatpush1.msra.mxu0 0.0
    %4668 = vmatprep.subr.mxu0 0.0
    %4669 = vmatpush1.msra.mxu0 0.0
    %4670 = vmatprep.subr.mxu0 0.0
    %4671 = vmatpush1.msra.mxu0 0.0
    %4672 = vmatprep.subr.mxu0 0.0
    %4673 = vmatpush1.msra.mxu0 0.0
    %4674 = vmatprep.subr.mxu0 0.0
    %4675 = vmatpush1.msra.mxu0 0.0
    %4676 = vmatprep.subr.mxu0 0.0
    %4677 = vmatpush1.msra.mxu0 0.0
    %4678 = vmatprep.subr.mxu0 0.0
    %4679 = vmatpush1.msra.mxu0 0.0
    %4680 = vmatprep.subr.mxu0 0.0
    %4681 = vmatpush1.msra.mxu0 0.0
    %4682 = vmatprep.subr.mxu0 0.0
    %4683 = vmatpush1.msra.mxu0 0.0
    %4684 = vmatprep.subr.mxu0 0.0
    %4685 = vmatpush1.msra.mxu0 0.0
    %4686 = vmatprep.subr.mxu0 0.0
    %4687 = vmatpush1.msra.mxu0 0.0
    %4688 = vmatprep.subr.mxu0 0.0
    %4689 = vmatpush1.msra.mxu0 %v4653
    %4690 = vmatprep.subr.mxu0 0.0
    %4691 = vmatpush2.msra.mxu0 0.0
    %4692 = vmatprep.subr.mxu0 0.0
    %4693 = vmatpush2.msra.mxu0 0.0
    %4694 = vmatprep.subr.mxu0 0.0
    %4695 = vmatpush2.msra.mxu0 0.0
    %4696 = vmatprep.subr.mxu0 0.0
    %4697 = vmatpush2.msra.mxu0 0.0
    %4698 = vmatprep.subr.mxu0 0.0
    %4699 = vmatpush2.msra.mxu0 0.0
    %4700 = vmatprep.subr.mxu0 0.0
    %4701 = vmatpush2.msra.mxu0 0.0
    %4702 = vmatprep.subr.mxu0 0.0
    %4703 = vmatpush2.msra.mxu0 0.0
    %4704 = vmatprep.subr.mxu0 0.0
    %4705 = vmatpush2.msra.mxu0 0.0
    %4706 = vmatprep.subr.mxu0 0.0
    %4707 = vmatpush2.msra.mxu0 0.0
    %4708 = vmatprep.subr.mxu0 0.0
    %4709 = vmatpush2.msra.mxu0 0.0
    %4710 = vmatprep.subr.mxu0 0.0
    %4711 = vmatpush2.msra.mxu0 0.0
    %4712 = vmatprep.subr.mxu0 0.0
    %4713 = vmatpush2.msra.mxu0 0.0
    %4714 = vmatprep.subr.mxu0 0.0
    %4715 = vmatpush2.msra.mxu0 0.0
    %4716 = vmatprep.subr.mxu0 0.0
    %4717 = vmatpush2.msra.mxu0 0.0
    %4718 = vmatprep.subr.mxu0 0.0
    %4719 = vmatpush2.msra.mxu0 0.0
    %4720 = vmatprep.subr.mxu0 0.0
    %4721 = vmatpush2.msra.mxu0 0.0
    %4722 = vmatprep.mubr.f32.mxu0 0.0
    %4723 = vmatmul.mubr.f32.gmra.mxu0 %v4656
    %v4724 = vpop.f32.mrf.mxu0
    %v4725 = vadd.f32 0.0, %v4724
    %v4726 = vpop.f32.mrf.mxu0
    %4727 = vdwg.mxu0
    %v4728 = vadd.f32 %v4649, %v4725
    %4729 = vst.msk [vmem:[#allocation4 + $0x8] sm:$0xff] %vm55, %v4728
    %v4730 = vld [vmem:[#allocation4] sm:$0xff]
    %v4731 = vld [vmem:[#allocation4 + $0x8] sm:$0xff]
    %v4732 = vadd.f32 %v2354, %v4730
    %v4733 = vadd.f32 %v2355, %v4731
    %v4734 = vld [vmem:[%s4 + $0x2] sm:$0x1]
    %v4736 = vlaneseq
    %v4737 = vshrl.u32 %v4736, 7
    %v4738 = vsub.s32 0, %v4737
    %v4739 = vrot.slane %v4734, %v4738
    %4740 = vrot.lane.b32.xlu0 %v4739, 32
    %v4741 = vpop.permute.xlu0 %4740
    %v4743 = vadd.f32 %v4732, %v4741
    %v4744 = vadd.f32 %v4733, %v4741
    %v4745 = vld [vmem:[%s4 + $0x3] sm:$0x1]
    %v4746 = vsel %vm55, %v4743, 0.0
    %4747 = vadd.xlane.f32.xlu0 %v4746
    %v4748 = vpop.xlane.xlu0 %4747
    %v4749 = vsel %vm55, %v4744, 0.0
    %4750 = vadd.xlane.f32.xlu0 %v4749
    %v4751 = vpop.xlane.xlu0 %4750
    %v4752 = vmul.f32 %v4748, %v2322
    %v4753 = vmul.f32 %v4751, %v2322
    %v4754 = vsub.f32 %v4743, %v4752
    %v4755 = vsub.f32 %v4744, %v4753
    %v4756 = vmul.f32 %v4754, %v4754
    %v4757 = vmul.f32 %v4755, %v4755
    %v4758 = vsel %vm55, %v4756, 0.0
    %4759 = vadd.xlane.f32.xlu0 %v4758
    %v4760 = vpop.xlane.xlu0 %4759
    %v4761 = vsel %vm55, %v4757, 0.0
    %4762 = vadd.xlane.f32.xlu0 %v4761
    %v4763 = vpop.xlane.xlu0 %4762
    %v4764 = vmul.f32 %v4760, %v2322
    %v4765 = vmul.f32 %v4763, %v2322
    %v4766 = vadd.f32 %v4764, 1e-05
    %v4767 = vadd.f32 %v4765, 1e-05
    %v4768 = vrsqrt.pop %v4766
    %v4769 = vrsqrt.pop %v4767
    %v4770 = vmul.f32 %v4754, %v4768
    %v4771 = vmul.f32 %v4755, %v4769
    %v4773 = vlaneseq
    %v4774 = vshrl.u32 %v4773, 7
    %v4775 = vsub.s32 0, %v4774
    %v4776 = vrot.slane %v4745, %v4775
    %4777 = vrot.lane.b32.xlu0 %v4776, 64
    %v4778 = vpop.permute.xlu0 %4777
    %v4780 = vmul.f32 %v4770, %v4778
    %v4781 = vmul.f32 %v4771, %v4778
    %4782 = vrot.lane.b32.xlu0 %v4776, 32
    %v4783 = vpop.permute.xlu0 %4782
    %v4785 = vadd.f32 %v4780, %v4783
    %v4786 = vadd.f32 %v4781, %v4783
    %v4787 = vld [vmem:[%s2 + $0x10] sm:$0xff]
    %v4788 = vld [vmem:[%s2 + $0x28] sm:$0xff]
    %v4789 = vld [vmem:[%s2 + $0x40] sm:$0xff]
    %v4790 = vld [vmem:[%s2 + $0x58] sm:$0xff]
    %v4791 = vld [vmem:[%s4 + $0x4] sm:$0x1]
    %v4793 = vlaneseq
    %v4794 = vshrl.u32 %v4793, 7
    %v4795 = vsub.s32 0, %v4794
    %v4796 = vrot.slane %v4791, %v4795
    %4797 = vrot.lane.b32.xlu0 %v4796, 64
    %v4798 = vpop.permute.xlu0 %4797
    %v4801 = vsel %vm55, %v4785, 0
    %v4804 = vsel %vm55, %v4786, 0
    %4806 = vmatprep.subr.mxu0 0.0
    %4807 = vmatpush1.msra.mxu0 0.0
    %4808 = vmatprep.subr.mxu0 0.0
    %4809 = vmatpush1.msra.mxu0 0.0
    %4810 = vmatprep.subr.mxu0 0.0
    %4811 = vmatpush1.msra.mxu0 0.0
    %4812 = vmatprep.subr.mxu0 0.0
    %4813 = vmatpush1.msra.mxu0 0.0
    %4814 = vmatprep.subr.mxu0 0.0
    %4815 = vmatpush1.msra.mxu0 0.0
    %4816 = vmatprep.subr.mxu0 0.0
    %4817 = vmatpush1.msra.mxu0 0.0
    %4818 = vmatprep.subr.mxu0 0.0
    %4819 = vmatpush1.msra.mxu0 0.0
    %4820 = vmatprep.subr.mxu0 0.0
    %4821 = vmatpush1.msra.mxu0 0.0
    %4822 = vmatprep.subr.mxu0 0.0
    %4823 = vmatpush1.msra.mxu0 0.0
    %4824 = vmatprep.subr.mxu0 0.0
    %4825 = vmatpush1.msra.mxu0 0.0
    %4826 = vmatprep.subr.mxu0 0.0
    %4827 = vmatpush1.msra.mxu0 0.0
    %4828 = vmatprep.subr.mxu0 0.0
    %4829 = vmatpush1.msra.mxu0 0.0
    %4830 = vmatprep.subr.mxu0 0.0
    %4831 = vmatpush1.msra.mxu0 %v4790
    %4832 = vmatprep.subr.mxu0 0.0
    %4833 = vmatpush1.msra.mxu0 %v4789
    %4834 = vmatprep.subr.mxu0 0.0
    %4835 = vmatpush1.msra.mxu0 %v4788
    %4836 = vmatprep.subr.mxu0 0.0
    %4837 = vmatpush1.msra.mxu0 %v4787
    %4838 = vmatprep.subr.mxu0 0.0
    %4839 = vmatpush2.msra.mxu0 0.0
    %4840 = vmatprep.subr.mxu0 0.0
    %4841 = vmatpush2.msra.mxu0 0.0
    %4842 = vmatprep.subr.mxu0 0.0
    %4843 = vmatpush2.msra.mxu0 0.0
    %4844 = vmatprep.subr.mxu0 0.0
    %4845 = vmatpush2.msra.mxu0 0.0
    %4846 = vmatprep.subr.mxu0 0.0
    %4847 = vmatpush2.msra.mxu0 0.0
    %4848 = vmatprep.subr.mxu0 0.0
    %4849 = vmatpush2.msra.mxu0 0.0
    %4850 = vmatprep.subr.mxu0 0.0
    %4851 = vmatpush2.msra.mxu0 0.0
    %4852 = vmatprep.subr.mxu0 0.0
    %4853 = vmatpush2.msra.mxu0 0.0
    %4854 = vmatprep.subr.mxu0 0.0
    %4855 = vmatpush2.msra.mxu0 0.0
    %4856 = vmatprep.subr.mxu0 0.0
    %4857 = vmatpush2.msra.mxu0 0.0
    %4858 = vmatprep.subr.mxu0 0.0
    %4859 = vmatpush2.msra.mxu0 0.0
    %4860 = vmatprep.subr.mxu0 0.0
    %4861 = vmatpush2.msra.mxu0 0.0
    %4862 = vmatprep.subr.mxu0 0.0
    %4863 = vmatpush2.msra.mxu0 0.0
    %4864 = vmatprep.subr.mxu0 0.0
    %4865 = vmatpush2.msra.mxu0 0.0
    %4866 = vmatprep.subr.mxu0 0.0
    %4867 = vmatpush2.msra.mxu0 0.0
    %4868 = vmatprep.subr.mxu0 0.0
    %4869 = vmatpush2.msra.mxu0 0.0
    %4870 = vmatprep.mubr.f32.mxu0 0.0
    %4871 = vmatmul.mubr.f32.gmra.mxu0 %v4801
    %v4872 = vpop.f32.mrf.mxu0
    %v4873 = vadd.f32 %v4798, %v4872
    %v4874 = vpop.f32.mrf.mxu0
    %4875 = vmatprep.mubr.f32.mxu0 0.0
    %4876 = vmatmul.mubr.f32.gmra.mxu0 %v4804
    %v4877 = vpop.f32.mrf.mxu0
    %v4878 = vadd.f32 %v4798, %v4877
    %v4879 = vpop.f32.mrf.mxu0
    %4880 = vdwg.mxu0
    %v4881 = vmax.f32 %v4873, 0.0
    %v4882 = vmax.f32 %v4878, 0.0
    %v4883 = vld [vmem:[%s3] sm:$0xff]
    %v4884 = vld [vmem:[%s3 + $0x8] sm:$0xff]
    %v4885 = vld [vmem:[%s3 + $0x10] sm:$0xff]
    %v4886 = vld [vmem:[%s3 + $0x18] sm:$0xff]
    %v4887 = vld [vmem:[%s3 + $0x20] sm:$0xff]
    %v4888 = vld [vmem:[%s3 + $0x28] sm:$0xff]
    %v4889 = vld [vmem:[%s3 + $0x30] sm:$0xff]
    %v4890 = vld [vmem:[%s3 + $0x38] sm:$0xff]
    %v4891 = vld [vmem:[%s4 + $0x5] sm:$0x1]
    %v4893 = vlaneseq
    %v4894 = vshrl.u32 %v4893, 7
    %v4895 = vsub.s32 0, %v4894
    %v4896 = vrot.slane %v4891, %v4895
    %vm4898 = vcmask 523264
    %v4900 = vsel %vm4898, %v4881, 0
    %v4903 = vsel %vm4898, %v4882, 0
    %4905 = vmatprep.subr.mxu0 0.0
    %4906 = vmatpush1.msra.mxu0 0.0
    %4907 = vmatprep.subr.mxu0 0.0
    %4908 = vmatpush1.msra.mxu0 0.0
    %4909 = vmatprep.subr.mxu0 0.0
    %4910 = vmatpush1.msra.mxu0 0.0
    %4911 = vmatprep.subr.mxu0 0.0
    %4912 = vmatpush1.msra.mxu0 0.0
    %4913 = vmatprep.subr.mxu0 0.0
    %4914 = vmatpush1.msra.mxu0 0.0
    %4915 = vmatprep.subr.mxu0 0.0
    %4916 = vmatpush1.msra.mxu0 0.0
    %4917 = vmatprep.subr.mxu0 0.0
    %4918 = vmatpush1.msra.mxu0 0.0
    %4919 = vmatprep.subr.mxu0 0.0
    %4920 = vmatpush1.msra.mxu0 0.0
    %4921 = vmatprep.subr.mxu0 0.0
    %4922 = vmatpush1.msra.mxu0 %v4890
    %4923 = vmatprep.subr.mxu0 0.0
    %4924 = vmatpush1.msra.mxu0 %v4889
    %4925 = vmatprep.subr.mxu0 0.0
    %4926 = vmatpush1.msra.mxu0 %v4888
    %4927 = vmatprep.subr.mxu0 0.0
    %4928 = vmatpush1.msra.mxu0 %v4887
    %4929 = vmatprep.subr.mxu0 0.0
    %4930 = vmatpush1.msra.mxu0 %v4886
    %4931 = vmatprep.subr.mxu0 0.0
    %4932 = vmatpush1.msra.mxu0 %v4885
    %4933 = vmatprep.subr.mxu0 0.0
    %4934 = vmatpush1.msra.mxu0 %v4884
    %4935 = vmatprep.subr.mxu0 0.0
    %4936 = vmatpush1.msra.mxu0 %v4883
    %4937 = vmatprep.subr.mxu0 0.0
    %4938 = vmatpush2.msra.mxu0 0.0
    %4939 = vmatprep.subr.mxu0 0.0
    %4940 = vmatpush2.msra.mxu0 0.0
    %4941 = vmatprep.subr.mxu0 0.0
    %4942 = vmatpush2.msra.mxu0 0.0
    %4943 = vmatprep.subr.mxu0 0.0
    %4944 = vmatpush2.msra.mxu0 0.0
    %4945 = vmatprep.subr.mxu0 0.0
    %4946 = vmatpush2.msra.mxu0 0.0
    %4947 = vmatprep.subr.mxu0 0.0
    %4948 = vmatpush2.msra.mxu0 0.0
    %4949 = vmatprep.subr.mxu0 0.0
    %4950 = vmatpush2.msra.mxu0 0.0
    %4951 = vmatprep.subr.mxu0 0.0
    %4952 = vmatpush2.msra.mxu0 0.0
    %4953 = vmatprep.subr.mxu0 0.0
    %4954 = vmatpush2.msra.mxu0 0.0
    %4955 = vmatprep.subr.mxu0 0.0
    %4956 = vmatpush2.msra.mxu0 0.0
    %4957 = vmatprep.subr.mxu0 0.0
    %4958 = vmatpush2.msra.mxu0 0.0
    %4959 = vmatprep.subr.mxu0 0.0
    %4960 = vmatpush2.msra.mxu0 0.0
    %4961 = vmatprep.subr.mxu0 0.0
    %4962 = vmatpush2.msra.mxu0 0.0
    %4963 = vmatprep.subr.mxu0 0.0
    %4964 = vmatpush2.msra.mxu0 0.0
    %4965 = vmatprep.subr.mxu0 0.0
    %4966 = vmatpush2.msra.mxu0 0.0
    %4967 = vmatprep.subr.mxu0 0.0
    %4968 = vmatpush2.msra.mxu0 0.0
    %4969 = vmatprep.mubr.f32.mxu0 0.0
    %4970 = vmatmul.mubr.f32.gmra.mxu0 %v4900
    %v4971 = vpop.f32.mrf.mxu0
    %v4972 = vadd.f32 %v4896, %v4971
    %v4973 = vpop.f32.mrf.mxu0
    %4974 = vmatprep.mubr.f32.mxu0 0.0
    %4975 = vmatmul.mubr.f32.gmra.mxu0 %v4903
    %v4976 = vpop.f32.mrf.mxu0
    %v4977 = vadd.f32 %v4896, %v4976
    %v4978 = vpop.f32.mrf.mxu0
    %4979 = vdwg.mxu0
    %v4980 = vadd.f32 %v4785, %v4972
    %v4981 = vadd.f32 %v4786, %v4977
    %v4982 = vsel %vm55, %v4980, 0.0
    %4983 = vadd.xlane.f32.xlu0 %v4982
    %v4984 = vpop.xlane.xlu0 %4983
    %v4985 = vsel %vm55, %v4981, 0.0
    %4986 = vadd.xlane.f32.xlu0 %v4985
    %v4987 = vpop.xlane.xlu0 %4986
    %v4988 = vmul.f32 %v4984, %v2322
    %v4989 = vmul.f32 %v4987, %v2322
    %v4990 = vsub.f32 %v4980, %v4988
    %v4991 = vsub.f32 %v4981, %v4989
    %v4992 = vmul.f32 %v4990, %v4990
    %v4993 = vmul.f32 %v4991, %v4991
    %v4994 = vsel %vm55, %v4992, 0.0
    %4995 = vadd.xlane.f32.xlu0 %v4994
    %v4996 = vpop.xlane.xlu0 %4995
    %v4997 = vsel %vm55, %v4993, 0.0
    %4998 = vadd.xlane.f32.xlu0 %v4997
    %v4999 = vpop.xlane.xlu0 %4998
    %v5000 = vmul.f32 %v4996, %v2322
    %v5001 = vmul.f32 %v4999, %v2322
    %v5002 = vadd.f32 %v5000, 1e-05
    %v5003 = vadd.f32 %v5001, 1e-05
    %v5004 = vrsqrt.pop %v5002
    %v5005 = vrsqrt.pop %v5003
    %v5006 = vmul.f32 %v4990, %v5004
    %v5007 = vmul.f32 %v4991, %v5005
    %v5009 = vmul.f32 %v5006, %v4796
    %v5010 = vmul.f32 %v5007, %v4796
    %5011 = vrot.lane.b32.xlu0 %v4796, 96
    %v5012 = vpop.permute.xlu0 %5011
    %v5014 = vadd.f32 %v5009, %v5012
    %v5015 = vadd.f32 %v5010, %v5012
    %5016 = vst.msk [vmem:[#allocation10] sm:$0xff] %vm55, %v5014
    %5017 = vst.msk [vmem:[#allocation10 + $0x8] sm:$0xff] %vm55, %v5015
    // Predicated region
    $region30: #{decoder_layer_pallas.1} parent=1 // pred_check
      _
    $region31: #{decoder_layer_pallas.1} parent=1 // pred_check_branch
      %5019 = sbr.rel (0) target = $region33
    $region32: #{decoder_layer_pallas.1} parent=1 // pred_region
      %s5021 = ssub.s32 256, 256
      %5022 = vsyncadd [#allocation7], %s5021
      %s5023 = sshll.u32 [#allocation10], 4
      %s5024 = int_to_ptr.vmem [resolvable:$true] %s5023
      %5029 = dma.vmem_to_hbm [thread:$0]  %s5024, 256, %s5, [#allocation7], 128, 128, 8
    $region33: #{decoder_layer_pallas.1} parent=1 // pred_fallthru
      _
    // Predicated region
    $region34: #{decoder_layer_pallas.1} parent=1 // pred_check
      _
    $region35: #{decoder_layer_pallas.1} parent=1 // pred_check_branch
      %5031 = sbr.rel (0) target = $region37
    $region36: #{decoder_layer_pallas.1} parent=1 // pred_region
      %5032 = dma.done [#allocation7], 256
    $region37: #{decoder_layer_pallas.1} parent=1 // pred_fallthru
      _
    %5033 = vsyncpa [#allocation6], 1
    %5034 = vsyncpa [#allocation9], 1
    %5035 = vsyncpa [#allocation7], 1

</llo_original>
